<compile_context>
chip_gen: v7x
topology: tpu7x:2x2x1
jax: 0.10.0
libtpu: 0.0.40
codegen_flags: <defaults>
</compile_context>

<pallas_src>
import math

import jax
import jax.numpy as jnp
from jax.experimental import pallas as pl
from jax.experimental.pallas import tpu as pltpu

# ----------------------------- configuration -------------------------------
D_MODEL = 32
N_HEADS = 4
HEAD_DIM = D_MODEL // N_HEADS
FFN_DIM = 64
NUM_LAYERS = 2
NUM_BOX_DECODER_LAYERS = 3   # > NUM_LAYERS => only box-refinement branch runs
QUERY_DIM = 4
NQ = 8          # number of queries
BS = 2          # batch
HW = 16         # flattened memory length
NLEVEL = 1
NUM_BODY_POINTS = 68
HALF = D_MODEL // 2
TWO_PI = 2.0 * math.pi
ATTN_SCALE = 1.0 / math.sqrt(HEAD_DIM)


# ----------------------- in-kernel helper functions -------------------------
def _linear(x, w, b, relu=False):
    """x (f32) @ w (bf16) with f32 accumulation, f32 bias."""
    y = jnp.dot(x.astype(jnp.bfloat16), w, preferred_element_type=jnp.float32) + b
    return jnp.maximum(y, 0.0) if relu else y


def _layernorm(x, g, b, eps=1e-5):
    mean = jnp.mean(x, axis=-1, keepdims=True)
    var = jnp.mean(jnp.square(x - mean), axis=-1, keepdims=True)
    return (x - mean) * jax.lax.rsqrt(var + eps) * g + b


def _inverse_sigmoid(x, eps=1e-3):
    x = jnp.clip(x, 0.0, 1.0)
    return jnp.log(jnp.maximum(x, eps) / jnp.maximum(1.0 - x, eps))


def _heads_attend(q_bf, q_off, k_bf, k_off, v_bf, v_off, wo_ref, wo_l, bo, mask):
    """Masked multi-head attention on whole (batch-major) slabs.

    q_bf/k_bf/v_bf are already-projected bf16 activations; heads are lane
    slices at the given offsets (sliced ONCE per head, no batch loop — the
    per-batch structure is enforced by the additive block-diagonal `mask`).
    Each head's output is folded straight into the output projection through
    the per-head Wo block (leading-axis indexed ref — no weight slicing).
    """
    acc = jnp.zeros((q_bf.shape[0], D_MODEL), jnp.float32)
    for h in range(N_HEADS):                      # static unroll (4 heads)
        qh = q_bf[:, q_off + h * HEAD_DIM: q_off + (h + 1) * HEAD_DIM]
        kh = k_bf[:, k_off + h * HEAD_DIM: k_off + (h + 1) * HEAD_DIM]
        vh = v_bf[:, v_off + h * HEAD_DIM: v_off + (h + 1) * HEAD_DIM]
        # contract head_dim of both operands -> no explicit K transpose
        s = jax.lax.dot_general(
            qh, kh, (((1,), (1,)), ((), ())),
            preferred_element_type=jnp.float32) * ATTN_SCALE
        s = s + mask                              # -1e9 on cross-batch entries
        s = s - jnp.max(s, axis=-1, keepdims=True)
        p = jnp.exp(s)
        p = p * pl.reciprocal(jnp.sum(p, axis=-1, keepdims=True), approx=True)
        hv = jnp.dot(p.astype(jnp.bfloat16), vh, preferred_element_type=jnp.float32)
        acc = acc + jnp.dot(hv.astype(jnp.bfloat16), wo_ref[wo_l, h],
                            preferred_element_type=jnp.float32)
    return acc + bo


# --------------------------- the fused kernel --------------------------------
def _decoder_kernel(
    tgt_ref, mem_ref, pos_ref, refu_ref, vr_ref,
    sine_s_ref, sine_ph_ref, smask_ref, cmask_ref,
    rph_w1_ref, rph_b1_ref, rph_w2_ref, rph_b2_ref,
    sa_wqk_ref, sa_bqk_ref, sa_wv_ref, sa_bv_ref, sa_wo_ref, sa_bo_ref,
    ca_wq_ref, ca_bq_ref, ca_wk_ref, ca_bk_ref, ca_wv_ref, ca_bv_ref,
    ca_wo_ref, ca_bo_ref,
    ffn_w1_ref, ffn_b1_ref, ffn_w2_ref, ffn_b2_ref,
    ln_g_ref, ln_b_ref, fn_g_ref, fn_b_ref,
    bb_w1_ref, bb_b1_ref, bb_w2_ref, bb_b2_ref, bb_w3_ref, bb_b3_ref,
    inter_ref, refp_ref,
):
    bf16 = jnp.bfloat16
    out = tgt_ref[...]                        # (bs*nq, D) batch-major rows, f32
    mem = mem_ref[...]                        # (bs*hw, D)
    mem_k = mem + pos_ref[...]                # keys carry `pos`
    vr = vr_ref[...]                          # (bs*nq, 4)
    self_mask = smask_ref[...]                # (bs*nq, bs*nq) block-diag mask
    cross_mask = cmask_ref[...]               # (bs*nq, bs*hw)
    sine_s = sine_s_ref[...]                  # (4, 2D) scatter matrix
    sine_ph = sine_ph_ref[...]                # (1, 2D) pi/2 on "cos" lanes

    ref_pts = jax.nn.sigmoid(refu_ref[...])   # (bs*nq, 4)
    ref_list = [ref_pts]                      # ref_points[0]

    # --- cross-attn K/V projections: layer-invariant, hoisted & packed -------
    # K_all[:, l*D:(l+1)*D] / V_all[:, l*D:(l+1)*D] belong to layer l.
    k_all = (jnp.dot(mem_k.astype(bf16), ca_wk_ref[...],
                     preferred_element_type=jnp.float32) + ca_bk_ref[...]).astype(bf16)
    v_all = (jnp.dot(mem.astype(bf16), ca_wv_ref[...],
                     preferred_element_type=jnp.float32) + ca_bv_ref[...]).astype(bf16)

    for l in range(NUM_LAYERS):               # static unroll (2 layers)
        # --- sine positional embedding (one matmul + one sin) + ref_point_head
        rp_in = ref_pts * vr                  # level-0 reference_points_input
        qse = jnp.sin(jnp.dot(rp_in, sine_s, preferred_element_type=jnp.float32)
                      + sine_ph)              # (bs*nq, 2D) == (pos_y,pos_x,pos_w,pos_h)
        hidden = _linear(qse, rph_w1_ref[...], rph_b1_ref[...], relu=True)
        query_pos = _linear(hidden, rph_w2_ref[...], rph_b2_ref[...])
        # pos_scale == 1 (query_scale is None / rm_dec_query_scale)

        # --- self-attention (q = k = tgt + query_pos, v = tgt), post-norm ----
        x_qk = out + query_pos
        qk = _linear(x_qk, sa_wqk_ref[l], sa_bqk_ref[l]).astype(bf16)   # (m, 2D)
        sv = _linear(out, sa_wv_ref[l], sa_bv_ref[l]).astype(bf16)      # (m, D)
        sa = _heads_attend(qk, 0, qk, D_MODEL, sv, 0,
                           sa_wo_ref, l, sa_bo_ref[l], self_mask)
        x = _layernorm(out + sa, ln_g_ref[l, 0], ln_b_ref[l, 0])

        # --- cross-attention over memory ---
        # TODO(synk): real DeformableTransformerDecoderLayer uses MSDeformAttn
        # sampling over spatial_shapes/level_start_index (and optional text
        # cross-attn); replaced here by dense masked cross-attention.
        qc = _linear(x + query_pos, ca_wq_ref[l], ca_bq_ref[l]).astype(bf16)
        ca = _heads_attend(qc, 0, k_all, l * D_MODEL, v_all, l * D_MODEL,
                           ca_wo_ref, l, ca_bo_ref[l], cross_mask)
        x = _layernorm(x + ca, ln_g_ref[l, 1], ln_b_ref[l, 1])

        # --- FFN ---
        ff = _linear(x, ffn_w1_ref[l], ffn_b1_ref[l], relu=True)
        x = _layernorm(x + _linear(ff, ffn_w2_ref[l], ffn_b2_ref[l]),
                       ln_g_ref[l, 2], ln_b_ref[l, 2])
        out = x

        # intermediate.append(self.norm(output))
        inter_ref[l] = _layernorm(out, fn_g_ref[...], fn_b_ref[...])

        # --- box refinement (layer_id < num_box_decoder_layers) --------------
        ref_before_sig = _inverse_sigmoid(ref_pts)
        b1 = _linear(out, bb_w1_ref[l], bb_b1_ref[l], relu=True)
        b2 = _linear(b1, bb_w2_ref[l], bb_b2_ref[l], relu=True)
        delta = _linear(b2, bb_w3_ref[l], bb_b3_ref[l])
        new_ref = jax.nn.sigmoid(delta + ref_before_sig)
        ref_list.append(new_ref)
        # TODO(synk): the layer_id == num_box_decoder_layers-1 top-k keypoint
        # split and layer_id >= num_box_decoder_layers keypoint-refinement
        # branches need externally attached class_embed/pose_embed/pose_hw_embed
        # heads, kpt_embed and text_dict (training dn handling); not exercised.
        ref_pts = new_ref   # .detach() in torch — identical for forward pass

    # single lane-packed store of all reference points
    refp_ref[...] = jnp.concatenate(ref_list, axis=-1)   # (m, (L+1)*4)


# ----------------------------- forward wrapper -------------------------------
@jax.jit
def transformer_decoder_forward(params, tgt, memory, pos, refpoints_unsigmoid,
                                valid_ratios):
    nq, bs, d = tgt.shape
    hw = memory.shape[0]
    m, lk = bs * nq, bs * hw

    # output += hw.weight[0, 0] * 0.0   (kept for fidelity with the reference)
    tgt2d = tgt.transpose(1, 0, 2).reshape(m, d) + params["hw_weight"][0, 0] * 0.0
    mem2d = memory.transpose(1, 0, 2).reshape(lk, d)
    pos2d = pos.transpose(1, 0, 2).reshape(lk, d)
    ref2d = refpoints_unsigmoid.transpose(1, 0, 2).reshape(m, QUERY_DIM)
    # reference_points[:, :, None] * cat([valid_ratios, valid_ratios], -1) @ level 0
    vr4 = jnp.concatenate([valid_ratios, valid_ratios], axis=-1)[:, 0, :]  # (bs, 4)
    vr_flat = jnp.repeat(vr4, nq, axis=0)                                  # (bs*nq, 4)

    # constant block-diagonal (per-batch) additive attention masks
    qb = jnp.arange(m, dtype=jnp.int32) // nq
    cb = jnp.arange(lk, dtype=jnp.int32) // hw
    self_mask = jnp.where(qb[:, None] == qb[None, :], 0.0, -1e9).astype(jnp.float32)
    cross_mask = jnp.where(qb[:, None] == cb[None, :], 0.0, -1e9).astype(jnp.float32)

    inputs = (
        tgt2d, mem2d, pos2d, ref2d, vr_flat,
        params["sine_s"], params["sine_phase"], self_mask, cross_mask,
        params["rph_w1"], params["rph_b1"], params["rph_w2"], params["rph_b2"],
        params["sa_wqk"], params["sa_bqk"], params["sa_wv"], params["sa_bv"],
        params["sa_wo"], params["sa_bo"],
        params["ca_wq"], params["ca_bq"], params["ca_wk"], params["ca_bk"],
        params["ca_wv"], params["ca_bv"], params["ca_wo"], params["ca_bo"],
        params["ffn_w1"], params["ffn_b1"], params["ffn_w2"], params["ffn_b2"],
        params["ln_g"], params["ln_b"], params["fn_g"], params["fn_b"],
        params["bb_w1"], params["bb_b1"], params["bb_w2"], params["bb_b2"],
        params["bb_w3"], params["bb_b3"],
    )
    vmem = pl.BlockSpec(memory_space=pltpu.MemorySpace.VMEM)
    inter, refp = pl.pallas_call(
        _decoder_kernel,
        out_shape=(
            jax.ShapeDtypeStruct((NUM_LAYERS, m, d), jnp.float32),
            jax.ShapeDtypeStruct((m, (NUM_LAYERS + 1) * QUERY_DIM), jnp.float32),
        ),
        in_specs=[vmem] * len(inputs),
        out_specs=(vmem, vmem),
        cost_estimate=pl.CostEstimate(flops=1_600_000, transcendentals=9_000,
                                      bytes_accessed=110_000),
    )(*inputs)

    inter = inter.reshape(NUM_LAYERS, bs, nq, d)
    refs = [refp[:, l * QUERY_DIM:(l + 1) * QUERY_DIM].reshape(bs, nq, QUERY_DIM)
            for l in range(NUM_LAYERS + 1)]
    return [inter[l] for l in range(NUM_LAYERS)], refs


# ----------------------------- deterministic parameter init -----------------
def init_linear(key, fan_in, fan_out):
    k1, k2 = jax.random.split(key)
    bound = 1.0 / math.sqrt(fan_in)
    w = jax.random.uniform(k1, (fan_in, fan_out), jnp.float32, -bound, bound)
    b = jax.random.uniform(k2, (1, fan_out), jnp.float32, -bound, bound)
    return w, b


def init_attn(key):
    kq, kk, kv, ko = jax.random.split(key, 4)
    return (init_linear(kq, D_MODEL, D_MODEL),
            init_linear(kk, D_MODEL, D_MODEL),
            init_linear(kv, D_MODEL, D_MODEL),
            init_linear(ko, D_MODEL, D_MODEL))


def init_params(key):
    keys = jax.random.split(key, 8)
    bf16 = jnp.bfloat16

    # ref_point_head: MLP(query_dim//2 * d_model -> d_model -> d_model)
    kr1, kr2 = jax.random.split(keys[0])
    rph_w1, rph_b1 = init_linear(kr1, QUERY_DIM // 2 * D_MODEL, D_MODEL)
    rph_w2, rph_b2 = init_linear(kr2, D_MODEL, D_MODEL)

    sa_wqk, sa_bqk, sa_wv, sa_bv, sa_wo, sa_bo = [], [], [], [], [], []
    ca_wq, ca_bq, ca_wk, ca_bk, ca_wv, ca_bv, ca_wo, ca_bo = ([] for _ in range(8))
    ffn_w1, ffn_b1, ffn_w2, ffn_b2 = [], [], [], []
    bb_w1, bb_b1, bb_w2, bb_b2, bb_w3, bb_b3 = [], [], [], [], [], []
    for i in range(NUM_LAYERS):
        klayer = jax.random.fold_in(keys[4], i)
        k1, k2, k3, k4 = jax.random.split(klayer, 4)
        # self-attention: fuse Wq|Wk (shared input), per-head leading-axis Wo
        (wq, bq), (wk, bk), (wv, bv), (wo, bo) = init_attn(k1)
        sa_wqk.append(jnp.concatenate([wq, wk], axis=1))
        sa_bqk.append(jnp.concatenate([bq, bk], axis=1))
        sa_wv.append(wv); sa_bv.append(bv)
        sa_wo.append(wo.reshape(N_HEADS, HEAD_DIM, D_MODEL)); sa_bo.append(bo)
        # cross-attention: K/V weights packed across layers (hoisted projection)
        (wq, bq), (wk, bk), (wv, bv), (wo, bo) = init_attn(k2)
        ca_wq.append(wq); ca_bq.append(bq)
        ca_wk.append(wk); ca_bk.append(bk)
        ca_wv.append(wv); ca_bv.append(bv)
        ca_wo.append(wo.reshape(N_HEADS, HEAD_DIM, D_MODEL)); ca_bo.append(bo)
        # FFN
        w1, b1 = init_linear(k3, D_MODEL, FFN_DIM)
        w2, b2 = init_linear(k4, FFN_DIM, D_MODEL)
        ffn_w1.append(w1); ffn_b1.append(b1); ffn_w2.append(w2); ffn_b2.append(b2)
        # bbox_embed MLP
        kbox = jax.random.fold_in(keys[3], i)
        kb1, kb2, kb3 = jax.random.split(kbox, 3)
        w1, b1 = init_linear(kb1, D_MODEL, D_MODEL)
        w2, b2 = init_linear(kb2, D_MODEL, D_MODEL)
        w3, b3 = init_linear(kb3, D_MODEL, QUERY_DIM)
        bb_w1.append(w1); bb_b1.append(b1); bb_w2.append(w2); bb_b2.append(b2)
        bb_w3.append(w3); bb_b3.append(b3)

    stackw = lambda xs: jnp.stack(xs, 0).astype(bf16)   # MXU operands in bf16
    stackb = lambda xs: jnp.stack(xs, 0)                # biases stay f32

    # sine-embedding scatter matrix + phase:  qse = sin(rp_in @ S + phase)
    # block order (pos_y, pos_x, pos_w, pos_h); odd lanes get +pi/2 (=> cos).
    idx = jnp.arange(HALF, dtype=jnp.float32)
    dim_t = 10000.0 ** (2.0 * (idx // 2) / HALF)
    coef = TWO_PI / dim_t
    sine_s = jnp.zeros((QUERY_DIM, 2 * D_MODEL), jnp.float32)
    for blk, coord in enumerate((1, 0, 2, 3)):
        sine_s = sine_s.at[coord, blk * HALF:(blk + 1) * HALF].set(coef)
    phase_blk = jnp.where(jnp.arange(HALF) % 2 == 1, math.pi / 2.0, 0.0)
    sine_phase = jnp.tile(phase_blk, (QUERY_DIM,)).reshape(1, 2 * D_MODEL)
    sine_phase = sine_phase.astype(jnp.float32)

    return dict(
        rph_w1=rph_w1.astype(bf16), rph_b1=rph_b1,
        rph_w2=rph_w2.astype(bf16), rph_b2=rph_b2,
        sa_wqk=stackw(sa_wqk), sa_bqk=stackb(sa_bqk),
        sa_wv=stackw(sa_wv), sa_bv=stackb(sa_bv),
        sa_wo=stackw(sa_wo), sa_bo=stackb(sa_bo),
        ca_wq=stackw(ca_wq), ca_bq=stackb(ca_bq),
        ca_wk=jnp.concatenate(ca_wk, axis=1).astype(bf16),
        ca_bk=jnp.concatenate(ca_bk, axis=1),
        ca_wv=jnp.concatenate(ca_wv, axis=1).astype(bf16),
        ca_bv=jnp.concatenate(ca_bv, axis=1),
        ca_wo=stackw(ca_wo), ca_bo=stackb(ca_bo),
        ffn_w1=stackw(ffn_w1), ffn_b1=stackb(ffn_b1),
        ffn_w2=stackw(ffn_w2), ffn_b2=stackb(ffn_b2),
        ln_g=jnp.ones((NUM_LAYERS, 3, 1, D_MODEL), jnp.float32),
        ln_b=jnp.zeros((NUM_LAYERS, 3, 1, D_MODEL), jnp.float32),
        fn_g=jnp.ones((1, D_MODEL), jnp.float32),
        fn_b=jnp.zeros((1, D_MODEL), jnp.float32),
        bb_w1=stackw(bb_w1), bb_b1=stackb(bb_b1),
        bb_w2=stackw(bb_w2), bb_b2=stackb(bb_b2),
        bb_w3=stackw(bb_w3), bb_b3=stackb(bb_b3),
        hw_weight=jax.random.normal(keys[1], (17, 2), jnp.float32),
        hw_append_weight=jax.random.normal(keys[2], (NUM_BODY_POINTS - 17, 2),
                                           jnp.float32),
        sine_s=sine_s, sine_phase=sine_phase,
    )


# ----------------------------- main ------------------------------------------
if __name__ == "__main__":
    key = jax.random.PRNGKey(0)
    k_tgt, k_mem, k_pos, k_ref, k_par = jax.random.split(key, 5)

    tgt = jax.random.normal(k_tgt, (NQ, BS, D_MODEL), jnp.float32)
    memory = jax.random.normal(k_mem, (HW, BS, D_MODEL), jnp.float32)
    pos = jax.random.normal(k_pos, (HW, BS, D_MODEL), jnp.float32)
    refpoints_unsigmoid = jax.random.normal(k_ref, (NQ, BS, QUERY_DIM), jnp.float32)
    valid_ratios = jnp.ones((BS, NLEVEL, 2), jnp.float32)

    params = init_params(k_par)

    intermediate, ref_points = transformer_decoder_forward(
        params, tgt, memory, pos, refpoints_unsigmoid, valid_ratios)
    jax.block_until_ready((intermediate, ref_points))

    assert len(intermediate) == NUM_LAYERS
    assert intermediate[0].shape == (BS, NQ, D_MODEL)
    assert len(ref_points) == NUM_LAYERS + 1
    assert ref_points[0].shape == (BS, NQ, QUERY_DIM)
    assert all(bool(jnp.all(jnp.isfinite(a))) for a in intermediate + ref_points)

    print("KERNEL_OK")
</pallas_src>

<mosaic_0001>
module attributes {stable_mosaic.version = 11 : i64} {
  func.func @_decoder_kernel(%arg0: memref<16x32xf32, #tpu.memory_space<vmem>>, %arg1: memref<32x32xf32, #tpu.memory_space<vmem>>, %arg2: memref<32x32xf32, #tpu.memory_space<vmem>>, %arg3: memref<16x4xf32, #tpu.memory_space<vmem>>, %arg4: memref<16x4xf32, #tpu.memory_space<vmem>>, %arg5: memref<4x64xf32, #tpu.memory_space<vmem>>, %arg6: memref<1x64xf32, #tpu.memory_space<vmem>>, %arg7: memref<16x16xf32, #tpu.memory_space<vmem>>, %arg8: memref<16x32xf32, #tpu.memory_space<vmem>>, %arg9: memref<64x32xbf16, #tpu.memory_space<vmem>>, %arg10: memref<1x32xf32, #tpu.memory_space<vmem>>, %arg11: memref<32x32xbf16, #tpu.memory_space<vmem>>, %arg12: memref<1x32xf32, #tpu.memory_space<vmem>>, %arg13: memref<2x32x64xbf16, #tpu.memory_space<vmem>>, %arg14: memref<2x1x64xf32, #tpu.memory_space<vmem>>, %arg15: memref<2x32x32xbf16, #tpu.memory_space<vmem>>, %arg16: memref<2x1x32xf32, #tpu.memory_space<vmem>>, %arg17: memref<2x4x8x32xbf16, #tpu.memory_space<vmem>>, %arg18: memref<2x1x32xf32, #tpu.memory_space<vmem>>, %arg19: memref<2x32x32xbf16, #tpu.memory_space<vmem>>, %arg20: memref<2x1x32xf32, #tpu.memory_space<vmem>>, %arg21: memref<32x64xbf16, #tpu.memory_space<vmem>>, %arg22: memref<1x64xf32, #tpu.memory_space<vmem>>, %arg23: memref<32x64xbf16, #tpu.memory_space<vmem>>, %arg24: memref<1x64xf32, #tpu.memory_space<vmem>>, %arg25: memref<2x4x8x32xbf16, #tpu.memory_space<vmem>>, %arg26: memref<2x1x32xf32, #tpu.memory_space<vmem>>, %arg27: memref<2x32x64xbf16, #tpu.memory_space<vmem>>, %arg28: memref<2x1x64xf32, #tpu.memory_space<vmem>>, %arg29: memref<2x64x32xbf16, #tpu.memory_space<vmem>>, %arg30: memref<2x1x32xf32, #tpu.memory_space<vmem>>, %arg31: memref<2x3x1x32xf32, #tpu.memory_space<vmem>>, %arg32: memref<2x3x1x32xf32, #tpu.memory_space<vmem>>, %arg33: memref<1x32xf32, #tpu.memory_space<vmem>>, %arg34: memref<1x32xf32, #tpu.memory_space<vmem>>, %arg35: memref<2x32x32xbf16, #tpu.memory_space<vmem>>, %arg36: memref<2x1x32xf32, #tpu.memory_space<vmem>>, %arg37: memref<2x32x32xbf16, #tpu.memory_space<vmem>>, %arg38: memref<2x1x32xf32, #tpu.memory_space<vmem>>, %arg39: memref<2x32x4xbf16, #tpu.memory_space<vmem>>, %arg40: memref<2x1x4xf32, #tpu.memory_space<vmem>>, %arg41: memref<2x16x32xf32, #tpu.memory_space<vmem>>, %arg42: memref<16x12xf32, #tpu.memory_space<vmem>>) attributes {dimension_semantics = [], scalar_prefetch = 0 : i64, scratch_operands = 0 : i64, tpu.core_type = #tpu.core_type<tc>} {
    %c0 = arith.constant 0 : index
    %c0_0 = arith.constant 0 : index
    %0 = vector.load %arg0[%c0, %c0_0] : memref<16x32xf32, #tpu.memory_space<vmem>>, vector<16x32xf32>
    %c0_1 = arith.constant 0 : index
    %c0_2 = arith.constant 0 : index
    %1 = vector.load %arg1[%c0_1, %c0_2] : memref<32x32xf32, #tpu.memory_space<vmem>>, vector<32x32xf32>
    %c0_3 = arith.constant 0 : index
    %c0_4 = arith.constant 0 : index
    %2 = vector.load %arg2[%c0_3, %c0_4] : memref<32x32xf32, #tpu.memory_space<vmem>>, vector<32x32xf32>
    %3 = arith.addf %1, %2 : vector<32x32xf32>
    %c0_5 = arith.constant 0 : index
    %c0_6 = arith.constant 0 : index
    %4 = vector.load %arg4[%c0_5, %c0_6] : memref<16x4xf32, #tpu.memory_space<vmem>>, vector<16x4xf32>
    %c0_7 = arith.constant 0 : index
    %c0_8 = arith.constant 0 : index
    %5 = vector.load %arg7[%c0_7, %c0_8] : memref<16x16xf32, #tpu.memory_space<vmem>>, vector<16x16xf32>
    %c0_9 = arith.constant 0 : index
    %c0_10 = arith.constant 0 : index
    %6 = vector.load %arg8[%c0_9, %c0_10] : memref<16x32xf32, #tpu.memory_space<vmem>>, vector<16x32xf32>
    %c0_11 = arith.constant 0 : index
    %c0_12 = arith.constant 0 : index
    %7 = vector.load %arg5[%c0_11, %c0_12] : memref<4x64xf32, #tpu.memory_space<vmem>>, vector<4x64xf32>
    %c0_13 = arith.constant 0 : index
    %c0_14 = arith.constant 0 : index
    %8 = vector.load %arg6[%c0_13, %c0_14] : memref<1x64xf32, #tpu.memory_space<vmem>>, vector<1x64xf32>
    %c0_15 = arith.constant 0 : index
    %c0_16 = arith.constant 0 : index
    %9 = vector.load %arg3[%c0_15, %c0_16] : memref<16x4xf32, #tpu.memory_space<vmem>>, vector<16x4xf32>
    %10 = arith.negf %9 : vector<16x4xf32>
    %11 = math.exp %10 : vector<16x4xf32>
    %cst = arith.constant 1.000000e+00 : f32
    %12 = vector.broadcast %cst : f32 to vector<16x4xf32>
    %13 = arith.addf %12, %11 : vector<16x4xf32>
    %14 = arith.divf %12, %13 : vector<16x4xf32>
    %15 = arith.truncf %3 : vector<32x32xf32> to vector<32x32xbf16>
    %c0_17 = arith.constant 0 : index
    %c0_18 = arith.constant 0 : index
    %16 = vector.load %arg21[%c0_17, %c0_18] : memref<32x64xbf16, #tpu.memory_space<vmem>>, vector<32x64xbf16>
    %cst_19 = arith.constant dense<0.000000e+00> : vector<32x64xf32>
    %17 = tpu.matmul %15, %16, %cst_19 {dimension_numbers = #tpu.dot_dimension_numbers<[1], [0], [0], [1], [0, 0, 1, 1], [], []>} : vector<32x32xbf16>, vector<32x64xbf16>, vector<32x64xf32> -> vector<32x64xf32>
    %c0_20 = arith.constant 0 : index
    %c0_21 = arith.constant 0 : index
    %18 = vector.load %arg22[%c0_20, %c0_21] : memref<1x64xf32, #tpu.memory_space<vmem>>, vector<1x64xf32>
    %19 = vector.broadcast %18 : vector<1x64xf32> to vector<32x64xf32>
    %20 = arith.addf %17, %19 : vector<32x64xf32>
    %21 = arith.truncf %20 : vector<32x64xf32> to vector<32x64xbf16>
    %22 = arith.truncf %1 : vector<32x32xf32> to vector<32x32xbf16>
    %c0_22 = arith.constant 0 : index
    %c0_23 = arith.constant 0 : index
    %23 = vector.load %arg23[%c0_22, %c0_23] : memref<32x64xbf16, #tpu.memory_space<vmem>>, vector<32x64xbf16>
    %cst_24 = arith.constant dense<0.000000e+00> : vector<32x64xf32>
    %24 = tpu.matmul %22, %23, %cst_24 {dimension_numbers = #tpu.dot_dimension_numbers<[1], [0], [0], [1], [0, 0, 1, 1], [], []>} : vector<32x32xbf16>, vector<32x64xbf16>, vector<32x64xf32> -> vector<32x64xf32>
    %c0_25 = arith.constant 0 : index
    %c0_26 = arith.constant 0 : index
    %25 = vector.load %arg24[%c0_25, %c0_26] : memref<1x64xf32, #tpu.memory_space<vmem>>, vector<1x64xf32>
    %26 = vector.broadcast %25 : vector<1x64xf32> to vector<32x64xf32>
    %27 = arith.addf %24, %26 : vector<32x64xf32>
    %28 = arith.truncf %27 : vector<32x64xf32> to vector<32x64xbf16>
    %29 = arith.mulf %14, %4 : vector<16x4xf32>
    %cst_27 = arith.constant dense<0.000000e+00> : vector<16x64xf32>
    %30 = tpu.matmul %29, %7, %cst_27 {dimension_numbers = #tpu.dot_dimension_numbers<[1], [0], [0], [1], [0, 0, 1, 1], [], []>} : vector<16x4xf32>, vector<4x64xf32>, vector<16x64xf32> -> vector<16x64xf32>
    %31 = vector.broadcast %8 : vector<1x64xf32> to vector<16x64xf32>
    %32 = arith.addf %30, %31 : vector<16x64xf32>
    %33 = math.sin %32 : vector<16x64xf32>
    %c0_28 = arith.constant 0 : index
    %c0_29 = arith.constant 0 : index
    %34 = vector.load %arg9[%c0_28, %c0_29] : memref<64x32xbf16, #tpu.memory_space<vmem>>, vector<64x32xbf16>
    %c0_30 = arith.constant 0 : index
    %c0_31 = arith.constant 0 : index
    %35 = vector.load %arg10[%c0_30, %c0_31] : memref<1x32xf32, #tpu.memory_space<vmem>>, vector<1x32xf32>
    %36 = arith.truncf %33 : vector<16x64xf32> to vector<16x64xbf16>
    %cst_32 = arith.constant dense<0.000000e+00> : vector<16x32xf32>
    %37 = tpu.matmul %36, %34, %cst_32 {dimension_numbers = #tpu.dot_dimension_numbers<[1], [0], [0], [1], [0, 0, 1, 1], [], []>} : vector<16x64xbf16>, vector<64x32xbf16>, vector<16x32xf32> -> vector<16x32xf32>
    %38 = vector.broadcast %35 : vector<1x32xf32> to vector<16x32xf32>
    %39 = arith.addf %37, %38 : vector<16x32xf32>
    %cst_33 = arith.constant 0.000000e+00 : f32
    %40 = vector.broadcast %cst_33 : f32 to vector<16x32xf32>
    %41 = arith.maximumf %39, %40 : vector<16x32xf32>
    %c0_34 = arith.constant 0 : index
    %c0_35 = arith.constant 0 : index
    %42 = vector.load %arg11[%c0_34, %c0_35] : memref<32x32xbf16, #tpu.memory_space<vmem>>, vector<32x32xbf16>
    %c0_36 = arith.constant 0 : index
    %c0_37 = arith.constant 0 : index
    %43 = vector.load %arg12[%c0_36, %c0_37] : memref<1x32xf32, #tpu.memory_space<vmem>>, vector<1x32xf32>
    %44 = arith.truncf %41 : vector<16x32xf32> to vector<16x32xbf16>
    %cst_38 = arith.constant dense<0.000000e+00> : vector<16x32xf32>
    %45 = tpu.matmul %44, %42, %cst_38 {dimension_numbers = #tpu.dot_dimension_numbers<[1], [0], [0], [1], [0, 0, 1, 1], [], []>} : vector<16x32xbf16>, vector<32x32xbf16>, vector<16x32xf32> -> vector<16x32xf32>
    %46 = vector.broadcast %43 : vector<1x32xf32> to vector<16x32xf32>
    %47 = arith.addf %45, %46 : vector<16x32xf32>
    %48 = arith.addf %0, %47 : vector<16x32xf32>
    %c0_39 = arith.constant 0 : index
    %c0_40 = arith.constant 0 : index
    %c0_41 = arith.constant 0 : index
    %49 = vector.load %arg13[%c0_39, %c0_40, %c0_41] : memref<2x32x64xbf16, #tpu.memory_space<vmem>>, vector<1x32x64xbf16>
    %50 = vector.shape_cast %49 : vector<1x32x64xbf16> to vector<32x64xbf16>
    %c0_42 = arith.constant 0 : index
    %c0_43 = arith.constant 0 : index
    %c0_44 = arith.constant 0 : index
    %51 = vector.load %arg14[%c0_42, %c0_43, %c0_44] : memref<2x1x64xf32, #tpu.memory_space<vmem>>, vector<1x1x64xf32>
    %52 = vector.shape_cast %51 : vector<1x1x64xf32> to vector<1x64xf32>
    %53 = arith.truncf %48 : vector<16x32xf32> to vector<16x32xbf16>
    %cst_45 = arith.constant dense<0.000000e+00> : vector<16x64xf32>
    %54 = tpu.matmul %53, %50, %cst_45 {dimension_numbers = #tpu.dot_dimension_numbers<[1], [0], [0], [1], [0, 0, 1, 1], [], []>} : vector<16x32xbf16>, vector<32x64xbf16>, vector<16x64xf32> -> vector<16x64xf32>
    %55 = vector.broadcast %52 : vector<1x64xf32> to vector<16x64xf32>
    %56 = arith.addf %54, %55 : vector<16x64xf32>
    %57 = arith.truncf %56 : vector<16x64xf32> to vector<16x64xbf16>
    %c0_46 = arith.constant 0 : index
    %c0_47 = arith.constant 0 : index
    %c0_48 = arith.constant 0 : index
    %58 = vector.load %arg15[%c0_46, %c0_47, %c0_48] : memref<2x32x32xbf16, #tpu.memory_space<vmem>>, vector<1x32x32xbf16>
    %59 = vector.shape_cast %58 : vector<1x32x32xbf16> to vector<32x32xbf16>
    %c0_49 = arith.constant 0 : index
    %c0_50 = arith.constant 0 : index
    %c0_51 = arith.constant 0 : index
    %60 = vector.load %arg16[%c0_49, %c0_50, %c0_51] : memref<2x1x32xf32, #tpu.memory_space<vmem>>, vector<1x1x32xf32>
    %61 = vector.shape_cast %60 : vector<1x1x32xf32> to vector<1x32xf32>
    %62 = arith.truncf %0 : vector<16x32xf32> to vector<16x32xbf16>
    %cst_52 = arith.constant dense<0.000000e+00> : vector<16x32xf32>
    %63 = tpu.matmul %62, %59, %cst_52 {dimension_numbers = #tpu.dot_dimension_numbers<[1], [0], [0], [1], [0, 0, 1, 1], [], []>} : vector<16x32xbf16>, vector<32x32xbf16>, vector<16x32xf32> -> vector<16x32xf32>
    %64 = vector.broadcast %61 : vector<1x32xf32> to vector<16x32xf32>
    %65 = arith.addf %63, %64 : vector<16x32xf32>
    %66 = arith.truncf %65 : vector<16x32xf32> to vector<16x32xbf16>
    %c0_53 = arith.constant 0 : index
    %c0_54 = arith.constant 0 : index
    %c0_55 = arith.constant 0 : index
    %67 = vector.load %arg18[%c0_53, %c0_54, %c0_55] : memref<2x1x32xf32, #tpu.memory_space<vmem>>, vector<1x1x32xf32>
    %68 = vector.shape_cast %67 : vector<1x1x32xf32> to vector<1x32xf32>
    %cst_56 = arith.constant 0.000000e+00 : f32
    %69 = vector.broadcast %cst_56 : f32 to vector<16x32xf32>
    %70 = vector.extract_strided_slice %57 {offsets = [0, 0], sizes = [16, 8], strides = [1, 1]} : vector<16x64xbf16> to vector<16x8xbf16>
    %71 = vector.extract_strided_slice %57 {offsets = [0, 32], sizes = [16, 8], strides = [1, 1]} : vector<16x64xbf16> to vector<16x8xbf16>
    %72 = vector.extract_strided_slice %66 {offsets = [0, 0], sizes = [16, 8], strides = [1, 1]} : vector<16x32xbf16> to vector<16x8xbf16>
    %cst_57 = arith.constant dense<0.000000e+00> : vector<16x16xf32>
    %73 = tpu.matmul %70, %71, %cst_57 {dimension_numbers = #tpu.dot_dimension_numbers<[1], [1], [0], [0], [0, 0, 1, 0], [], []>} : vector<16x8xbf16>, vector<16x8xbf16>, vector<16x16xf32> -> vector<16x16xf32>
    %cst_58 = arith.constant 0.353553385 : f32
    %74 = vector.broadcast %cst_58 : f32 to vector<16x16xf32>
    %75 = arith.mulf %73, %74 : vector<16x16xf32>
    %76 = arith.addf %75, %5 : vector<16x16xf32>
    %cst_59 = arith.constant dense<0xFF800000> : vector<16xf32>
    %77 = vector.multi_reduction <maximumf>, %76, %cst_59 [1] : vector<16x16xf32> to vector<16xf32>
    %78 = vector.shape_cast %77 : vector<16xf32> to vector<16x1xf32>
    %79 = vector.broadcast %78 : vector<16x1xf32> to vector<16x16xf32>
    %80 = arith.subf %76, %79 : vector<16x16xf32>
    %81 = math.exp %80 : vector<16x16xf32>
    %cst_60 = arith.constant dense<0.000000e+00> : vector<16xf32>
    %82 = vector.multi_reduction <add>, %81, %cst_60 [1] : vector<16x16xf32> to vector<16xf32>
    %83 = vector.shape_cast %82 : vector<16xf32> to vector<16x1xf32>
    %84 = tpu.reciprocal %83 {approx = true} : vector<16x1xf32> -> vector<16x1xf32>
    %85 = vector.broadcast %84 : vector<16x1xf32> to vector<16x16xf32>
    %86 = arith.mulf %81, %85 : vector<16x16xf32>
    %87 = arith.truncf %86 : vector<16x16xf32> to vector<16x16xbf16>
    %cst_61 = arith.constant dense<0.000000e+00> : vector<16x8xf32>
    %88 = tpu.matmul %87, %72, %cst_61 {dimension_numbers = #tpu.dot_dimension_numbers<[1], [0], [0], [1], [0, 0, 1, 1], [], []>} : vector<16x16xbf16>, vector<16x8xbf16>, vector<16x8xf32> -> vector<16x8xf32>
    %89 = arith.truncf %88 : vector<16x8xf32> to vector<16x8xbf16>
    %c0_62 = arith.constant 0 : index
    %c0_63 = arith.constant 0 : index
    %c0_64 = arith.constant 0 : index
    %c0_65 = arith.constant 0 : index
    %90 = vector.load %arg17[%c0_62, %c0_63, %c0_64, %c0_65] : memref<2x4x8x32xbf16, #tpu.memory_space<vmem>>, vector<1x1x8x32xbf16>
    %91 = vector.shape_cast %90 : vector<1x1x8x32xbf16> to vector<8x32xbf16>
    %cst_66 = arith.constant dense<0.000000e+00> : vector<16x32xf32>
    %92 = tpu.matmul %89, %91, %cst_66 {dimension_numbers = #tpu.dot_dimension_numbers<[1], [0], [0], [1], [0, 0, 1, 1], [], []>} : vector<16x8xbf16>, vector<8x32xbf16>, vector<16x32xf32> -> vector<16x32xf32>
    %93 = arith.addf %69, %92 : vector<16x32xf32>
    %94 = vector.extract_strided_slice %57 {offsets = [0, 8], sizes = [16, 8], strides = [1, 1]} : vector<16x64xbf16> to vector<16x8xbf16>
    %95 = vector.extract_strided_slice %57 {offsets = [0, 40], sizes = [16, 8], strides = [1, 1]} : vector<16x64xbf16> to vector<16x8xbf16>
    %96 = vector.extract_strided_slice %66 {offsets = [0, 8], sizes = [16, 8], strides = [1, 1]} : vector<16x32xbf16> to vector<16x8xbf16>
    %cst_67 = arith.constant dense<0.000000e+00> : vector<16x16xf32>
    %97 = tpu.matmul %94, %95, %cst_67 {dimension_numbers = #tpu.dot_dimension_numbers<[1], [1], [0], [0], [0, 0, 1, 0], [], []>} : vector<16x8xbf16>, vector<16x8xbf16>, vector<16x16xf32> -> vector<16x16xf32>
    %cst_68 = arith.constant 0.353553385 : f32
    %98 = vector.broadcast %cst_68 : f32 to vector<16x16xf32>
    %99 = arith.mulf %97, %98 : vector<16x16xf32>
    %100 = arith.addf %99, %5 : vector<16x16xf32>
    %cst_69 = arith.constant dense<0xFF800000> : vector<16xf32>
    %101 = vector.multi_reduction <maximumf>, %100, %cst_69 [1] : vector<16x16xf32> to vector<16xf32>
    %102 = vector.shape_cast %101 : vector<16xf32> to vector<16x1xf32>
    %103 = vector.broadcast %102 : vector<16x1xf32> to vector<16x16xf32>
    %104 = arith.subf %100, %103 : vector<16x16xf32>
    %105 = math.exp %104 : vector<16x16xf32>
    %cst_70 = arith.constant dense<0.000000e+00> : vector<16xf32>
    %106 = vector.multi_reduction <add>, %105, %cst_70 [1] : vector<16x16xf32> to vector<16xf32>
    %107 = vector.shape_cast %106 : vector<16xf32> to vector<16x1xf32>
    %108 = tpu.reciprocal %107 {approx = true} : vector<16x1xf32> -> vector<16x1xf32>
    %109 = vector.broadcast %108 : vector<16x1xf32> to vector<16x16xf32>
    %110 = arith.mulf %105, %109 : vector<16x16xf32>
    %111 = arith.truncf %110 : vector<16x16xf32> to vector<16x16xbf16>
    %cst_71 = arith.constant dense<0.000000e+00> : vector<16x8xf32>
    %112 = tpu.matmul %111, %96, %cst_71 {dimension_numbers = #tpu.dot_dimension_numbers<[1], [0], [0], [1], [0, 0, 1, 1], [], []>} : vector<16x16xbf16>, vector<16x8xbf16>, vector<16x8xf32> -> vector<16x8xf32>
    %113 = arith.truncf %112 : vector<16x8xf32> to vector<16x8xbf16>
    %c0_72 = arith.constant 0 : index
    %c1 = arith.constant 1 : index
    %c0_73 = arith.constant 0 : index
    %c0_74 = arith.constant 0 : index
    %114 = vector.load %arg17[%c0_72, %c1, %c0_73, %c0_74] : memref<2x4x8x32xbf16, #tpu.memory_space<vmem>>, vector<1x1x8x32xbf16>
    %115 = vector.shape_cast %114 : vector<1x1x8x32xbf16> to vector<8x32xbf16>
    %cst_75 = arith.constant dense<0.000000e+00> : vector<16x32xf32>
    %116 = tpu.matmul %113, %115, %cst_75 {dimension_numbers = #tpu.dot_dimension_numbers<[1], [0], [0], [1], [0, 0, 1, 1], [], []>} : vector<16x8xbf16>, vector<8x32xbf16>, vector<16x32xf32> -> vector<16x32xf32>
    %117 = arith.addf %93, %116 : vector<16x32xf32>
    %118 = vector.extract_strided_slice %57 {offsets = [0, 16], sizes = [16, 8], strides = [1, 1]} : vector<16x64xbf16> to vector<16x8xbf16>
    %119 = vector.extract_strided_slice %57 {offsets = [0, 48], sizes = [16, 8], strides = [1, 1]} : vector<16x64xbf16> to vector<16x8xbf16>
    %120 = vector.extract_strided_slice %66 {offsets = [0, 16], sizes = [16, 8], strides = [1, 1]} : vector<16x32xbf16> to vector<16x8xbf16>
    %cst_76 = arith.constant dense<0.000000e+00> : vector<16x16xf32>
    %121 = tpu.matmul %118, %119, %cst_76 {dimension_numbers = #tpu.dot_dimension_numbers<[1], [1], [0], [0], [0, 0, 1, 0], [], []>} : vector<16x8xbf16>, vector<16x8xbf16>, vector<16x16xf32> -> vector<16x16xf32>
    %cst_77 = arith.constant 0.353553385 : f32
    %122 = vector.broadcast %cst_77 : f32 to vector<16x16xf32>
    %123 = arith.mulf %121, %122 : vector<16x16xf32>
    %124 = arith.addf %123, %5 : vector<16x16xf32>
    %cst_78 = arith.constant dense<0xFF800000> : vector<16xf32>
    %125 = vector.multi_reduction <maximumf>, %124, %cst_78 [1] : vector<16x16xf32> to vector<16xf32>
    %126 = vector.shape_cast %125 : vector<16xf32> to vector<16x1xf32>
    %127 = vector.broadcast %126 : vector<16x1xf32> to vector<16x16xf32>
    %128 = arith.subf %124, %127 : vector<16x16xf32>
    %129 = math.exp %128 : vector<16x16xf32>
    %cst_79 = arith.constant dense<0.000000e+00> : vector<16xf32>
    %130 = vector.multi_reduction <add>, %129, %cst_79 [1] : vector<16x16xf32> to vector<16xf32>
    %131 = vector.shape_cast %130 : vector<16xf32> to vector<16x1xf32>
    %132 = tpu.reciprocal %131 {approx = true} : vector<16x1xf32> -> vector<16x1xf32>
    %133 = vector.broadcast %132 : vector<16x1xf32> to vector<16x16xf32>
    %134 = arith.mulf %129, %133 : vector<16x16xf32>
    %135 = arith.truncf %134 : vector<16x16xf32> to vector<16x16xbf16>
    %cst_80 = arith.constant dense<0.000000e+00> : vector<16x8xf32>
    %136 = tpu.matmul %135, %120, %cst_80 {dimension_numbers = #tpu.dot_dimension_numbers<[1], [0], [0], [1], [0, 0, 1, 1], [], []>} : vector<16x16xbf16>, vector<16x8xbf16>, vector<16x8xf32> -> vector<16x8xf32>
    %137 = arith.truncf %136 : vector<16x8xf32> to vector<16x8xbf16>
    %c0_81 = arith.constant 0 : index
    %c2 = arith.constant 2 : index
    %c0_82 = arith.constant 0 : index
    %c0_83 = arith.constant 0 : index
    %138 = vector.load %arg17[%c0_81, %c2, %c0_82, %c0_83] : memref<2x4x8x32xbf16, #tpu.memory_space<vmem>>, vector<1x1x8x32xbf16>
    %139 = vector.shape_cast %138 : vector<1x1x8x32xbf16> to vector<8x32xbf16>
    %cst_84 = arith.constant dense<0.000000e+00> : vector<16x32xf32>
    %140 = tpu.matmul %137, %139, %cst_84 {dimension_numbers = #tpu.dot_dimension_numbers<[1], [0], [0], [1], [0, 0, 1, 1], [], []>} : vector<16x8xbf16>, vector<8x32xbf16>, vector<16x32xf32> -> vector<16x32xf32>
    %141 = arith.addf %117, %140 : vector<16x32xf32>
    %142 = vector.extract_strided_slice %57 {offsets = [0, 24], sizes = [16, 8], strides = [1, 1]} : vector<16x64xbf16> to vector<16x8xbf16>
    %143 = vector.extract_strided_slice %57 {offsets = [0, 56], sizes = [16, 8], strides = [1, 1]} : vector<16x64xbf16> to vector<16x8xbf16>
    %144 = vector.extract_strided_slice %66 {offsets = [0, 24], sizes = [16, 8], strides = [1, 1]} : vector<16x32xbf16> to vector<16x8xbf16>
    %cst_85 = arith.constant dense<0.000000e+00> : vector<16x16xf32>
    %145 = tpu.matmul %142, %143, %cst_85 {dimension_numbers = #tpu.dot_dimension_numbers<[1], [1], [0], [0], [0, 0, 1, 0], [], []>} : vector<16x8xbf16>, vector<16x8xbf16>, vector<16x16xf32> -> vector<16x16xf32>
    %cst_86 = arith.constant 0.353553385 : f32
    %146 = vector.broadcast %cst_86 : f32 to vector<16x16xf32>
    %147 = arith.mulf %145, %146 : vector<16x16xf32>
    %148 = arith.addf %147, %5 : vector<16x16xf32>
    %cst_87 = arith.constant dense<0xFF800000> : vector<16xf32>
    %149 = vector.multi_reduction <maximumf>, %148, %cst_87 [1] : vector<16x16xf32> to vector<16xf32>
    %150 = vector.shape_cast %149 : vector<16xf32> to vector<16x1xf32>
    %151 = vector.broadcast %150 : vector<16x1xf32> to vector<16x16xf32>
    %152 = arith.subf %148, %151 : vector<16x16xf32>
    %153 = math.exp %152 : vector<16x16xf32>
    %cst_88 = arith.constant dense<0.000000e+00> : vector<16xf32>
    %154 = vector.multi_reduction <add>, %153, %cst_88 [1] : vector<16x16xf32> to vector<16xf32>
    %155 = vector.shape_cast %154 : vector<16xf32> to vector<16x1xf32>
    %156 = tpu.reciprocal %155 {approx = true} : vector<16x1xf32> -> vector<16x1xf32>
    %157 = vector.broadcast %156 : vector<16x1xf32> to vector<16x16xf32>
    %158 = arith.mulf %153, %157 : vector<16x16xf32>
    %159 = arith.truncf %158 : vector<16x16xf32> to vector<16x16xbf16>
    %cst_89 = arith.constant dense<0.000000e+00> : vector<16x8xf32>
    %160 = tpu.matmul %159, %144, %cst_89 {dimension_numbers = #tpu.dot_dimension_numbers<[1], [0], [0], [1], [0, 0, 1, 1], [], []>} : vector<16x16xbf16>, vector<16x8xbf16>, vector<16x8xf32> -> vector<16x8xf32>
    %161 = arith.truncf %160 : vector<16x8xf32> to vector<16x8xbf16>
    %c0_90 = arith.constant 0 : index
    %c3 = arith.constant 3 : index
    %c0_91 = arith.constant 0 : index
    %c0_92 = arith.constant 0 : index
    %162 = vector.load %arg17[%c0_90, %c3, %c0_91, %c0_92] : memref<2x4x8x32xbf16, #tpu.memory_space<vmem>>, vector<1x1x8x32xbf16>
    %163 = vector.shape_cast %162 : vector<1x1x8x32xbf16> to vector<8x32xbf16>
    %cst_93 = arith.constant dense<0.000000e+00> : vector<16x32xf32>
    %164 = tpu.matmul %161, %163, %cst_93 {dimension_numbers = #tpu.dot_dimension_numbers<[1], [0], [0], [1], [0, 0, 1, 1], [], []>} : vector<16x8xbf16>, vector<8x32xbf16>, vector<16x32xf32> -> vector<16x32xf32>
    %165 = arith.addf %141, %164 : vector<16x32xf32>
    %166 = vector.broadcast %68 : vector<1x32xf32> to vector<16x32xf32>
    %167 = arith.addf %165, %166 : vector<16x32xf32>
    %168 = arith.addf %0, %167 : vector<16x32xf32>
    %c0_94 = arith.constant 0 : index
    %c0_95 = arith.constant 0 : index
    %c0_96 = arith.constant 0 : index
    %c0_97 = arith.constant 0 : index
    %169 = vector.load %arg31[%c0_94, %c0_95, %c0_96, %c0_97] : memref<2x3x1x32xf32, #tpu.memory_space<vmem>>, vector<1x1x1x32xf32>
    %170 = vector.shape_cast %169 : vector<1x1x1x32xf32> to vector<1x32xf32>
    %c0_98 = arith.constant 0 : index
    %c0_99 = arith.constant 0 : index
    %c0_100 = arith.constant 0 : index
    %c0_101 = arith.constant 0 : index
    %171 = vector.load %arg32[%c0_98, %c0_99, %c0_100, %c0_101] : memref<2x3x1x32xf32, #tpu.memory_space<vmem>>, vector<1x1x1x32xf32>
    %172 = vector.shape_cast %171 : vector<1x1x1x32xf32> to vector<1x32xf32>
    %cst_102 = arith.constant dense<0.000000e+00> : vector<16xf32>
    %173 = vector.multi_reduction <add>, %168, %cst_102 [1] : vector<16x32xf32> to vector<16xf32>
    %174 = vector.shape_cast %173 : vector<16xf32> to vector<16x1xf32>
    %cst_103 = arith.constant 3.200000e+01 : f32
    %175 = vector.broadcast %cst_103 : f32 to vector<16x1xf32>
    %176 = arith.divf %174, %175 : vector<16x1xf32>
    %177 = vector.broadcast %176 : vector<16x1xf32> to vector<16x32xf32>
    %178 = arith.subf %168, %177 : vector<16x32xf32>
    %179 = arith.mulf %178, %178 : vector<16x32xf32>
    %cst_104 = arith.constant dense<0.000000e+00> : vector<16xf32>
    %180 = vector.multi_reduction <add>, %179, %cst_104 [1] : vector<16x32xf32> to vector<16xf32>
    %181 = vector.shape_cast %180 : vector<16xf32> to vector<16x1xf32>
    %cst_105 = arith.constant 3.200000e+01 : f32
    %182 = vector.broadcast %cst_105 : f32 to vector<16x1xf32>
    %183 = arith.divf %181, %182 : vector<16x1xf32>
    %184 = vector.broadcast %176 : vector<16x1xf32> to vector<16x32xf32>
    %185 = arith.subf %168, %184 : vector<16x32xf32>
    %cst_106 = arith.constant 9.99999974E-6 : f32
    %186 = vector.broadcast %cst_106 : f32 to vector<16x1xf32>
    %187 = arith.addf %183, %186 : vector<16x1xf32>
    %188 = math.rsqrt %187 : vector<16x1xf32>
    %189 = vector.broadcast %188 : vector<16x1xf32> to vector<16x32xf32>
    %190 = arith.mulf %185, %189 : vector<16x32xf32>
    %191 = vector.broadcast %170 : vector<1x32xf32> to vector<16x32xf32>
    %192 = arith.mulf %190, %191 : vector<16x32xf32>
    %193 = vector.broadcast %172 : vector<1x32xf32> to vector<16x32xf32>
    %194 = arith.addf %192, %193 : vector<16x32xf32>
    %195 = arith.addf %194, %47 : vector<16x32xf32>
    %c0_107 = arith.constant 0 : index
    %c0_108 = arith.constant 0 : index
    %c0_109 = arith.constant 0 : index
    %196 = vector.load %arg19[%c0_107, %c0_108, %c0_109] : memref<2x32x32xbf16, #tpu.memory_space<vmem>>, vector<1x32x32xbf16>
    %197 = vector.shape_cast %196 : vector<1x32x32xbf16> to vector<32x32xbf16>
    %c0_110 = arith.constant 0 : index
    %c0_111 = arith.constant 0 : index
    %c0_112 = arith.constant 0 : index
    %198 = vector.load %arg20[%c0_110, %c0_111, %c0_112] : memref<2x1x32xf32, #tpu.memory_space<vmem>>, vector<1x1x32xf32>
    %199 = vector.shape_cast %198 : vector<1x1x32xf32> to vector<1x32xf32>
    %200 = arith.truncf %195 : vector<16x32xf32> to vector<16x32xbf16>
    %cst_113 = arith.constant dense<0.000000e+00> : vector<16x32xf32>
    %201 = tpu.matmul %200, %197, %cst_113 {dimension_numbers = #tpu.dot_dimension_numbers<[1], [0], [0], [1], [0, 0, 1, 1], [], []>} : vector<16x32xbf16>, vector<32x32xbf16>, vector<16x32xf32> -> vector<16x32xf32>
    %202 = vector.broadcast %199 : vector<1x32xf32> to vector<16x32xf32>
    %203 = arith.addf %201, %202 : vector<16x32xf32>
    %204 = arith.truncf %203 : vector<16x32xf32> to vector<16x32xbf16>
    %c0_114 = arith.constant 0 : index
    %c0_115 = arith.constant 0 : index
    %c0_116 = arith.constant 0 : index
    %205 = vector.load %arg26[%c0_114, %c0_115, %c0_116] : memref<2x1x32xf32, #tpu.memory_space<vmem>>, vector<1x1x32xf32>
    %206 = vector.shape_cast %205 : vector<1x1x32xf32> to vector<1x32xf32>
    %cst_117 = arith.constant 0.000000e+00 : f32
    %207 = vector.broadcast %cst_117 : f32 to vector<16x32xf32>
    %208 = vector.extract_strided_slice %204 {offsets = [0, 0], sizes = [16, 8], strides = [1, 1]} : vector<16x32xbf16> to vector<16x8xbf16>
    %209 = vector.extract_strided_slice %21 {offsets = [0, 0], sizes = [32, 8], strides = [1, 1]} : vector<32x64xbf16> to vector<32x8xbf16>
    %210 = vector.extract_strided_slice %28 {offsets = [0, 0], sizes = [32, 8], strides = [1, 1]} : vector<32x64xbf16> to vector<32x8xbf16>
    %cst_118 = arith.constant dense<0.000000e+00> : vector<16x32xf32>
    %211 = tpu.matmul %208, %209, %cst_118 {dimension_numbers = #tpu.dot_dimension_numbers<[1], [1], [0], [0], [0, 0, 1, 0], [], []>} : vector<16x8xbf16>, vector<32x8xbf16>, vector<16x32xf32> -> vector<16x32xf32>
    %cst_119 = arith.constant 0.353553385 : f32
    %212 = vector.broadcast %cst_119 : f32 to vector<16x32xf32>
    %213 = arith.mulf %211, %212 : vector<16x32xf32>
    %214 = arith.addf %213, %6 : vector<16x32xf32>
    %cst_120 = arith.constant dense<0xFF800000> : vector<16xf32>
    %215 = vector.multi_reduction <maximumf>, %214, %cst_120 [1] : vector<16x32xf32> to vector<16xf32>
    %216 = vector.shape_cast %215 : vector<16xf32> to vector<16x1xf32>
    %217 = vector.broadcast %216 : vector<16x1xf32> to vector<16x32xf32>
    %218 = arith.subf %214, %217 : vector<16x32xf32>
    %219 = math.exp %218 : vector<16x32xf32>
    %cst_121 = arith.constant dense<0.000000e+00> : vector<16xf32>
    %220 = vector.multi_reduction <add>, %219, %cst_121 [1] : vector<16x32xf32> to vector<16xf32>
    %221 = vector.shape_cast %220 : vector<16xf32> to vector<16x1xf32>
    %222 = tpu.reciprocal %221 {approx = true} : vector<16x1xf32> -> vector<16x1xf32>
    %223 = vector.broadcast %222 : vector<16x1xf32> to vector<16x32xf32>
    %224 = arith.mulf %219, %223 : vector<16x32xf32>
    %225 = arith.truncf %224 : vector<16x32xf32> to vector<16x32xbf16>
    %cst_122 = arith.constant dense<0.000000e+00> : vector<16x8xf32>
    %226 = tpu.matmul %225, %210, %cst_122 {dimension_numbers = #tpu.dot_dimension_numbers<[1], [0], [0], [1], [0, 0, 1, 1], [], []>} : vector<16x32xbf16>, vector<32x8xbf16>, vector<16x8xf32> -> vector<16x8xf32>
    %227 = arith.truncf %226 : vector<16x8xf32> to vector<16x8xbf16>
    %c0_123 = arith.constant 0 : index
    %c0_124 = arith.constant 0 : index
    %c0_125 = arith.constant 0 : index
    %c0_126 = arith.constant 0 : index
    %228 = vector.load %arg25[%c0_123, %c0_124, %c0_125, %c0_126] : memref<2x4x8x32xbf16, #tpu.memory_space<vmem>>, vector<1x1x8x32xbf16>
    %229 = vector.shape_cast %228 : vector<1x1x8x32xbf16> to vector<8x32xbf16>
    %cst_127 = arith.constant dense<0.000000e+00> : vector<16x32xf32>
    %230 = tpu.matmul %227, %229, %cst_127 {dimension_numbers = #tpu.dot_dimension_numbers<[1], [0], [0], [1], [0, 0, 1, 1], [], []>} : vector<16x8xbf16>, vector<8x32xbf16>, vector<16x32xf32> -> vector<16x32xf32>
    %231 = arith.addf %207, %230 : vector<16x32xf32>
    %232 = vector.extract_strided_slice %204 {offsets = [0, 8], sizes = [16, 8], strides = [1, 1]} : vector<16x32xbf16> to vector<16x8xbf16>
    %233 = vector.extract_strided_slice %21 {offsets = [0, 8], sizes = [32, 8], strides = [1, 1]} : vector<32x64xbf16> to vector<32x8xbf16>
    %234 = vector.extract_strided_slice %28 {offsets = [0, 8], sizes = [32, 8], strides = [1, 1]} : vector<32x64xbf16> to vector<32x8xbf16>
    %cst_128 = arith.constant dense<0.000000e+00> : vector<16x32xf32>
    %235 = tpu.matmul %232, %233, %cst_128 {dimension_numbers = #tpu.dot_dimension_numbers<[1], [1], [0], [0], [0, 0, 1, 0], [], []>} : vector<16x8xbf16>, vector<32x8xbf16>, vector<16x32xf32> -> vector<16x32xf32>
    %cst_129 = arith.constant 0.353553385 : f32
    %236 = vector.broadcast %cst_129 : f32 to vector<16x32xf32>
    %237 = arith.mulf %235, %236 : vector<16x32xf32>
    %238 = arith.addf %237, %6 : vector<16x32xf32>
    %cst_130 = arith.constant dense<0xFF800000> : vector<16xf32>
    %239 = vector.multi_reduction <maximumf>, %238, %cst_130 [1] : vector<16x32xf32> to vector<16xf32>
    %240 = vector.shape_cast %239 : vector<16xf32> to vector<16x1xf32>
    %241 = vector.broadcast %240 : vector<16x1xf32> to vector<16x32xf32>
    %242 = arith.subf %238, %241 : vector<16x32xf32>
    %243 = math.exp %242 : vector<16x32xf32>
    %cst_131 = arith.constant dense<0.000000e+00> : vector<16xf32>
    %244 = vector.multi_reduction <add>, %243, %cst_131 [1] : vector<16x32xf32> to vector<16xf32>
    %245 = vector.shape_cast %244 : vector<16xf32> to vector<16x1xf32>
    %246 = tpu.reciprocal %245 {approx = true} : vector<16x1xf32> -> vector<16x1xf32>
    %247 = vector.broadcast %246 : vector<16x1xf32> to vector<16x32xf32>
    %248 = arith.mulf %243, %247 : vector<16x32xf32>
    %249 = arith.truncf %248 : vector<16x32xf32> to vector<16x32xbf16>
    %cst_132 = arith.constant dense<0.000000e+00> : vector<16x8xf32>
    %250 = tpu.matmul %249, %234, %cst_132 {dimension_numbers = #tpu.dot_dimension_numbers<[1], [0], [0], [1], [0, 0, 1, 1], [], []>} : vector<16x32xbf16>, vector<32x8xbf16>, vector<16x8xf32> -> vector<16x8xf32>
    %251 = arith.truncf %250 : vector<16x8xf32> to vector<16x8xbf16>
    %c0_133 = arith.constant 0 : index
    %c1_134 = arith.constant 1 : index
    %c0_135 = arith.constant 0 : index
    %c0_136 = arith.constant 0 : index
    %252 = vector.load %arg25[%c0_133, %c1_134, %c0_135, %c0_136] : memref<2x4x8x32xbf16, #tpu.memory_space<vmem>>, vector<1x1x8x32xbf16>
    %253 = vector.shape_cast %252 : vector<1x1x8x32xbf16> to vector<8x32xbf16>
    %cst_137 = arith.constant dense<0.000000e+00> : vector<16x32xf32>
    %254 = tpu.matmul %251, %253, %cst_137 {dimension_numbers = #tpu.dot_dimension_numbers<[1], [0], [0], [1], [0, 0, 1, 1], [], []>} : vector<16x8xbf16>, vector<8x32xbf16>, vector<16x32xf32> -> vector<16x32xf32>
    %255 = arith.addf %231, %254 : vector<16x32xf32>
    %256 = vector.extract_strided_slice %204 {offsets = [0, 16], sizes = [16, 8], strides = [1, 1]} : vector<16x32xbf16> to vector<16x8xbf16>
    %257 = vector.extract_strided_slice %21 {offsets = [0, 16], sizes = [32, 8], strides = [1, 1]} : vector<32x64xbf16> to vector<32x8xbf16>
    %258 = vector.extract_strided_slice %28 {offsets = [0, 16], sizes = [32, 8], strides = [1, 1]} : vector<32x64xbf16> to vector<32x8xbf16>
    %cst_138 = arith.constant dense<0.000000e+00> : vector<16x32xf32>
    %259 = tpu.matmul %256, %257, %cst_138 {dimension_numbers = #tpu.dot_dimension_numbers<[1], [1], [0], [0], [0, 0, 1, 0], [], []>} : vector<16x8xbf16>, vector<32x8xbf16>, vector<16x32xf32> -> vector<16x32xf32>
    %cst_139 = arith.constant 0.353553385 : f32
    %260 = vector.broadcast %cst_139 : f32 to vector<16x32xf32>
    %261 = arith.mulf %259, %260 : vector<16x32xf32>
    %262 = arith.addf %261, %6 : vector<16x32xf32>
    %cst_140 = arith.constant dense<0xFF800000> : vector<16xf32>
    %263 = vector.multi_reduction <maximumf>, %262, %cst_140 [1] : vector<16x32xf32> to vector<16xf32>
    %264 = vector.shape_cast %263 : vector<16xf32> to vector<16x1xf32>
    %265 = vector.broadcast %264 : vector<16x1xf32> to vector<16x32xf32>
    %266 = arith.subf %262, %265 : vector<16x32xf32>
    %267 = math.exp %266 : vector<16x32xf32>
    %cst_141 = arith.constant dense<0.000000e+00> : vector<16xf32>
    %268 = vector.multi_reduction <add>, %267, %cst_141 [1] : vector<16x32xf32> to vector<16xf32>
    %269 = vector.shape_cast %268 : vector<16xf32> to vector<16x1xf32>
    %270 = tpu.reciprocal %269 {approx = true} : vector<16x1xf32> -> vector<16x1xf32>
    %271 = vector.broadcast %270 : vector<16x1xf32> to vector<16x32xf32>
    %272 = arith.mulf %267, %271 : vector<16x32xf32>
    %273 = arith.truncf %272 : vector<16x32xf32> to vector<16x32xbf16>
    %cst_142 = arith.constant dense<0.000000e+00> : vector<16x8xf32>
    %274 = tpu.matmul %273, %258, %cst_142 {dimension_numbers = #tpu.dot_dimension_numbers<[1], [0], [0], [1], [0, 0, 1, 1], [], []>} : vector<16x32xbf16>, vector<32x8xbf16>, vector<16x8xf32> -> vector<16x8xf32>
    %275 = arith.truncf %274 : vector<16x8xf32> to vector<16x8xbf16>
    %c0_143 = arith.constant 0 : index
    %c2_144 = arith.constant 2 : index
    %c0_145 = arith.constant 0 : index
    %c0_146 = arith.constant 0 : index
    %276 = vector.load %arg25[%c0_143, %c2_144, %c0_145, %c0_146] : memref<2x4x8x32xbf16, #tpu.memory_space<vmem>>, vector<1x1x8x32xbf16>
    %277 = vector.shape_cast %276 : vector<1x1x8x32xbf16> to vector<8x32xbf16>
    %cst_147 = arith.constant dense<0.000000e+00> : vector<16x32xf32>
    %278 = tpu.matmul %275, %277, %cst_147 {dimension_numbers = #tpu.dot_dimension_numbers<[1], [0], [0], [1], [0, 0, 1, 1], [], []>} : vector<16x8xbf16>, vector<8x32xbf16>, vector<16x32xf32> -> vector<16x32xf32>
    %279 = arith.addf %255, %278 : vector<16x32xf32>
    %280 = vector.extract_strided_slice %204 {offsets = [0, 24], sizes = [16, 8], strides = [1, 1]} : vector<16x32xbf16> to vector<16x8xbf16>
    %281 = vector.extract_strided_slice %21 {offsets = [0, 24], sizes = [32, 8], strides = [1, 1]} : vector<32x64xbf16> to vector<32x8xbf16>
    %282 = vector.extract_strided_slice %28 {offsets = [0, 24], sizes = [32, 8], strides = [1, 1]} : vector<32x64xbf16> to vector<32x8xbf16>
    %cst_148 = arith.constant dense<0.000000e+00> : vector<16x32xf32>
    %283 = tpu.matmul %280, %281, %cst_148 {dimension_numbers = #tpu.dot_dimension_numbers<[1], [1], [0], [0], [0, 0, 1, 0], [], []>} : vector<16x8xbf16>, vector<32x8xbf16>, vector<16x32xf32> -> vector<16x32xf32>
    %cst_149 = arith.constant 0.353553385 : f32
    %284 = vector.broadcast %cst_149 : f32 to vector<16x32xf32>
    %285 = arith.mulf %283, %284 : vector<16x32xf32>
    %286 = arith.addf %285, %6 : vector<16x32xf32>
    %cst_150 = arith.constant dense<0xFF800000> : vector<16xf32>
    %287 = vector.multi_reduction <maximumf>, %286, %cst_150 [1] : vector<16x32xf32> to vector<16xf32>
    %288 = vector.shape_cast %287 : vector<16xf32> to vector<16x1xf32>
    %289 = vector.broadcast %288 : vector<16x1xf32> to vector<16x32xf32>
    %290 = arith.subf %286, %289 : vector<16x32xf32>
    %291 = math.exp %290 : vector<16x32xf32>
    %cst_151 = arith.constant dense<0.000000e+00> : vector<16xf32>
    %292 = vector.multi_reduction <add>, %291, %cst_151 [1] : vector<16x32xf32> to vector<16xf32>
    %293 = vector.shape_cast %292 : vector<16xf32> to vector<16x1xf32>
    %294 = tpu.reciprocal %293 {approx = true} : vector<16x1xf32> -> vector<16x1xf32>
    %295 = vector.broadcast %294 : vector<16x1xf32> to vector<16x32xf32>
    %296 = arith.mulf %291, %295 : vector<16x32xf32>
    %297 = arith.truncf %296 : vector<16x32xf32> to vector<16x32xbf16>
    %cst_152 = arith.constant dense<0.000000e+00> : vector<16x8xf32>
    %298 = tpu.matmul %297, %282, %cst_152 {dimension_numbers = #tpu.dot_dimension_numbers<[1], [0], [0], [1], [0, 0, 1, 1], [], []>} : vector<16x32xbf16>, vector<32x8xbf16>, vector<16x8xf32> -> vector<16x8xf32>
    %299 = arith.truncf %298 : vector<16x8xf32> to vector<16x8xbf16>
    %c0_153 = arith.constant 0 : index
    %c3_154 = arith.constant 3 : index
    %c0_155 = arith.constant 0 : index
    %c0_156 = arith.constant 0 : index
    %300 = vector.load %arg25[%c0_153, %c3_154, %c0_155, %c0_156] : memref<2x4x8x32xbf16, #tpu.memory_space<vmem>>, vector<1x1x8x32xbf16>
    %301 = vector.shape_cast %300 : vector<1x1x8x32xbf16> to vector<8x32xbf16>
    %cst_157 = arith.constant dense<0.000000e+00> : vector<16x32xf32>
    %302 = tpu.matmul %299, %301, %cst_157 {dimension_numbers = #tpu.dot_dimension_numbers<[1], [0], [0], [1], [0, 0, 1, 1], [], []>} : vector<16x8xbf16>, vector<8x32xbf16>, vector<16x32xf32> -> vector<16x32xf32>
    %303 = arith.addf %279, %302 : vector<16x32xf32>
    %304 = vector.broadcast %206 : vector<1x32xf32> to vector<16x32xf32>
    %305 = arith.addf %303, %304 : vector<16x32xf32>
    %306 = arith.addf %194, %305 : vector<16x32xf32>
    %c0_158 = arith.constant 0 : index
    %c1_159 = arith.constant 1 : index
    %c0_160 = arith.constant 0 : index
    %c0_161 = arith.constant 0 : index
    %307 = vector.load %arg31[%c0_158, %c1_159, %c0_160, %c0_161] : memref<2x3x1x32xf32, #tpu.memory_space<vmem>>, vector<1x1x1x32xf32>
    %308 = vector.shape_cast %307 : vector<1x1x1x32xf32> to vector<1x32xf32>
    %c0_162 = arith.constant 0 : index
    %c1_163 = arith.constant 1 : index
    %c0_164 = arith.constant 0 : index
    %c0_165 = arith.constant 0 : index
    %309 = vector.load %arg32[%c0_162, %c1_163, %c0_164, %c0_165] : memref<2x3x1x32xf32, #tpu.memory_space<vmem>>, vector<1x1x1x32xf32>
    %310 = vector.shape_cast %309 : vector<1x1x1x32xf32> to vector<1x32xf32>
    %cst_166 = arith.constant dense<0.000000e+00> : vector<16xf32>
    %311 = vector.multi_reduction <add>, %306, %cst_166 [1] : vector<16x32xf32> to vector<16xf32>
    %312 = vector.shape_cast %311 : vector<16xf32> to vector<16x1xf32>
    %cst_167 = arith.constant 3.200000e+01 : f32
    %313 = vector.broadcast %cst_167 : f32 to vector<16x1xf32>
    %314 = arith.divf %312, %313 : vector<16x1xf32>
    %315 = vector.broadcast %314 : vector<16x1xf32> to vector<16x32xf32>
    %316 = arith.subf %306, %315 : vector<16x32xf32>
    %317 = arith.mulf %316, %316 : vector<16x32xf32>
    %cst_168 = arith.constant dense<0.000000e+00> : vector<16xf32>
    %318 = vector.multi_reduction <add>, %317, %cst_168 [1] : vector<16x32xf32> to vector<16xf32>
    %319 = vector.shape_cast %318 : vector<16xf32> to vector<16x1xf32>
    %cst_169 = arith.constant 3.200000e+01 : f32
    %320 = vector.broadcast %cst_169 : f32 to vector<16x1xf32>
    %321 = arith.divf %319, %320 : vector<16x1xf32>
    %322 = vector.broadcast %314 : vector<16x1xf32> to vector<16x32xf32>
    %323 = arith.subf %306, %322 : vector<16x32xf32>
    %cst_170 = arith.constant 9.99999974E-6 : f32
    %324 = vector.broadcast %cst_170 : f32 to vector<16x1xf32>
    %325 = arith.addf %321, %324 : vector<16x1xf32>
    %326 = math.rsqrt %325 : vector<16x1xf32>
    %327 = vector.broadcast %326 : vector<16x1xf32> to vector<16x32xf32>
    %328 = arith.mulf %323, %327 : vector<16x32xf32>
    %329 = vector.broadcast %308 : vector<1x32xf32> to vector<16x32xf32>
    %330 = arith.mulf %328, %329 : vector<16x32xf32>
    %331 = vector.broadcast %310 : vector<1x32xf32> to vector<16x32xf32>
    %332 = arith.addf %330, %331 : vector<16x32xf32>
    %c0_171 = arith.constant 0 : index
    %c0_172 = arith.constant 0 : index
    %c0_173 = arith.constant 0 : index
    %333 = vector.load %arg27[%c0_171, %c0_172, %c0_173] : memref<2x32x64xbf16, #tpu.memory_space<vmem>>, vector<1x32x64xbf16>
    %334 = vector.shape_cast %333 : vector<1x32x64xbf16> to vector<32x64xbf16>
    %c0_174 = arith.constant 0 : index
    %c0_175 = arith.constant 0 : index
    %c0_176 = arith.constant 0 : index
    %335 = vector.load %arg28[%c0_174, %c0_175, %c0_176] : memref<2x1x64xf32, #tpu.memory_space<vmem>>, vector<1x1x64xf32>
    %336 = vector.shape_cast %335 : vector<1x1x64xf32> to vector<1x64xf32>
    %337 = arith.truncf %332 : vector<16x32xf32> to vector<16x32xbf16>
    %cst_177 = arith.constant dense<0.000000e+00> : vector<16x64xf32>
    %338 = tpu.matmul %337, %334, %cst_177 {dimension_numbers = #tpu.dot_dimension_numbers<[1], [0], [0], [1], [0, 0, 1, 1], [], []>} : vector<16x32xbf16>, vector<32x64xbf16>, vector<16x64xf32> -> vector<16x64xf32>
    %339 = vector.broadcast %336 : vector<1x64xf32> to vector<16x64xf32>
    %340 = arith.addf %338, %339 : vector<16x64xf32>
    %cst_178 = arith.constant 0.000000e+00 : f32
    %341 = vector.broadcast %cst_178 : f32 to vector<16x64xf32>
    %342 = arith.maximumf %340, %341 : vector<16x64xf32>
    %c0_179 = arith.constant 0 : index
    %c0_180 = arith.constant 0 : index
    %c0_181 = arith.constant 0 : index
    %343 = vector.load %arg29[%c0_179, %c0_180, %c0_181] : memref<2x64x32xbf16, #tpu.memory_space<vmem>>, vector<1x64x32xbf16>
    %344 = vector.shape_cast %343 : vector<1x64x32xbf16> to vector<64x32xbf16>
    %c0_182 = arith.constant 0 : index
    %c0_183 = arith.constant 0 : index
    %c0_184 = arith.constant 0 : index
    %345 = vector.load %arg30[%c0_182, %c0_183, %c0_184] : memref<2x1x32xf32, #tpu.memory_space<vmem>>, vector<1x1x32xf32>
    %346 = vector.shape_cast %345 : vector<1x1x32xf32> to vector<1x32xf32>
    %347 = arith.truncf %342 : vector<16x64xf32> to vector<16x64xbf16>
    %cst_185 = arith.constant dense<0.000000e+00> : vector<16x32xf32>
    %348 = tpu.matmul %347, %344, %cst_185 {dimension_numbers = #tpu.dot_dimension_numbers<[1], [0], [0], [1], [0, 0, 1, 1], [], []>} : vector<16x64xbf16>, vector<64x32xbf16>, vector<16x32xf32> -> vector<16x32xf32>
    %349 = vector.broadcast %346 : vector<1x32xf32> to vector<16x32xf32>
    %350 = arith.addf %348, %349 : vector<16x32xf32>
    %351 = arith.addf %332, %350 : vector<16x32xf32>
    %c0_186 = arith.constant 0 : index
    %c2_187 = arith.constant 2 : index
    %c0_188 = arith.constant 0 : index
    %c0_189 = arith.constant 0 : index
    %352 = vector.load %arg31[%c0_186, %c2_187, %c0_188, %c0_189] : memref<2x3x1x32xf32, #tpu.memory_space<vmem>>, vector<1x1x1x32xf32>
    %353 = vector.shape_cast %352 : vector<1x1x1x32xf32> to vector<1x32xf32>
    %c0_190 = arith.constant 0 : index
    %c2_191 = arith.constant 2 : index
    %c0_192 = arith.constant 0 : index
    %c0_193 = arith.constant 0 : index
    %354 = vector.load %arg32[%c0_190, %c2_191, %c0_192, %c0_193] : memref<2x3x1x32xf32, #tpu.memory_space<vmem>>, vector<1x1x1x32xf32>
    %355 = vector.shape_cast %354 : vector<1x1x1x32xf32> to vector<1x32xf32>
    %cst_194 = arith.constant dense<0.000000e+00> : vector<16xf32>
    %356 = vector.multi_reduction <add>, %351, %cst_194 [1] : vector<16x32xf32> to vector<16xf32>
    %357 = vector.shape_cast %356 : vector<16xf32> to vector<16x1xf32>
    %cst_195 = arith.constant 3.200000e+01 : f32
    %358 = vector.broadcast %cst_195 : f32 to vector<16x1xf32>
    %359 = arith.divf %357, %358 : vector<16x1xf32>
    %360 = vector.broadcast %359 : vector<16x1xf32> to vector<16x32xf32>
    %361 = arith.subf %351, %360 : vector<16x32xf32>
    %362 = arith.mulf %361, %361 : vector<16x32xf32>
    %cst_196 = arith.constant dense<0.000000e+00> : vector<16xf32>
    %363 = vector.multi_reduction <add>, %362, %cst_196 [1] : vector<16x32xf32> to vector<16xf32>
    %364 = vector.shape_cast %363 : vector<16xf32> to vector<16x1xf32>
    %cst_197 = arith.constant 3.200000e+01 : f32
    %365 = vector.broadcast %cst_197 : f32 to vector<16x1xf32>
    %366 = arith.divf %364, %365 : vector<16x1xf32>
    %367 = vector.broadcast %359 : vector<16x1xf32> to vector<16x32xf32>
    %368 = arith.subf %351, %367 : vector<16x32xf32>
    %cst_198 = arith.constant 9.99999974E-6 : f32
    %369 = vector.broadcast %cst_198 : f32 to vector<16x1xf32>
    %370 = arith.addf %366, %369 : vector<16x1xf32>
    %371 = math.rsqrt %370 : vector<16x1xf32>
    %372 = vector.broadcast %371 : vector<16x1xf32> to vector<16x32xf32>
    %373 = arith.mulf %368, %372 : vector<16x32xf32>
    %374 = vector.broadcast %353 : vector<1x32xf32> to vector<16x32xf32>
    %375 = arith.mulf %373, %374 : vector<16x32xf32>
    %376 = vector.broadcast %355 : vector<1x32xf32> to vector<16x32xf32>
    %377 = arith.addf %375, %376 : vector<16x32xf32>
    %c0_199 = arith.constant 0 : index
    %c0_200 = arith.constant 0 : index
    %378 = vector.load %arg33[%c0_199, %c0_200] : memref<1x32xf32, #tpu.memory_space<vmem>>, vector<1x32xf32>
    %c0_201 = arith.constant 0 : index
    %c0_202 = arith.constant 0 : index
    %379 = vector.load %arg34[%c0_201, %c0_202] : memref<1x32xf32, #tpu.memory_space<vmem>>, vector<1x32xf32>
    %cst_203 = arith.constant dense<0.000000e+00> : vector<16xf32>
    %380 = vector.multi_reduction <add>, %377, %cst_203 [1] : vector<16x32xf32> to vector<16xf32>
    %381 = vector.shape_cast %380 : vector<16xf32> to vector<16x1xf32>
    %cst_204 = arith.constant 3.200000e+01 : f32
    %382 = vector.broadcast %cst_204 : f32 to vector<16x1xf32>
    %383 = arith.divf %381, %382 : vector<16x1xf32>
    %384 = vector.broadcast %383 : vector<16x1xf32> to vector<16x32xf32>
    %385 = arith.subf %377, %384 : vector<16x32xf32>
    %386 = arith.mulf %385, %385 : vector<16x32xf32>
    %cst_205 = arith.constant dense<0.000000e+00> : vector<16xf32>
    %387 = vector.multi_reduction <add>, %386, %cst_205 [1] : vector<16x32xf32> to vector<16xf32>
    %388 = vector.shape_cast %387 : vector<16xf32> to vector<16x1xf32>
    %cst_206 = arith.constant 3.200000e+01 : f32
    %389 = vector.broadcast %cst_206 : f32 to vector<16x1xf32>
    %390 = arith.divf %388, %389 : vector<16x1xf32>
    %391 = vector.broadcast %383 : vector<16x1xf32> to vector<16x32xf32>
    %392 = arith.subf %377, %391 : vector<16x32xf32>
    %cst_207 = arith.constant 9.99999974E-6 : f32
    %393 = vector.broadcast %cst_207 : f32 to vector<16x1xf32>
    %394 = arith.addf %390, %393 : vector<16x1xf32>
    %395 = math.rsqrt %394 : vector<16x1xf32>
    %396 = vector.broadcast %395 : vector<16x1xf32> to vector<16x32xf32>
    %397 = arith.mulf %392, %396 : vector<16x32xf32>
    %398 = vector.broadcast %378 : vector<1x32xf32> to vector<16x32xf32>
    %399 = arith.mulf %397, %398 : vector<16x32xf32>
    %400 = vector.broadcast %379 : vector<1x32xf32> to vector<16x32xf32>
    %401 = arith.addf %399, %400 : vector<16x32xf32>
    %c0_208 = arith.constant 0 : index
    %c0_209 = arith.constant 0 : index
    %c0_210 = arith.constant 0 : index
    %402 = vector.load %arg41[%c0_208, %c0_209, %c0_210] : memref<2x16x32xf32, #tpu.memory_space<vmem>>, vector<1x16x32xf32>
    %403 = vector.shape_cast %402 : vector<1x16x32xf32> to vector<16x32xf32>
    %404 = vector.shape_cast %401 : vector<16x32xf32> to vector<1x16x32xf32>
    tpu.vector_store %arg41[%c0_208, %c0_209, %c0_210], %404 {strides = array<i32>} : memref<2x16x32xf32, #tpu.memory_space<vmem>>, vector<1x16x32xf32>,
    %cst_211 = arith.constant 0.000000e+00 : f32
    %cst_212 = arith.constant 1.000000e+00 : f32
    %405 = vector.broadcast %cst_211 : f32 to vector<16x4xf32>
    %406 = arith.maximumf %405, %14 : vector<16x4xf32>
    %407 = vector.broadcast %cst_212 : f32 to vector<16x4xf32>
    %408 = arith.minimumf %407, %406 : vector<16x4xf32>
    %cst_213 = arith.constant 1.000000e-03 : f32
    %409 = vector.broadcast %cst_213 : f32 to vector<16x4xf32>
    %410 = arith.maximumf %408, %409 : vector<16x4xf32>
    %cst_214 = arith.constant 1.000000e+00 : f32
    %411 = vector.broadcast %cst_214 : f32 to vector<16x4xf32>
    %412 = arith.subf %411, %408 : vector<16x4xf32>
    %cst_215 = arith.constant 1.000000e-03 : f32
    %413 = vector.broadcast %cst_215 : f32 to vector<16x4xf32>
    %414 = arith.maximumf %412, %413 : vector<16x4xf32>
    %415 = arith.divf %410, %414 : vector<16x4xf32>
    %416 = math.log %415 : vector<16x4xf32>
    %c0_216 = arith.constant 0 : index
    %c0_217 = arith.constant 0 : index
    %c0_218 = arith.constant 0 : index
    %417 = vector.load %arg35[%c0_216, %c0_217, %c0_218] : memref<2x32x32xbf16, #tpu.memory_space<vmem>>, vector<1x32x32xbf16>
    %418 = vector.shape_cast %417 : vector<1x32x32xbf16> to vector<32x32xbf16>
    %c0_219 = arith.constant 0 : index
    %c0_220 = arith.constant 0 : index
    %c0_221 = arith.constant 0 : index
    %419 = vector.load %arg36[%c0_219, %c0_220, %c0_221] : memref<2x1x32xf32, #tpu.memory_space<vmem>>, vector<1x1x32xf32>
    %420 = vector.shape_cast %419 : vector<1x1x32xf32> to vector<1x32xf32>
    %421 = arith.truncf %377 : vector<16x32xf32> to vector<16x32xbf16>
    %cst_222 = arith.constant dense<0.000000e+00> : vector<16x32xf32>
    %422 = tpu.matmul %421, %418, %cst_222 {dimension_numbers = #tpu.dot_dimension_numbers<[1], [0], [0], [1], [0, 0, 1, 1], [], []>} : vector<16x32xbf16>, vector<32x32xbf16>, vector<16x32xf32> -> vector<16x32xf32>
    %423 = vector.broadcast %420 : vector<1x32xf32> to vector<16x32xf32>
    %424 = arith.addf %422, %423 : vector<16x32xf32>
    %cst_223 = arith.constant 0.000000e+00 : f32
    %425 = vector.broadcast %cst_223 : f32 to vector<16x32xf32>
    %426 = arith.maximumf %424, %425 : vector<16x32xf32>
    %c0_224 = arith.constant 0 : index
    %c0_225 = arith.constant 0 : index
    %c0_226 = arith.constant 0 : index
    %427 = vector.load %arg37[%c0_224, %c0_225, %c0_226] : memref<2x32x32xbf16, #tpu.memory_space<vmem>>, vector<1x32x32xbf16>
    %428 = vector.shape_cast %427 : vector<1x32x32xbf16> to vector<32x32xbf16>
    %c0_227 = arith.constant 0 : index
    %c0_228 = arith.constant 0 : index
    %c0_229 = arith.constant 0 : index
    %429 = vector.load %arg38[%c0_227, %c0_228, %c0_229] : memref<2x1x32xf32, #tpu.memory_space<vmem>>, vector<1x1x32xf32>
    %430 = vector.shape_cast %429 : vector<1x1x32xf32> to vector<1x32xf32>
    %431 = arith.truncf %426 : vector<16x32xf32> to vector<16x32xbf16>
    %cst_230 = arith.constant dense<0.000000e+00> : vector<16x32xf32>
    %432 = tpu.matmul %431, %428, %cst_230 {dimension_numbers = #tpu.dot_dimension_numbers<[1], [0], [0], [1], [0, 0, 1, 1], [], []>} : vector<16x32xbf16>, vector<32x32xbf16>, vector<16x32xf32> -> vector<16x32xf32>
    %433 = vector.broadcast %430 : vector<1x32xf32> to vector<16x32xf32>
    %434 = arith.addf %432, %433 : vector<16x32xf32>
    %cst_231 = arith.constant 0.000000e+00 : f32
    %435 = vector.broadcast %cst_231 : f32 to vector<16x32xf32>
    %436 = arith.maximumf %434, %435 : vector<16x32xf32>
    %c0_232 = arith.constant 0 : index
    %c0_233 = arith.constant 0 : index
    %c0_234 = arith.constant 0 : index
    %437 = vector.load %arg39[%c0_232, %c0_233, %c0_234] : memref<2x32x4xbf16, #tpu.memory_space<vmem>>, vector<1x32x4xbf16>
    %438 = vector.shape_cast %437 : vector<1x32x4xbf16> to vector<32x4xbf16>
    %c0_235 = arith.constant 0 : index
    %c0_236 = arith.constant 0 : index
    %c0_237 = arith.constant 0 : index
    %439 = vector.load %arg40[%c0_235, %c0_236, %c0_237] : memref<2x1x4xf32, #tpu.memory_space<vmem>>, vector<1x1x4xf32>
    %440 = vector.shape_cast %439 : vector<1x1x4xf32> to vector<1x4xf32>
    %441 = arith.truncf %436 : vector<16x32xf32> to vector<16x32xbf16>
    %cst_238 = arith.constant dense<0.000000e+00> : vector<16x4xf32>
    %442 = tpu.matmul %441, %438, %cst_238 {dimension_numbers = #tpu.dot_dimension_numbers<[1], [0], [0], [1], [0, 0, 1, 1], [], []>} : vector<16x32xbf16>, vector<32x4xbf16>, vector<16x4xf32> -> vector<16x4xf32>
    %443 = vector.broadcast %440 : vector<1x4xf32> to vector<16x4xf32>
    %444 = arith.addf %442, %443 : vector<16x4xf32>
    %445 = arith.addf %444, %416 : vector<16x4xf32>
    %446 = arith.negf %445 : vector<16x4xf32>
    %447 = math.exp %446 : vector<16x4xf32>
    %cst_239 = arith.constant 1.000000e+00 : f32
    %448 = vector.broadcast %cst_239 : f32 to vector<16x4xf32>
    %449 = arith.addf %448, %447 : vector<16x4xf32>
    %450 = arith.divf %448, %449 : vector<16x4xf32>
    %451 = arith.mulf %450, %4 : vector<16x4xf32>
    %cst_240 = arith.constant dense<0.000000e+00> : vector<16x64xf32>
    %452 = tpu.matmul %451, %7, %cst_240 {dimension_numbers = #tpu.dot_dimension_numbers<[1], [0], [0], [1], [0, 0, 1, 1], [], []>} : vector<16x4xf32>, vector<4x64xf32>, vector<16x64xf32> -> vector<16x64xf32>
    %453 = vector.broadcast %8 : vector<1x64xf32> to vector<16x64xf32>
    %454 = arith.addf %452, %453 : vector<16x64xf32>
    %455 = math.sin %454 : vector<16x64xf32>
    %c0_241 = arith.constant 0 : index
    %c0_242 = arith.constant 0 : index
    %456 = vector.load %arg9[%c0_241, %c0_242] : memref<64x32xbf16, #tpu.memory_space<vmem>>, vector<64x32xbf16>
    %c0_243 = arith.constant 0 : index
    %c0_244 = arith.constant 0 : index
    %457 = vector.load %arg10[%c0_243, %c0_244] : memref<1x32xf32, #tpu.memory_space<vmem>>, vector<1x32xf32>
    %458 = arith.truncf %455 : vector<16x64xf32> to vector<16x64xbf16>
    %cst_245 = arith.constant dense<0.000000e+00> : vector<16x32xf32>
    %459 = tpu.matmul %458, %456, %cst_245 {dimension_numbers = #tpu.dot_dimension_numbers<[1], [0], [0], [1], [0, 0, 1, 1], [], []>} : vector<16x64xbf16>, vector<64x32xbf16>, vector<16x32xf32> -> vector<16x32xf32>
    %460 = vector.broadcast %457 : vector<1x32xf32> to vector<16x32xf32>
    %461 = arith.addf %459, %460 : vector<16x32xf32>
    %cst_246 = arith.constant 0.000000e+00 : f32
    %462 = vector.broadcast %cst_246 : f32 to vector<16x32xf32>
    %463 = arith.maximumf %461, %462 : vector<16x32xf32>
    %c0_247 = arith.constant 0 : index
    %c0_248 = arith.constant 0 : index
    %464 = vector.load %arg11[%c0_247, %c0_248] : memref<32x32xbf16, #tpu.memory_space<vmem>>, vector<32x32xbf16>
    %c0_249 = arith.constant 0 : index
    %c0_250 = arith.constant 0 : index
    %465 = vector.load %arg12[%c0_249, %c0_250] : memref<1x32xf32, #tpu.memory_space<vmem>>, vector<1x32xf32>
    %466 = arith.truncf %463 : vector<16x32xf32> to vector<16x32xbf16>
    %cst_251 = arith.constant dense<0.000000e+00> : vector<16x32xf32>
    %467 = tpu.matmul %466, %464, %cst_251 {dimension_numbers = #tpu.dot_dimension_numbers<[1], [0], [0], [1], [0, 0, 1, 1], [], []>} : vector<16x32xbf16>, vector<32x32xbf16>, vector<16x32xf32> -> vector<16x32xf32>
    %468 = vector.broadcast %465 : vector<1x32xf32> to vector<16x32xf32>
    %469 = arith.addf %467, %468 : vector<16x32xf32>
    %470 = arith.addf %377, %469 : vector<16x32xf32>
    %c1_252 = arith.constant 1 : index
    %c0_253 = arith.constant 0 : index
    %c0_254 = arith.constant 0 : index
    %471 = vector.load %arg13[%c1_252, %c0_253, %c0_254] : memref<2x32x64xbf16, #tpu.memory_space<vmem>>, vector<1x32x64xbf16>
    %472 = vector.shape_cast %471 : vector<1x32x64xbf16> to vector<32x64xbf16>
    %c1_255 = arith.constant 1 : index
    %c0_256 = arith.constant 0 : index
    %c0_257 = arith.constant 0 : index
    %473 = vector.load %arg14[%c1_255, %c0_256, %c0_257] : memref<2x1x64xf32, #tpu.memory_space<vmem>>, vector<1x1x64xf32>
    %474 = vector.shape_cast %473 : vector<1x1x64xf32> to vector<1x64xf32>
    %475 = arith.truncf %470 : vector<16x32xf32> to vector<16x32xbf16>
    %cst_258 = arith.constant dense<0.000000e+00> : vector<16x64xf32>
    %476 = tpu.matmul %475, %472, %cst_258 {dimension_numbers = #tpu.dot_dimension_numbers<[1], [0], [0], [1], [0, 0, 1, 1], [], []>} : vector<16x32xbf16>, vector<32x64xbf16>, vector<16x64xf32> -> vector<16x64xf32>
    %477 = vector.broadcast %474 : vector<1x64xf32> to vector<16x64xf32>
    %478 = arith.addf %476, %477 : vector<16x64xf32>
    %479 = arith.truncf %478 : vector<16x64xf32> to vector<16x64xbf16>
    %c1_259 = arith.constant 1 : index
    %c0_260 = arith.constant 0 : index
    %c0_261 = arith.constant 0 : index
    %480 = vector.load %arg15[%c1_259, %c0_260, %c0_261] : memref<2x32x32xbf16, #tpu.memory_space<vmem>>, vector<1x32x32xbf16>
    %481 = vector.shape_cast %480 : vector<1x32x32xbf16> to vector<32x32xbf16>
    %c1_262 = arith.constant 1 : index
    %c0_263 = arith.constant 0 : index
    %c0_264 = arith.constant 0 : index
    %482 = vector.load %arg16[%c1_262, %c0_263, %c0_264] : memref<2x1x32xf32, #tpu.memory_space<vmem>>, vector<1x1x32xf32>
    %483 = vector.shape_cast %482 : vector<1x1x32xf32> to vector<1x32xf32>
    %484 = arith.truncf %377 : vector<16x32xf32> to vector<16x32xbf16>
    %cst_265 = arith.constant dense<0.000000e+00> : vector<16x32xf32>
    %485 = tpu.matmul %484, %481, %cst_265 {dimension_numbers = #tpu.dot_dimension_numbers<[1], [0], [0], [1], [0, 0, 1, 1], [], []>} : vector<16x32xbf16>, vector<32x32xbf16>, vector<16x32xf32> -> vector<16x32xf32>
    %486 = vector.broadcast %483 : vector<1x32xf32> to vector<16x32xf32>
    %487 = arith.addf %485, %486 : vector<16x32xf32>
    %488 = arith.truncf %487 : vector<16x32xf32> to vector<16x32xbf16>
    %c1_266 = arith.constant 1 : index
    %c0_267 = arith.constant 0 : index
    %c0_268 = arith.constant 0 : index
    %489 = vector.load %arg18[%c1_266, %c0_267, %c0_268] : memref<2x1x32xf32, #tpu.memory_space<vmem>>, vector<1x1x32xf32>
    %490 = vector.shape_cast %489 : vector<1x1x32xf32> to vector<1x32xf32>
    %cst_269 = arith.constant 0.000000e+00 : f32
    %491 = vector.broadcast %cst_269 : f32 to vector<16x32xf32>
    %492 = vector.extract_strided_slice %479 {offsets = [0, 0], sizes = [16, 8], strides = [1, 1]} : vector<16x64xbf16> to vector<16x8xbf16>
    %493 = vector.extract_strided_slice %479 {offsets = [0, 32], sizes = [16, 8], strides = [1, 1]} : vector<16x64xbf16> to vector<16x8xbf16>
    %494 = vector.extract_strided_slice %488 {offsets = [0, 0], sizes = [16, 8], strides = [1, 1]} : vector<16x32xbf16> to vector<16x8xbf16>
    %cst_270 = arith.constant dense<0.000000e+00> : vector<16x16xf32>
    %495 = tpu.matmul %492, %493, %cst_270 {dimension_numbers = #tpu.dot_dimension_numbers<[1], [1], [0], [0], [0, 0, 1, 0], [], []>} : vector<16x8xbf16>, vector<16x8xbf16>, vector<16x16xf32> -> vector<16x16xf32>
    %cst_271 = arith.constant 0.353553385 : f32
    %496 = vector.broadcast %cst_271 : f32 to vector<16x16xf32>
    %497 = arith.mulf %495, %496 : vector<16x16xf32>
    %498 = arith.addf %497, %5 : vector<16x16xf32>
    %cst_272 = arith.constant dense<0xFF800000> : vector<16xf32>
    %499 = vector.multi_reduction <maximumf>, %498, %cst_272 [1] : vector<16x16xf32> to vector<16xf32>
    %500 = vector.shape_cast %499 : vector<16xf32> to vector<16x1xf32>
    %501 = vector.broadcast %500 : vector<16x1xf32> to vector<16x16xf32>
    %502 = arith.subf %498, %501 : vector<16x16xf32>
    %503 = math.exp %502 : vector<16x16xf32>
    %cst_273 = arith.constant dense<0.000000e+00> : vector<16xf32>
    %504 = vector.multi_reduction <add>, %503, %cst_273 [1] : vector<16x16xf32> to vector<16xf32>
    %505 = vector.shape_cast %504 : vector<16xf32> to vector<16x1xf32>
    %506 = tpu.reciprocal %505 {approx = true} : vector<16x1xf32> -> vector<16x1xf32>
    %507 = vector.broadcast %506 : vector<16x1xf32> to vector<16x16xf32>
    %508 = arith.mulf %503, %507 : vector<16x16xf32>
    %509 = arith.truncf %508 : vector<16x16xf32> to vector<16x16xbf16>
    %cst_274 = arith.constant dense<0.000000e+00> : vector<16x8xf32>
    %510 = tpu.matmul %509, %494, %cst_274 {dimension_numbers = #tpu.dot_dimension_numbers<[1], [0], [0], [1], [0, 0, 1, 1], [], []>} : vector<16x16xbf16>, vector<16x8xbf16>, vector<16x8xf32> -> vector<16x8xf32>
    %511 = arith.truncf %510 : vector<16x8xf32> to vector<16x8xbf16>
    %c1_275 = arith.constant 1 : index
    %c0_276 = arith.constant 0 : index
    %c0_277 = arith.constant 0 : index
    %c0_278 = arith.constant 0 : index
    %512 = vector.load %arg17[%c1_275, %c0_276, %c0_277, %c0_278] : memref<2x4x8x32xbf16, #tpu.memory_space<vmem>>, vector<1x1x8x32xbf16>
    %513 = vector.shape_cast %512 : vector<1x1x8x32xbf16> to vector<8x32xbf16>
    %cst_279 = arith.constant dense<0.000000e+00> : vector<16x32xf32>
    %514 = tpu.matmul %511, %513, %cst_279 {dimension_numbers = #tpu.dot_dimension_numbers<[1], [0], [0], [1], [0, 0, 1, 1], [], []>} : vector<16x8xbf16>, vector<8x32xbf16>, vector<16x32xf32> -> vector<16x32xf32>
    %515 = arith.addf %491, %514 : vector<16x32xf32>
    %516 = vector.extract_strided_slice %479 {offsets = [0, 8], sizes = [16, 8], strides = [1, 1]} : vector<16x64xbf16> to vector<16x8xbf16>
    %517 = vector.extract_strided_slice %479 {offsets = [0, 40], sizes = [16, 8], strides = [1, 1]} : vector<16x64xbf16> to vector<16x8xbf16>
    %518 = vector.extract_strided_slice %488 {offsets = [0, 8], sizes = [16, 8], strides = [1, 1]} : vector<16x32xbf16> to vector<16x8xbf16>
    %cst_280 = arith.constant dense<0.000000e+00> : vector<16x16xf32>
    %519 = tpu.matmul %516, %517, %cst_280 {dimension_numbers = #tpu.dot_dimension_numbers<[1], [1], [0], [0], [0, 0, 1, 0], [], []>} : vector<16x8xbf16>, vector<16x8xbf16>, vector<16x16xf32> -> vector<16x16xf32>
    %cst_281 = arith.constant 0.353553385 : f32
    %520 = vector.broadcast %cst_281 : f32 to vector<16x16xf32>
    %521 = arith.mulf %519, %520 : vector<16x16xf32>
    %522 = arith.addf %521, %5 : vector<16x16xf32>
    %cst_282 = arith.constant dense<0xFF800000> : vector<16xf32>
    %523 = vector.multi_reduction <maximumf>, %522, %cst_282 [1] : vector<16x16xf32> to vector<16xf32>
    %524 = vector.shape_cast %523 : vector<16xf32> to vector<16x1xf32>
    %525 = vector.broadcast %524 : vector<16x1xf32> to vector<16x16xf32>
    %526 = arith.subf %522, %525 : vector<16x16xf32>
    %527 = math.exp %526 : vector<16x16xf32>
    %cst_283 = arith.constant dense<0.000000e+00> : vector<16xf32>
    %528 = vector.multi_reduction <add>, %527, %cst_283 [1] : vector<16x16xf32> to vector<16xf32>
    %529 = vector.shape_cast %528 : vector<16xf32> to vector<16x1xf32>
    %530 = tpu.reciprocal %529 {approx = true} : vector<16x1xf32> -> vector<16x1xf32>
    %531 = vector.broadcast %530 : vector<16x1xf32> to vector<16x16xf32>
    %532 = arith.mulf %527, %531 : vector<16x16xf32>
    %533 = arith.truncf %532 : vector<16x16xf32> to vector<16x16xbf16>
    %cst_284 = arith.constant dense<0.000000e+00> : vector<16x8xf32>
    %534 = tpu.matmul %533, %518, %cst_284 {dimension_numbers = #tpu.dot_dimension_numbers<[1], [0], [0], [1], [0, 0, 1, 1], [], []>} : vector<16x16xbf16>, vector<16x8xbf16>, vector<16x8xf32> -> vector<16x8xf32>
    %535 = arith.truncf %534 : vector<16x8xf32> to vector<16x8xbf16>
    %c1_285 = arith.constant 1 : index
    %c1_286 = arith.constant 1 : index
    %c0_287 = arith.constant 0 : index
    %c0_288 = arith.constant 0 : index
    %536 = vector.load %arg17[%c1_285, %c1_286, %c0_287, %c0_288] : memref<2x4x8x32xbf16, #tpu.memory_space<vmem>>, vector<1x1x8x32xbf16>
    %537 = vector.shape_cast %536 : vector<1x1x8x32xbf16> to vector<8x32xbf16>
    %cst_289 = arith.constant dense<0.000000e+00> : vector<16x32xf32>
    %538 = tpu.matmul %535, %537, %cst_289 {dimension_numbers = #tpu.dot_dimension_numbers<[1], [0], [0], [1], [0, 0, 1, 1], [], []>} : vector<16x8xbf16>, vector<8x32xbf16>, vector<16x32xf32> -> vector<16x32xf32>
    %539 = arith.addf %515, %538 : vector<16x32xf32>
    %540 = vector.extract_strided_slice %479 {offsets = [0, 16], sizes = [16, 8], strides = [1, 1]} : vector<16x64xbf16> to vector<16x8xbf16>
    %541 = vector.extract_strided_slice %479 {offsets = [0, 48], sizes = [16, 8], strides = [1, 1]} : vector<16x64xbf16> to vector<16x8xbf16>
    %542 = vector.extract_strided_slice %488 {offsets = [0, 16], sizes = [16, 8], strides = [1, 1]} : vector<16x32xbf16> to vector<16x8xbf16>
    %cst_290 = arith.constant dense<0.000000e+00> : vector<16x16xf32>
    %543 = tpu.matmul %540, %541, %cst_290 {dimension_numbers = #tpu.dot_dimension_numbers<[1], [1], [0], [0], [0, 0, 1, 0], [], []>} : vector<16x8xbf16>, vector<16x8xbf16>, vector<16x16xf32> -> vector<16x16xf32>
    %cst_291 = arith.constant 0.353553385 : f32
    %544 = vector.broadcast %cst_291 : f32 to vector<16x16xf32>
    %545 = arith.mulf %543, %544 : vector<16x16xf32>
    %546 = arith.addf %545, %5 : vector<16x16xf32>
    %cst_292 = arith.constant dense<0xFF800000> : vector<16xf32>
    %547 = vector.multi_reduction <maximumf>, %546, %cst_292 [1] : vector<16x16xf32> to vector<16xf32>
    %548 = vector.shape_cast %547 : vector<16xf32> to vector<16x1xf32>
    %549 = vector.broadcast %548 : vector<16x1xf32> to vector<16x16xf32>
    %550 = arith.subf %546, %549 : vector<16x16xf32>
    %551 = math.exp %550 : vector<16x16xf32>
    %cst_293 = arith.constant dense<0.000000e+00> : vector<16xf32>
    %552 = vector.multi_reduction <add>, %551, %cst_293 [1] : vector<16x16xf32> to vector<16xf32>
    %553 = vector.shape_cast %552 : vector<16xf32> to vector<16x1xf32>
    %554 = tpu.reciprocal %553 {approx = true} : vector<16x1xf32> -> vector<16x1xf32>
    %555 = vector.broadcast %554 : vector<16x1xf32> to vector<16x16xf32>
    %556 = arith.mulf %551, %555 : vector<16x16xf32>
    %557 = arith.truncf %556 : vector<16x16xf32> to vector<16x16xbf16>
    %cst_294 = arith.constant dense<0.000000e+00> : vector<16x8xf32>
    %558 = tpu.matmul %557, %542, %cst_294 {dimension_numbers = #tpu.dot_dimension_numbers<[1], [0], [0], [1], [0, 0, 1, 1], [], []>} : vector<16x16xbf16>, vector<16x8xbf16>, vector<16x8xf32> -> vector<16x8xf32>
    %559 = arith.truncf %558 : vector<16x8xf32> to vector<16x8xbf16>
    %c1_295 = arith.constant 1 : index
    %c2_296 = arith.constant 2 : index
    %c0_297 = arith.constant 0 : index
    %c0_298 = arith.constant 0 : index
    %560 = vector.load %arg17[%c1_295, %c2_296, %c0_297, %c0_298] : memref<2x4x8x32xbf16, #tpu.memory_space<vmem>>, vector<1x1x8x32xbf16>
    %561 = vector.shape_cast %560 : vector<1x1x8x32xbf16> to vector<8x32xbf16>
    %cst_299 = arith.constant dense<0.000000e+00> : vector<16x32xf32>
    %562 = tpu.matmul %559, %561, %cst_299 {dimension_numbers = #tpu.dot_dimension_numbers<[1], [0], [0], [1], [0, 0, 1, 1], [], []>} : vector<16x8xbf16>, vector<8x32xbf16>, vector<16x32xf32> -> vector<16x32xf32>
    %563 = arith.addf %539, %562 : vector<16x32xf32>
    %564 = vector.extract_strided_slice %479 {offsets = [0, 24], sizes = [16, 8], strides = [1, 1]} : vector<16x64xbf16> to vector<16x8xbf16>
    %565 = vector.extract_strided_slice %479 {offsets = [0, 56], sizes = [16, 8], strides = [1, 1]} : vector<16x64xbf16> to vector<16x8xbf16>
    %566 = vector.extract_strided_slice %488 {offsets = [0, 24], sizes = [16, 8], strides = [1, 1]} : vector<16x32xbf16> to vector<16x8xbf16>
    %cst_300 = arith.constant dense<0.000000e+00> : vector<16x16xf32>
    %567 = tpu.matmul %564, %565, %cst_300 {dimension_numbers = #tpu.dot_dimension_numbers<[1], [1], [0], [0], [0, 0, 1, 0], [], []>} : vector<16x8xbf16>, vector<16x8xbf16>, vector<16x16xf32> -> vector<16x16xf32>
    %cst_301 = arith.constant 0.353553385 : f32
    %568 = vector.broadcast %cst_301 : f32 to vector<16x16xf32>
    %569 = arith.mulf %567, %568 : vector<16x16xf32>
    %570 = arith.addf %569, %5 : vector<16x16xf32>
    %cst_302 = arith.constant dense<0xFF800000> : vector<16xf32>
    %571 = vector.multi_reduction <maximumf>, %570, %cst_302 [1] : vector<16x16xf32> to vector<16xf32>
    %572 = vector.shape_cast %571 : vector<16xf32> to vector<16x1xf32>
    %573 = vector.broadcast %572 : vector<16x1xf32> to vector<16x16xf32>
    %574 = arith.subf %570, %573 : vector<16x16xf32>
    %575 = math.exp %574 : vector<16x16xf32>
    %cst_303 = arith.constant dense<0.000000e+00> : vector<16xf32>
    %576 = vector.multi_reduction <add>, %575, %cst_303 [1] : vector<16x16xf32> to vector<16xf32>
    %577 = vector.shape_cast %576 : vector<16xf32> to vector<16x1xf32>
    %578 = tpu.reciprocal %577 {approx = true} : vector<16x1xf32> -> vector<16x1xf32>
    %579 = vector.broadcast %578 : vector<16x1xf32> to vector<16x16xf32>
    %580 = arith.mulf %575, %579 : vector<16x16xf32>
    %581 = arith.truncf %580 : vector<16x16xf32> to vector<16x16xbf16>
    %cst_304 = arith.constant dense<0.000000e+00> : vector<16x8xf32>
    %582 = tpu.matmul %581, %566, %cst_304 {dimension_numbers = #tpu.dot_dimension_numbers<[1], [0], [0], [1], [0, 0, 1, 1], [], []>} : vector<16x16xbf16>, vector<16x8xbf16>, vector<16x8xf32> -> vector<16x8xf32>
    %583 = arith.truncf %582 : vector<16x8xf32> to vector<16x8xbf16>
    %c1_305 = arith.constant 1 : index
    %c3_306 = arith.constant 3 : index
    %c0_307 = arith.constant 0 : index
    %c0_308 = arith.constant 0 : index
    %584 = vector.load %arg17[%c1_305, %c3_306, %c0_307, %c0_308] : memref<2x4x8x32xbf16, #tpu.memory_space<vmem>>, vector<1x1x8x32xbf16>
    %585 = vector.shape_cast %584 : vector<1x1x8x32xbf16> to vector<8x32xbf16>
    %cst_309 = arith.constant dense<0.000000e+00> : vector<16x32xf32>
    %586 = tpu.matmul %583, %585, %cst_309 {dimension_numbers = #tpu.dot_dimension_numbers<[1], [0], [0], [1], [0, 0, 1, 1], [], []>} : vector<16x8xbf16>, vector<8x32xbf16>, vector<16x32xf32> -> vector<16x32xf32>
    %587 = arith.addf %563, %586 : vector<16x32xf32>
    %588 = vector.broadcast %490 : vector<1x32xf32> to vector<16x32xf32>
    %589 = arith.addf %587, %588 : vector<16x32xf32>
    %590 = arith.addf %377, %589 : vector<16x32xf32>
    %c1_310 = arith.constant 1 : index
    %c0_311 = arith.constant 0 : index
    %c0_312 = arith.constant 0 : index
    %c0_313 = arith.constant 0 : index
    %591 = vector.load %arg31[%c1_310, %c0_311, %c0_312, %c0_313] : memref<2x3x1x32xf32, #tpu.memory_space<vmem>>, vector<1x1x1x32xf32>
    %592 = vector.shape_cast %591 : vector<1x1x1x32xf32> to vector<1x32xf32>
    %c1_314 = arith.constant 1 : index
    %c0_315 = arith.constant 0 : index
    %c0_316 = arith.constant 0 : index
    %c0_317 = arith.constant 0 : index
    %593 = vector.load %arg32[%c1_314, %c0_315, %c0_316, %c0_317] : memref<2x3x1x32xf32, #tpu.memory_space<vmem>>, vector<1x1x1x32xf32>
    %594 = vector.shape_cast %593 : vector<1x1x1x32xf32> to vector<1x32xf32>
    %cst_318 = arith.constant dense<0.000000e+00> : vector<16xf32>
    %595 = vector.multi_reduction <add>, %590, %cst_318 [1] : vector<16x32xf32> to vector<16xf32>
    %596 = vector.shape_cast %595 : vector<16xf32> to vector<16x1xf32>
    %cst_319 = arith.constant 3.200000e+01 : f32
    %597 = vector.broadcast %cst_319 : f32 to vector<16x1xf32>
    %598 = arith.divf %596, %597 : vector<16x1xf32>
    %599 = vector.broadcast %598 : vector<16x1xf32> to vector<16x32xf32>
    %600 = arith.subf %590, %599 : vector<16x32xf32>
    %601 = arith.mulf %600, %600 : vector<16x32xf32>
    %cst_320 = arith.constant dense<0.000000e+00> : vector<16xf32>
    %602 = vector.multi_reduction <add>, %601, %cst_320 [1] : vector<16x32xf32> to vector<16xf32>
    %603 = vector.shape_cast %602 : vector<16xf32> to vector<16x1xf32>
    %cst_321 = arith.constant 3.200000e+01 : f32
    %604 = vector.broadcast %cst_321 : f32 to vector<16x1xf32>
    %605 = arith.divf %603, %604 : vector<16x1xf32>
    %606 = vector.broadcast %598 : vector<16x1xf32> to vector<16x32xf32>
    %607 = arith.subf %590, %606 : vector<16x32xf32>
    %cst_322 = arith.constant 9.99999974E-6 : f32
    %608 = vector.broadcast %cst_322 : f32 to vector<16x1xf32>
    %609 = arith.addf %605, %608 : vector<16x1xf32>
    %610 = math.rsqrt %609 : vector<16x1xf32>
    %611 = vector.broadcast %610 : vector<16x1xf32> to vector<16x32xf32>
    %612 = arith.mulf %607, %611 : vector<16x32xf32>
    %613 = vector.broadcast %592 : vector<1x32xf32> to vector<16x32xf32>
    %614 = arith.mulf %612, %613 : vector<16x32xf32>
    %615 = vector.broadcast %594 : vector<1x32xf32> to vector<16x32xf32>
    %616 = arith.addf %614, %615 : vector<16x32xf32>
    %617 = arith.addf %616, %469 : vector<16x32xf32>
    %c1_323 = arith.constant 1 : index
    %c0_324 = arith.constant 0 : index
    %c0_325 = arith.constant 0 : index
    %618 = vector.load %arg19[%c1_323, %c0_324, %c0_325] : memref<2x32x32xbf16, #tpu.memory_space<vmem>>, vector<1x32x32xbf16>
    %619 = vector.shape_cast %618 : vector<1x32x32xbf16> to vector<32x32xbf16>
    %c1_326 = arith.constant 1 : index
    %c0_327 = arith.constant 0 : index
    %c0_328 = arith.constant 0 : index
    %620 = vector.load %arg20[%c1_326, %c0_327, %c0_328] : memref<2x1x32xf32, #tpu.memory_space<vmem>>, vector<1x1x32xf32>
    %621 = vector.shape_cast %620 : vector<1x1x32xf32> to vector<1x32xf32>
    %622 = arith.truncf %617 : vector<16x32xf32> to vector<16x32xbf16>
    %cst_329 = arith.constant dense<0.000000e+00> : vector<16x32xf32>
    %623 = tpu.matmul %622, %619, %cst_329 {dimension_numbers = #tpu.dot_dimension_numbers<[1], [0], [0], [1], [0, 0, 1, 1], [], []>} : vector<16x32xbf16>, vector<32x32xbf16>, vector<16x32xf32> -> vector<16x32xf32>
    %624 = vector.broadcast %621 : vector<1x32xf32> to vector<16x32xf32>
    %625 = arith.addf %623, %624 : vector<16x32xf32>
    %626 = arith.truncf %625 : vector<16x32xf32> to vector<16x32xbf16>
    %c1_330 = arith.constant 1 : index
    %c0_331 = arith.constant 0 : index
    %c0_332 = arith.constant 0 : index
    %627 = vector.load %arg26[%c1_330, %c0_331, %c0_332] : memref<2x1x32xf32, #tpu.memory_space<vmem>>, vector<1x1x32xf32>
    %628 = vector.shape_cast %627 : vector<1x1x32xf32> to vector<1x32xf32>
    %cst_333 = arith.constant 0.000000e+00 : f32
    %629 = vector.broadcast %cst_333 : f32 to vector<16x32xf32>
    %630 = vector.extract_strided_slice %626 {offsets = [0, 0], sizes = [16, 8], strides = [1, 1]} : vector<16x32xbf16> to vector<16x8xbf16>
    %631 = vector.extract_strided_slice %21 {offsets = [0, 32], sizes = [32, 8], strides = [1, 1]} : vector<32x64xbf16> to vector<32x8xbf16>
    %632 = vector.extract_strided_slice %28 {offsets = [0, 32], sizes = [32, 8], strides = [1, 1]} : vector<32x64xbf16> to vector<32x8xbf16>
    %cst_334 = arith.constant dense<0.000000e+00> : vector<16x32xf32>
    %633 = tpu.matmul %630, %631, %cst_334 {dimension_numbers = #tpu.dot_dimension_numbers<[1], [1], [0], [0], [0, 0, 1, 0], [], []>} : vector<16x8xbf16>, vector<32x8xbf16>, vector<16x32xf32> -> vector<16x32xf32>
    %cst_335 = arith.constant 0.353553385 : f32
    %634 = vector.broadcast %cst_335 : f32 to vector<16x32xf32>
    %635 = arith.mulf %633, %634 : vector<16x32xf32>
    %636 = arith.addf %635, %6 : vector<16x32xf32>
    %cst_336 = arith.constant dense<0xFF800000> : vector<16xf32>
    %637 = vector.multi_reduction <maximumf>, %636, %cst_336 [1] : vector<16x32xf32> to vector<16xf32>
    %638 = vector.shape_cast %637 : vector<16xf32> to vector<16x1xf32>
    %639 = vector.broadcast %638 : vector<16x1xf32> to vector<16x32xf32>
    %640 = arith.subf %636, %639 : vector<16x32xf32>
    %641 = math.exp %640 : vector<16x32xf32>
    %cst_337 = arith.constant dense<0.000000e+00> : vector<16xf32>
    %642 = vector.multi_reduction <add>, %641, %cst_337 [1] : vector<16x32xf32> to vector<16xf32>
    %643 = vector.shape_cast %642 : vector<16xf32> to vector<16x1xf32>
    %644 = tpu.reciprocal %643 {approx = true} : vector<16x1xf32> -> vector<16x1xf32>
    %645 = vector.broadcast %644 : vector<16x1xf32> to vector<16x32xf32>
    %646 = arith.mulf %641, %645 : vector<16x32xf32>
    %647 = arith.truncf %646 : vector<16x32xf32> to vector<16x32xbf16>
    %cst_338 = arith.constant dense<0.000000e+00> : vector<16x8xf32>
    %648 = tpu.matmul %647, %632, %cst_338 {dimension_numbers = #tpu.dot_dimension_numbers<[1], [0], [0], [1], [0, 0, 1, 1], [], []>} : vector<16x32xbf16>, vector<32x8xbf16>, vector<16x8xf32> -> vector<16x8xf32>
    %649 = arith.truncf %648 : vector<16x8xf32> to vector<16x8xbf16>
    %c1_339 = arith.constant 1 : index
    %c0_340 = arith.constant 0 : index
    %c0_341 = arith.constant 0 : index
    %c0_342 = arith.constant 0 : index
    %650 = vector.load %arg25[%c1_339, %c0_340, %c0_341, %c0_342] : memref<2x4x8x32xbf16, #tpu.memory_space<vmem>>, vector<1x1x8x32xbf16>
    %651 = vector.shape_cast %650 : vector<1x1x8x32xbf16> to vector<8x32xbf16>
    %cst_343 = arith.constant dense<0.000000e+00> : vector<16x32xf32>
    %652 = tpu.matmul %649, %651, %cst_343 {dimension_numbers = #tpu.dot_dimension_numbers<[1], [0], [0], [1], [0, 0, 1, 1], [], []>} : vector<16x8xbf16>, vector<8x32xbf16>, vector<16x32xf32> -> vector<16x32xf32>
    %653 = arith.addf %629, %652 : vector<16x32xf32>
    %654 = vector.extract_strided_slice %626 {offsets = [0, 8], sizes = [16, 8], strides = [1, 1]} : vector<16x32xbf16> to vector<16x8xbf16>
    %655 = vector.extract_strided_slice %21 {offsets = [0, 40], sizes = [32, 8], strides = [1, 1]} : vector<32x64xbf16> to vector<32x8xbf16>
    %656 = vector.extract_strided_slice %28 {offsets = [0, 40], sizes = [32, 8], strides = [1, 1]} : vector<32x64xbf16> to vector<32x8xbf16>
    %cst_344 = arith.constant dense<0.000000e+00> : vector<16x32xf32>
    %657 = tpu.matmul %654, %655, %cst_344 {dimension_numbers = #tpu.dot_dimension_numbers<[1], [1], [0], [0], [0, 0, 1, 0], [], []>} : vector<16x8xbf16>, vector<32x8xbf16>, vector<16x32xf32> -> vector<16x32xf32>
    %cst_345 = arith.constant 0.353553385 : f32
    %658 = vector.broadcast %cst_345 : f32 to vector<16x32xf32>
    %659 = arith.mulf %657, %658 : vector<16x32xf32>
    %660 = arith.addf %659, %6 : vector<16x32xf32>
    %cst_346 = arith.constant dense<0xFF800000> : vector<16xf32>
    %661 = vector.multi_reduction <maximumf>, %660, %cst_346 [1] : vector<16x32xf32> to vector<16xf32>
    %662 = vector.shape_cast %661 : vector<16xf32> to vector<16x1xf32>
    %663 = vector.broadcast %662 : vector<16x1xf32> to vector<16x32xf32>
    %664 = arith.subf %660, %663 : vector<16x32xf32>
    %665 = math.exp %664 : vector<16x32xf32>
    %cst_347 = arith.constant dense<0.000000e+00> : vector<16xf32>
    %666 = vector.multi_reduction <add>, %665, %cst_347 [1] : vector<16x32xf32> to vector<16xf32>
    %667 = vector.shape_cast %666 : vector<16xf32> to vector<16x1xf32>
    %668 = tpu.reciprocal %667 {approx = true} : vector<16x1xf32> -> vector<16x1xf32>
    %669 = vector.broadcast %668 : vector<16x1xf32> to vector<16x32xf32>
    %670 = arith.mulf %665, %669 : vector<16x32xf32>
    %671 = arith.truncf %670 : vector<16x32xf32> to vector<16x32xbf16>
    %cst_348 = arith.constant dense<0.000000e+00> : vector<16x8xf32>
    %672 = tpu.matmul %671, %656, %cst_348 {dimension_numbers = #tpu.dot_dimension_numbers<[1], [0], [0], [1], [0, 0, 1, 1], [], []>} : vector<16x32xbf16>, vector<32x8xbf16>, vector<16x8xf32> -> vector<16x8xf32>
    %673 = arith.truncf %672 : vector<16x8xf32> to vector<16x8xbf16>
    %c1_349 = arith.constant 1 : index
    %c1_350 = arith.constant 1 : index
    %c0_351 = arith.constant 0 : index
    %c0_352 = arith.constant 0 : index
    %674 = vector.load %arg25[%c1_349, %c1_350, %c0_351, %c0_352] : memref<2x4x8x32xbf16, #tpu.memory_space<vmem>>, vector<1x1x8x32xbf16>
    %675 = vector.shape_cast %674 : vector<1x1x8x32xbf16> to vector<8x32xbf16>
    %cst_353 = arith.constant dense<0.000000e+00> : vector<16x32xf32>
    %676 = tpu.matmul %673, %675, %cst_353 {dimension_numbers = #tpu.dot_dimension_numbers<[1], [0], [0], [1], [0, 0, 1, 1], [], []>} : vector<16x8xbf16>, vector<8x32xbf16>, vector<16x32xf32> -> vector<16x32xf32>
    %677 = arith.addf %653, %676 : vector<16x32xf32>
    %678 = vector.extract_strided_slice %626 {offsets = [0, 16], sizes = [16, 8], strides = [1, 1]} : vector<16x32xbf16> to vector<16x8xbf16>
    %679 = vector.extract_strided_slice %21 {offsets = [0, 48], sizes = [32, 8], strides = [1, 1]} : vector<32x64xbf16> to vector<32x8xbf16>
    %680 = vector.extract_strided_slice %28 {offsets = [0, 48], sizes = [32, 8], strides = [1, 1]} : vector<32x64xbf16> to vector<32x8xbf16>
    %cst_354 = arith.constant dense<0.000000e+00> : vector<16x32xf32>
    %681 = tpu.matmul %678, %679, %cst_354 {dimension_numbers = #tpu.dot_dimension_numbers<[1], [1], [0], [0], [0, 0, 1, 0], [], []>} : vector<16x8xbf16>, vector<32x8xbf16>, vector<16x32xf32> -> vector<16x32xf32>
    %cst_355 = arith.constant 0.353553385 : f32
    %682 = vector.broadcast %cst_355 : f32 to vector<16x32xf32>
    %683 = arith.mulf %681, %682 : vector<16x32xf32>
    %684 = arith.addf %683, %6 : vector<16x32xf32>
    %cst_356 = arith.constant dense<0xFF800000> : vector<16xf32>
    %685 = vector.multi_reduction <maximumf>, %684, %cst_356 [1] : vector<16x32xf32> to vector<16xf32>
    %686 = vector.shape_cast %685 : vector<16xf32> to vector<16x1xf32>
    %687 = vector.broadcast %686 : vector<16x1xf32> to vector<16x32xf32>
    %688 = arith.subf %684, %687 : vector<16x32xf32>
    %689 = math.exp %688 : vector<16x32xf32>
    %cst_357 = arith.constant dense<0.000000e+00> : vector<16xf32>
    %690 = vector.multi_reduction <add>, %689, %cst_357 [1] : vector<16x32xf32> to vector<16xf32>
    %691 = vector.shape_cast %690 : vector<16xf32> to vector<16x1xf32>
    %692 = tpu.reciprocal %691 {approx = true} : vector<16x1xf32> -> vector<16x1xf32>
    %693 = vector.broadcast %692 : vector<16x1xf32> to vector<16x32xf32>
    %694 = arith.mulf %689, %693 : vector<16x32xf32>
    %695 = arith.truncf %694 : vector<16x32xf32> to vector<16x32xbf16>
    %cst_358 = arith.constant dense<0.000000e+00> : vector<16x8xf32>
    %696 = tpu.matmul %695, %680, %cst_358 {dimension_numbers = #tpu.dot_dimension_numbers<[1], [0], [0], [1], [0, 0, 1, 1], [], []>} : vector<16x32xbf16>, vector<32x8xbf16>, vector<16x8xf32> -> vector<16x8xf32>
    %697 = arith.truncf %696 : vector<16x8xf32> to vector<16x8xbf16>
    %c1_359 = arith.constant 1 : index
    %c2_360 = arith.constant 2 : index
    %c0_361 = arith.constant 0 : index
    %c0_362 = arith.constant 0 : index
    %698 = vector.load %arg25[%c1_359, %c2_360, %c0_361, %c0_362] : memref<2x4x8x32xbf16, #tpu.memory_space<vmem>>, vector<1x1x8x32xbf16>
    %699 = vector.shape_cast %698 : vector<1x1x8x32xbf16> to vector<8x32xbf16>
    %cst_363 = arith.constant dense<0.000000e+00> : vector<16x32xf32>
    %700 = tpu.matmul %697, %699, %cst_363 {dimension_numbers = #tpu.dot_dimension_numbers<[1], [0], [0], [1], [0, 0, 1, 1], [], []>} : vector<16x8xbf16>, vector<8x32xbf16>, vector<16x32xf32> -> vector<16x32xf32>
    %701 = arith.addf %677, %700 : vector<16x32xf32>
    %702 = vector.extract_strided_slice %626 {offsets = [0, 24], sizes = [16, 8], strides = [1, 1]} : vector<16x32xbf16> to vector<16x8xbf16>
    %703 = vector.extract_strided_slice %21 {offsets = [0, 56], sizes = [32, 8], strides = [1, 1]} : vector<32x64xbf16> to vector<32x8xbf16>
    %704 = vector.extract_strided_slice %28 {offsets = [0, 56], sizes = [32, 8], strides = [1, 1]} : vector<32x64xbf16> to vector<32x8xbf16>
    %cst_364 = arith.constant dense<0.000000e+00> : vector<16x32xf32>
    %705 = tpu.matmul %702, %703, %cst_364 {dimension_numbers = #tpu.dot_dimension_numbers<[1], [1], [0], [0], [0, 0, 1, 0], [], []>} : vector<16x8xbf16>, vector<32x8xbf16>, vector<16x32xf32> -> vector<16x32xf32>
    %cst_365 = arith.constant 0.353553385 : f32
    %706 = vector.broadcast %cst_365 : f32 to vector<16x32xf32>
    %707 = arith.mulf %705, %706 : vector<16x32xf32>
    %708 = arith.addf %707, %6 : vector<16x32xf32>
    %cst_366 = arith.constant dense<0xFF800000> : vector<16xf32>
    %709 = vector.multi_reduction <maximumf>, %708, %cst_366 [1] : vector<16x32xf32> to vector<16xf32>
    %710 = vector.shape_cast %709 : vector<16xf32> to vector<16x1xf32>
    %711 = vector.broadcast %710 : vector<16x1xf32> to vector<16x32xf32>
    %712 = arith.subf %708, %711 : vector<16x32xf32>
    %713 = math.exp %712 : vector<16x32xf32>
    %cst_367 = arith.constant dense<0.000000e+00> : vector<16xf32>
    %714 = vector.multi_reduction <add>, %713, %cst_367 [1] : vector<16x32xf32> to vector<16xf32>
    %715 = vector.shape_cast %714 : vector<16xf32> to vector<16x1xf32>
    %716 = tpu.reciprocal %715 {approx = true} : vector<16x1xf32> -> vector<16x1xf32>
    %717 = vector.broadcast %716 : vector<16x1xf32> to vector<16x32xf32>
    %718 = arith.mulf %713, %717 : vector<16x32xf32>
    %719 = arith.truncf %718 : vector<16x32xf32> to vector<16x32xbf16>
    %cst_368 = arith.constant dense<0.000000e+00> : vector<16x8xf32>
    %720 = tpu.matmul %719, %704, %cst_368 {dimension_numbers = #tpu.dot_dimension_numbers<[1], [0], [0], [1], [0, 0, 1, 1], [], []>} : vector<16x32xbf16>, vector<32x8xbf16>, vector<16x8xf32> -> vector<16x8xf32>
    %721 = arith.truncf %720 : vector<16x8xf32> to vector<16x8xbf16>
    %c1_369 = arith.constant 1 : index
    %c3_370 = arith.constant 3 : index
    %c0_371 = arith.constant 0 : index
    %c0_372 = arith.constant 0 : index
    %722 = vector.load %arg25[%c1_369, %c3_370, %c0_371, %c0_372] : memref<2x4x8x32xbf16, #tpu.memory_space<vmem>>, vector<1x1x8x32xbf16>
    %723 = vector.shape_cast %722 : vector<1x1x8x32xbf16> to vector<8x32xbf16>
    %cst_373 = arith.constant dense<0.000000e+00> : vector<16x32xf32>
    %724 = tpu.matmul %721, %723, %cst_373 {dimension_numbers = #tpu.dot_dimension_numbers<[1], [0], [0], [1], [0, 0, 1, 1], [], []>} : vector<16x8xbf16>, vector<8x32xbf16>, vector<16x32xf32> -> vector<16x32xf32>
    %725 = arith.addf %701, %724 : vector<16x32xf32>
    %726 = vector.broadcast %628 : vector<1x32xf32> to vector<16x32xf32>
    %727 = arith.addf %725, %726 : vector<16x32xf32>
    %728 = arith.addf %616, %727 : vector<16x32xf32>
    %c1_374 = arith.constant 1 : index
    %c1_375 = arith.constant 1 : index
    %c0_376 = arith.constant 0 : index
    %c0_377 = arith.constant 0 : index
    %729 = vector.load %arg31[%c1_374, %c1_375, %c0_376, %c0_377] : memref<2x3x1x32xf32, #tpu.memory_space<vmem>>, vector<1x1x1x32xf32>
    %730 = vector.shape_cast %729 : vector<1x1x1x32xf32> to vector<1x32xf32>
    %c1_378 = arith.constant 1 : index
    %c1_379 = arith.constant 1 : index
    %c0_380 = arith.constant 0 : index
    %c0_381 = arith.constant 0 : index
    %731 = vector.load %arg32[%c1_378, %c1_379, %c0_380, %c0_381] : memref<2x3x1x32xf32, #tpu.memory_space<vmem>>, vector<1x1x1x32xf32>
    %732 = vector.shape_cast %731 : vector<1x1x1x32xf32> to vector<1x32xf32>
    %cst_382 = arith.constant dense<0.000000e+00> : vector<16xf32>
    %733 = vector.multi_reduction <add>, %728, %cst_382 [1] : vector<16x32xf32> to vector<16xf32>
    %734 = vector.shape_cast %733 : vector<16xf32> to vector<16x1xf32>
    %cst_383 = arith.constant 3.200000e+01 : f32
    %735 = vector.broadcast %cst_383 : f32 to vector<16x1xf32>
    %736 = arith.divf %734, %735 : vector<16x1xf32>
    %737 = vector.broadcast %736 : vector<16x1xf32> to vector<16x32xf32>
    %738 = arith.subf %728, %737 : vector<16x32xf32>
    %739 = arith.mulf %738, %738 : vector<16x32xf32>
    %cst_384 = arith.constant dense<0.000000e+00> : vector<16xf32>
    %740 = vector.multi_reduction <add>, %739, %cst_384 [1] : vector<16x32xf32> to vector<16xf32>
    %741 = vector.shape_cast %740 : vector<16xf32> to vector<16x1xf32>
    %cst_385 = arith.constant 3.200000e+01 : f32
    %742 = vector.broadcast %cst_385 : f32 to vector<16x1xf32>
    %743 = arith.divf %741, %742 : vector<16x1xf32>
    %744 = vector.broadcast %736 : vector<16x1xf32> to vector<16x32xf32>
    %745 = arith.subf %728, %744 : vector<16x32xf32>
    %cst_386 = arith.constant 9.99999974E-6 : f32
    %746 = vector.broadcast %cst_386 : f32 to vector<16x1xf32>
    %747 = arith.addf %743, %746 : vector<16x1xf32>
    %748 = math.rsqrt %747 : vector<16x1xf32>
    %749 = vector.broadcast %748 : vector<16x1xf32> to vector<16x32xf32>
    %750 = arith.mulf %745, %749 : vector<16x32xf32>
    %751 = vector.broadcast %730 : vector<1x32xf32> to vector<16x32xf32>
    %752 = arith.mulf %750, %751 : vector<16x32xf32>
    %753 = vector.broadcast %732 : vector<1x32xf32> to vector<16x32xf32>
    %754 = arith.addf %752, %753 : vector<16x32xf32>
    %c1_387 = arith.constant 1 : index
    %c0_388 = arith.constant 0 : index
    %c0_389 = arith.constant 0 : index
    %755 = vector.load %arg27[%c1_387, %c0_388, %c0_389] : memref<2x32x64xbf16, #tpu.memory_space<vmem>>, vector<1x32x64xbf16>
    %756 = vector.shape_cast %755 : vector<1x32x64xbf16> to vector<32x64xbf16>
    %c1_390 = arith.constant 1 : index
    %c0_391 = arith.constant 0 : index
    %c0_392 = arith.constant 0 : index
    %757 = vector.load %arg28[%c1_390, %c0_391, %c0_392] : memref<2x1x64xf32, #tpu.memory_space<vmem>>, vector<1x1x64xf32>
    %758 = vector.shape_cast %757 : vector<1x1x64xf32> to vector<1x64xf32>
    %759 = arith.truncf %754 : vector<16x32xf32> to vector<16x32xbf16>
    %cst_393 = arith.constant dense<0.000000e+00> : vector<16x64xf32>
    %760 = tpu.matmul %759, %756, %cst_393 {dimension_numbers = #tpu.dot_dimension_numbers<[1], [0], [0], [1], [0, 0, 1, 1], [], []>} : vector<16x32xbf16>, vector<32x64xbf16>, vector<16x64xf32> -> vector<16x64xf32>
    %761 = vector.broadcast %758 : vector<1x64xf32> to vector<16x64xf32>
    %762 = arith.addf %760, %761 : vector<16x64xf32>
    %cst_394 = arith.constant 0.000000e+00 : f32
    %763 = vector.broadcast %cst_394 : f32 to vector<16x64xf32>
    %764 = arith.maximumf %762, %763 : vector<16x64xf32>
    %c1_395 = arith.constant 1 : index
    %c0_396 = arith.constant 0 : index
    %c0_397 = arith.constant 0 : index
    %765 = vector.load %arg29[%c1_395, %c0_396, %c0_397] : memref<2x64x32xbf16, #tpu.memory_space<vmem>>, vector<1x64x32xbf16>
    %766 = vector.shape_cast %765 : vector<1x64x32xbf16> to vector<64x32xbf16>
    %c1_398 = arith.constant 1 : index
    %c0_399 = arith.constant 0 : index
    %c0_400 = arith.constant 0 : index
    %767 = vector.load %arg30[%c1_398, %c0_399, %c0_400] : memref<2x1x32xf32, #tpu.memory_space<vmem>>, vector<1x1x32xf32>
    %768 = vector.shape_cast %767 : vector<1x1x32xf32> to vector<1x32xf32>
    %769 = arith.truncf %764 : vector<16x64xf32> to vector<16x64xbf16>
    %cst_401 = arith.constant dense<0.000000e+00> : vector<16x32xf32>
    %770 = tpu.matmul %769, %766, %cst_401 {dimension_numbers = #tpu.dot_dimension_numbers<[1], [0], [0], [1], [0, 0, 1, 1], [], []>} : vector<16x64xbf16>, vector<64x32xbf16>, vector<16x32xf32> -> vector<16x32xf32>
    %771 = vector.broadcast %768 : vector<1x32xf32> to vector<16x32xf32>
    %772 = arith.addf %770, %771 : vector<16x32xf32>
    %773 = arith.addf %754, %772 : vector<16x32xf32>
    %c1_402 = arith.constant 1 : index
    %c2_403 = arith.constant 2 : index
    %c0_404 = arith.constant 0 : index
    %c0_405 = arith.constant 0 : index
    %774 = vector.load %arg31[%c1_402, %c2_403, %c0_404, %c0_405] : memref<2x3x1x32xf32, #tpu.memory_space<vmem>>, vector<1x1x1x32xf32>
    %775 = vector.shape_cast %774 : vector<1x1x1x32xf32> to vector<1x32xf32>
    %c1_406 = arith.constant 1 : index
    %c2_407 = arith.constant 2 : index
    %c0_408 = arith.constant 0 : index
    %c0_409 = arith.constant 0 : index
    %776 = vector.load %arg32[%c1_406, %c2_407, %c0_408, %c0_409] : memref<2x3x1x32xf32, #tpu.memory_space<vmem>>, vector<1x1x1x32xf32>
    %777 = vector.shape_cast %776 : vector<1x1x1x32xf32> to vector<1x32xf32>
    %cst_410 = arith.constant dense<0.000000e+00> : vector<16xf32>
    %778 = vector.multi_reduction <add>, %773, %cst_410 [1] : vector<16x32xf32> to vector<16xf32>
    %779 = vector.shape_cast %778 : vector<16xf32> to vector<16x1xf32>
    %cst_411 = arith.constant 3.200000e+01 : f32
    %780 = vector.broadcast %cst_411 : f32 to vector<16x1xf32>
    %781 = arith.divf %779, %780 : vector<16x1xf32>
    %782 = vector.broadcast %781 : vector<16x1xf32> to vector<16x32xf32>
    %783 = arith.subf %773, %782 : vector<16x32xf32>
    %784 = arith.mulf %783, %783 : vector<16x32xf32>
    %cst_412 = arith.constant dense<0.000000e+00> : vector<16xf32>
    %785 = vector.multi_reduction <add>, %784, %cst_412 [1] : vector<16x32xf32> to vector<16xf32>
    %786 = vector.shape_cast %785 : vector<16xf32> to vector<16x1xf32>
    %cst_413 = arith.constant 3.200000e+01 : f32
    %787 = vector.broadcast %cst_413 : f32 to vector<16x1xf32>
    %788 = arith.divf %786, %787 : vector<16x1xf32>
    %789 = vector.broadcast %781 : vector<16x1xf32> to vector<16x32xf32>
    %790 = arith.subf %773, %789 : vector<16x32xf32>
    %cst_414 = arith.constant 9.99999974E-6 : f32
    %791 = vector.broadcast %cst_414 : f32 to vector<16x1xf32>
    %792 = arith.addf %788, %791 : vector<16x1xf32>
    %793 = math.rsqrt %792 : vector<16x1xf32>
    %794 = vector.broadcast %793 : vector<16x1xf32> to vector<16x32xf32>
    %795 = arith.mulf %790, %794 : vector<16x32xf32>
    %796 = vector.broadcast %775 : vector<1x32xf32> to vector<16x32xf32>
    %797 = arith.mulf %795, %796 : vector<16x32xf32>
    %798 = vector.broadcast %777 : vector<1x32xf32> to vector<16x32xf32>
    %799 = arith.addf %797, %798 : vector<16x32xf32>
    %c0_415 = arith.constant 0 : index
    %c0_416 = arith.constant 0 : index
    %800 = vector.load %arg33[%c0_415, %c0_416] : memref<1x32xf32, #tpu.memory_space<vmem>>, vector<1x32xf32>
    %c0_417 = arith.constant 0 : index
    %c0_418 = arith.constant 0 : index
    %801 = vector.load %arg34[%c0_417, %c0_418] : memref<1x32xf32, #tpu.memory_space<vmem>>, vector<1x32xf32>
    %cst_419 = arith.constant dense<0.000000e+00> : vector<16xf32>
    %802 = vector.multi_reduction <add>, %799, %cst_419 [1] : vector<16x32xf32> to vector<16xf32>
    %803 = vector.shape_cast %802 : vector<16xf32> to vector<16x1xf32>
    %cst_420 = arith.constant 3.200000e+01 : f32
    %804 = vector.broadcast %cst_420 : f32 to vector<16x1xf32>
    %805 = arith.divf %803, %804 : vector<16x1xf32>
    %806 = vector.broadcast %805 : vector<16x1xf32> to vector<16x32xf32>
    %807 = arith.subf %799, %806 : vector<16x32xf32>
    %808 = arith.mulf %807, %807 : vector<16x32xf32>
    %cst_421 = arith.constant dense<0.000000e+00> : vector<16xf32>
    %809 = vector.multi_reduction <add>, %808, %cst_421 [1] : vector<16x32xf32> to vector<16xf32>
    %810 = vector.shape_cast %809 : vector<16xf32> to vector<16x1xf32>
    %cst_422 = arith.constant 3.200000e+01 : f32
    %811 = vector.broadcast %cst_422 : f32 to vector<16x1xf32>
    %812 = arith.divf %810, %811 : vector<16x1xf32>
    %813 = vector.broadcast %805 : vector<16x1xf32> to vector<16x32xf32>
    %814 = arith.subf %799, %813 : vector<16x32xf32>
    %cst_423 = arith.constant 9.99999974E-6 : f32
    %815 = vector.broadcast %cst_423 : f32 to vector<16x1xf32>
    %816 = arith.addf %812, %815 : vector<16x1xf32>
    %817 = math.rsqrt %816 : vector<16x1xf32>
    %818 = vector.broadcast %817 : vector<16x1xf32> to vector<16x32xf32>
    %819 = arith.mulf %814, %818 : vector<16x32xf32>
    %820 = vector.broadcast %800 : vector<1x32xf32> to vector<16x32xf32>
    %821 = arith.mulf %819, %820 : vector<16x32xf32>
    %822 = vector.broadcast %801 : vector<1x32xf32> to vector<16x32xf32>
    %823 = arith.addf %821, %822 : vector<16x32xf32>
    %c1_424 = arith.constant 1 : index
    %c0_425 = arith.constant 0 : index
    %c0_426 = arith.constant 0 : index
    %824 = vector.load %arg41[%c1_424, %c0_425, %c0_426] : memref<2x16x32xf32, #tpu.memory_space<vmem>>, vector<1x16x32xf32>
    %825 = vector.shape_cast %824 : vector<1x16x32xf32> to vector<16x32xf32>
    %826 = vector.shape_cast %823 : vector<16x32xf32> to vector<1x16x32xf32>
    tpu.vector_store %arg41[%c1_424, %c0_425, %c0_426], %826 {strides = array<i32>} : memref<2x16x32xf32, #tpu.memory_space<vmem>>, vector<1x16x32xf32>,
    %cst_427 = arith.constant 0.000000e+00 : f32
    %cst_428 = arith.constant 1.000000e+00 : f32
    %827 = vector.broadcast %cst_427 : f32 to vector<16x4xf32>
    %828 = arith.maximumf %827, %450 : vector<16x4xf32>
    %829 = vector.broadcast %cst_428 : f32 to vector<16x4xf32>
    %830 = arith.minimumf %829, %828 : vector<16x4xf32>
    %cst_429 = arith.constant 1.000000e-03 : f32
    %831 = vector.broadcast %cst_429 : f32 to vector<16x4xf32>
    %832 = arith.maximumf %830, %831 : vector<16x4xf32>
    %cst_430 = arith.constant 1.000000e+00 : f32
    %833 = vector.broadcast %cst_430 : f32 to vector<16x4xf32>
    %834 = arith.subf %833, %830 : vector<16x4xf32>
    %cst_431 = arith.constant 1.000000e-03 : f32
    %835 = vector.broadcast %cst_431 : f32 to vector<16x4xf32>
    %836 = arith.maximumf %834, %835 : vector<16x4xf32>
    %837 = arith.divf %832, %836 : vector<16x4xf32>
    %838 = math.log %837 : vector<16x4xf32>
    %c1_432 = arith.constant 1 : index
    %c0_433 = arith.constant 0 : index
    %c0_434 = arith.constant 0 : index
    %839 = vector.load %arg35[%c1_432, %c0_433, %c0_434] : memref<2x32x32xbf16, #tpu.memory_space<vmem>>, vector<1x32x32xbf16>
    %840 = vector.shape_cast %839 : vector<1x32x32xbf16> to vector<32x32xbf16>
    %c1_435 = arith.constant 1 : index
    %c0_436 = arith.constant 0 : index
    %c0_437 = arith.constant 0 : index
    %841 = vector.load %arg36[%c1_435, %c0_436, %c0_437] : memref<2x1x32xf32, #tpu.memory_space<vmem>>, vector<1x1x32xf32>
    %842 = vector.shape_cast %841 : vector<1x1x32xf32> to vector<1x32xf32>
    %843 = arith.truncf %799 : vector<16x32xf32> to vector<16x32xbf16>
    %cst_438 = arith.constant dense<0.000000e+00> : vector<16x32xf32>
    %844 = tpu.matmul %843, %840, %cst_438 {dimension_numbers = #tpu.dot_dimension_numbers<[1], [0], [0], [1], [0, 0, 1, 1], [], []>} : vector<16x32xbf16>, vector<32x32xbf16>, vector<16x32xf32> -> vector<16x32xf32>
    %845 = vector.broadcast %842 : vector<1x32xf32> to vector<16x32xf32>
    %846 = arith.addf %844, %845 : vector<16x32xf32>
    %cst_439 = arith.constant 0.000000e+00 : f32
    %847 = vector.broadcast %cst_439 : f32 to vector<16x32xf32>
    %848 = arith.maximumf %846, %847 : vector<16x32xf32>
    %c1_440 = arith.constant 1 : index
    %c0_441 = arith.constant 0 : index
    %c0_442 = arith.constant 0 : index
    %849 = vector.load %arg37[%c1_440, %c0_441, %c0_442] : memref<2x32x32xbf16, #tpu.memory_space<vmem>>, vector<1x32x32xbf16>
    %850 = vector.shape_cast %849 : vector<1x32x32xbf16> to vector<32x32xbf16>
    %c1_443 = arith.constant 1 : index
    %c0_444 = arith.constant 0 : index
    %c0_445 = arith.constant 0 : index
    %851 = vector.load %arg38[%c1_443, %c0_444, %c0_445] : memref<2x1x32xf32, #tpu.memory_space<vmem>>, vector<1x1x32xf32>
    %852 = vector.shape_cast %851 : vector<1x1x32xf32> to vector<1x32xf32>
    %853 = arith.truncf %848 : vector<16x32xf32> to vector<16x32xbf16>
    %cst_446 = arith.constant dense<0.000000e+00> : vector<16x32xf32>
    %854 = tpu.matmul %853, %850, %cst_446 {dimension_numbers = #tpu.dot_dimension_numbers<[1], [0], [0], [1], [0, 0, 1, 1], [], []>} : vector<16x32xbf16>, vector<32x32xbf16>, vector<16x32xf32> -> vector<16x32xf32>
    %855 = vector.broadcast %852 : vector<1x32xf32> to vector<16x32xf32>
    %856 = arith.addf %854, %855 : vector<16x32xf32>
    %cst_447 = arith.constant 0.000000e+00 : f32
    %857 = vector.broadcast %cst_447 : f32 to vector<16x32xf32>
    %858 = arith.maximumf %856, %857 : vector<16x32xf32>
    %c1_448 = arith.constant 1 : index
    %c0_449 = arith.constant 0 : index
    %c0_450 = arith.constant 0 : index
    %859 = vector.load %arg39[%c1_448, %c0_449, %c0_450] : memref<2x32x4xbf16, #tpu.memory_space<vmem>>, vector<1x32x4xbf16>
    %860 = vector.shape_cast %859 : vector<1x32x4xbf16> to vector<32x4xbf16>
    %c1_451 = arith.constant 1 : index
    %c0_452 = arith.constant 0 : index
    %c0_453 = arith.constant 0 : index
    %861 = vector.load %arg40[%c1_451, %c0_452, %c0_453] : memref<2x1x4xf32, #tpu.memory_space<vmem>>, vector<1x1x4xf32>
    %862 = vector.shape_cast %861 : vector<1x1x4xf32> to vector<1x4xf32>
    %863 = arith.truncf %858 : vector<16x32xf32> to vector<16x32xbf16>
    %cst_454 = arith.constant dense<0.000000e+00> : vector<16x4xf32>
    %864 = tpu.matmul %863, %860, %cst_454 {dimension_numbers = #tpu.dot_dimension_numbers<[1], [0], [0], [1], [0, 0, 1, 1], [], []>} : vector<16x32xbf16>, vector<32x4xbf16>, vector<16x4xf32> -> vector<16x4xf32>
    %865 = vector.broadcast %862 : vector<1x4xf32> to vector<16x4xf32>
    %866 = arith.addf %864, %865 : vector<16x4xf32>
    %867 = arith.addf %866, %838 : vector<16x4xf32>
    %868 = arith.negf %867 : vector<16x4xf32>
    %869 = math.exp %868 : vector<16x4xf32>
    %cst_455 = arith.constant 1.000000e+00 : f32
    %870 = vector.broadcast %cst_455 : f32 to vector<16x4xf32>
    %871 = arith.addf %870, %869 : vector<16x4xf32>
    %872 = arith.divf %870, %871 : vector<16x4xf32>
    %873 = tpu.concatenate %14, %450, %872 in 1 : vector<16x4xf32>, vector<16x4xf32>, vector<16x4xf32> -> vector<16x12xf32>
    %c0_456 = arith.constant 0 : index
    %c0_457 = arith.constant 0 : index
    %874 = vector.load %arg42[%c0_456, %c0_457] : memref<16x12xf32, #tpu.memory_space<vmem>>, vector<16x12xf32>
    tpu.vector_store %arg42[%c0_456, %c0_457], %873 {strides = array<i32>} : memref<16x12xf32, #tpu.memory_space<vmem>>, vector<16x12xf32>,
    return
  }
}

</mosaic_0001>

<llo_original>
// kernel: transformer_decoder_forward.1
$region0: #{transformer_decoder_forward.1}
  #allocation0 [shape = 'u32[]', space=smem, size = 0x4, offset = 0x4, fixed_abs, tag = 'smem constant byte address 0x4 - core index']
  #allocation1 [shape = 'u32[144,128]{1,0:T(1,128)}', space=vmem, size = 0x12000, scoped, tag = 'internal scratch']
  %s0 = inlined_call_operand.smem [shape: u32[43], index: -1, kind: input, shape index: {}]
  %s1 = sld [smem:[%s0]]
  %s2 = scalar_lea.smem %s0, 1
  %s3 = sld [smem:[%s2]]
  %s4 = scalar_lea.smem %s0, 2
  %s5 = sld [smem:[%s4]]
  %s6 = scalar_lea.smem %s0, 3
  %s7 = sld [smem:[%s6]]
  %s8 = scalar_lea.smem %s0, 4
  %s9 = sld [smem:[%s8]]
  %s10 = scalar_lea.smem %s0, 5
  %s11 = sld [smem:[%s10]]
  %s12 = scalar_lea.smem %s0, 6
  %s13 = sld [smem:[%s12]]
  %s14 = scalar_lea.smem %s0, 7
  %s15 = sld [smem:[%s14]]
  %s16 = scalar_lea.smem %s0, 8
  %s17 = sld [smem:[%s16]]
  %s18 = scalar_lea.smem %s0, 9
  %s19 = sld [smem:[%s18]]
  %s20 = scalar_lea.smem %s0, 10
  %s21 = sld [smem:[%s20]]
  %s22 = scalar_lea.smem %s0, 11
  %s23 = sld [smem:[%s22]]
  %s24 = scalar_lea.smem %s0, 12
  %s25 = sld [smem:[%s24]]
  %s26 = scalar_lea.smem %s0, 13
  %s27 = sld [smem:[%s26]]
  %s28 = scalar_lea.smem %s0, 14
  %s29 = sld [smem:[%s28]]
  %s30 = scalar_lea.smem %s0, 15
  %s31 = sld [smem:[%s30]]
  %s32 = scalar_lea.smem %s0, 16
  %s33 = sld [smem:[%s32]]
  %s34 = scalar_lea.smem %s0, 17
  %s35 = sld [smem:[%s34]]
  %s36 = scalar_lea.smem %s0, 18
  %s37 = sld [smem:[%s36]]
  %s38 = scalar_lea.smem %s0, 19
  %s39 = sld [smem:[%s38]]
  %s40 = scalar_lea.smem %s0, 20
  %s41 = sld [smem:[%s40]]
  %s42 = scalar_lea.smem %s0, 21
  %s43 = sld [smem:[%s42]]
  %s44 = scalar_lea.smem %s0, 22
  %s45 = sld [smem:[%s44]]
  %s46 = scalar_lea.smem %s0, 23
  %s47 = sld [smem:[%s46]]
  %s48 = scalar_lea.smem %s0, 24
  %s49 = sld [smem:[%s48]]
  %s50 = scalar_lea.smem %s0, 25
  %s51 = sld [smem:[%s50]]
  %s52 = scalar_lea.smem %s0, 26
  %s53 = sld [smem:[%s52]]
  %s54 = scalar_lea.smem %s0, 27
  %s55 = sld [smem:[%s54]]
  %s56 = scalar_lea.smem %s0, 28
  %s57 = sld [smem:[%s56]]
  %s58 = scalar_lea.smem %s0, 29
  %s59 = sld [smem:[%s58]]
  %s60 = scalar_lea.smem %s0, 30
  %s61 = sld [smem:[%s60]]
  %s62 = scalar_lea.smem %s0, 31
  %s63 = sld [smem:[%s62]]
  %s64 = scalar_lea.smem %s0, 32
  %s65 = sld [smem:[%s64]]
  %s66 = scalar_lea.smem %s0, 33
  %s67 = sld [smem:[%s66]]
  %s68 = scalar_lea.smem %s0, 34
  %s69 = sld [smem:[%s68]]
  %s70 = scalar_lea.smem %s0, 35
  %s71 = sld [smem:[%s70]]
  %s72 = scalar_lea.smem %s0, 36
  %s73 = sld [smem:[%s72]]
  %s74 = scalar_lea.smem %s0, 37
  %s75 = sld [smem:[%s74]]
  %s76 = scalar_lea.smem %s0, 38
  %s77 = sld [smem:[%s76]]
  %s78 = scalar_lea.smem %s0, 39
  %s79 = sld [smem:[%s78]]
  %s80 = scalar_lea.smem %s0, 40
  %s81 = sld [smem:[%s80]]
  %s82 = scalar_lea.smem %s0, 41
  %s83 = sld [smem:[%s82]]
  %s84 = scalar_lea.smem %s0, 42
  %s85 = sld [smem:[%s84]]
  %86 = xla_tuple %s83, %s85
  %s87 = sld [smem:[#allocation0]]
  $region182: #{transformer_decoder_forward.1} parent=0
    _
  %s89 = ssub.s32 1, %s87
  %s90 = scalar_select 0, %s89, %s87
  // Predicated region
  $region2: #{transformer_decoder_forward.1} parent=0 // pred_check
    _
  $region3: #{transformer_decoder_forward.1} parent=0 // pred_check_branch
    %92 = sbr.rel (0) target = $region5
  $region4: #{transformer_decoder_forward.1} parent=0 // pred_region
    _
  $region5: #{transformer_decoder_forward.1} parent=0 // pred_fallthru
    _
  // Predicated region
  $region6: #{transformer_decoder_forward.1} parent=0 // pred_check
    _
  $region7: #{transformer_decoder_forward.1} parent=0 // pred_check_branch
    %94 = sbr.rel (0) target = $region9
  $region8: #{transformer_decoder_forward.1} parent=0 // pred_region
    _
  $region9: #{transformer_decoder_forward.1} parent=0 // pred_fallthru
    _
  // Predicated region
  $region10: #{transformer_decoder_forward.1} parent=0 // pred_check
    _
  $region11: #{transformer_decoder_forward.1} parent=0 // pred_check_branch
    %96 = sbr.rel (0) target = $region13
  $region12: #{transformer_decoder_forward.1} parent=0 // pred_region
    _
  $region13: #{transformer_decoder_forward.1} parent=0 // pred_fallthru
    _
  // Predicated region
  $region14: #{transformer_decoder_forward.1} parent=0 // pred_check
    _
  $region15: #{transformer_decoder_forward.1} parent=0 // pred_check_branch
    %98 = sbr.rel (0) target = $region17
  $region16: #{transformer_decoder_forward.1} parent=0 // pred_region
    _
  $region17: #{transformer_decoder_forward.1} parent=0 // pred_fallthru
    _
  // Predicated region
  $region18: #{transformer_decoder_forward.1} parent=0 // pred_check
    _
  $region19: #{transformer_decoder_forward.1} parent=0 // pred_check_branch
    %100 = sbr.rel (0) target = $region21
  $region20: #{transformer_decoder_forward.1} parent=0 // pred_region
    _
  $region21: #{transformer_decoder_forward.1} parent=0 // pred_fallthru
    _
  // Predicated region
  $region22: #{transformer_decoder_forward.1} parent=0 // pred_check
    _
  $region23: #{transformer_decoder_forward.1} parent=0 // pred_check_branch
    %102 = sbr.rel (0) target = $region25
  $region24: #{transformer_decoder_forward.1} parent=0 // pred_region
    _
  $region25: #{transformer_decoder_forward.1} parent=0 // pred_fallthru
    _
  // Predicated region
  $region26: #{transformer_decoder_forward.1} parent=0 // pred_check
    _
  $region27: #{transformer_decoder_forward.1} parent=0 // pred_check_branch
    %104 = sbr.rel (0) target = $region29
  $region28: #{transformer_decoder_forward.1} parent=0 // pred_region
    _
  $region29: #{transformer_decoder_forward.1} parent=0 // pred_fallthru
    _
  // Predicated region
  $region30: #{transformer_decoder_forward.1} parent=0 // pred_check
    _
  $region31: #{transformer_decoder_forward.1} parent=0 // pred_check_branch
    %106 = sbr.rel (0) target = $region33
  $region32: #{transformer_decoder_forward.1} parent=0 // pred_region
    _
  $region33: #{transformer_decoder_forward.1} parent=0 // pred_fallthru
    _
  // Predicated region
  $region34: #{transformer_decoder_forward.1} parent=0 // pred_check
    _
  $region35: #{transformer_decoder_forward.1} parent=0 // pred_check_branch
    %108 = sbr.rel (0) target = $region37
  $region36: #{transformer_decoder_forward.1} parent=0 // pred_region
    _
  $region37: #{transformer_decoder_forward.1} parent=0 // pred_fallthru
    _
  // Predicated region
  $region38: #{transformer_decoder_forward.1} parent=0 // pred_check
    _
  $region39: #{transformer_decoder_forward.1} parent=0 // pred_check_branch
    %110 = sbr.rel (0) target = $region41
  $region40: #{transformer_decoder_forward.1} parent=0 // pred_region
    _
  $region41: #{transformer_decoder_forward.1} parent=0 // pred_fallthru
    _
  // Predicated region
  $region42: #{transformer_decoder_forward.1} parent=0 // pred_check
    _
  $region43: #{transformer_decoder_forward.1} parent=0 // pred_check_branch
    %112 = sbr.rel (0) target = $region45
  $region44: #{transformer_decoder_forward.1} parent=0 // pred_region
    _
  $region45: #{transformer_decoder_forward.1} parent=0 // pred_fallthru
    _
  // Predicated region
  $region46: #{transformer_decoder_forward.1} parent=0 // pred_check
    _
  $region47: #{transformer_decoder_forward.1} parent=0 // pred_check_branch
    %114 = sbr.rel (0) target = $region49
  $region48: #{transformer_decoder_forward.1} parent=0 // pred_region
    _
  $region49: #{transformer_decoder_forward.1} parent=0 // pred_fallthru
    _
  // Predicated region
  $region50: #{transformer_decoder_forward.1} parent=0 // pred_check
    _
  $region51: #{transformer_decoder_forward.1} parent=0 // pred_check_branch
    %116 = sbr.rel (0) target = $region53
  $region52: #{transformer_decoder_forward.1} parent=0 // pred_region
    _
  $region53: #{transformer_decoder_forward.1} parent=0 // pred_fallthru
    _
  // Predicated region
  $region54: #{transformer_decoder_forward.1} parent=0 // pred_check
    _
  $region55: #{transformer_decoder_forward.1} parent=0 // pred_check_branch
    %118 = sbr.rel (0) target = $region57
  $region56: #{transformer_decoder_forward.1} parent=0 // pred_region
    _
  $region57: #{transformer_decoder_forward.1} parent=0 // pred_fallthru
    _
  // Predicated region
  $region58: #{transformer_decoder_forward.1} parent=0 // pred_check
    _
  $region59: #{transformer_decoder_forward.1} parent=0 // pred_check_branch
    %120 = sbr.rel (0) target = $region61
  $region60: #{transformer_decoder_forward.1} parent=0 // pred_region
    _
  $region61: #{transformer_decoder_forward.1} parent=0 // pred_fallthru
    _
  // Predicated region
  $region62: #{transformer_decoder_forward.1} parent=0 // pred_check
    _
  $region63: #{transformer_decoder_forward.1} parent=0 // pred_check_branch
    %122 = sbr.rel (0) target = $region65
  $region64: #{transformer_decoder_forward.1} parent=0 // pred_region
    _
  $region65: #{transformer_decoder_forward.1} parent=0 // pred_fallthru
    _
  // Predicated region
  $region66: #{transformer_decoder_forward.1} parent=0 // pred_check
    _
  $region67: #{transformer_decoder_forward.1} parent=0 // pred_check_branch
    %124 = sbr.rel (0) target = $region69
  $region68: #{transformer_decoder_forward.1} parent=0 // pred_region
    _
  $region69: #{transformer_decoder_forward.1} parent=0 // pred_fallthru
    _
  // Predicated region
  $region70: #{transformer_decoder_forward.1} parent=0 // pred_check
    _
  $region71: #{transformer_decoder_forward.1} parent=0 // pred_check_branch
    %126 = sbr.rel (0) target = $region73
  $region72: #{transformer_decoder_forward.1} parent=0 // pred_region
    _
  $region73: #{transformer_decoder_forward.1} parent=0 // pred_fallthru
    _
  // Predicated region
  $region74: #{transformer_decoder_forward.1} parent=0 // pred_check
    _
  $region75: #{transformer_decoder_forward.1} parent=0 // pred_check_branch
    %128 = sbr.rel (0) target = $region77
  $region76: #{transformer_decoder_forward.1} parent=0 // pred_region
    _
  $region77: #{transformer_decoder_forward.1} parent=0 // pred_fallthru
    _
  // Predicated region
  $region78: #{transformer_decoder_forward.1} parent=0 // pred_check
    _
  $region79: #{transformer_decoder_forward.1} parent=0 // pred_check_branch
    %130 = sbr.rel (0) target = $region81
  $region80: #{transformer_decoder_forward.1} parent=0 // pred_region
    _
  $region81: #{transformer_decoder_forward.1} parent=0 // pred_fallthru
    _
  // Predicated region
  $region82: #{transformer_decoder_forward.1} parent=0 // pred_check
    _
  $region83: #{transformer_decoder_forward.1} parent=0 // pred_check_branch
    %132 = sbr.rel (0) target = $region85
  $region84: #{transformer_decoder_forward.1} parent=0 // pred_region
    _
  $region85: #{transformer_decoder_forward.1} parent=0 // pred_fallthru
    _
  // Predicated region
  $region86: #{transformer_decoder_forward.1} parent=0 // pred_check
    _
  $region87: #{transformer_decoder_forward.1} parent=0 // pred_check_branch
    %134 = sbr.rel (0) target = $region89
  $region88: #{transformer_decoder_forward.1} parent=0 // pred_region
    _
  $region89: #{transformer_decoder_forward.1} parent=0 // pred_fallthru
    _
  // Predicated region
  $region90: #{transformer_decoder_forward.1} parent=0 // pred_check
    _
  $region91: #{transformer_decoder_forward.1} parent=0 // pred_check_branch
    %136 = sbr.rel (0) target = $region93
  $region92: #{transformer_decoder_forward.1} parent=0 // pred_region
    _
  $region93: #{transformer_decoder_forward.1} parent=0 // pred_fallthru
    _
  // Predicated region
  $region94: #{transformer_decoder_forward.1} parent=0 // pred_check
    _
  $region95: #{transformer_decoder_forward.1} parent=0 // pred_check_branch
    %138 = sbr.rel (0) target = $region97
  $region96: #{transformer_decoder_forward.1} parent=0 // pred_region
    _
  $region97: #{transformer_decoder_forward.1} parent=0 // pred_fallthru
    _
  // Predicated region
  $region98: #{transformer_decoder_forward.1} parent=0 // pred_check
    _
  $region99: #{transformer_decoder_forward.1} parent=0 // pred_check_branch
    %140 = sbr.rel (0) target = $region101
  $region100: #{transformer_decoder_forward.1} parent=0 // pred_region
    _
  $region101: #{transformer_decoder_forward.1} parent=0 // pred_fallthru
    _
  // Predicated region
  $region102: #{transformer_decoder_forward.1} parent=0 // pred_check
    _
  $region103: #{transformer_decoder_forward.1} parent=0 // pred_check_branch
    %142 = sbr.rel (0) target = $region105
  $region104: #{transformer_decoder_forward.1} parent=0 // pred_region
    _
  $region105: #{transformer_decoder_forward.1} parent=0 // pred_fallthru
    _
  // Predicated region
  $region106: #{transformer_decoder_forward.1} parent=0 // pred_check
    _
  $region107: #{transformer_decoder_forward.1} parent=0 // pred_check_branch
    %144 = sbr.rel (0) target = $region109
  $region108: #{transformer_decoder_forward.1} parent=0 // pred_region
    _
  $region109: #{transformer_decoder_forward.1} parent=0 // pred_fallthru
    _
  // Predicated region
  $region110: #{transformer_decoder_forward.1} parent=0 // pred_check
    _
  $region111: #{transformer_decoder_forward.1} parent=0 // pred_check_branch
    %146 = sbr.rel (0) target = $region113
  $region112: #{transformer_decoder_forward.1} parent=0 // pred_region
    _
  $region113: #{transformer_decoder_forward.1} parent=0 // pred_fallthru
    _
  // Predicated region
  $region114: #{transformer_decoder_forward.1} parent=0 // pred_check
    _
  $region115: #{transformer_decoder_forward.1} parent=0 // pred_check_branch
    %148 = sbr.rel (0) target = $region117
  $region116: #{transformer_decoder_forward.1} parent=0 // pred_region
    _
  $region117: #{transformer_decoder_forward.1} parent=0 // pred_fallthru
    _
  // Predicated region
  $region118: #{transformer_decoder_forward.1} parent=0 // pred_check
    _
  $region119: #{transformer_decoder_forward.1} parent=0 // pred_check_branch
    %150 = sbr.rel (0) target = $region121
  $region120: #{transformer_decoder_forward.1} parent=0 // pred_region
    _
  $region121: #{transformer_decoder_forward.1} parent=0 // pred_fallthru
    _
  // Predicated region
  $region122: #{transformer_decoder_forward.1} parent=0 // pred_check
    _
  $region123: #{transformer_decoder_forward.1} parent=0 // pred_check_branch
    %152 = sbr.rel (0) target = $region125
  $region124: #{transformer_decoder_forward.1} parent=0 // pred_region
    _
  $region125: #{transformer_decoder_forward.1} parent=0 // pred_fallthru
    _
  // Predicated region
  $region126: #{transformer_decoder_forward.1} parent=0 // pred_check
    _
  $region127: #{transformer_decoder_forward.1} parent=0 // pred_check_branch
    %154 = sbr.rel (0) target = $region129
  $region128: #{transformer_decoder_forward.1} parent=0 // pred_region
    _
  $region129: #{transformer_decoder_forward.1} parent=0 // pred_fallthru
    _
  // Predicated region
  $region130: #{transformer_decoder_forward.1} parent=0 // pred_check
    _
  $region131: #{transformer_decoder_forward.1} parent=0 // pred_check_branch
    %156 = sbr.rel (0) target = $region133
  $region132: #{transformer_decoder_forward.1} parent=0 // pred_region
    _
  $region133: #{transformer_decoder_forward.1} parent=0 // pred_fallthru
    _
  // Predicated region
  $region134: #{transformer_decoder_forward.1} parent=0 // pred_check
    _
  $region135: #{transformer_decoder_forward.1} parent=0 // pred_check_branch
    %158 = sbr.rel (0) target = $region137
  $region136: #{transformer_decoder_forward.1} parent=0 // pred_region
    _
  $region137: #{transformer_decoder_forward.1} parent=0 // pred_fallthru
    _
  // Predicated region
  $region138: #{transformer_decoder_forward.1} parent=0 // pred_check
    _
  $region139: #{transformer_decoder_forward.1} parent=0 // pred_check_branch
    %160 = sbr.rel (0) target = $region141
  $region140: #{transformer_decoder_forward.1} parent=0 // pred_region
    _
  $region141: #{transformer_decoder_forward.1} parent=0 // pred_fallthru
    _
  // Predicated region
  $region142: #{transformer_decoder_forward.1} parent=0 // pred_check
    _
  $region143: #{transformer_decoder_forward.1} parent=0 // pred_check_branch
    %162 = sbr.rel (0) target = $region145
  $region144: #{transformer_decoder_forward.1} parent=0 // pred_region
    _
  $region145: #{transformer_decoder_forward.1} parent=0 // pred_fallthru
    _
  // Predicated region
  $region146: #{transformer_decoder_forward.1} parent=0 // pred_check
    _
  $region147: #{transformer_decoder_forward.1} parent=0 // pred_check_branch
    %164 = sbr.rel (0) target = $region149
  $region148: #{transformer_decoder_forward.1} parent=0 // pred_region
    _
  $region149: #{transformer_decoder_forward.1} parent=0 // pred_fallthru
    _
  // Predicated region
  $region150: #{transformer_decoder_forward.1} parent=0 // pred_check
    _
  $region151: #{transformer_decoder_forward.1} parent=0 // pred_check_branch
    %166 = sbr.rel (0) target = $region153
  $region152: #{transformer_decoder_forward.1} parent=0 // pred_region
    _
  $region153: #{transformer_decoder_forward.1} parent=0 // pred_fallthru
    _
  // Predicated region
  $region154: #{transformer_decoder_forward.1} parent=0 // pred_check
    _
  $region155: #{transformer_decoder_forward.1} parent=0 // pred_check_branch
    %168 = sbr.rel (0) target = $region157
  $region156: #{transformer_decoder_forward.1} parent=0 // pred_region
    _
  $region157: #{transformer_decoder_forward.1} parent=0 // pred_fallthru
    _
  // Predicated region
  $region158: #{transformer_decoder_forward.1} parent=0 // pred_check
    _
  $region159: #{transformer_decoder_forward.1} parent=0 // pred_check_branch
    %170 = sbr.rel (0) target = $region161
  $region160: #{transformer_decoder_forward.1} parent=0 // pred_region
    _
  $region161: #{transformer_decoder_forward.1} parent=0 // pred_fallthru
    _
  // Predicated region
  $region162: #{transformer_decoder_forward.1} parent=0 // pred_check
    _
  $region163: #{transformer_decoder_forward.1} parent=0 // pred_check_branch
    %172 = sbr.rel (0) target = $region165
  $region164: #{transformer_decoder_forward.1} parent=0 // pred_region
    _
  $region165: #{transformer_decoder_forward.1} parent=0 // pred_fallthru
    _
  %v174 = vld [vmem:[%s1] sm:$0xff]
  %v175 = vld [vmem:[%s1 + $0x8] sm:$0xff]
  %v176 = vld [vmem:[%s3] sm:$0xff]
  %v177 = vld [vmem:[%s3 + $0x8] sm:$0xff]
  %v178 = vld [vmem:[%s3 + $0x10] sm:$0xff]
  %v179 = vld [vmem:[%s3 + $0x18] sm:$0xff]
  %v180 = vld [vmem:[%s5] sm:$0xff]
  %v181 = vld [vmem:[%s5 + $0x8] sm:$0xff]
  %v182 = vld [vmem:[%s5 + $0x10] sm:$0xff]
  %v183 = vld [vmem:[%s5 + $0x18] sm:$0xff]
  %v184 = vadd.f32 %v176, %v180
  %v185 = vadd.f32 %v177, %v181
  %v186 = vadd.f32 %v178, %v182
  %v187 = vadd.f32 %v179, %v183
  %v188 = vld [vmem:[%s9] sm:$0xff]
  %v189 = vld [vmem:[%s9 + $0x8] sm:$0xff]
  %v190 = vld [vmem:[%s15] sm:$0xff]
  %v191 = vld [vmem:[%s15 + $0x8] sm:$0xff]
  %v192 = vld [vmem:[%s17] sm:$0xff]
  %v193 = vld [vmem:[%s17 + $0x8] sm:$0xff]
  %v194 = vld [vmem:[%s11] sm:$0xf]
  %v195 = vld [vmem:[%s13] sm:$0x1]
  %v196 = vld [vmem:[%s7] sm:$0xff]
  %v197 = vld [vmem:[%s7 + $0x8] sm:$0xff]
  %v198 = vxor.u32 %v196, 2147483648
  %v199 = vxor.u32 %v197, 2147483648
  %v200 = vmul.f32 %v198, 1.442695
  %v201 = vpow.pop %v200
  %v202 = vmul.f32 %v199, 1.442695
  %v203 = vpow.pop %v202
  %v204 = vadd.f32 %v201, 1.0
  %v205 = vadd.f32 %v203, 1.0
  %v206 = vrcp.pop %v204
  %v207 = vmul.f32 1.0, %v206
  %v208 = vrcp.pop %v205
  %v209 = vmul.f32 1.0, %v208
  %v210 = vpack.c.bf16 %v185, %v184
  %v211 = vpack.c.bf16 %v187, %v186
  %v212 = vld [vmem:[%s43] sm:$0xf]
  %v213 = vld [vmem:[%s43 + $0x4] sm:$0xf]
  %v214 = vld [vmem:[%s43 + $0x8] sm:$0xf]
  %v215 = vld [vmem:[%s43 + $0xc] sm:$0xf]
  %v216 = vld [vmem:[%s45] sm:$0x1]
  %v218 = vlaneseq
  %v219 = vshrl.u32 %v218, 7
  %v220 = vsub.s32 0, %v219
  %v221 = vrot.slane %v216, %v220
  %v227 = vunpack.c.l.b16 %v212
  %v228 = vunpack.c.l.b16 %v213
  %v229 = vunpack.c.l.b16 %v214
  %v230 = vunpack.c.l.b16 %v215
  %v231 = vpack.c.b16 %v228, %v227
  %v232 = vpack.c.b16 %v230, %v229
  %vm235 = vcmask 261120
  %v237 = vsel %vm235, %v210, 0
  %v240 = vsel %vm235, %v211, 0
  %242 = vmatprep.subr.bf16.mxu0 0
  %243 = vmatpush1.bf16.msra.mxu0 %v231
  %244 = vmatprep.subr.bf16.mxu0 0
  %245 = vmatpush1.bf16.msra.mxu0 %v232
  %246 = vmatprep.subr.bf16.mxu0 0
  %247 = vmatpush1.bf16.msra.mxu0 0
  %248 = vmatprep.subr.bf16.mxu0 0
  %249 = vmatpush1.bf16.msra.mxu0 0
  %250 = vmatprep.subr.bf16.mxu0 0
  %251 = vmatpush1.bf16.msra.mxu0 0
  %252 = vmatprep.subr.bf16.mxu0 0
  %253 = vmatpush1.bf16.msra.mxu0 0
  %254 = vmatprep.subr.bf16.mxu0 0
  %255 = vmatpush1.bf16.msra.mxu0 0
  %256 = vmatprep.subr.bf16.mxu0 0
  %257 = vmatpush1.bf16.msra.mxu0 0
  %258 = vmatprep.subr.bf16.mxu0 0
  %259 = vmatpush1.bf16.msra.mxu0 0
  %260 = vmatprep.subr.bf16.mxu0 0
  %261 = vmatpush1.bf16.msra.mxu0 0
  %262 = vmatprep.subr.bf16.mxu0 0
  %263 = vmatpush1.bf16.msra.mxu0 0
  %264 = vmatprep.subr.bf16.mxu0 0
  %265 = vmatpush1.bf16.msra.mxu0 0
  %266 = vmatprep.subr.bf16.mxu0 0
  %267 = vmatpush1.bf16.msra.mxu0 0
  %268 = vmatprep.subr.bf16.mxu0 0
  %269 = vmatpush1.bf16.msra.mxu0 0
  %270 = vmatprep.subr.bf16.mxu0 0
  %271 = vmatpush1.bf16.msra.mxu0 0
  %272 = vmatprep.subr.bf16.mxu0 0
  %273 = vmatpush1.bf16.msra.mxu0 0
  %274 = vmatprep.mubr.bf16.mxu0 0
  %275 = vmatmul.mubr.bf16.gmra.mrb[0].mxu0 %v237
  %v276 = vpop.f32.mrb[0].mxu0
  %v277 = vadd.f32 %v221, %v276
  %v278 = vpop.f32.mrb[0].mxu0
  %v279 = vpop.f32.mrb[0].mxu0
  %v280 = vadd.f32 %v221, %v279
  %v281 = vpop.f32.mrb[0].mxu0
  %282 = vmatprep.mubr.bf16.mxu0 0
  %283 = vmatmul.mubr.bf16.gmra.mrb[0].mxu0 %v240
  %v284 = vpop.f32.mrb[0].mxu0
  %v285 = vadd.f32 %v221, %v284
  %v286 = vpop.f32.mrb[0].mxu0
  %v287 = vpop.f32.mrb[0].mxu0
  %v288 = vadd.f32 %v221, %v287
  %v289 = vpop.f32.mrb[0].mxu0
  %290 = vdwg.mxu0
  %v291 = vpack.c.bf16 %v280, %v277
  %v292 = vpack.c.bf16 %v288, %v285
  %v293 = vpack.c.bf16 %v177, %v176
  %v294 = vpack.c.bf16 %v179, %v178
  %v295 = vld [vmem:[%s47] sm:$0xf]
  %v296 = vld [vmem:[%s47 + $0x4] sm:$0xf]
  %v297 = vld [vmem:[%s47 + $0x8] sm:$0xf]
  %v298 = vld [vmem:[%s47 + $0xc] sm:$0xf]
  %v299 = vld [vmem:[%s49] sm:$0x1]
  %v301 = vlaneseq
  %v302 = vshrl.u32 %v301, 7
  %v303 = vsub.s32 0, %v302
  %v304 = vrot.slane %v299, %v303
  %v310 = vunpack.c.l.b16 %v295
  %v311 = vunpack.c.l.b16 %v296
  %v312 = vunpack.c.l.b16 %v297
  %v313 = vunpack.c.l.b16 %v298
  %v314 = vpack.c.b16 %v311, %v310
  %v315 = vpack.c.b16 %v313, %v312
  %v319 = vsel %vm235, %v293, 0
  %v322 = vsel %vm235, %v294, 0
  %324 = vmatprep.subr.bf16.mxu0 0
  %325 = vmatpush1.bf16.msra.mxu0 %v314
  %326 = vmatprep.subr.bf16.mxu0 0
  %327 = vmatpush1.bf16.msra.mxu0 %v315
  %328 = vmatprep.subr.bf16.mxu0 0
  %329 = vmatpush1.bf16.msra.mxu0 0
  %330 = vmatprep.subr.bf16.mxu0 0
  %331 = vmatpush1.bf16.msra.mxu0 0
  %332 = vmatprep.subr.bf16.mxu0 0
  %333 = vmatpush1.bf16.msra.mxu0 0
  %334 = vmatprep.subr.bf16.mxu0 0
  %335 = vmatpush1.bf16.msra.mxu0 0
  %336 = vmatprep.subr.bf16.mxu0 0
  %337 = vmatpush1.bf16.msra.mxu0 0
  %338 = vmatprep.subr.bf16.mxu0 0
  %339 = vmatpush1.bf16.msra.mxu0 0
  %340 = vmatprep.subr.bf16.mxu0 0
  %341 = vmatpush1.bf16.msra.mxu0 0
  %342 = vmatprep.subr.bf16.mxu0 0
  %343 = vmatpush1.bf16.msra.mxu0 0
  %344 = vmatprep.subr.bf16.mxu0 0
  %345 = vmatpush1.bf16.msra.mxu0 0
  %346 = vmatprep.subr.bf16.mxu0 0
  %347 = vmatpush1.bf16.msra.mxu0 0
  %348 = vmatprep.subr.bf16.mxu0 0
  %349 = vmatpush1.bf16.msra.mxu0 0
  %350 = vmatprep.subr.bf16.mxu0 0
  %351 = vmatpush1.bf16.msra.mxu0 0
  %352 = vmatprep.subr.bf16.mxu0 0
  %353 = vmatpush1.bf16.msra.mxu0 0
  %354 = vmatprep.subr.bf16.mxu0 0
  %355 = vmatpush1.bf16.msra.mxu0 0
  %356 = vmatprep.mubr.bf16.mxu0 0
  %357 = vmatmul.mubr.bf16.gmra.mrb[0].mxu0 %v319
  %v358 = vpop.f32.mrb[0].mxu0
  %v359 = vadd.f32 %v304, %v358
  %v360 = vpop.f32.mrb[0].mxu0
  %v361 = vpop.f32.mrb[0].mxu0
  %v362 = vadd.f32 %v304, %v361
  %v363 = vpop.f32.mrb[0].mxu0
  %364 = vmatprep.mubr.bf16.mxu0 0
  %365 = vmatmul.mubr.bf16.gmra.mrb[0].mxu0 %v322
  %v366 = vpop.f32.mrb[0].mxu0
  %v367 = vadd.f32 %v304, %v366
  %v368 = vpop.f32.mrb[0].mxu0
  %v369 = vpop.f32.mrb[0].mxu0
  %v370 = vadd.f32 %v304, %v369
  %v371 = vpop.f32.mrb[0].mxu0
  %372 = vdwg.mxu0
  %v373 = vpack.c.bf16 %v362, %v359
  %v374 = vpack.c.bf16 %v370, %v367
  %v375 = vmul.f32 %v207, %v188
  %v376 = vmul.f32 %v209, %v189
  %v378 = vlaneseq
  %v379 = vshrl.u32 %v378, 7
  %v380 = vsub.s32 0, %v379
  %v381 = vrot.slane %v195, %v380
  %vm383 = vcmask 31744
  %v385 = vsel %vm383, %v375, 0
  %v388 = vsel %vm383, %v376, 0
  %vm390 = vcmask 1043456
  %v392 = vsel %vm390, %v194, 0
  %394 = vmatprep.subr.mxu0 0.0
  %395 = vmatpush1.msra.mxu0 %v392
  %396 = vmatprep.subr.mxu0 0.0
  %397 = vmatpush1.msra.mxu0 0.0
  %398 = vmatprep.subr.mxu0 0.0
  %399 = vmatpush1.msra.mxu0 0.0
  %400 = vmatprep.subr.mxu0 0.0
  %401 = vmatpush1.msra.mxu0 0.0
  %402 = vmatprep.subr.mxu0 0.0
  %403 = vmatpush1.msra.mxu0 0.0
  %404 = vmatprep.subr.mxu0 0.0
  %405 = vmatpush1.msra.mxu0 0.0
  %406 = vmatprep.subr.mxu0 0.0
  %407 = vmatpush1.msra.mxu0 0.0
  %408 = vmatprep.subr.mxu0 0.0
  %409 = vmatpush1.msra.mxu0 0.0
  %410 = vmatprep.subr.mxu0 0.0
  %411 = vmatpush1.msra.mxu0 0.0
  %412 = vmatprep.subr.mxu0 0.0
  %413 = vmatpush1.msra.mxu0 0.0
  %414 = vmatprep.subr.mxu0 0.0
  %415 = vmatpush1.msra.mxu0 0.0
  %416 = vmatprep.subr.mxu0 0.0
  %417 = vmatpush1.msra.mxu0 0.0
  %418 = vmatprep.subr.mxu0 0.0
  %419 = vmatpush1.msra.mxu0 0.0
  %420 = vmatprep.subr.mxu0 0.0
  %421 = vmatpush1.msra.mxu0 0.0
  %422 = vmatprep.subr.mxu0 0.0
  %423 = vmatpush1.msra.mxu0 0.0
  %424 = vmatprep.subr.mxu0 0.0
  %425 = vmatpush1.msra.mxu0 0.0
  %426 = vmatprep.subr.mxu0 0.0
  %427 = vmatpush1.msra.mxu0 0.0
  %428 = vmatprep.subr.mxu0 0.0
  %429 = vmatpush1.msra.mxu0 0.0
  %430 = vmatprep.subr.mxu0 0.0
  %431 = vmatpush1.msra.mxu0 0.0
  %432 = vmatprep.subr.mxu0 0.0
  %433 = vmatpush1.msra.mxu0 0.0
  %434 = vmatprep.subr.mxu0 0.0
  %435 = vmatpush1.msra.mxu0 0.0
  %436 = vmatprep.subr.mxu0 0.0
  %437 = vmatpush1.msra.mxu0 0.0
  %438 = vmatprep.subr.mxu0 0.0
  %439 = vmatpush1.msra.mxu0 0.0
  %440 = vmatprep.subr.mxu0 0.0
  %441 = vmatpush1.msra.mxu0 0.0
  %442 = vmatprep.subr.mxu0 0.0
  %443 = vmatpush1.msra.mxu0 0.0
  %444 = vmatprep.subr.mxu0 0.0
  %445 = vmatpush1.msra.mxu0 0.0
  %446 = vmatprep.subr.mxu0 0.0
  %447 = vmatpush1.msra.mxu0 0.0
  %448 = vmatprep.subr.mxu0 0.0
  %449 = vmatpush1.msra.mxu0 0.0
  %450 = vmatprep.subr.mxu0 0.0
  %451 = vmatpush1.msra.mxu0 0.0
  %452 = vmatprep.subr.mxu0 0.0
  %453 = vmatpush1.msra.mxu0 0.0
  %454 = vmatprep.subr.mxu0 0.0
  %455 = vmatpush1.msra.mxu0 0.0
  %456 = vmatprep.subr.mxu0 0.0
  %457 = vmatpush1.msra.mxu0 0.0
  %458 = vmatprep.mubr.f32.mxu0 0.0
  %459 = vmatmul.mubr.f32.gmra.mrb[0].mxu0 %v385
  %v460 = vpop.f32.mrb[0].mxu0
  %v461 = vadd.f32 %v381, %v460
  %v462 = vpop.f32.mrb[0].mxu0
  %463 = vmatprep.mubr.f32.mxu0 0.0
  %464 = vmatmul.mubr.f32.gmra.mrb[0].mxu0 %v388
  %v465 = vpop.f32.mrb[0].mxu0
  %v466 = vadd.f32 %v381, %v465
  %v467 = vpop.f32.mrb[0].mxu0
  %468 = vdwg.mxu0
  %v469 = vand.u32 2147483647, %v461
  %vm470 = vcmp.le.f32.partialorder %v469, 0.7853982
  %vm471 = vcmp.lt.s32.totalorder %v461, 0
  %v472 = vand.u32 %v461, 2139095040
  %v473 = vshrl.u32 %v472, 23
  %v474 = vsub.s32 %v473, 127
  %v475 = vand.u32 2147483647, %v461
  %v476 = vand.u32 %v475, 8388607
  %v477 = vor.u32 %v476, 8388608
  %v478 = vsub.s32 0, %v477
  %v479 = vadd.s32 %v474, 1
  %vm480 = vcmp.gt.s32.totalorder %v479, 0
  %v481 = vsel %vm480, %v479, 0
  %v482 = vshrl.u32 %v481, 5
  %v483 = vand.u32 %v481, 31
  %v484 = vsub.s32 32, %v483
  %v485 = vshrl.u32 683565275, %v484
  %v486 = vshll.u32 683565275, %v483
  %v487 = vshrl.u32 2475754826, %v484
  %v488 = vor.u32 %v486, %v487
  %v489 = vshll.u32 2475754826, %v483
  %v490 = vshrl.u32 2131351028, %v484
  %v491 = vor.u32 %v489, %v490
  %v492 = vshll.u32 2131351028, %v483
  %v493 = vshrl.u32 2102212464, %v484
  %v494 = vor.u32 %v492, %v493
  %v495 = vshll.u32 2102212464, %v483
  %v496 = vshrl.u32 920167782, %v484
  %v497 = vor.u32 %v495, %v496
  %v498 = vshll.u32 920167782, %v483
  %v499 = vshrl.u32 1326507024, %v484
  %v500 = vor.u32 %v498, %v499
  %vm501 = vcmp.lt.s32.totalorder %v482, 1
  %vm502 = vcmp.lt.s32.totalorder %v482, 2
  %vm503 = vcmp.lt.s32.totalorder %v482, 3
  %vm504 = vcmp.lt.s32.totalorder %v482, 4
  %v505 = vsel %vm501, %v485, %v488
  %v506 = vsel %vm504, %v494, 2102212464
  %v507 = vsel %vm503, %v491, %v506
  %v508 = vsel %vm502, %v505, %v507
  %v509 = vsel %vm501, %v488, %v491
  %v510 = vsel %vm504, %v497, 920167782
  %v511 = vsel %vm503, %v494, %v510
  %v512 = vsel %vm502, %v509, %v511
  %v513 = vsel %vm501, %v491, %v494
  %v514 = vsel %vm504, %v500, 1326507024
  %v515 = vsel %vm503, %v497, %v514
  %v516 = vsel %vm502, %v513, %v515
  %v517 = vshll.u32 %v477, 8
  %v518 = vmul.u32.u64.compose %v517, %v516
  %v519 = vextract.low.u32 %v518
  %v520 = vextract.high.u32 %v518
  %v521 = vmul.u32.u64.compose %v517, %v512
  %v522 = vextract.low.u32 %v521
  %v523 = vextract.high.u32 %v521
  %v524 = vmul.u32 %v517, %v508
  %v525 = vadd.s32 %v520, %v522
  %vm526 = vc.u32 %v520, %v522
  %v527 = vadd.s32 %v523, 1
  %v528 = vsel %vm526, %v527, %v523
  %v529 = vadd.s32 %v524, %v528
  %v530 = vadd.s32 %v529, 536870912
  %v531 = vshrl.u32 %v530, 30
  %v532 = vshll.u32 %v531, 30
  %v533 = vsub.s32 %v529, %v532
  %vm534 = vcmp.lt.s32.totalorder %v533, 0
  %v535 = vsub.s32 0, %v533
  %v536 = vsel %vm534, %v535, %v533
  %v537 = vclz %v536
  %v538 = vsub.s32 %v537, 2
  %vm539 = vcmp.gt.s32.totalorder 0, %v538
  %v540 = vsel %vm539, 0, %v538
  %v541 = vsub.s32 32, %v540
  %v542 = vshll.u32 %v533, %v540
  %v543 = vshrl.u32 %v525, %v541
  %v544 = vor.u32 %v542, %v543
  %v545 = vsub.s32 4294967266, %v540
  %v546 = vadd.s32 %v545, 127
  %v547 = vshll.u32 %v546, 23
  %v548 = vor.u32 4788187, %v547
  %v549 = vand.u32 2147483647, %v548
  %v551 = vcvt.s32.f32 %v544
  %v552 = vmul.f32 %v551, %v549
  %v553 = vxor.u32 %v552, 2147483648
  %v554 = vsel %vm471, %v553, %v552
  %v555 = vsub.s32 4, %v531
  %v556 = vsel %vm471, %v555, %v531
  %v557 = vsel %vm470, %v461, %v554
  %v558 = vsel %vm470, 0, %v556
  %v559 = vcosq.f32.pop %v557
  %v560 = vsinq.f32.pop %v557
  %vm561 = vweird.f32 %v461
  %v562 = vadd.s32 %v558, 3
  %v563 = vand.u32 %v562, 3
  %vm564 = vcmp.lt.s32.totalorder %v563, 2
  %vm565 = vcmp.eq.s32.totalorder %v563, 0
  %v566 = vxor.u32 %v560, 2147483648
  %v567 = vsel %vm565, %v559, %v566
  %vm568 = vcmp.eq.s32.totalorder %v563, 2
  %v569 = vxor.u32 %v559, 2147483648
  %v570 = vsel %vm568, %v569, %v560
  %v571 = vsel %vm564, %v567, %v570
  %v572 = vsel %vm561, nan, %v571
  %v573 = vand.u32 2147483647, %v466
  %vm574 = vcmp.le.f32.partialorder %v573, 0.7853982
  %vm575 = vcmp.lt.s32.totalorder %v466, 0
  %v576 = vand.u32 %v466, 2139095040
  %v577 = vshrl.u32 %v576, 23
  %v578 = vsub.s32 %v577, 127
  %v579 = vand.u32 2147483647, %v466
  %v580 = vand.u32 %v579, 8388607
  %v581 = vor.u32 %v580, 8388608
  %v582 = vsub.s32 0, %v581
  %v583 = vadd.s32 %v578, 1
  %vm584 = vcmp.gt.s32.totalorder %v583, 0
  %v585 = vsel %vm584, %v583, 0
  %v586 = vshrl.u32 %v585, 5
  %v587 = vand.u32 %v585, 31
  %v588 = vsub.s32 32, %v587
  %v589 = vshrl.u32 683565275, %v588
  %v590 = vshll.u32 683565275, %v587
  %v591 = vshrl.u32 2475754826, %v588
  %v592 = vor.u32 %v590, %v591
  %v593 = vshll.u32 2475754826, %v587
  %v594 = vshrl.u32 2131351028, %v588
  %v595 = vor.u32 %v593, %v594
  %v596 = vshll.u32 2131351028, %v587
  %v597 = vshrl.u32 2102212464, %v588
  %v598 = vor.u32 %v596, %v597
  %v599 = vshll.u32 2102212464, %v587
  %v600 = vshrl.u32 920167782, %v588
  %v601 = vor.u32 %v599, %v600
  %v602 = vshll.u32 920167782, %v587
  %v603 = vshrl.u32 1326507024, %v588
  %v604 = vor.u32 %v602, %v603
  %vm605 = vcmp.lt.s32.totalorder %v586, 1
  %vm606 = vcmp.lt.s32.totalorder %v586, 2
  %vm607 = vcmp.lt.s32.totalorder %v586, 3
  %vm608 = vcmp.lt.s32.totalorder %v586, 4
  %v609 = vsel %vm605, %v589, %v592
  %v610 = vsel %vm608, %v598, 2102212464
  %v611 = vsel %vm607, %v595, %v610
  %v612 = vsel %vm606, %v609, %v611
  %v613 = vsel %vm605, %v592, %v595
  %v614 = vsel %vm608, %v601, 920167782
  %v615 = vsel %vm607, %v598, %v614
  %v616 = vsel %vm606, %v613, %v615
  %v617 = vsel %vm605, %v595, %v598
  %v618 = vsel %vm608, %v604, 1326507024
  %v619 = vsel %vm607, %v601, %v618
  %v620 = vsel %vm606, %v617, %v619
  %v621 = vshll.u32 %v581, 8
  %v622 = vmul.u32.u64.compose %v621, %v620
  %v623 = vextract.low.u32 %v622
  %v624 = vextract.high.u32 %v622
  %v625 = vmul.u32.u64.compose %v621, %v616
  %v626 = vextract.low.u32 %v625
  %v627 = vextract.high.u32 %v625
  %v628 = vmul.u32 %v621, %v612
  %v629 = vadd.s32 %v624, %v626
  %vm630 = vc.u32 %v624, %v626
  %v631 = vadd.s32 %v627, 1
  %v632 = vsel %vm630, %v631, %v627
  %v633 = vadd.s32 %v628, %v632
  %v634 = vadd.s32 %v633, 536870912
  %v635 = vshrl.u32 %v634, 30
  %v636 = vshll.u32 %v635, 30
  %v637 = vsub.s32 %v633, %v636
  %vm638 = vcmp.lt.s32.totalorder %v637, 0
  %v639 = vsub.s32 0, %v637
  %v640 = vsel %vm638, %v639, %v637
  %v641 = vclz %v640
  %v642 = vsub.s32 %v641, 2
  %vm643 = vcmp.gt.s32.totalorder 0, %v642
  %v644 = vsel %vm643, 0, %v642
  %v645 = vsub.s32 32, %v644
  %v646 = vshll.u32 %v637, %v644
  %v647 = vshrl.u32 %v629, %v645
  %v648 = vor.u32 %v646, %v647
  %v649 = vsub.s32 4294967266, %v644
  %v650 = vadd.s32 %v649, 127
  %v651 = vshll.u32 %v650, 23
  %v652 = vor.u32 4788187, %v651
  %v653 = vand.u32 2147483647, %v652
  %v655 = vcvt.s32.f32 %v648
  %v656 = vmul.f32 %v655, %v653
  %v657 = vxor.u32 %v656, 2147483648
  %v658 = vsel %vm575, %v657, %v656
  %v659 = vsub.s32 4, %v635
  %v660 = vsel %vm575, %v659, %v635
  %v661 = vsel %vm574, %v466, %v658
  %v662 = vsel %vm574, 0, %v660
  %v663 = vcosq.f32.pop %v661
  %v664 = vsinq.f32.pop %v661
  %vm665 = vweird.f32 %v466
  %v666 = vadd.s32 %v662, 3
  %v667 = vand.u32 %v666, 3
  %vm668 = vcmp.lt.s32.totalorder %v667, 2
  %vm669 = vcmp.eq.s32.totalorder %v667, 0
  %v670 = vxor.u32 %v664, 2147483648
  %v671 = vsel %vm669, %v663, %v670
  %vm672 = vcmp.eq.s32.totalorder %v667, 2
  %v673 = vxor.u32 %v663, 2147483648
  %v674 = vsel %vm672, %v673, %v664
  %v675 = vsel %vm668, %v671, %v674
  %v676 = vsel %vm665, nan, %v675
  %v677 = vld [vmem:[%s19] sm:$0xf]
  %v678 = vld [vmem:[%s19 + $0x4] sm:$0xf]
  %v679 = vld [vmem:[%s19 + $0x8] sm:$0xf]
  %v680 = vld [vmem:[%s19 + $0xc] sm:$0xf]
  %v681 = vld [vmem:[%s19 + $0x10] sm:$0xf]
  %v682 = vld [vmem:[%s19 + $0x14] sm:$0xf]
  %v683 = vld [vmem:[%s19 + $0x18] sm:$0xf]
  %v684 = vld [vmem:[%s19 + $0x1c] sm:$0xf]
  %v685 = vld [vmem:[%s21] sm:$0x1]
  %v686 = vpack.c.bf16 %v676, %v572
  %v688 = vlaneseq
  %v689 = vshrl.u32 %v688, 7
  %v690 = vsub.s32 0, %v689
  %v691 = vrot.slane %v685, %v690
  %v701 = vunpack.c.l.b16 %v677
  %v702 = vunpack.c.l.b16 %v678
  %v703 = vunpack.c.l.b16 %v679
  %v704 = vunpack.c.l.b16 %v680
  %v705 = vunpack.c.l.b16 %v681
  %v706 = vunpack.c.l.b16 %v682
  %v707 = vunpack.c.l.b16 %v683
  %v708 = vunpack.c.l.b16 %v684
  %v709 = vpack.c.b16 %v702, %v701
  %v710 = vpack.c.b16 %v704, %v703
  %v711 = vpack.c.b16 %v706, %v705
  %v712 = vpack.c.b16 %v708, %v707
  %vm717 = vcmask 523264
  %v719 = vsel %vm717, %v686, 0
  %721 = vmatprep.subr.bf16.mxu0 0
  %722 = vmatpush1.bf16.msra.mxu0 %v709
  %723 = vmatprep.subr.bf16.mxu0 0
  %724 = vmatpush1.bf16.msra.mxu0 %v710
  %725 = vmatprep.subr.bf16.mxu0 0
  %726 = vmatpush1.bf16.msra.mxu0 %v711
  %727 = vmatprep.subr.bf16.mxu0 0
  %728 = vmatpush1.bf16.msra.mxu0 %v712
  %729 = vmatprep.subr.bf16.mxu0 0
  %730 = vmatpush1.bf16.msra.mxu0 0
  %731 = vmatprep.subr.bf16.mxu0 0
  %732 = vmatpush1.bf16.msra.mxu0 0
  %733 = vmatprep.subr.bf16.mxu0 0
  %734 = vmatpush1.bf16.msra.mxu0 0
  %735 = vmatprep.subr.bf16.mxu0 0
  %736 = vmatpush1.bf16.msra.mxu0 0
  %737 = vmatprep.subr.bf16.mxu0 0
  %738 = vmatpush1.bf16.msra.mxu0 0
  %739 = vmatprep.subr.bf16.mxu0 0
  %740 = vmatpush1.bf16.msra.mxu0 0
  %741 = vmatprep.subr.bf16.mxu0 0
  %742 = vmatpush1.bf16.msra.mxu0 0
  %743 = vmatprep.subr.bf16.mxu0 0
  %744 = vmatpush1.bf16.msra.mxu0 0
  %745 = vmatprep.subr.bf16.mxu0 0
  %746 = vmatpush1.bf16.msra.mxu0 0
  %747 = vmatprep.subr.bf16.mxu0 0
  %748 = vmatpush1.bf16.msra.mxu0 0
  %749 = vmatprep.subr.bf16.mxu0 0
  %750 = vmatpush1.bf16.msra.mxu0 0
  %751 = vmatprep.subr.bf16.mxu0 0
  %752 = vmatpush1.bf16.msra.mxu0 0
  %753 = vmatprep.mubr.bf16.mxu0 0
  %754 = vmatmul.mubr.bf16.gmra.mrb[0].mxu0 %v719
  %v755 = vpop.f32.mrb[0].mxu0
  %v756 = vadd.f32 %v691, %v755
  %v757 = vpop.f32.mrb[0].mxu0
  %v758 = vpop.f32.mrb[0].mxu0
  %v759 = vadd.f32 %v691, %v758
  %v760 = vpop.f32.mrb[0].mxu0
  %761 = vdwg.mxu0
  %v762 = vmax.f32 %v756, 0.0
  %v763 = vmax.f32 %v759, 0.0
  %v764 = vld [vmem:[%s23] sm:$0xf]
  %v765 = vld [vmem:[%s23 + $0x4] sm:$0xf]
  %v766 = vld [vmem:[%s23 + $0x8] sm:$0xf]
  %v767 = vld [vmem:[%s23 + $0xc] sm:$0xf]
  %v768 = vld [vmem:[%s25] sm:$0x1]
  %v769 = vpack.c.bf16 %v763, %v762
  %v771 = vlaneseq
  %v772 = vshrl.u32 %v771, 7
  %v773 = vsub.s32 0, %v772
  %v774 = vrot.slane %v768, %v773
  %v780 = vunpack.c.l.b16 %v764
  %v781 = vunpack.c.l.b16 %v765
  %v782 = vunpack.c.l.b16 %v766
  %v783 = vunpack.c.l.b16 %v767
  %v784 = vpack.c.b16 %v781, %v780
  %v785 = vpack.c.b16 %v783, %v782
  %v789 = vsel %vm235, %v769, 0
  %791 = vmatprep.subr.bf16.mxu0 0
  %792 = vmatpush1.bf16.msra.mxu0 %v784
  %793 = vmatprep.subr.bf16.mxu0 0
  %794 = vmatpush1.bf16.msra.mxu0 %v785
  %795 = vmatprep.subr.bf16.mxu0 0
  %796 = vmatpush1.bf16.msra.mxu0 0
  %797 = vmatprep.subr.bf16.mxu0 0
  %798 = vmatpush1.bf16.msra.mxu0 0
  %799 = vmatprep.subr.bf16.mxu0 0
  %800 = vmatpush1.bf16.msra.mxu0 0
  %801 = vmatprep.subr.bf16.mxu0 0
  %802 = vmatpush1.bf16.msra.mxu0 0
  %803 = vmatprep.subr.bf16.mxu0 0
  %804 = vmatpush1.bf16.msra.mxu0 0
  %805 = vmatprep.subr.bf16.mxu0 0
  %806 = vmatpush1.bf16.msra.mxu0 0
  %807 = vmatprep.subr.bf16.mxu0 0
  %808 = vmatpush1.bf16.msra.mxu0 0
  %809 = vmatprep.subr.bf16.mxu0 0
  %810 = vmatpush1.bf16.msra.mxu0 0
  %811 = vmatprep.subr.bf16.mxu0 0
  %812 = vmatpush1.bf16.msra.mxu0 0
  %813 = vmatprep.subr.bf16.mxu0 0
  %814 = vmatpush1.bf16.msra.mxu0 0
  %815 = vmatprep.subr.bf16.mxu0 0
  %816 = vmatpush1.bf16.msra.mxu0 0
  %817 = vmatprep.subr.bf16.mxu0 0
  %818 = vmatpush1.bf16.msra.mxu0 0
  %819 = vmatprep.subr.bf16.mxu0 0
  %820 = vmatpush1.bf16.msra.mxu0 0
  %821 = vmatprep.subr.bf16.mxu0 0
  %822 = vmatpush1.bf16.msra.mxu0 0
  %823 = vmatprep.mubr.bf16.mxu0 0
  %824 = vmatmul.mubr.bf16.gmra.mrb[0].mxu0 %v789
  %v825 = vpop.f32.mrb[0].mxu0
  %v826 = vadd.f32 %v774, %v825
  %v827 = vpop.f32.mrb[0].mxu0
  %v828 = vpop.f32.mrb[0].mxu0
  %v829 = vadd.f32 %v774, %v828
  %v830 = vpop.f32.mrb[0].mxu0
  %831 = vdwg.mxu0
  %v832 = vadd.f32 %v174, %v826
  %v833 = vadd.f32 %v175, %v829
  %v834 = vld [vmem:[%s27] sm:$0xf]
  %v835 = vld [vmem:[%s27 + $0x4] sm:$0xf]
  %v836 = vld [vmem:[%s27 + $0x8] sm:$0xf]
  %v837 = vld [vmem:[%s27 + $0xc] sm:$0xf]
  %v838 = vld [vmem:[%s29] sm:$0x1]
  %v839 = vpack.c.bf16 %v833, %v832
  %v841 = vlaneseq
  %v842 = vshrl.u32 %v841, 7
  %v843 = vsub.s32 0, %v842
  %v844 = vrot.slane %v838, %v843
  %v850 = vunpack.c.l.b16 %v834
  %v851 = vunpack.c.l.b16 %v835
  %v852 = vunpack.c.l.b16 %v836
  %v853 = vunpack.c.l.b16 %v837
  %v854 = vpack.c.b16 %v851, %v850
  %v855 = vpack.c.b16 %v853, %v852
  %v859 = vsel %vm235, %v839, 0
  %861 = vmatprep.subr.bf16.mxu0 0
  %862 = vmatpush1.bf16.msra.mxu0 %v854
  %863 = vmatprep.subr.bf16.mxu0 0
  %864 = vmatpush1.bf16.msra.mxu0 %v855
  %865 = vmatprep.subr.bf16.mxu0 0
  %866 = vmatpush1.bf16.msra.mxu0 0
  %867 = vmatprep.subr.bf16.mxu0 0
  %868 = vmatpush1.bf16.msra.mxu0 0
  %869 = vmatprep.subr.bf16.mxu0 0
  %870 = vmatpush1.bf16.msra.mxu0 0
  %871 = vmatprep.subr.bf16.mxu0 0
  %872 = vmatpush1.bf16.msra.mxu0 0
  %873 = vmatprep.subr.bf16.mxu0 0
  %874 = vmatpush1.bf16.msra.mxu0 0
  %875 = vmatprep.subr.bf16.mxu0 0
  %876 = vmatpush1.bf16.msra.mxu0 0
  %877 = vmatprep.subr.bf16.mxu0 0
  %878 = vmatpush1.bf16.msra.mxu0 0
  %879 = vmatprep.subr.bf16.mxu0 0
  %880 = vmatpush1.bf16.msra.mxu0 0
  %881 = vmatprep.subr.bf16.mxu0 0
  %882 = vmatpush1.bf16.msra.mxu0 0
  %883 = vmatprep.subr.bf16.mxu0 0
  %884 = vmatpush1.bf16.msra.mxu0 0
  %885 = vmatprep.subr.bf16.mxu0 0
  %886 = vmatpush1.bf16.msra.mxu0 0
  %887 = vmatprep.subr.bf16.mxu0 0
  %888 = vmatpush1.bf16.msra.mxu0 0
  %889 = vmatprep.subr.bf16.mxu0 0
  %890 = vmatpush1.bf16.msra.mxu0 0
  %891 = vmatprep.subr.bf16.mxu0 0
  %892 = vmatpush1.bf16.msra.mxu0 0
  %893 = vmatprep.mubr.bf16.mxu0 0
  %894 = vmatmul.mubr.bf16.gmra.mrb[0].mxu0 %v859
  %v895 = vpop.f32.mrb[0].mxu0
  %v896 = vadd.f32 %v844, %v895
  %v897 = vpop.f32.mrb[0].mxu0
  %v898 = vpop.f32.mrb[0].mxu0
  %v899 = vadd.f32 %v844, %v898
  %v900 = vpop.f32.mrb[0].mxu0
  %901 = vdwg.mxu0
  %v902 = vpack.c.bf16 %v899, %v896
  %v903 = vld [vmem:[%s31] sm:$0xf]
  %v904 = vld [vmem:[%s31 + $0x4] sm:$0xf]
  %v905 = vld [vmem:[%s31 + $0x8] sm:$0xf]
  %v906 = vld [vmem:[%s31 + $0xc] sm:$0xf]
  %v907 = vld [vmem:[%s33] sm:$0x1]
  %v908 = vpack.c.bf16 %v175, %v174
  %v910 = vlaneseq
  %v911 = vshrl.u32 %v910, 7
  %v912 = vsub.s32 0, %v911
  %v913 = vrot.slane %v907, %v912
  %v919 = vunpack.c.l.b16 %v903
  %v920 = vunpack.c.l.b16 %v904
  %v921 = vunpack.c.l.b16 %v905
  %v922 = vunpack.c.l.b16 %v906
  %v923 = vpack.c.b16 %v920, %v919
  %v924 = vpack.c.b16 %v922, %v921
  %v928 = vsel %vm235, %v908, 0
  %930 = vmatprep.subr.bf16.mxu0 0
  %931 = vmatpush1.bf16.msra.mxu0 %v923
  %932 = vmatprep.subr.bf16.mxu0 0
  %933 = vmatpush1.bf16.msra.mxu0 %v924
  %934 = vmatprep.subr.bf16.mxu0 0
  %935 = vmatpush1.bf16.msra.mxu0 0
  %936 = vmatprep.subr.bf16.mxu0 0
  %937 = vmatpush1.bf16.msra.mxu0 0
  %938 = vmatprep.subr.bf16.mxu0 0
  %939 = vmatpush1.bf16.msra.mxu0 0
  %940 = vmatprep.subr.bf16.mxu0 0
  %941 = vmatpush1.bf16.msra.mxu0 0
  %942 = vmatprep.subr.bf16.mxu0 0
  %943 = vmatpush1.bf16.msra.mxu0 0
  %944 = vmatprep.subr.bf16.mxu0 0
  %945 = vmatpush1.bf16.msra.mxu0 0
  %946 = vmatprep.subr.bf16.mxu0 0
  %947 = vmatpush1.bf16.msra.mxu0 0
  %948 = vmatprep.subr.bf16.mxu0 0
  %949 = vmatpush1.bf16.msra.mxu0 0
  %950 = vmatprep.subr.bf16.mxu0 0
  %951 = vmatpush1.bf16.msra.mxu0 0
  %952 = vmatprep.subr.bf16.mxu0 0
  %953 = vmatpush1.bf16.msra.mxu0 0
  %954 = vmatprep.subr.bf16.mxu0 0
  %955 = vmatpush1.bf16.msra.mxu0 0
  %956 = vmatprep.subr.bf16.mxu0 0
  %957 = vmatpush1.bf16.msra.mxu0 0
  %958 = vmatprep.subr.bf16.mxu0 0
  %959 = vmatpush1.bf16.msra.mxu0 0
  %960 = vmatprep.subr.bf16.mxu0 0
  %961 = vmatpush1.bf16.msra.mxu0 0
  %962 = vmatprep.mubr.bf16.mxu0 0
  %963 = vmatmul.mubr.bf16.gmra.mrb[0].mxu0 %v928
  %v964 = vpop.f32.mrb[0].mxu0
  %v965 = vadd.f32 %v913, %v964
  %v966 = vpop.f32.mrb[0].mxu0
  %v967 = vpop.f32.mrb[0].mxu0
  %v968 = vadd.f32 %v913, %v967
  %v969 = vpop.f32.mrb[0].mxu0
  %970 = vdwg.mxu0
  %v971 = vpack.c.bf16 %v968, %v965
  %v972 = vld [vmem:[%s37] sm:$0x1]
  %974 = vrot.lane.b32.xlu0 %v902, 96
  %v975 = vpop.permute.xlu0 %974
  %vm976 = vcmask 64512
  %v978 = vsel %vm976, %v902, 0
  %v981 = vsel %vm976, %v975, 0
  %983 = vmatprep.subr.bf16.mxu0 0
  %984 = vmatpush1.bf16.xpose.msra.mxu0 %v981
  %985 = vmatprep.subr.bf16.mxu0 0
  %986 = vmatpush1.bf16.xpose.msra.mxu0 0
  %987 = vmatprep.subr.bf16.mxu0 0
  %988 = vmatpush1.bf16.xpose.msra.mxu0 0
  %989 = vmatprep.subr.bf16.mxu0 0
  %990 = vmatpush1.bf16.xpose.msra.mxu0 0
  %991 = vmatprep.subr.bf16.mxu0 0
  %992 = vmatpush1.bf16.xpose.msra.mxu0 0
  %993 = vmatprep.subr.bf16.mxu0 0
  %994 = vmatpush1.bf16.xpose.msra.mxu0 0
  %995 = vmatprep.subr.bf16.mxu0 0
  %996 = vmatpush1.bf16.xpose.msra.mxu0 0
  %997 = vmatprep.subr.bf16.mxu0 0
  %998 = vmatpush1.bf16.xpose.msra.mxu0 0
  %999 = vmatprep.subr.bf16.mxu0 0
  %1000 = vmatpush1.bf16.xpose.msra.mxu0 0
  %1001 = vmatprep.subr.bf16.mxu0 0
  %1002 = vmatpush1.bf16.xpose.msra.mxu0 0
  %1003 = vmatprep.subr.bf16.mxu0 0
  %1004 = vmatpush1.bf16.xpose.msra.mxu0 0
  %1005 = vmatprep.subr.bf16.mxu0 0
  %1006 = vmatpush1.bf16.xpose.msra.mxu0 0
  %1007 = vmatprep.subr.bf16.mxu0 0
  %1008 = vmatpush1.bf16.xpose.msra.mxu0 0
  %1009 = vmatprep.subr.bf16.mxu0 0
  %1010 = vmatpush1.bf16.xpose.msra.mxu0 0
  %1011 = vmatprep.subr.bf16.mxu0 0
  %1012 = vmatpush1.bf16.xpose.msra.mxu0 0
  %1013 = vmatprep.subr.bf16.mxu0 0
  %1014 = vmatpush1.bf16.xpose.msra.mxu0 0
  %1015 = vmatprep.mubr.bf16.mxu0 0
  %1016 = vmatmul.mubr.bf16.gmra.mrb[0].mxu0 %v978
  %v1017 = vpop.f32.mrb[0].mxu0
  %v1018 = vadd.f32 0.0, %v1017
  %v1019 = vpop.f32.mrb[0].mxu0
  %v1020 = vpop.f32.mrb[0].mxu0
  %v1021 = vadd.f32 0.0, %v1020
  %v1022 = vpop.f32.mrb[0].mxu0
  %1023 = vdwg.mxu0
  %v1024 = vmul.f32 %v1018, 0.35355338
  %v1025 = vmul.f32 %v1021, 0.35355338
  %v1026 = vadd.f32 %v1024, %v190
  %v1027 = vadd.f32 %v1025, %v191
  %vm1028 = vcmask 130048
  %v1029 = vsel %vm1028, %v1026, -inf
  %1030 = vmax.xlane.f32.xlu0 %v1029
  %v1031 = vpop.xlane.xlu0 %1030
  %v1032 = vsel %vm1028, %v1027, -inf
  %1033 = vmax.xlane.f32.xlu0 %v1032
  %v1034 = vpop.xlane.xlu0 %1033
  %v1035 = vsub.f32 %v1026, %v1031
  %v1036 = vsub.f32 %v1027, %v1034
  %v1037 = vmul.f32 %v1035, 1.442695
  %v1038 = vpow.pop %v1037
  %v1039 = vmul.f32 %v1036, 1.442695
  %v1040 = vpow.pop %v1039
  %v1041 = vsel %vm1028, %v1038, 0.0
  %1042 = vadd.xlane.f32.xlu0 %v1041
  %v1043 = vpop.xlane.xlu0 %1042
  %v1044 = vsel %vm1028, %v1040, 0.0
  %1045 = vadd.xlane.f32.xlu0 %v1044
  %v1046 = vpop.xlane.xlu0 %1045
  %v1047 = vrcp.pop %v1043
  %v1048 = vrcp.pop %v1046
  %v1049 = vmul.f32 %v1038, %v1047
  %v1050 = vmul.f32 %v1040, %v1048
  %v1051 = vpack.c.bf16 %v1050, %v1049
  %v1053 = vsel %vm1028, %v1051, 0
  %1055 = vmatprep.subr.bf16.mxu0 0
  %1056 = vmatpush1.bf16.msra.mxu0 %v971
  %1057 = vmatprep.subr.bf16.mxu0 0
  %1058 = vmatpush1.bf16.msra.mxu0 0
  %1059 = vmatprep.subr.bf16.mxu0 0
  %1060 = vmatpush1.bf16.msra.mxu0 0
  %1061 = vmatprep.subr.bf16.mxu0 0
  %1062 = vmatpush1.bf16.msra.mxu0 0
  %1063 = vmatprep.subr.bf16.mxu0 0
  %1064 = vmatpush1.bf16.msra.mxu0 0
  %1065 = vmatprep.subr.bf16.mxu0 0
  %1066 = vmatpush1.bf16.msra.mxu0 0
  %1067 = vmatprep.subr.bf16.mxu0 0
  %1068 = vmatpush1.bf16.msra.mxu0 0
  %1069 = vmatprep.subr.bf16.mxu0 0
  %1070 = vmatpush1.bf16.msra.mxu0 0
  %1071 = vmatprep.subr.bf16.mxu0 0
  %1072 = vmatpush1.bf16.msra.mxu0 0
  %1073 = vmatprep.subr.bf16.mxu0 0
  %1074 = vmatpush1.bf16.msra.mxu0 0
  %1075 = vmatprep.subr.bf16.mxu0 0
  %1076 = vmatpush1.bf16.msra.mxu0 0
  %1077 = vmatprep.subr.bf16.mxu0 0
  %1078 = vmatpush1.bf16.msra.mxu0 0
  %1079 = vmatprep.subr.bf16.mxu0 0
  %1080 = vmatpush1.bf16.msra.mxu0 0
  %1081 = vmatprep.subr.bf16.mxu0 0
  %1082 = vmatpush1.bf16.msra.mxu0 0
  %1083 = vmatprep.subr.bf16.mxu0 0
  %1084 = vmatpush1.bf16.msra.mxu0 0
  %1085 = vmatprep.subr.bf16.mxu0 0
  %1086 = vmatpush1.bf16.msra.mxu0 0
  %1087 = vmatprep.mubr.bf16.mxu0 0
  %1088 = vmatmul.mubr.bf16.gmra.mrb[0].mxu0 %v1053
  %v1089 = vpop.f32.mrb[0].mxu0
  %v1090 = vadd.f32 0.0, %v1089
  %v1091 = vpop.f32.mrb[0].mxu0
  %v1092 = vpop.f32.mrb[0].mxu0
  %v1093 = vadd.f32 0.0, %v1092
  %v1094 = vpop.f32.mrb[0].mxu0
  %1095 = vdwg.mxu0
  %v1096 = vpack.c.bf16 %v1093, %v1090
  %v1097 = vld [vmem:[%s35] sm:$0xf]
  %1098 = vrot.lane.b32.xlu0 %v902, 120
  %v1099 = vpop.permute.xlu0 %1098
  %1100 = vrot.lane.b32.xlu0 %v902, 88
  %v1101 = vpop.permute.xlu0 %1100
  %v1103 = vsel %vm976, %v1099, 0
  %v1106 = vsel %vm976, %v1101, 0
  %1108 = vmatprep.subr.bf16.mxu0 0
  %1109 = vmatpush1.bf16.xpose.msra.mxu0 %v1106
  %1110 = vmatprep.subr.bf16.mxu0 0
  %1111 = vmatpush1.bf16.xpose.msra.mxu0 0
  %1112 = vmatprep.subr.bf16.mxu0 0
  %1113 = vmatpush1.bf16.xpose.msra.mxu0 0
  %1114 = vmatprep.subr.bf16.mxu0 0
  %1115 = vmatpush1.bf16.xpose.msra.mxu0 0
  %1116 = vmatprep.subr.bf16.mxu0 0
  %1117 = vmatpush1.bf16.xpose.msra.mxu0 0
  %1118 = vmatprep.subr.bf16.mxu0 0
  %1119 = vmatpush1.bf16.xpose.msra.mxu0 0
  %1120 = vmatprep.subr.bf16.mxu0 0
  %1121 = vmatpush1.bf16.xpose.msra.mxu0 0
  %1122 = vmatprep.subr.bf16.mxu0 0
  %1123 = vmatpush1.bf16.xpose.msra.mxu0 0
  %1124 = vmatprep.subr.bf16.mxu0 0
  %1125 = vmatpush1.bf16.xpose.msra.mxu0 0
  %1126 = vmatprep.subr.bf16.mxu0 0
  %1127 = vmatpush1.bf16.xpose.msra.mxu0 0
  %1128 = vmatprep.subr.bf16.mxu0 0
  %1129 = vmatpush1.bf16.xpose.msra.mxu0 0
  %1130 = vmatprep.subr.bf16.mxu0 0
  %1131 = vmatpush1.bf16.xpose.msra.mxu0 0
  %1132 = vmatprep.subr.bf16.mxu0 0
  %1133 = vmatpush1.bf16.xpose.msra.mxu0 0
  %1134 = vmatprep.subr.bf16.mxu0 0
  %1135 = vmatpush1.bf16.xpose.msra.mxu0 0
  %1136 = vmatprep.subr.bf16.mxu0 0
  %1137 = vmatpush1.bf16.xpose.msra.mxu0 0
  %1138 = vmatprep.subr.bf16.mxu0 0
  %1139 = vmatpush1.bf16.xpose.msra.mxu0 0
  %1140 = vmatprep.mubr.bf16.mxu0 0
  %1141 = vmatmul.mubr.bf16.gmra.mrb[0].mxu0 %v1103
  %v1142 = vpop.f32.mrb[0].mxu0
  %v1143 = vadd.f32 0.0, %v1142
  %v1144 = vpop.f32.mrb[0].mxu0
  %v1145 = vpop.f32.mrb[0].mxu0
  %v1146 = vadd.f32 0.0, %v1145
  %v1147 = vpop.f32.mrb[0].mxu0
  %1148 = vdwg.mxu0
  %v1149 = vmul.f32 %v1143, 0.35355338
  %v1150 = vmul.f32 %v1146, 0.35355338
  %v1151 = vadd.f32 %v1149, %v190
  %v1152 = vadd.f32 %v1150, %v191
  %v1153 = vsel %vm1028, %v1151, -inf
  %1154 = vmax.xlane.f32.xlu0 %v1153
  %v1155 = vpop.xlane.xlu0 %1154
  %v1156 = vsel %vm1028, %v1152, -inf
  %1157 = vmax.xlane.f32.xlu0 %v1156
  %v1158 = vpop.xlane.xlu0 %1157
  %v1159 = vsub.f32 %v1151, %v1155
  %v1160 = vsub.f32 %v1152, %v1158
  %v1161 = vmul.f32 %v1159, 1.442695
  %v1162 = vpow.pop %v1161
  %v1163 = vmul.f32 %v1160, 1.442695
  %v1164 = vpow.pop %v1163
  %v1165 = vsel %vm1028, %v1162, 0.0
  %1166 = vadd.xlane.f32.xlu0 %v1165
  %v1167 = vpop.xlane.xlu0 %1166
  %v1168 = vsel %vm1028, %v1164, 0.0
  %1169 = vadd.xlane.f32.xlu0 %v1168
  %v1170 = vpop.xlane.xlu0 %1169
  %v1171 = vrcp.pop %v1167
  %v1172 = vrcp.pop %v1170
  %v1173 = vmul.f32 %v1162, %v1171
  %v1174 = vmul.f32 %v1164, %v1172
  %v1175 = vpack.c.bf16 %v1174, %v1173
  %1177 = vrot.lane.b32.xlu0 %v971, 120
  %v1178 = vpop.permute.xlu0 %1177
  %v1181 = vsel %vm1028, %v1175, 0
  %1183 = vmatprep.subr.bf16.mxu0 0
  %1184 = vmatpush1.bf16.msra.mxu0 %v1178
  %1185 = vmatprep.subr.bf16.mxu0 0
  %1186 = vmatpush1.bf16.msra.mxu0 0
  %1187 = vmatprep.subr.bf16.mxu0 0
  %1188 = vmatpush1.bf16.msra.mxu0 0
  %1189 = vmatprep.subr.bf16.mxu0 0
  %1190 = vmatpush1.bf16.msra.mxu0 0
  %1191 = vmatprep.subr.bf16.mxu0 0
  %1192 = vmatpush1.bf16.msra.mxu0 0
  %1193 = vmatprep.subr.bf16.mxu0 0
  %1194 = vmatpush1.bf16.msra.mxu0 0
  %1195 = vmatprep.subr.bf16.mxu0 0
  %1196 = vmatpush1.bf16.msra.mxu0 0
  %1197 = vmatprep.subr.bf16.mxu0 0
  %1198 = vmatpush1.bf16.msra.mxu0 0
  %1199 = vmatprep.subr.bf16.mxu0 0
  %1200 = vmatpush1.bf16.msra.mxu0 0
  %1201 = vmatprep.subr.bf16.mxu0 0
  %1202 = vmatpush1.bf16.msra.mxu0 0
  %1203 = vmatprep.subr.bf16.mxu0 0
  %1204 = vmatpush1.bf16.msra.mxu0 0
  %1205 = vmatprep.subr.bf16.mxu0 0
  %1206 = vmatpush1.bf16.msra.mxu0 0
  %1207 = vmatprep.subr.bf16.mxu0 0
  %1208 = vmatpush1.bf16.msra.mxu0 0
  %1209 = vmatprep.subr.bf16.mxu0 0
  %1210 = vmatpush1.bf16.msra.mxu0 0
  %1211 = vmatprep.subr.bf16.mxu0 0
  %1212 = vmatpush1.bf16.msra.mxu0 0
  %1213 = vmatprep.subr.bf16.mxu0 0
  %1214 = vmatpush1.bf16.msra.mxu0 0
  %1215 = vmatprep.mubr.bf16.mxu0 0
  %1216 = vmatmul.mubr.bf16.gmra.mrb[0].mxu0 %v1181
  %v1217 = vpop.f32.mrb[0].mxu0
  %v1218 = vadd.f32 0.0, %v1217
  %v1219 = vpop.f32.mrb[0].mxu0
  %v1220 = vpop.f32.mrb[0].mxu0
  %v1221 = vadd.f32 0.0, %v1220
  %v1222 = vpop.f32.mrb[0].mxu0
  %1223 = vdwg.mxu0
  %v1224 = vpack.c.bf16 %v1221, %v1218
  %s1225 = scalar_lea.vmem %s35, 4
  %v1226 = vld [vmem:[%s1225] sm:$0xf]
  %v1228 = vsel %vm976, %v1224, 0
  %v1231 = vsel %vm390, %v1226, 0
  %1233 = vmatprep.subr.bf16.mxu0 0
  %1234 = vmatpush1.bf16.msra.mxu0 %v1231
  %1235 = vmatprep.subr.bf16.mxu0 0
  %1236 = vmatpush1.bf16.msra.mxu0 0
  %1237 = vmatprep.subr.bf16.mxu0 0
  %1238 = vmatpush1.bf16.msra.mxu0 0
  %1239 = vmatprep.subr.bf16.mxu0 0
  %1240 = vmatpush1.bf16.msra.mxu0 0
  %1241 = vmatprep.subr.bf16.mxu0 0
  %1242 = vmatpush1.bf16.msra.mxu0 0
  %1243 = vmatprep.subr.bf16.mxu0 0
  %1244 = vmatpush1.bf16.msra.mxu0 0
  %1245 = vmatprep.subr.bf16.mxu0 0
  %1246 = vmatpush1.bf16.msra.mxu0 0
  %1247 = vmatprep.subr.bf16.mxu0 0
  %1248 = vmatpush1.bf16.msra.mxu0 0
  %1249 = vmatprep.subr.bf16.mxu0 0
  %1250 = vmatpush1.bf16.msra.mxu0 0
  %1251 = vmatprep.subr.bf16.mxu0 0
  %1252 = vmatpush1.bf16.msra.mxu0 0
  %1253 = vmatprep.subr.bf16.mxu0 0
  %1254 = vmatpush1.bf16.msra.mxu0 0
  %1255 = vmatprep.subr.bf16.mxu0 0
  %1256 = vmatpush1.bf16.msra.mxu0 0
  %1257 = vmatprep.subr.bf16.mxu0 0
  %1258 = vmatpush1.bf16.msra.mxu0 0
  %1259 = vmatprep.subr.bf16.mxu0 0
  %1260 = vmatpush1.bf16.msra.mxu0 0
  %1261 = vmatprep.subr.bf16.mxu0 0
  %1262 = vmatpush1.bf16.msra.mxu0 0
  %1263 = vmatprep.subr.bf16.mxu0 0
  %1264 = vmatpush1.bf16.msra.mxu0 0
  %1265 = vmatprep.mubr.bf16.mxu0 0
  %1266 = vmatmul.mubr.bf16.gmra.mrb[0].mxu0 %v1228
  %v1267 = vpop.f32.mrb[0].mxu0
  %v1268 = vadd.f32 0.0, %v1267
  %v1269 = vpop.f32.mrb[0].mxu0
  %v1270 = vpop.f32.mrb[0].mxu0
  %v1271 = vadd.f32 0.0, %v1270
  %v1272 = vpop.f32.mrb[0].mxu0
  %1273 = vdwg.mxu0
  %v1275 = vsel %vm976, %v1096, 0
  %v1278 = vsel %vm390, %v1097, 0
  %1280 = vmatprep.subr.bf16.mxu0 0
  %1281 = vmatpush1.bf16.msra.mxu0 %v1278
  %1282 = vmatprep.subr.bf16.mxu0 0
  %1283 = vmatpush1.bf16.msra.mxu0 0
  %1284 = vmatprep.subr.bf16.mxu0 0
  %1285 = vmatpush1.bf16.msra.mxu0 0
  %1286 = vmatprep.subr.bf16.mxu0 0
  %1287 = vmatpush1.bf16.msra.mxu0 0
  %1288 = vmatprep.subr.bf16.mxu0 0
  %1289 = vmatpush1.bf16.msra.mxu0 0
  %1290 = vmatprep.subr.bf16.mxu0 0
  %1291 = vmatpush1.bf16.msra.mxu0 0
  %1292 = vmatprep.subr.bf16.mxu0 0
  %1293 = vmatpush1.bf16.msra.mxu0 0
  %1294 = vmatprep.subr.bf16.mxu0 0
  %1295 = vmatpush1.bf16.msra.mxu0 0
  %1296 = vmatprep.subr.bf16.mxu0 0
  %1297 = vmatpush1.bf16.msra.mxu0 0
  %1298 = vmatprep.subr.bf16.mxu0 0
  %1299 = vmatpush1.bf16.msra.mxu0 0
  %1300 = vmatprep.subr.bf16.mxu0 0
  %1301 = vmatpush1.bf16.msra.mxu0 0
  %1302 = vmatprep.subr.bf16.mxu0 0
  %1303 = vmatpush1.bf16.msra.mxu0 0
  %1304 = vmatprep.subr.bf16.mxu0 0
  %1305 = vmatpush1.bf16.msra.mxu0 0
  %1306 = vmatprep.subr.bf16.mxu0 0
  %1307 = vmatpush1.bf16.msra.mxu0 0
  %1308 = vmatprep.subr.bf16.mxu0 0
  %1309 = vmatpush1.bf16.msra.mxu0 0
  %1310 = vmatprep.subr.bf16.mxu0 0
  %1311 = vmatpush1.bf16.msra.mxu0 0
  %1312 = vmatprep.mubr.bf16.mxu0 0
  %1313 = vmatmul.mubr.bf16.gmra.mrb[0].mxu0 %v1275
  %v1314 = vpop.f32.mrb[0].mxu0
  %v1315 = vadd.f32 %v1268, %v1314
  %v1316 = vpop.f32.mrb[0].mxu0
  %v1317 = vpop.f32.mrb[0].mxu0
  %v1318 = vadd.f32 %v1271, %v1317
  %v1319 = vpop.f32.mrb[0].mxu0
  %1320 = vdwg.mxu0
  %1321 = vrot.lane.b32.xlu0 %v902, 112
  %v1322 = vpop.permute.xlu0 %1321
  %1323 = vrot.lane.b32.xlu0 %v902, 80
  %v1324 = vpop.permute.xlu0 %1323
  %v1326 = vsel %vm976, %v1322, 0
  %v1329 = vsel %vm976, %v1324, 0
  %1331 = vmatprep.subr.bf16.mxu0 0
  %1332 = vmatpush1.bf16.xpose.msra.mxu0 %v1329
  %1333 = vmatprep.subr.bf16.mxu0 0
  %1334 = vmatpush1.bf16.xpose.msra.mxu0 0
  %1335 = vmatprep.subr.bf16.mxu0 0
  %1336 = vmatpush1.bf16.xpose.msra.mxu0 0
  %1337 = vmatprep.subr.bf16.mxu0 0
  %1338 = vmatpush1.bf16.xpose.msra.mxu0 0
  %1339 = vmatprep.subr.bf16.mxu0 0
  %1340 = vmatpush1.bf16.xpose.msra.mxu0 0
  %1341 = vmatprep.subr.bf16.mxu0 0
  %1342 = vmatpush1.bf16.xpose.msra.mxu0 0
  %1343 = vmatprep.subr.bf16.mxu0 0
  %1344 = vmatpush1.bf16.xpose.msra.mxu0 0
  %1345 = vmatprep.subr.bf16.mxu0 0
  %1346 = vmatpush1.bf16.xpose.msra.mxu0 0
  %1347 = vmatprep.subr.bf16.mxu0 0
  %1348 = vmatpush1.bf16.xpose.msra.mxu0 0
  %1349 = vmatprep.subr.bf16.mxu0 0
  %1350 = vmatpush1.bf16.xpose.msra.mxu0 0
  %1351 = vmatprep.subr.bf16.mxu0 0
  %1352 = vmatpush1.bf16.xpose.msra.mxu0 0
  %1353 = vmatprep.subr.bf16.mxu0 0
  %1354 = vmatpush1.bf16.xpose.msra.mxu0 0
  %1355 = vmatprep.subr.bf16.mxu0 0
  %1356 = vmatpush1.bf16.xpose.msra.mxu0 0
  %1357 = vmatprep.subr.bf16.mxu0 0
  %1358 = vmatpush1.bf16.xpose.msra.mxu0 0
  %1359 = vmatprep.subr.bf16.mxu0 0
  %1360 = vmatpush1.bf16.xpose.msra.mxu0 0
  %1361 = vmatprep.subr.bf16.mxu0 0
  %1362 = vmatpush1.bf16.xpose.msra.mxu0 0
  %1363 = vmatprep.mubr.bf16.mxu0 0
  %1364 = vmatmul.mubr.bf16.gmra.mrb[0].mxu0 %v1326
  %v1365 = vpop.f32.mrb[0].mxu0
  %v1366 = vadd.f32 0.0, %v1365
  %v1367 = vpop.f32.mrb[0].mxu0
  %v1368 = vpop.f32.mrb[0].mxu0
  %v1369 = vadd.f32 0.0, %v1368
  %v1370 = vpop.f32.mrb[0].mxu0
  %1371 = vdwg.mxu0
  %v1372 = vmul.f32 %v1366, 0.35355338
  %v1373 = vmul.f32 %v1369, 0.35355338
  %v1374 = vadd.f32 %v1372, %v190
  %v1375 = vadd.f32 %v1373, %v191
  %v1376 = vsel %vm1028, %v1374, -inf
  %1377 = vmax.xlane.f32.xlu0 %v1376
  %v1378 = vpop.xlane.xlu0 %1377
  %v1379 = vsel %vm1028, %v1375, -inf
  %1380 = vmax.xlane.f32.xlu0 %v1379
  %v1381 = vpop.xlane.xlu0 %1380
  %v1382 = vsub.f32 %v1374, %v1378
  %v1383 = vsub.f32 %v1375, %v1381
  %v1384 = vmul.f32 %v1382, 1.442695
  %v1385 = vpow.pop %v1384
  %v1386 = vmul.f32 %v1383, 1.442695
  %v1387 = vpow.pop %v1386
  %v1388 = vsel %vm1028, %v1385, 0.0
  %1389 = vadd.xlane.f32.xlu0 %v1388
  %v1390 = vpop.xlane.xlu0 %1389
  %v1391 = vsel %vm1028, %v1387, 0.0
  %1392 = vadd.xlane.f32.xlu0 %v1391
  %v1393 = vpop.xlane.xlu0 %1392
  %v1394 = vrcp.pop %v1390
  %v1395 = vrcp.pop %v1393
  %v1396 = vmul.f32 %v1385, %v1394
  %v1397 = vmul.f32 %v1387, %v1395
  %v1398 = vpack.c.bf16 %v1397, %v1396
  %1399 = vrot.lane.b32.xlu0 %v971, 112
  %v1400 = vpop.permute.xlu0 %1399
  %v1403 = vsel %vm1028, %v1398, 0
  %1405 = vmatprep.subr.bf16.mxu0 0
  %1406 = vmatpush1.bf16.msra.mxu0 %v1400
  %1407 = vmatprep.subr.bf16.mxu0 0
  %1408 = vmatpush1.bf16.msra.mxu0 0
  %1409 = vmatprep.subr.bf16.mxu0 0
  %1410 = vmatpush1.bf16.msra.mxu0 0
  %1411 = vmatprep.subr.bf16.mxu0 0
  %1412 = vmatpush1.bf16.msra.mxu0 0
  %1413 = vmatprep.subr.bf16.mxu0 0
  %1414 = vmatpush1.bf16.msra.mxu0 0
  %1415 = vmatprep.subr.bf16.mxu0 0
  %1416 = vmatpush1.bf16.msra.mxu0 0
  %1417 = vmatprep.subr.bf16.mxu0 0
  %1418 = vmatpush1.bf16.msra.mxu0 0
  %1419 = vmatprep.subr.bf16.mxu0 0
  %1420 = vmatpush1.bf16.msra.mxu0 0
  %1421 = vmatprep.subr.bf16.mxu0 0
  %1422 = vmatpush1.bf16.msra.mxu0 0
  %1423 = vmatprep.subr.bf16.mxu0 0
  %1424 = vmatpush1.bf16.msra.mxu0 0
  %1425 = vmatprep.subr.bf16.mxu0 0
  %1426 = vmatpush1.bf16.msra.mxu0 0
  %1427 = vmatprep.subr.bf16.mxu0 0
  %1428 = vmatpush1.bf16.msra.mxu0 0
  %1429 = vmatprep.subr.bf16.mxu0 0
  %1430 = vmatpush1.bf16.msra.mxu0 0
  %1431 = vmatprep.subr.bf16.mxu0 0
  %1432 = vmatpush1.bf16.msra.mxu0 0
  %1433 = vmatprep.subr.bf16.mxu0 0
  %1434 = vmatpush1.bf16.msra.mxu0 0
  %1435 = vmatprep.subr.bf16.mxu0 0
  %1436 = vmatpush1.bf16.msra.mxu0 0
  %1437 = vmatprep.mubr.bf16.mxu0 0
  %1438 = vmatmul.mubr.bf16.gmra.mrb[0].mxu0 %v1403
  %v1439 = vpop.f32.mrb[0].mxu0
  %v1440 = vadd.f32 0.0, %v1439
  %v1441 = vpop.f32.mrb[0].mxu0
  %v1442 = vpop.f32.mrb[0].mxu0
  %v1443 = vadd.f32 0.0, %v1442
  %v1444 = vpop.f32.mrb[0].mxu0
  %1445 = vdwg.mxu0
  %v1446 = vpack.c.bf16 %v1443, %v1440
  %s1447 = scalar_lea.vmem %s35, 8
  %v1448 = vld [vmem:[%s1447] sm:$0xf]
  %v1450 = vsel %vm976, %v1446, 0
  %v1453 = vsel %vm390, %v1448, 0
  %1455 = vmatprep.subr.bf16.mxu0 0
  %1456 = vmatpush1.bf16.msra.mxu0 %v1453
  %1457 = vmatprep.subr.bf16.mxu0 0
  %1458 = vmatpush1.bf16.msra.mxu0 0
  %1459 = vmatprep.subr.bf16.mxu0 0
  %1460 = vmatpush1.bf16.msra.mxu0 0
  %1461 = vmatprep.subr.bf16.mxu0 0
  %1462 = vmatpush1.bf16.msra.mxu0 0
  %1463 = vmatprep.subr.bf16.mxu0 0
  %1464 = vmatpush1.bf16.msra.mxu0 0
  %1465 = vmatprep.subr.bf16.mxu0 0
  %1466 = vmatpush1.bf16.msra.mxu0 0
  %1467 = vmatprep.subr.bf16.mxu0 0
  %1468 = vmatpush1.bf16.msra.mxu0 0
  %1469 = vmatprep.subr.bf16.mxu0 0
  %1470 = vmatpush1.bf16.msra.mxu0 0
  %1471 = vmatprep.subr.bf16.mxu0 0
  %1472 = vmatpush1.bf16.msra.mxu0 0
  %1473 = vmatprep.subr.bf16.mxu0 0
  %1474 = vmatpush1.bf16.msra.mxu0 0
  %1475 = vmatprep.subr.bf16.mxu0 0
  %1476 = vmatpush1.bf16.msra.mxu0 0
  %1477 = vmatprep.subr.bf16.mxu0 0
  %1478 = vmatpush1.bf16.msra.mxu0 0
  %1479 = vmatprep.subr.bf16.mxu0 0
  %1480 = vmatpush1.bf16.msra.mxu0 0
  %1481 = vmatprep.subr.bf16.mxu0 0
  %1482 = vmatpush1.bf16.msra.mxu0 0
  %1483 = vmatprep.subr.bf16.mxu0 0
  %1484 = vmatpush1.bf16.msra.mxu0 0
  %1485 = vmatprep.subr.bf16.mxu0 0
  %1486 = vmatpush1.bf16.msra.mxu0 0
  %1487 = vmatprep.mubr.bf16.mxu0 0
  %1488 = vmatmul.mubr.bf16.gmra.mrb[0].mxu0 %v1450
  %v1489 = vpop.f32.mrb[0].mxu0
  %v1490 = vadd.f32 0.0, %v1489
  %v1491 = vpop.f32.mrb[0].mxu0
  %v1492 = vpop.f32.mrb[0].mxu0
  %v1493 = vadd.f32 0.0, %v1492
  %v1494 = vpop.f32.mrb[0].mxu0
  %1495 = vdwg.mxu0
  %v1496 = vadd.f32 %v1315, %v1490
  %v1497 = vadd.f32 %v1318, %v1493
  %1498 = vrot.lane.b32.xlu0 %v902, 104
  %v1499 = vpop.permute.xlu0 %1498
  %1500 = vrot.lane.b32.xlu0 %v902, 72
  %v1501 = vpop.permute.xlu0 %1500
  %v1503 = vsel %vm976, %v1499, 0
  %v1506 = vsel %vm976, %v1501, 0
  %1508 = vmatprep.subr.bf16.mxu0 0
  %1509 = vmatpush1.bf16.xpose.msra.mxu0 %v1506
  %1510 = vmatprep.subr.bf16.mxu0 0
  %1511 = vmatpush1.bf16.xpose.msra.mxu0 0
  %1512 = vmatprep.subr.bf16.mxu0 0
  %1513 = vmatpush1.bf16.xpose.msra.mxu0 0
  %1514 = vmatprep.subr.bf16.mxu0 0
  %1515 = vmatpush1.bf16.xpose.msra.mxu0 0
  %1516 = vmatprep.subr.bf16.mxu0 0
  %1517 = vmatpush1.bf16.xpose.msra.mxu0 0
  %1518 = vmatprep.subr.bf16.mxu0 0
  %1519 = vmatpush1.bf16.xpose.msra.mxu0 0
  %1520 = vmatprep.subr.bf16.mxu0 0
  %1521 = vmatpush1.bf16.xpose.msra.mxu0 0
  %1522 = vmatprep.subr.bf16.mxu0 0
  %1523 = vmatpush1.bf16.xpose.msra.mxu0 0
  %1524 = vmatprep.subr.bf16.mxu0 0
  %1525 = vmatpush1.bf16.xpose.msra.mxu0 0
  %1526 = vmatprep.subr.bf16.mxu0 0
  %1527 = vmatpush1.bf16.xpose.msra.mxu0 0
  %1528 = vmatprep.subr.bf16.mxu0 0
  %1529 = vmatpush1.bf16.xpose.msra.mxu0 0
  %1530 = vmatprep.subr.bf16.mxu0 0
  %1531 = vmatpush1.bf16.xpose.msra.mxu0 0
  %1532 = vmatprep.subr.bf16.mxu0 0
  %1533 = vmatpush1.bf16.xpose.msra.mxu0 0
  %1534 = vmatprep.subr.bf16.mxu0 0
  %1535 = vmatpush1.bf16.xpose.msra.mxu0 0
  %1536 = vmatprep.subr.bf16.mxu0 0
  %1537 = vmatpush1.bf16.xpose.msra.mxu0 0
  %1538 = vmatprep.subr.bf16.mxu0 0
  %1539 = vmatpush1.bf16.xpose.msra.mxu0 0
  %1540 = vmatprep.mubr.bf16.mxu0 0
  %1541 = vmatmul.mubr.bf16.gmra.mrb[0].mxu0 %v1503
  %v1542 = vpop.f32.mrb[0].mxu0
  %v1543 = vadd.f32 0.0, %v1542
  %v1544 = vpop.f32.mrb[0].mxu0
  %v1545 = vpop.f32.mrb[0].mxu0
  %v1546 = vadd.f32 0.0, %v1545
  %v1547 = vpop.f32.mrb[0].mxu0
  %1548 = vdwg.mxu0
  %v1549 = vmul.f32 %v1543, 0.35355338
  %v1550 = vmul.f32 %v1546, 0.35355338
  %v1551 = vadd.f32 %v1549, %v190
  %v1552 = vadd.f32 %v1550, %v191
  %v1553 = vsel %vm1028, %v1551, -inf
  %1554 = vmax.xlane.f32.xlu0 %v1553
  %v1555 = vpop.xlane.xlu0 %1554
  %v1556 = vsel %vm1028, %v1552, -inf
  %1557 = vmax.xlane.f32.xlu0 %v1556
  %v1558 = vpop.xlane.xlu0 %1557
  %v1559 = vsub.f32 %v1551, %v1555
  %v1560 = vsub.f32 %v1552, %v1558
  %v1561 = vmul.f32 %v1559, 1.442695
  %v1562 = vpow.pop %v1561
  %v1563 = vmul.f32 %v1560, 1.442695
  %v1564 = vpow.pop %v1563
  %v1565 = vsel %vm1028, %v1562, 0.0
  %1566 = vadd.xlane.f32.xlu0 %v1565
  %v1567 = vpop.xlane.xlu0 %1566
  %v1568 = vsel %vm1028, %v1564, 0.0
  %1569 = vadd.xlane.f32.xlu0 %v1568
  %v1570 = vpop.xlane.xlu0 %1569
  %v1571 = vrcp.pop %v1567
  %v1572 = vrcp.pop %v1570
  %v1573 = vmul.f32 %v1562, %v1571
  %v1574 = vmul.f32 %v1564, %v1572
  %v1575 = vpack.c.bf16 %v1574, %v1573
  %1576 = vrot.lane.b32.xlu0 %v971, 104
  %v1577 = vpop.permute.xlu0 %1576
  %v1580 = vsel %vm1028, %v1575, 0
  %1582 = vmatprep.subr.bf16.mxu0 0
  %1583 = vmatpush1.bf16.msra.mxu0 %v1577
  %1584 = vmatprep.subr.bf16.mxu0 0
  %1585 = vmatpush1.bf16.msra.mxu0 0
  %1586 = vmatprep.subr.bf16.mxu0 0
  %1587 = vmatpush1.bf16.msra.mxu0 0
  %1588 = vmatprep.subr.bf16.mxu0 0
  %1589 = vmatpush1.bf16.msra.mxu0 0
  %1590 = vmatprep.subr.bf16.mxu0 0
  %1591 = vmatpush1.bf16.msra.mxu0 0
  %1592 = vmatprep.subr.bf16.mxu0 0
  %1593 = vmatpush1.bf16.msra.mxu0 0
  %1594 = vmatprep.subr.bf16.mxu0 0
  %1595 = vmatpush1.bf16.msra.mxu0 0
  %1596 = vmatprep.subr.bf16.mxu0 0
  %1597 = vmatpush1.bf16.msra.mxu0 0
  %1598 = vmatprep.subr.bf16.mxu0 0
  %1599 = vmatpush1.bf16.msra.mxu0 0
  %1600 = vmatprep.subr.bf16.mxu0 0
  %1601 = vmatpush1.bf16.msra.mxu0 0
  %1602 = vmatprep.subr.bf16.mxu0 0
  %1603 = vmatpush1.bf16.msra.mxu0 0
  %1604 = vmatprep.subr.bf16.mxu0 0
  %1605 = vmatpush1.bf16.msra.mxu0 0
  %1606 = vmatprep.subr.bf16.mxu0 0
  %1607 = vmatpush1.bf16.msra.mxu0 0
  %1608 = vmatprep.subr.bf16.mxu0 0
  %1609 = vmatpush1.bf16.msra.mxu0 0
  %1610 = vmatprep.subr.bf16.mxu0 0
  %1611 = vmatpush1.bf16.msra.mxu0 0
  %1612 = vmatprep.subr.bf16.mxu0 0
  %1613 = vmatpush1.bf16.msra.mxu0 0
  %1614 = vmatprep.mubr.bf16.mxu0 0
  %1615 = vmatmul.mubr.bf16.gmra.mrb[0].mxu0 %v1580
  %v1616 = vpop.f32.mrb[0].mxu0
  %v1617 = vadd.f32 0.0, %v1616
  %v1618 = vpop.f32.mrb[0].mxu0
  %v1619 = vpop.f32.mrb[0].mxu0
  %v1620 = vadd.f32 0.0, %v1619
  %v1621 = vpop.f32.mrb[0].mxu0
  %1622 = vdwg.mxu0
  %v1623 = vpack.c.bf16 %v1620, %v1617
  %s1624 = scalar_lea.vmem %s35, 12
  %v1625 = vld [vmem:[%s1624] sm:$0xf]
  %v1627 = vsel %vm976, %v1623, 0
  %v1630 = vsel %vm390, %v1625, 0
  %1632 = vmatprep.subr.bf16.mxu0 0
  %1633 = vmatpush1.bf16.msra.mxu0 %v1630
  %1634 = vmatprep.subr.bf16.mxu0 0
  %1635 = vmatpush1.bf16.msra.mxu0 0
  %1636 = vmatprep.subr.bf16.mxu0 0
  %1637 = vmatpush1.bf16.msra.mxu0 0
  %1638 = vmatprep.subr.bf16.mxu0 0
  %1639 = vmatpush1.bf16.msra.mxu0 0
  %1640 = vmatprep.subr.bf16.mxu0 0
  %1641 = vmatpush1.bf16.msra.mxu0 0
  %1642 = vmatprep.subr.bf16.mxu0 0
  %1643 = vmatpush1.bf16.msra.mxu0 0
  %1644 = vmatprep.subr.bf16.mxu0 0
  %1645 = vmatpush1.bf16.msra.mxu0 0
  %1646 = vmatprep.subr.bf16.mxu0 0
  %1647 = vmatpush1.bf16.msra.mxu0 0
  %1648 = vmatprep.subr.bf16.mxu0 0
  %1649 = vmatpush1.bf16.msra.mxu0 0
  %1650 = vmatprep.subr.bf16.mxu0 0
  %1651 = vmatpush1.bf16.msra.mxu0 0
  %1652 = vmatprep.subr.bf16.mxu0 0
  %1653 = vmatpush1.bf16.msra.mxu0 0
  %1654 = vmatprep.subr.bf16.mxu0 0
  %1655 = vmatpush1.bf16.msra.mxu0 0
  %1656 = vmatprep.subr.bf16.mxu0 0
  %1657 = vmatpush1.bf16.msra.mxu0 0
  %1658 = vmatprep.subr.bf16.mxu0 0
  %1659 = vmatpush1.bf16.msra.mxu0 0
  %1660 = vmatprep.subr.bf16.mxu0 0
  %1661 = vmatpush1.bf16.msra.mxu0 0
  %1662 = vmatprep.subr.bf16.mxu0 0
  %1663 = vmatpush1.bf16.msra.mxu0 0
  %1664 = vmatprep.mubr.bf16.mxu0 0
  %1665 = vmatmul.mubr.bf16.gmra.mrb[0].mxu0 %v1627
  %v1666 = vpop.f32.mrb[0].mxu0
  %v1667 = vadd.f32 0.0, %v1666
  %v1668 = vpop.f32.mrb[0].mxu0
  %v1669 = vpop.f32.mrb[0].mxu0
  %v1670 = vadd.f32 0.0, %v1669
  %v1671 = vpop.f32.mrb[0].mxu0
  %1672 = vdwg.mxu0
  %v1673 = vadd.f32 %v1496, %v1667
  %v1674 = vadd.f32 %v1497, %v1670
  %v1676 = vlaneseq
  %v1677 = vshrl.u32 %v1676, 7
  %v1678 = vsub.s32 0, %v1677
  %v1679 = vrot.slane %v972, %v1678
  %v1681 = vadd.f32 %v1673, %v1679
  %v1682 = vadd.f32 %v1674, %v1679
  %v1683 = vadd.f32 %v174, %v1681
  %v1684 = vadd.f32 %v175, %v1682
  %v1685 = vld [vmem:[%s63] sm:$0x1]
  %v1686 = vld [vmem:[%s65] sm:$0x1]
  %v1687 = vsel %vm235, %v1683, 0.0
  %1688 = vadd.xlane.f32.xlu0 %v1687
  %v1689 = vpop.xlane.xlu0 %1688
  %v1690 = vsel %vm235, %v1684, 0.0
  %1691 = vadd.xlane.f32.xlu0 %v1690
  %v1692 = vpop.xlane.xlu0 %1691
  %v1693 = vrcp.pop 32.0
  %v1694 = vmul.f32 %v1689, %v1693
  %v1695 = vmul.f32 %v1692, %v1693
  %v1696 = vsub.f32 %v1683, %v1694
  %v1697 = vsub.f32 %v1684, %v1695
  %v1698 = vmul.f32 %v1696, %v1696
  %v1699 = vmul.f32 %v1697, %v1697
  %v1700 = vsel %vm235, %v1698, 0.0
  %1701 = vadd.xlane.f32.xlu0 %v1700
  %v1702 = vpop.xlane.xlu0 %1701
  %v1703 = vsel %vm235, %v1699, 0.0
  %1704 = vadd.xlane.f32.xlu0 %v1703
  %v1705 = vpop.xlane.xlu0 %1704
  %v1706 = vmul.f32 %v1702, %v1693
  %v1707 = vmul.f32 %v1705, %v1693
  %v1708 = vadd.f32 %v1706, 1e-05
  %v1709 = vadd.f32 %v1707, 1e-05
  %v1710 = vrsqrt.pop %v1708
  %v1711 = vrsqrt.pop %v1709
  %v1712 = vmul.f32 %v1696, %v1710
  %v1713 = vmul.f32 %v1697, %v1711
  %v1715 = vlaneseq
  %v1716 = vshrl.u32 %v1715, 7
  %v1717 = vsub.s32 0, %v1716
  %v1718 = vrot.slane %v1685, %v1717
  %v1720 = vmul.f32 %v1712, %v1718
  %v1721 = vmul.f32 %v1713, %v1718
  %v1723 = vlaneseq
  %v1724 = vshrl.u32 %v1723, 7
  %v1725 = vsub.s32 0, %v1724
  %v1726 = vrot.slane %v1686, %v1725
  %v1728 = vadd.f32 %v1720, %v1726
  %v1729 = vadd.f32 %v1721, %v1726
  %v1730 = vadd.f32 %v1728, %v826
  %v1731 = vadd.f32 %v1729, %v829
  %v1732 = vld [vmem:[%s39] sm:$0xf]
  %v1733 = vld [vmem:[%s39 + $0x4] sm:$0xf]
  %v1734 = vld [vmem:[%s39 + $0x8] sm:$0xf]
  %v1735 = vld [vmem:[%s39 + $0xc] sm:$0xf]
  %v1736 = vld [vmem:[%s41] sm:$0x1]
  %v1737 = vpack.c.bf16 %v1731, %v1730
  %v1739 = vlaneseq
  %v1740 = vshrl.u32 %v1739, 7
  %v1741 = vsub.s32 0, %v1740
  %v1742 = vrot.slane %v1736, %v1741
  %v1748 = vunpack.c.l.b16 %v1732
  %v1749 = vunpack.c.l.b16 %v1733
  %v1750 = vunpack.c.l.b16 %v1734
  %v1751 = vunpack.c.l.b16 %v1735
  %v1752 = vpack.c.b16 %v1749, %v1748
  %v1753 = vpack.c.b16 %v1751, %v1750
  %v1757 = vsel %vm235, %v1737, 0
  %1759 = vmatprep.subr.bf16.mxu0 0
  %1760 = vmatpush1.bf16.msra.mxu0 %v1752
  %1761 = vmatprep.subr.bf16.mxu0 0
  %1762 = vmatpush1.bf16.msra.mxu0 %v1753
  %1763 = vmatprep.subr.bf16.mxu0 0
  %1764 = vmatpush1.bf16.msra.mxu0 0
  %1765 = vmatprep.subr.bf16.mxu0 0
  %1766 = vmatpush1.bf16.msra.mxu0 0
  %1767 = vmatprep.subr.bf16.mxu0 0
  %1768 = vmatpush1.bf16.msra.mxu0 0
  %1769 = vmatprep.subr.bf16.mxu0 0
  %1770 = vmatpush1.bf16.msra.mxu0 0
  %1771 = vmatprep.subr.bf16.mxu0 0
  %1772 = vmatpush1.bf16.msra.mxu0 0
  %1773 = vmatprep.subr.bf16.mxu0 0
  %1774 = vmatpush1.bf16.msra.mxu0 0
  %1775 = vmatprep.subr.bf16.mxu0 0
  %1776 = vmatpush1.bf16.msra.mxu0 0
  %1777 = vmatprep.subr.bf16.mxu0 0
  %1778 = vmatpush1.bf16.msra.mxu0 0
  %1779 = vmatprep.subr.bf16.mxu0 0
  %1780 = vmatpush1.bf16.msra.mxu0 0
  %1781 = vmatprep.subr.bf16.mxu0 0
  %1782 = vmatpush1.bf16.msra.mxu0 0
  %1783 = vmatprep.subr.bf16.mxu0 0
  %1784 = vmatpush1.bf16.msra.mxu0 0
  %1785 = vmatprep.subr.bf16.mxu0 0
  %1786 = vmatpush1.bf16.msra.mxu0 0
  %1787 = vmatprep.subr.bf16.mxu0 0
  %1788 = vmatpush1.bf16.msra.mxu0 0
  %1789 = vmatprep.subr.bf16.mxu0 0
  %1790 = vmatpush1.bf16.msra.mxu0 0
  %1791 = vmatprep.mubr.bf16.mxu0 0
  %1792 = vmatmul.mubr.bf16.gmra.mrb[0].mxu0 %v1757
  %v1793 = vpop.f32.mrb[0].mxu0
  %v1794 = vadd.f32 %v1742, %v1793
  %v1795 = vpop.f32.mrb[0].mxu0
  %v1796 = vpop.f32.mrb[0].mxu0
  %v1797 = vadd.f32 %v1742, %v1796
  %v1798 = vpop.f32.mrb[0].mxu0
  %1799 = vdwg.mxu0
  %v1800 = vpack.c.bf16 %v1797, %v1794
  %v1801 = vld [vmem:[%s53] sm:$0x1]
  %v1803 = vsel %vm976, %v1800, 0
  %v1806 = vsel %vm976, %v291, 0
  %v1809 = vsel %vm976, %v292, 0
  %1811 = vmatprep.subr.bf16.mxu0 0
  %1812 = vmatpush1.bf16.xpose.msra.mxu0 %v1806
  %1813 = vmatprep.subr.bf16.mxu0 0
  %1814 = vmatpush1.bf16.xpose.msra.mxu0 %v1809
  %1815 = vmatprep.subr.bf16.mxu0 0
  %1816 = vmatpush1.bf16.xpose.msra.mxu0 0
  %1817 = vmatprep.subr.bf16.mxu0 0
  %1818 = vmatpush1.bf16.xpose.msra.mxu0 0
  %1819 = vmatprep.subr.bf16.mxu0 0
  %1820 = vmatpush1.bf16.xpose.msra.mxu0 0
  %1821 = vmatprep.subr.bf16.mxu0 0
  %1822 = vmatpush1.bf16.xpose.msra.mxu0 0
  %1823 = vmatprep.subr.bf16.mxu0 0
  %1824 = vmatpush1.bf16.xpose.msra.mxu0 0
  %1825 = vmatprep.subr.bf16.mxu0 0
  %1826 = vmatpush1.bf16.xpose.msra.mxu0 0
  %1827 = vmatprep.subr.bf16.mxu0 0
  %1828 = vmatpush1.bf16.xpose.msra.mxu0 0
  %1829 = vmatprep.subr.bf16.mxu0 0
  %1830 = vmatpush1.bf16.xpose.msra.mxu0 0
  %1831 = vmatprep.subr.bf16.mxu0 0
  %1832 = vmatpush1.bf16.xpose.msra.mxu0 0
  %1833 = vmatprep.subr.bf16.mxu0 0
  %1834 = vmatpush1.bf16.xpose.msra.mxu0 0
  %1835 = vmatprep.subr.bf16.mxu0 0
  %1836 = vmatpush1.bf16.xpose.msra.mxu0 0
  %1837 = vmatprep.subr.bf16.mxu0 0
  %1838 = vmatpush1.bf16.xpose.msra.mxu0 0
  %1839 = vmatprep.subr.bf16.mxu0 0
  %1840 = vmatpush1.bf16.xpose.msra.mxu0 0
  %1841 = vmatprep.subr.bf16.mxu0 0
  %1842 = vmatpush1.bf16.xpose.msra.mxu0 0
  %1843 = vmatprep.mubr.bf16.mxu0 0
  %1844 = vmatmul.mubr.bf16.gmra.mrb[0].mxu0 %v1803
  %v1845 = vpop.f32.mrb[0].mxu0
  %v1846 = vadd.f32 0.0, %v1845
  %v1847 = vpop.f32.mrb[0].mxu0
  %v1848 = vpop.f32.mrb[0].mxu0
  %v1849 = vadd.f32 0.0, %v1848
  %v1850 = vpop.f32.mrb[0].mxu0
  %1851 = vdwg.mxu0
  %v1852 = vmul.f32 %v1846, 0.35355338
  %v1853 = vmul.f32 %v1849, 0.35355338
  %v1854 = vadd.f32 %v1852, %v192
  %v1855 = vadd.f32 %v1853, %v193
  %v1856 = vsel %vm235, %v1854, -inf
  %1857 = vmax.xlane.f32.xlu0 %v1856
  %v1858 = vpop.xlane.xlu0 %1857
  %v1859 = vsel %vm235, %v1855, -inf
  %1860 = vmax.xlane.f32.xlu0 %v1859
  %v1861 = vpop.xlane.xlu0 %1860
  %v1862 = vsub.f32 %v1854, %v1858
  %v1863 = vsub.f32 %v1855, %v1861
  %v1864 = vmul.f32 %v1862, 1.442695
  %v1865 = vpow.pop %v1864
  %v1866 = vmul.f32 %v1863, 1.442695
  %v1867 = vpow.pop %v1866
  %v1868 = vsel %vm235, %v1865, 0.0
  %1869 = vadd.xlane.f32.xlu0 %v1868
  %v1870 = vpop.xlane.xlu0 %1869
  %v1871 = vsel %vm235, %v1867, 0.0
  %1872 = vadd.xlane.f32.xlu0 %v1871
  %v1873 = vpop.xlane.xlu0 %1872
  %v1874 = vrcp.pop %v1870
  %v1875 = vrcp.pop %v1873
  %v1876 = vmul.f32 %v1865, %v1874
  %v1877 = vmul.f32 %v1867, %v1875
  %v1878 = vpack.c.bf16 %v1877, %v1876
  %v1880 = vsel %vm235, %v1878, 0
  %1882 = vmatprep.subr.bf16.mxu0 0
  %1883 = vmatpush1.bf16.msra.mxu0 %v373
  %1884 = vmatprep.subr.bf16.mxu0 0
  %1885 = vmatpush1.bf16.msra.mxu0 %v374
  %1886 = vmatprep.subr.bf16.mxu0 0
  %1887 = vmatpush1.bf16.msra.mxu0 0
  %1888 = vmatprep.subr.bf16.mxu0 0
  %1889 = vmatpush1.bf16.msra.mxu0 0
  %1890 = vmatprep.subr.bf16.mxu0 0
  %1891 = vmatpush1.bf16.msra.mxu0 0
  %1892 = vmatprep.subr.bf16.mxu0 0
  %1893 = vmatpush1.bf16.msra.mxu0 0
  %1894 = vmatprep.subr.bf16.mxu0 0
  %1895 = vmatpush1.bf16.msra.mxu0 0
  %1896 = vmatprep.subr.bf16.mxu0 0
  %1897 = vmatpush1.bf16.msra.mxu0 0
  %1898 = vmatprep.subr.bf16.mxu0 0
  %1899 = vmatpush1.bf16.msra.mxu0 0
  %1900 = vmatprep.subr.bf16.mxu0 0
  %1901 = vmatpush1.bf16.msra.mxu0 0
  %1902 = vmatprep.subr.bf16.mxu0 0
  %1903 = vmatpush1.bf16.msra.mxu0 0
  %1904 = vmatprep.subr.bf16.mxu0 0
  %1905 = vmatpush1.bf16.msra.mxu0 0
  %1906 = vmatprep.subr.bf16.mxu0 0
  %1907 = vmatpush1.bf16.msra.mxu0 0
  %1908 = vmatprep.subr.bf16.mxu0 0
  %1909 = vmatpush1.bf16.msra.mxu0 0
  %1910 = vmatprep.subr.bf16.mxu0 0
  %1911 = vmatpush1.bf16.msra.mxu0 0
  %1912 = vmatprep.subr.bf16.mxu0 0
  %1913 = vmatpush1.bf16.msra.mxu0 0
  %1914 = vmatprep.mubr.bf16.mxu0 0
  %1915 = vmatmul.mubr.bf16.gmra.mrb[0].mxu0 %v1880
  %v1916 = vpop.f32.mrb[0].mxu0
  %v1917 = vadd.f32 0.0, %v1916
  %v1918 = vpop.f32.mrb[0].mxu0
  %v1919 = vpop.f32.mrb[0].mxu0
  %v1920 = vadd.f32 0.0, %v1919
  %v1921 = vpop.f32.mrb[0].mxu0
  %1922 = vdwg.mxu0
  %v1923 = vpack.c.bf16 %v1920, %v1917
  %v1924 = vld [vmem:[%s51] sm:$0xf]
  %1926 = vrot.lane.b32.xlu0 %v1800, 120
  %v1927 = vpop.permute.xlu0 %1926
  %1930 = vrot.lane.b32.xlu0 %v291, 120
  %v1931 = vpop.permute.xlu0 %1930
  %1932 = vrot.lane.b32.xlu0 %v292, 120
  %v1933 = vpop.permute.xlu0 %1932
  %v1935 = vsel %vm976, %v1927, 0
  %v1938 = vsel %vm976, %v1931, 0
  %v1941 = vsel %vm976, %v1933, 0
  %1943 = vmatprep.subr.bf16.mxu0 0
  %1944 = vmatpush1.bf16.xpose.msra.mxu0 %v1938
  %1945 = vmatprep.subr.bf16.mxu0 0
  %1946 = vmatpush1.bf16.xpose.msra.mxu0 %v1941
  %1947 = vmatprep.subr.bf16.mxu0 0
  %1948 = vmatpush1.bf16.xpose.msra.mxu0 0
  %1949 = vmatprep.subr.bf16.mxu0 0
  %1950 = vmatpush1.bf16.xpose.msra.mxu0 0
  %1951 = vmatprep.subr.bf16.mxu0 0
  %1952 = vmatpush1.bf16.xpose.msra.mxu0 0
  %1953 = vmatprep.subr.bf16.mxu0 0
  %1954 = vmatpush1.bf16.xpose.msra.mxu0 0
  %1955 = vmatprep.subr.bf16.mxu0 0
  %1956 = vmatpush1.bf16.xpose.msra.mxu0 0
  %1957 = vmatprep.subr.bf16.mxu0 0
  %1958 = vmatpush1.bf16.xpose.msra.mxu0 0
  %1959 = vmatprep.subr.bf16.mxu0 0
  %1960 = vmatpush1.bf16.xpose.msra.mxu0 0
  %1961 = vmatprep.subr.bf16.mxu0 0
  %1962 = vmatpush1.bf16.xpose.msra.mxu0 0
  %1963 = vmatprep.subr.bf16.mxu0 0
  %1964 = vmatpush1.bf16.xpose.msra.mxu0 0
  %1965 = vmatprep.subr.bf16.mxu0 0
  %1966 = vmatpush1.bf16.xpose.msra.mxu0 0
  %1967 = vmatprep.subr.bf16.mxu0 0
  %1968 = vmatpush1.bf16.xpose.msra.mxu0 0
  %1969 = vmatprep.subr.bf16.mxu0 0
  %1970 = vmatpush1.bf16.xpose.msra.mxu0 0
  %1971 = vmatprep.subr.bf16.mxu0 0
  %1972 = vmatpush1.bf16.xpose.msra.mxu0 0
  %1973 = vmatprep.subr.bf16.mxu0 0
  %1974 = vmatpush1.bf16.xpose.msra.mxu0 0
  %1975 = vmatprep.mubr.bf16.mxu0 0
  %1976 = vmatmul.mubr.bf16.gmra.mrb[0].mxu0 %v1935
  %v1977 = vpop.f32.mrb[0].mxu0
  %v1978 = vadd.f32 0.0, %v1977
  %v1979 = vpop.f32.mrb[0].mxu0
  %v1980 = vpop.f32.mrb[0].mxu0
  %v1981 = vadd.f32 0.0, %v1980
  %v1982 = vpop.f32.mrb[0].mxu0
  %1983 = vdwg.mxu0
  %v1984 = vmul.f32 %v1978, 0.35355338
  %v1985 = vmul.f32 %v1981, 0.35355338
  %v1986 = vadd.f32 %v1984, %v192
  %v1987 = vadd.f32 %v1985, %v193
  %v1988 = vsel %vm235, %v1986, -inf
  %1989 = vmax.xlane.f32.xlu0 %v1988
  %v1990 = vpop.xlane.xlu0 %1989
  %v1991 = vsel %vm235, %v1987, -inf
  %1992 = vmax.xlane.f32.xlu0 %v1991
  %v1993 = vpop.xlane.xlu0 %1992
  %v1994 = vsub.f32 %v1986, %v1990
  %v1995 = vsub.f32 %v1987, %v1993
  %v1996 = vmul.f32 %v1994, 1.442695
  %v1997 = vpow.pop %v1996
  %v1998 = vmul.f32 %v1995, 1.442695
  %v1999 = vpow.pop %v1998
  %v2000 = vsel %vm235, %v1997, 0.0
  %2001 = vadd.xlane.f32.xlu0 %v2000
  %v2002 = vpop.xlane.xlu0 %2001
  %v2003 = vsel %vm235, %v1999, 0.0
  %2004 = vadd.xlane.f32.xlu0 %v2003
  %v2005 = vpop.xlane.xlu0 %2004
  %v2006 = vrcp.pop %v2002
  %v2007 = vrcp.pop %v2005
  %v2008 = vmul.f32 %v1997, %v2006
  %v2009 = vmul.f32 %v1999, %v2007
  %v2010 = vpack.c.bf16 %v2009, %v2008
  %2013 = vrot.lane.b32.xlu0 %v373, 120
  %v2014 = vpop.permute.xlu0 %2013
  %2015 = vrot.lane.b32.xlu0 %v374, 120
  %v2016 = vpop.permute.xlu0 %2015
  %v2020 = vsel %vm235, %v2010, 0
  %2022 = vmatprep.subr.bf16.mxu0 0
  %2023 = vmatpush1.bf16.msra.mxu0 %v2014
  %2024 = vmatprep.subr.bf16.mxu0 0
  %2025 = vmatpush1.bf16.msra.mxu0 %v2016
  %2026 = vmatprep.subr.bf16.mxu0 0
  %2027 = vmatpush1.bf16.msra.mxu0 0
  %2028 = vmatprep.subr.bf16.mxu0 0
  %2029 = vmatpush1.bf16.msra.mxu0 0
  %2030 = vmatprep.subr.bf16.mxu0 0
  %2031 = vmatpush1.bf16.msra.mxu0 0
  %2032 = vmatprep.subr.bf16.mxu0 0
  %2033 = vmatpush1.bf16.msra.mxu0 0
  %2034 = vmatprep.subr.bf16.mxu0 0
  %2035 = vmatpush1.bf16.msra.mxu0 0
  %2036 = vmatprep.subr.bf16.mxu0 0
  %2037 = vmatpush1.bf16.msra.mxu0 0
  %2038 = vmatprep.subr.bf16.mxu0 0
  %2039 = vmatpush1.bf16.msra.mxu0 0
  %2040 = vmatprep.subr.bf16.mxu0 0
  %2041 = vmatpush1.bf16.msra.mxu0 0
  %2042 = vmatprep.subr.bf16.mxu0 0
  %2043 = vmatpush1.bf16.msra.mxu0 0
  %2044 = vmatprep.subr.bf16.mxu0 0
  %2045 = vmatpush1.bf16.msra.mxu0 0
  %2046 = vmatprep.subr.bf16.mxu0 0
  %2047 = vmatpush1.bf16.msra.mxu0 0
  %2048 = vmatprep.subr.bf16.mxu0 0
  %2049 = vmatpush1.bf16.msra.mxu0 0
  %2050 = vmatprep.subr.bf16.mxu0 0
  %2051 = vmatpush1.bf16.msra.mxu0 0
  %2052 = vmatprep.subr.bf16.mxu0 0
  %2053 = vmatpush1.bf16.msra.mxu0 0
  %2054 = vmatprep.mubr.bf16.mxu0 0
  %2055 = vmatmul.mubr.bf16.gmra.mrb[0].mxu0 %v2020
  %v2056 = vpop.f32.mrb[0].mxu0
  %v2057 = vadd.f32 0.0, %v2056
  %v2058 = vpop.f32.mrb[0].mxu0
  %v2059 = vpop.f32.mrb[0].mxu0
  %v2060 = vadd.f32 0.0, %v2059
  %v2061 = vpop.f32.mrb[0].mxu0
  %2062 = vdwg.mxu0
  %v2063 = vpack.c.bf16 %v2060, %v2057
  %s2064 = scalar_lea.vmem %s51, 4
  %v2065 = vld [vmem:[%s2064] sm:$0xf]
  %v2067 = vsel %vm976, %v2063, 0
  %v2070 = vsel %vm390, %v2065, 0
  %2072 = vmatprep.subr.bf16.mxu0 0
  %2073 = vmatpush1.bf16.msra.mxu0 %v2070
  %2074 = vmatprep.subr.bf16.mxu0 0
  %2075 = vmatpush1.bf16.msra.mxu0 0
  %2076 = vmatprep.subr.bf16.mxu0 0
  %2077 = vmatpush1.bf16.msra.mxu0 0
  %2078 = vmatprep.subr.bf16.mxu0 0
  %2079 = vmatpush1.bf16.msra.mxu0 0
  %2080 = vmatprep.subr.bf16.mxu0 0
  %2081 = vmatpush1.bf16.msra.mxu0 0
  %2082 = vmatprep.subr.bf16.mxu0 0
  %2083 = vmatpush1.bf16.msra.mxu0 0
  %2084 = vmatprep.subr.bf16.mxu0 0
  %2085 = vmatpush1.bf16.msra.mxu0 0
  %2086 = vmatprep.subr.bf16.mxu0 0
  %2087 = vmatpush1.bf16.msra.mxu0 0
  %2088 = vmatprep.subr.bf16.mxu0 0
  %2089 = vmatpush1.bf16.msra.mxu0 0
  %2090 = vmatprep.subr.bf16.mxu0 0
  %2091 = vmatpush1.bf16.msra.mxu0 0
  %2092 = vmatprep.subr.bf16.mxu0 0
  %2093 = vmatpush1.bf16.msra.mxu0 0
  %2094 = vmatprep.subr.bf16.mxu0 0
  %2095 = vmatpush1.bf16.msra.mxu0 0
  %2096 = vmatprep.subr.bf16.mxu0 0
  %2097 = vmatpush1.bf16.msra.mxu0 0
  %2098 = vmatprep.subr.bf16.mxu0 0
  %2099 = vmatpush1.bf16.msra.mxu0 0
  %2100 = vmatprep.subr.bf16.mxu0 0
  %2101 = vmatpush1.bf16.msra.mxu0 0
  %2102 = vmatprep.subr.bf16.mxu0 0
  %2103 = vmatpush1.bf16.msra.mxu0 0
  %2104 = vmatprep.mubr.bf16.mxu0 0
  %2105 = vmatmul.mubr.bf16.gmra.mrb[0].mxu0 %v2067
  %v2106 = vpop.f32.mrb[0].mxu0
  %v2107 = vadd.f32 0.0, %v2106
  %v2108 = vpop.f32.mrb[0].mxu0
  %v2109 = vpop.f32.mrb[0].mxu0
  %v2110 = vadd.f32 0.0, %v2109
  %v2111 = vpop.f32.mrb[0].mxu0
  %2112 = vdwg.mxu0
  %v2114 = vsel %vm976, %v1923, 0
  %v2117 = vsel %vm390, %v1924, 0
  %2119 = vmatprep.subr.bf16.mxu0 0
  %2120 = vmatpush1.bf16.msra.mxu0 %v2117
  %2121 = vmatprep.subr.bf16.mxu0 0
  %2122 = vmatpush1.bf16.msra.mxu0 0
  %2123 = vmatprep.subr.bf16.mxu0 0
  %2124 = vmatpush1.bf16.msra.mxu0 0
  %2125 = vmatprep.subr.bf16.mxu0 0
  %2126 = vmatpush1.bf16.msra.mxu0 0
  %2127 = vmatprep.subr.bf16.mxu0 0
  %2128 = vmatpush1.bf16.msra.mxu0 0
  %2129 = vmatprep.subr.bf16.mxu0 0
  %2130 = vmatpush1.bf16.msra.mxu0 0
  %2131 = vmatprep.subr.bf16.mxu0 0
  %2132 = vmatpush1.bf16.msra.mxu0 0
  %2133 = vmatprep.subr.bf16.mxu0 0
  %2134 = vmatpush1.bf16.msra.mxu0 0
  %2135 = vmatprep.subr.bf16.mxu0 0
  %2136 = vmatpush1.bf16.msra.mxu0 0
  %2137 = vmatprep.subr.bf16.mxu0 0
  %2138 = vmatpush1.bf16.msra.mxu0 0
  %2139 = vmatprep.subr.bf16.mxu0 0
  %2140 = vmatpush1.bf16.msra.mxu0 0
  %2141 = vmatprep.subr.bf16.mxu0 0
  %2142 = vmatpush1.bf16.msra.mxu0 0
  %2143 = vmatprep.subr.bf16.mxu0 0
  %2144 = vmatpush1.bf16.msra.mxu0 0
  %2145 = vmatprep.subr.bf16.mxu0 0
  %2146 = vmatpush1.bf16.msra.mxu0 0
  %2147 = vmatprep.subr.bf16.mxu0 0
  %2148 = vmatpush1.bf16.msra.mxu0 0
  %2149 = vmatprep.subr.bf16.mxu0 0
  %2150 = vmatpush1.bf16.msra.mxu0 0
  %2151 = vmatprep.mubr.bf16.mxu0 0
  %2152 = vmatmul.mubr.bf16.gmra.mrb[0].mxu0 %v2114
  %v2153 = vpop.f32.mrb[0].mxu0
  %v2154 = vadd.f32 %v2107, %v2153
  %v2155 = vpop.f32.mrb[0].mxu0
  %v2156 = vpop.f32.mrb[0].mxu0
  %v2157 = vadd.f32 %v2110, %v2156
  %v2158 = vpop.f32.mrb[0].mxu0
  %2159 = vdwg.mxu0
  %2160 = vrot.lane.b32.xlu0 %v1800, 112
  %v2161 = vpop.permute.xlu0 %2160
  %2162 = vrot.lane.b32.xlu0 %v291, 112
  %v2163 = vpop.permute.xlu0 %2162
  %2164 = vrot.lane.b32.xlu0 %v292, 112
  %v2165 = vpop.permute.xlu0 %2164
  %v2167 = vsel %vm976, %v2161, 0
  %v2170 = vsel %vm976, %v2163, 0
  %v2173 = vsel %vm976, %v2165, 0
  %2175 = vmatprep.subr.bf16.mxu0 0
  %2176 = vmatpush1.bf16.xpose.msra.mxu0 %v2170
  %2177 = vmatprep.subr.bf16.mxu0 0
  %2178 = vmatpush1.bf16.xpose.msra.mxu0 %v2173
  %2179 = vmatprep.subr.bf16.mxu0 0
  %2180 = vmatpush1.bf16.xpose.msra.mxu0 0
  %2181 = vmatprep.subr.bf16.mxu0 0
  %2182 = vmatpush1.bf16.xpose.msra.mxu0 0
  %2183 = vmatprep.subr.bf16.mxu0 0
  %2184 = vmatpush1.bf16.xpose.msra.mxu0 0
  %2185 = vmatprep.subr.bf16.mxu0 0
  %2186 = vmatpush1.bf16.xpose.msra.mxu0 0
  %2187 = vmatprep.subr.bf16.mxu0 0
  %2188 = vmatpush1.bf16.xpose.msra.mxu0 0
  %2189 = vmatprep.subr.bf16.mxu0 0
  %2190 = vmatpush1.bf16.xpose.msra.mxu0 0
  %2191 = vmatprep.subr.bf16.mxu0 0
  %2192 = vmatpush1.bf16.xpose.msra.mxu0 0
  %2193 = vmatprep.subr.bf16.mxu0 0
  %2194 = vmatpush1.bf16.xpose.msra.mxu0 0
  %2195 = vmatprep.subr.bf16.mxu0 0
  %2196 = vmatpush1.bf16.xpose.msra.mxu0 0
  %2197 = vmatprep.subr.bf16.mxu0 0
  %2198 = vmatpush1.bf16.xpose.msra.mxu0 0
  %2199 = vmatprep.subr.bf16.mxu0 0
  %2200 = vmatpush1.bf16.xpose.msra.mxu0 0
  %2201 = vmatprep.subr.bf16.mxu0 0
  %2202 = vmatpush1.bf16.xpose.msra.mxu0 0
  %2203 = vmatprep.subr.bf16.mxu0 0
  %2204 = vmatpush1.bf16.xpose.msra.mxu0 0
  %2205 = vmatprep.subr.bf16.mxu0 0
  %2206 = vmatpush1.bf16.xpose.msra.mxu0 0
  %2207 = vmatprep.mubr.bf16.mxu0 0
  %2208 = vmatmul.mubr.bf16.gmra.mrb[0].mxu0 %v2167
  %v2209 = vpop.f32.mrb[0].mxu0
  %v2210 = vadd.f32 0.0, %v2209
  %v2211 = vpop.f32.mrb[0].mxu0
  %v2212 = vpop.f32.mrb[0].mxu0
  %v2213 = vadd.f32 0.0, %v2212
  %v2214 = vpop.f32.mrb[0].mxu0
  %2215 = vdwg.mxu0
  %v2216 = vmul.f32 %v2210, 0.35355338
  %v2217 = vmul.f32 %v2213, 0.35355338
  %v2218 = vadd.f32 %v2216, %v192
  %v2219 = vadd.f32 %v2217, %v193
  %v2220 = vsel %vm235, %v2218, -inf
  %2221 = vmax.xlane.f32.xlu0 %v2220
  %v2222 = vpop.xlane.xlu0 %2221
  %v2223 = vsel %vm235, %v2219, -inf
  %2224 = vmax.xlane.f32.xlu0 %v2223
  %v2225 = vpop.xlane.xlu0 %2224
  %v2226 = vsub.f32 %v2218, %v2222
  %v2227 = vsub.f32 %v2219, %v2225
  %v2228 = vmul.f32 %v2226, 1.442695
  %v2229 = vpow.pop %v2228
  %v2230 = vmul.f32 %v2227, 1.442695
  %v2231 = vpow.pop %v2230
  %v2232 = vsel %vm235, %v2229, 0.0
  %2233 = vadd.xlane.f32.xlu0 %v2232
  %v2234 = vpop.xlane.xlu0 %2233
  %v2235 = vsel %vm235, %v2231, 0.0
  %2236 = vadd.xlane.f32.xlu0 %v2235
  %v2237 = vpop.xlane.xlu0 %2236
  %v2238 = vrcp.pop %v2234
  %v2239 = vrcp.pop %v2237
  %v2240 = vmul.f32 %v2229, %v2238
  %v2241 = vmul.f32 %v2231, %v2239
  %v2242 = vpack.c.bf16 %v2241, %v2240
  %2243 = vrot.lane.b32.xlu0 %v373, 112
  %v2244 = vpop.permute.xlu0 %2243
  %2245 = vrot.lane.b32.xlu0 %v374, 112
  %v2246 = vpop.permute.xlu0 %2245
  %v2250 = vsel %vm235, %v2242, 0
  %2252 = vmatprep.subr.bf16.mxu0 0
  %2253 = vmatpush1.bf16.msra.mxu0 %v2244
  %2254 = vmatprep.subr.bf16.mxu0 0
  %2255 = vmatpush1.bf16.msra.mxu0 %v2246
  %2256 = vmatprep.subr.bf16.mxu0 0
  %2257 = vmatpush1.bf16.msra.mxu0 0
  %2258 = vmatprep.subr.bf16.mxu0 0
  %2259 = vmatpush1.bf16.msra.mxu0 0
  %2260 = vmatprep.subr.bf16.mxu0 0
  %2261 = vmatpush1.bf16.msra.mxu0 0
  %2262 = vmatprep.subr.bf16.mxu0 0
  %2263 = vmatpush1.bf16.msra.mxu0 0
  %2264 = vmatprep.subr.bf16.mxu0 0
  %2265 = vmatpush1.bf16.msra.mxu0 0
  %2266 = vmatprep.subr.bf16.mxu0 0
  %2267 = vmatpush1.bf16.msra.mxu0 0
  %2268 = vmatprep.subr.bf16.mxu0 0
  %2269 = vmatpush1.bf16.msra.mxu0 0
  %2270 = vmatprep.subr.bf16.mxu0 0
  %2271 = vmatpush1.bf16.msra.mxu0 0
  %2272 = vmatprep.subr.bf16.mxu0 0
  %2273 = vmatpush1.bf16.msra.mxu0 0
  %2274 = vmatprep.subr.bf16.mxu0 0
  %2275 = vmatpush1.bf16.msra.mxu0 0
  %2276 = vmatprep.subr.bf16.mxu0 0
  %2277 = vmatpush1.bf16.msra.mxu0 0
  %2278 = vmatprep.subr.bf16.mxu0 0
  %2279 = vmatpush1.bf16.msra.mxu0 0
  %2280 = vmatprep.subr.bf16.mxu0 0
  %2281 = vmatpush1.bf16.msra.mxu0 0
  %2282 = vmatprep.subr.bf16.mxu0 0
  %2283 = vmatpush1.bf16.msra.mxu0 0
  %2284 = vmatprep.mubr.bf16.mxu0 0
  %2285 = vmatmul.mubr.bf16.gmra.mrb[0].mxu0 %v2250
  %v2286 = vpop.f32.mrb[0].mxu0
  %v2287 = vadd.f32 0.0, %v2286
  %v2288 = vpop.f32.mrb[0].mxu0
  %v2289 = vpop.f32.mrb[0].mxu0
  %v2290 = vadd.f32 0.0, %v2289
  %v2291 = vpop.f32.mrb[0].mxu0
  %2292 = vdwg.mxu0
  %v2293 = vpack.c.bf16 %v2290, %v2287
  %s2294 = scalar_lea.vmem %s51, 8
  %v2295 = vld [vmem:[%s2294] sm:$0xf]
  %v2297 = vsel %vm976, %v2293, 0
  %v2300 = vsel %vm390, %v2295, 0
  %2302 = vmatprep.subr.bf16.mxu0 0
  %2303 = vmatpush1.bf16.msra.mxu0 %v2300
  %2304 = vmatprep.subr.bf16.mxu0 0
  %2305 = vmatpush1.bf16.msra.mxu0 0
  %2306 = vmatprep.subr.bf16.mxu0 0
  %2307 = vmatpush1.bf16.msra.mxu0 0
  %2308 = vmatprep.subr.bf16.mxu0 0
  %2309 = vmatpush1.bf16.msra.mxu0 0
  %2310 = vmatprep.subr.bf16.mxu0 0
  %2311 = vmatpush1.bf16.msra.mxu0 0
  %2312 = vmatprep.subr.bf16.mxu0 0
  %2313 = vmatpush1.bf16.msra.mxu0 0
  %2314 = vmatprep.subr.bf16.mxu0 0
  %2315 = vmatpush1.bf16.msra.mxu0 0
  %2316 = vmatprep.subr.bf16.mxu0 0
  %2317 = vmatpush1.bf16.msra.mxu0 0
  %2318 = vmatprep.subr.bf16.mxu0 0
  %2319 = vmatpush1.bf16.msra.mxu0 0
  %2320 = vmatprep.subr.bf16.mxu0 0
  %2321 = vmatpush1.bf16.msra.mxu0 0
  %2322 = vmatprep.subr.bf16.mxu0 0
  %2323 = vmatpush1.bf16.msra.mxu0 0
  %2324 = vmatprep.subr.bf16.mxu0 0
  %2325 = vmatpush1.bf16.msra.mxu0 0
  %2326 = vmatprep.subr.bf16.mxu0 0
  %2327 = vmatpush1.bf16.msra.mxu0 0
  %2328 = vmatprep.subr.bf16.mxu0 0
  %2329 = vmatpush1.bf16.msra.mxu0 0
  %2330 = vmatprep.subr.bf16.mxu0 0
  %2331 = vmatpush1.bf16.msra.mxu0 0
  %2332 = vmatprep.subr.bf16.mxu0 0
  %2333 = vmatpush1.bf16.msra.mxu0 0
  %2334 = vmatprep.mubr.bf16.mxu0 0
  %2335 = vmatmul.mubr.bf16.gmra.mrb[0].mxu0 %v2297
  %v2336 = vpop.f32.mrb[0].mxu0
  %v2337 = vadd.f32 0.0, %v2336
  %v2338 = vpop.f32.mrb[0].mxu0
  %v2339 = vpop.f32.mrb[0].mxu0
  %v2340 = vadd.f32 0.0, %v2339
  %v2341 = vpop.f32.mrb[0].mxu0
  %2342 = vdwg.mxu0
  %v2343 = vadd.f32 %v2154, %v2337
  %v2344 = vadd.f32 %v2157, %v2340
  %2345 = vrot.lane.b32.xlu0 %v1800, 104
  %v2346 = vpop.permute.xlu0 %2345
  %2347 = vrot.lane.b32.xlu0 %v291, 104
  %v2348 = vpop.permute.xlu0 %2347
  %2349 = vrot.lane.b32.xlu0 %v292, 104
  %v2350 = vpop.permute.xlu0 %2349
  %v2352 = vsel %vm976, %v2346, 0
  %v2355 = vsel %vm976, %v2348, 0
  %v2358 = vsel %vm976, %v2350, 0
  %2360 = vmatprep.subr.bf16.mxu0 0
  %2361 = vmatpush1.bf16.xpose.msra.mxu0 %v2355
  %2362 = vmatprep.subr.bf16.mxu0 0
  %2363 = vmatpush1.bf16.xpose.msra.mxu0 %v2358
  %2364 = vmatprep.subr.bf16.mxu0 0
  %2365 = vmatpush1.bf16.xpose.msra.mxu0 0
  %2366 = vmatprep.subr.bf16.mxu0 0
  %2367 = vmatpush1.bf16.xpose.msra.mxu0 0
  %2368 = vmatprep.subr.bf16.mxu0 0
  %2369 = vmatpush1.bf16.xpose.msra.mxu0 0
  %2370 = vmatprep.subr.bf16.mxu0 0
  %2371 = vmatpush1.bf16.xpose.msra.mxu0 0
  %2372 = vmatprep.subr.bf16.mxu0 0
  %2373 = vmatpush1.bf16.xpose.msra.mxu0 0
  %2374 = vmatprep.subr.bf16.mxu0 0
  %2375 = vmatpush1.bf16.xpose.msra.mxu0 0
  %2376 = vmatprep.subr.bf16.mxu0 0
  %2377 = vmatpush1.bf16.xpose.msra.mxu0 0
  %2378 = vmatprep.subr.bf16.mxu0 0
  %2379 = vmatpush1.bf16.xpose.msra.mxu0 0
  %2380 = vmatprep.subr.bf16.mxu0 0
  %2381 = vmatpush1.bf16.xpose.msra.mxu0 0
  %2382 = vmatprep.subr.bf16.mxu0 0
  %2383 = vmatpush1.bf16.xpose.msra.mxu0 0
  %2384 = vmatprep.subr.bf16.mxu0 0
  %2385 = vmatpush1.bf16.xpose.msra.mxu0 0
  %2386 = vmatprep.subr.bf16.mxu0 0
  %2387 = vmatpush1.bf16.xpose.msra.mxu0 0
  %2388 = vmatprep.subr.bf16.mxu0 0
  %2389 = vmatpush1.bf16.xpose.msra.mxu0 0
  %2390 = vmatprep.subr.bf16.mxu0 0
  %2391 = vmatpush1.bf16.xpose.msra.mxu0 0
  %2392 = vmatprep.mubr.bf16.mxu0 0
  %2393 = vmatmul.mubr.bf16.gmra.mrb[0].mxu0 %v2352
  %v2394 = vpop.f32.mrb[0].mxu0
  %v2395 = vadd.f32 0.0, %v2394
  %v2396 = vpop.f32.mrb[0].mxu0
  %v2397 = vpop.f32.mrb[0].mxu0
  %v2398 = vadd.f32 0.0, %v2397
  %v2399 = vpop.f32.mrb[0].mxu0
  %2400 = vdwg.mxu0
  %v2401 = vmul.f32 %v2395, 0.35355338
  %v2402 = vmul.f32 %v2398, 0.35355338
  %v2403 = vadd.f32 %v2401, %v192
  %v2404 = vadd.f32 %v2402, %v193
  %v2405 = vsel %vm235, %v2403, -inf
  %2406 = vmax.xlane.f32.xlu0 %v2405
  %v2407 = vpop.xlane.xlu0 %2406
  %v2408 = vsel %vm235, %v2404, -inf
  %2409 = vmax.xlane.f32.xlu0 %v2408
  %v2410 = vpop.xlane.xlu0 %2409
  %v2411 = vsub.f32 %v2403, %v2407
  %v2412 = vsub.f32 %v2404, %v2410
  %v2413 = vmul.f32 %v2411, 1.442695
  %v2414 = vpow.pop %v2413
  %v2415 = vmul.f32 %v2412, 1.442695
  %v2416 = vpow.pop %v2415
  %v2417 = vsel %vm235, %v2414, 0.0
  %2418 = vadd.xlane.f32.xlu0 %v2417
  %v2419 = vpop.xlane.xlu0 %2418
  %v2420 = vsel %vm235, %v2416, 0.0
  %2421 = vadd.xlane.f32.xlu0 %v2420
  %v2422 = vpop.xlane.xlu0 %2421
  %v2423 = vrcp.pop %v2419
  %v2424 = vrcp.pop %v2422
  %v2425 = vmul.f32 %v2414, %v2423
  %v2426 = vmul.f32 %v2416, %v2424
  %v2427 = vpack.c.bf16 %v2426, %v2425
  %2428 = vrot.lane.b32.xlu0 %v373, 104
  %v2429 = vpop.permute.xlu0 %2428
  %2430 = vrot.lane.b32.xlu0 %v374, 104
  %v2431 = vpop.permute.xlu0 %2430
  %v2435 = vsel %vm235, %v2427, 0
  %2437 = vmatprep.subr.bf16.mxu0 0
  %2438 = vmatpush1.bf16.msra.mxu0 %v2429
  %2439 = vmatprep.subr.bf16.mxu0 0
  %2440 = vmatpush1.bf16.msra.mxu0 %v2431
  %2441 = vmatprep.subr.bf16.mxu0 0
  %2442 = vmatpush1.bf16.msra.mxu0 0
  %2443 = vmatprep.subr.bf16.mxu0 0
  %2444 = vmatpush1.bf16.msra.mxu0 0
  %2445 = vmatprep.subr.bf16.mxu0 0
  %2446 = vmatpush1.bf16.msra.mxu0 0
  %2447 = vmatprep.subr.bf16.mxu0 0
  %2448 = vmatpush1.bf16.msra.mxu0 0
  %2449 = vmatprep.subr.bf16.mxu0 0
  %2450 = vmatpush1.bf16.msra.mxu0 0
  %2451 = vmatprep.subr.bf16.mxu0 0
  %2452 = vmatpush1.bf16.msra.mxu0 0
  %2453 = vmatprep.subr.bf16.mxu0 0
  %2454 = vmatpush1.bf16.msra.mxu0 0
  %2455 = vmatprep.subr.bf16.mxu0 0
  %2456 = vmatpush1.bf16.msra.mxu0 0
  %2457 = vmatprep.subr.bf16.mxu0 0
  %2458 = vmatpush1.bf16.msra.mxu0 0
  %2459 = vmatprep.subr.bf16.mxu0 0
  %2460 = vmatpush1.bf16.msra.mxu0 0
  %2461 = vmatprep.subr.bf16.mxu0 0
  %2462 = vmatpush1.bf16.msra.mxu0 0
  %2463 = vmatprep.subr.bf16.mxu0 0
  %2464 = vmatpush1.bf16.msra.mxu0 0
  %2465 = vmatprep.subr.bf16.mxu0 0
  %2466 = vmatpush1.bf16.msra.mxu0 0
  %2467 = vmatprep.subr.bf16.mxu0 0
  %2468 = vmatpush1.bf16.msra.mxu0 0
  %2469 = vmatprep.mubr.bf16.mxu0 0
  %2470 = vmatmul.mubr.bf16.gmra.mrb[0].mxu0 %v2435
  %v2471 = vpop.f32.mrb[0].mxu0
  %v2472 = vadd.f32 0.0, %v2471
  %v2473 = vpop.f32.mrb[0].mxu0
  %v2474 = vpop.f32.mrb[0].mxu0
  %v2475 = vadd.f32 0.0, %v2474
  %v2476 = vpop.f32.mrb[0].mxu0
  %2477 = vdwg.mxu0
  %v2478 = vpack.c.bf16 %v2475, %v2472
  %s2479 = scalar_lea.vmem %s51, 12
  %v2480 = vld [vmem:[%s2479] sm:$0xf]
  %v2482 = vsel %vm976, %v2478, 0
  %v2485 = vsel %vm390, %v2480, 0
  %2487 = vmatprep.subr.bf16.mxu0 0
  %2488 = vmatpush1.bf16.msra.mxu0 %v2485
  %2489 = vmatprep.subr.bf16.mxu0 0
  %2490 = vmatpush1.bf16.msra.mxu0 0
  %2491 = vmatprep.subr.bf16.mxu0 0
  %2492 = vmatpush1.bf16.msra.mxu0 0
  %2493 = vmatprep.subr.bf16.mxu0 0
  %2494 = vmatpush1.bf16.msra.mxu0 0
  %2495 = vmatprep.subr.bf16.mxu0 0
  %2496 = vmatpush1.bf16.msra.mxu0 0
  %2497 = vmatprep.subr.bf16.mxu0 0
  %2498 = vmatpush1.bf16.msra.mxu0 0
  %2499 = vmatprep.subr.bf16.mxu0 0
  %2500 = vmatpush1.bf16.msra.mxu0 0
  %2501 = vmatprep.subr.bf16.mxu0 0
  %2502 = vmatpush1.bf16.msra.mxu0 0
  %2503 = vmatprep.subr.bf16.mxu0 0
  %2504 = vmatpush1.bf16.msra.mxu0 0
  %2505 = vmatprep.subr.bf16.mxu0 0
  %2506 = vmatpush1.bf16.msra.mxu0 0
  %2507 = vmatprep.subr.bf16.mxu0 0
  %2508 = vmatpush1.bf16.msra.mxu0 0
  %2509 = vmatprep.subr.bf16.mxu0 0
  %2510 = vmatpush1.bf16.msra.mxu0 0
  %2511 = vmatprep.subr.bf16.mxu0 0
  %2512 = vmatpush1.bf16.msra.mxu0 0
  %2513 = vmatprep.subr.bf16.mxu0 0
  %2514 = vmatpush1.bf16.msra.mxu0 0
  %2515 = vmatprep.subr.bf16.mxu0 0
  %2516 = vmatpush1.bf16.msra.mxu0 0
  %2517 = vmatprep.subr.bf16.mxu0 0
  %2518 = vmatpush1.bf16.msra.mxu0 0
  %2519 = vmatprep.mubr.bf16.mxu0 0
  %2520 = vmatmul.mubr.bf16.gmra.mrb[0].mxu0 %v2482
  %v2521 = vpop.f32.mrb[0].mxu0
  %v2522 = vadd.f32 0.0, %v2521
  %v2523 = vpop.f32.mrb[0].mxu0
  %v2524 = vpop.f32.mrb[0].mxu0
  %v2525 = vadd.f32 0.0, %v2524
  %v2526 = vpop.f32.mrb[0].mxu0
  %2527 = vdwg.mxu0
  %v2528 = vadd.f32 %v2343, %v2522
  %v2529 = vadd.f32 %v2344, %v2525
  %v2531 = vlaneseq
  %v2532 = vshrl.u32 %v2531, 7
  %v2533 = vsub.s32 0, %v2532
  %v2534 = vrot.slane %v1801, %v2533
  %v2536 = vadd.f32 %v2528, %v2534
  %v2537 = vadd.f32 %v2529, %v2534
  %v2538 = vadd.f32 %v1728, %v2536
  %v2539 = vadd.f32 %v1729, %v2537
  %s2540 = scalar_lea.vmem %s63, 1
  %v2541 = vld [vmem:[%s2540] sm:$0x1]
  %s2542 = scalar_lea.vmem %s65, 1
  %v2543 = vld [vmem:[%s2542] sm:$0x1]
  %v2544 = vsel %vm235, %v2538, 0.0
  %2545 = vadd.xlane.f32.xlu0 %v2544
  %v2546 = vpop.xlane.xlu0 %2545
  %v2547 = vsel %vm235, %v2539, 0.0
  %2548 = vadd.xlane.f32.xlu0 %v2547
  %v2549 = vpop.xlane.xlu0 %2548
  %v2550 = vmul.f32 %v2546, %v1693
  %v2551 = vmul.f32 %v2549, %v1693
  %v2552 = vsub.f32 %v2538, %v2550
  %v2553 = vsub.f32 %v2539, %v2551
  %v2554 = vmul.f32 %v2552, %v2552
  %v2555 = vmul.f32 %v2553, %v2553
  %v2556 = vsel %vm235, %v2554, 0.0
  %2557 = vadd.xlane.f32.xlu0 %v2556
  %v2558 = vpop.xlane.xlu0 %2557
  %v2559 = vsel %vm235, %v2555, 0.0
  %2560 = vadd.xlane.f32.xlu0 %v2559
  %v2561 = vpop.xlane.xlu0 %2560
  %v2562 = vmul.f32 %v2558, %v1693
  %v2563 = vmul.f32 %v2561, %v1693
  %v2564 = vadd.f32 %v2562, 1e-05
  %v2565 = vadd.f32 %v2563, 1e-05
  %v2566 = vrsqrt.pop %v2564
  %v2567 = vrsqrt.pop %v2565
  %v2568 = vmul.f32 %v2552, %v2566
  %v2569 = vmul.f32 %v2553, %v2567
  %v2571 = vlaneseq
  %v2572 = vshrl.u32 %v2571, 7
  %v2573 = vsub.s32 0, %v2572
  %v2574 = vrot.slane %v2541, %v2573
  %v2576 = vmul.f32 %v2568, %v2574
  %v2577 = vmul.f32 %v2569, %v2574
  %v2579 = vlaneseq
  %v2580 = vshrl.u32 %v2579, 7
  %v2581 = vsub.s32 0, %v2580
  %v2582 = vrot.slane %v2543, %v2581
  %v2584 = vadd.f32 %v2576, %v2582
  %v2585 = vadd.f32 %v2577, %v2582
  %v2586 = vld [vmem:[%s55] sm:$0xf]
  %v2587 = vld [vmem:[%s55 + $0x4] sm:$0xf]
  %v2588 = vld [vmem:[%s55 + $0x8] sm:$0xf]
  %v2589 = vld [vmem:[%s55 + $0xc] sm:$0xf]
  %v2590 = vld [vmem:[%s57] sm:$0x1]
  %v2591 = vpack.c.bf16 %v2585, %v2584
  %v2593 = vlaneseq
  %v2594 = vshrl.u32 %v2593, 7
  %v2595 = vsub.s32 0, %v2594
  %v2596 = vrot.slane %v2590, %v2595
  %v2602 = vunpack.c.l.b16 %v2586
  %v2603 = vunpack.c.l.b16 %v2587
  %v2604 = vunpack.c.l.b16 %v2588
  %v2605 = vunpack.c.l.b16 %v2589
  %v2606 = vpack.c.b16 %v2603, %v2602
  %v2607 = vpack.c.b16 %v2605, %v2604
  %v2611 = vsel %vm235, %v2591, 0
  %2613 = vmatprep.subr.bf16.mxu0 0
  %2614 = vmatpush1.bf16.msra.mxu0 %v2606
  %2615 = vmatprep.subr.bf16.mxu0 0
  %2616 = vmatpush1.bf16.msra.mxu0 %v2607
  %2617 = vmatprep.subr.bf16.mxu0 0
  %2618 = vmatpush1.bf16.msra.mxu0 0
  %2619 = vmatprep.subr.bf16.mxu0 0
  %2620 = vmatpush1.bf16.msra.mxu0 0
  %2621 = vmatprep.subr.bf16.mxu0 0
  %2622 = vmatpush1.bf16.msra.mxu0 0
  %2623 = vmatprep.subr.bf16.mxu0 0
  %2624 = vmatpush1.bf16.msra.mxu0 0
  %2625 = vmatprep.subr.bf16.mxu0 0
  %2626 = vmatpush1.bf16.msra.mxu0 0
  %2627 = vmatprep.subr.bf16.mxu0 0
  %2628 = vmatpush1.bf16.msra.mxu0 0
  %2629 = vmatprep.subr.bf16.mxu0 0
  %2630 = vmatpush1.bf16.msra.mxu0 0
  %2631 = vmatprep.subr.bf16.mxu0 0
  %2632 = vmatpush1.bf16.msra.mxu0 0
  %2633 = vmatprep.subr.bf16.mxu0 0
  %2634 = vmatpush1.bf16.msra.mxu0 0
  %2635 = vmatprep.subr.bf16.mxu0 0
  %2636 = vmatpush1.bf16.msra.mxu0 0
  %2637 = vmatprep.subr.bf16.mxu0 0
  %2638 = vmatpush1.bf16.msra.mxu0 0
  %2639 = vmatprep.subr.bf16.mxu0 0
  %2640 = vmatpush1.bf16.msra.mxu0 0
  %2641 = vmatprep.subr.bf16.mxu0 0
  %2642 = vmatpush1.bf16.msra.mxu0 0
  %2643 = vmatprep.subr.bf16.mxu0 0
  %2644 = vmatpush1.bf16.msra.mxu0 0
  %2645 = vmatprep.mubr.bf16.mxu0 0
  %2646 = vmatmul.mubr.bf16.gmra.mrb[0].mxu0 %v2611
  %v2647 = vpop.f32.mrb[0].mxu0
  %v2648 = vadd.f32 %v2596, %v2647
  %v2649 = vpop.f32.mrb[0].mxu0
  %v2650 = vpop.f32.mrb[0].mxu0
  %v2651 = vadd.f32 %v2596, %v2650
  %v2652 = vpop.f32.mrb[0].mxu0
  %2653 = vdwg.mxu0
  %v2654 = vmax.f32 %v2648, 0.0
  %v2655 = vmax.f32 %v2651, 0.0
  %v2656 = vld [vmem:[%s59] sm:$0xf]
  %v2657 = vld [vmem:[%s59 + $0x4] sm:$0xf]
  %v2658 = vld [vmem:[%s59 + $0x8] sm:$0xf]
  %v2659 = vld [vmem:[%s59 + $0xc] sm:$0xf]
  %v2660 = vld [vmem:[%s59 + $0x10] sm:$0xf]
  %v2661 = vld [vmem:[%s59 + $0x14] sm:$0xf]
  %v2662 = vld [vmem:[%s59 + $0x18] sm:$0xf]
  %v2663 = vld [vmem:[%s59 + $0x1c] sm:$0xf]
  %v2664 = vld [vmem:[%s61] sm:$0x1]
  %v2665 = vpack.c.bf16 %v2655, %v2654
  %v2667 = vlaneseq
  %v2668 = vshrl.u32 %v2667, 7
  %v2669 = vsub.s32 0, %v2668
  %v2670 = vrot.slane %v2664, %v2669
  %v2680 = vunpack.c.l.b16 %v2656
  %v2681 = vunpack.c.l.b16 %v2657
  %v2682 = vunpack.c.l.b16 %v2658
  %v2683 = vunpack.c.l.b16 %v2659
  %v2684 = vunpack.c.l.b16 %v2660
  %v2685 = vunpack.c.l.b16 %v2661
  %v2686 = vunpack.c.l.b16 %v2662
  %v2687 = vunpack.c.l.b16 %v2663
  %v2688 = vpack.c.b16 %v2681, %v2680
  %v2689 = vpack.c.b16 %v2683, %v2682
  %v2690 = vpack.c.b16 %v2685, %v2684
  %v2691 = vpack.c.b16 %v2687, %v2686
  %v2697 = vsel %vm717, %v2665, 0
  %2699 = vmatprep.subr.bf16.mxu0 0
  %2700 = vmatpush1.bf16.msra.mxu0 %v2688
  %2701 = vmatprep.subr.bf16.mxu0 0
  %2702 = vmatpush1.bf16.msra.mxu0 %v2689
  %2703 = vmatprep.subr.bf16.mxu0 0
  %2704 = vmatpush1.bf16.msra.mxu0 %v2690
  %2705 = vmatprep.subr.bf16.mxu0 0
  %2706 = vmatpush1.bf16.msra.mxu0 %v2691
  %2707 = vmatprep.subr.bf16.mxu0 0
  %2708 = vmatpush1.bf16.msra.mxu0 0
  %2709 = vmatprep.subr.bf16.mxu0 0
  %2710 = vmatpush1.bf16.msra.mxu0 0
  %2711 = vmatprep.subr.bf16.mxu0 0
  %2712 = vmatpush1.bf16.msra.mxu0 0
  %2713 = vmatprep.subr.bf16.mxu0 0
  %2714 = vmatpush1.bf16.msra.mxu0 0
  %2715 = vmatprep.subr.bf16.mxu0 0
  %2716 = vmatpush1.bf16.msra.mxu0 0
  %2717 = vmatprep.subr.bf16.mxu0 0
  %2718 = vmatpush1.bf16.msra.mxu0 0
  %2719 = vmatprep.subr.bf16.mxu0 0
  %2720 = vmatpush1.bf16.msra.mxu0 0
  %2721 = vmatprep.subr.bf16.mxu0 0
  %2722 = vmatpush1.bf16.msra.mxu0 0
  %2723 = vmatprep.subr.bf16.mxu0 0
  %2724 = vmatpush1.bf16.msra.mxu0 0
  %2725 = vmatprep.subr.bf16.mxu0 0
  %2726 = vmatpush1.bf16.msra.mxu0 0
  %2727 = vmatprep.subr.bf16.mxu0 0
  %2728 = vmatpush1.bf16.msra.mxu0 0
  %2729 = vmatprep.subr.bf16.mxu0 0
  %2730 = vmatpush1.bf16.msra.mxu0 0
  %2731 = vmatprep.mubr.bf16.mxu0 0
  %2732 = vmatmul.mubr.bf16.gmra.mrb[0].mxu0 %v2697
  %v2733 = vpop.f32.mrb[0].mxu0
  %v2734 = vadd.f32 %v2670, %v2733
  %v2735 = vpop.f32.mrb[0].mxu0
  %v2736 = vpop.f32.mrb[0].mxu0
  %v2737 = vadd.f32 %v2670, %v2736
  %v2738 = vpop.f32.mrb[0].mxu0
  %2739 = vdwg.mxu0
  %v2740 = vadd.f32 %v2584, %v2734
  %v2741 = vadd.f32 %v2585, %v2737
  %s2742 = scalar_lea.vmem %s63, 2
  %v2743 = vld [vmem:[%s2742] sm:$0x1]
  %s2744 = scalar_lea.vmem %s65, 2
  %v2745 = vld [vmem:[%s2744] sm:$0x1]
  %v2746 = vsel %vm235, %v2740, 0.0
  %2747 = vadd.xlane.f32.xlu0 %v2746
  %v2748 = vpop.xlane.xlu0 %2747
  %v2749 = vsel %vm235, %v2741, 0.0
  %2750 = vadd.xlane.f32.xlu0 %v2749
  %v2751 = vpop.xlane.xlu0 %2750
  %v2752 = vmul.f32 %v2748, %v1693
  %v2753 = vmul.f32 %v2751, %v1693
  %v2754 = vsub.f32 %v2740, %v2752
  %v2755 = vsub.f32 %v2741, %v2753
  %v2756 = vmul.f32 %v2754, %v2754
  %v2757 = vmul.f32 %v2755, %v2755
  %v2758 = vsel %vm235, %v2756, 0.0
  %2759 = vadd.xlane.f32.xlu0 %v2758
  %v2760 = vpop.xlane.xlu0 %2759
  %v2761 = vsel %vm235, %v2757, 0.0
  %2762 = vadd.xlane.f32.xlu0 %v2761
  %v2763 = vpop.xlane.xlu0 %2762
  %v2764 = vmul.f32 %v2760, %v1693
  %v2765 = vmul.f32 %v2763, %v1693
  %v2766 = vadd.f32 %v2764, 1e-05
  %v2767 = vadd.f32 %v2765, 1e-05
  %v2768 = vrsqrt.pop %v2766
  %v2769 = vrsqrt.pop %v2767
  %v2770 = vmul.f32 %v2754, %v2768
  %v2771 = vmul.f32 %v2755, %v2769
  %v2773 = vlaneseq
  %v2774 = vshrl.u32 %v2773, 7
  %v2775 = vsub.s32 0, %v2774
  %v2776 = vrot.slane %v2743, %v2775
  %v2778 = vmul.f32 %v2770, %v2776
  %v2779 = vmul.f32 %v2771, %v2776
  %v2781 = vlaneseq
  %v2782 = vshrl.u32 %v2781, 7
  %v2783 = vsub.s32 0, %v2782
  %v2784 = vrot.slane %v2745, %v2783
  %v2786 = vadd.f32 %v2778, %v2784
  %v2787 = vadd.f32 %v2779, %v2784
  %v2788 = vld [vmem:[%s67] sm:$0x1]
  %v2789 = vld [vmem:[%s69] sm:$0x1]
  %v2790 = vsel %vm235, %v2786, 0.0
  %2791 = vadd.xlane.f32.xlu0 %v2790
  %v2792 = vpop.xlane.xlu0 %2791
  %v2793 = vsel %vm235, %v2787, 0.0
  %2794 = vadd.xlane.f32.xlu0 %v2793
  %v2795 = vpop.xlane.xlu0 %2794
  %v2796 = vmul.f32 %v2792, %v1693
  %v2797 = vmul.f32 %v2795, %v1693
  %v2798 = vsub.f32 %v2786, %v2796
  %v2799 = vsub.f32 %v2787, %v2797
  %v2800 = vmul.f32 %v2798, %v2798
  %v2801 = vmul.f32 %v2799, %v2799
  %v2802 = vsel %vm235, %v2800, 0.0
  %2803 = vadd.xlane.f32.xlu0 %v2802
  %v2804 = vpop.xlane.xlu0 %2803
  %v2805 = vsel %vm235, %v2801, 0.0
  %2806 = vadd.xlane.f32.xlu0 %v2805
  %v2807 = vpop.xlane.xlu0 %2806
  %v2808 = vmul.f32 %v2804, %v1693
  %v2809 = vmul.f32 %v2807, %v1693
  %v2810 = vadd.f32 %v2808, 1e-05
  %v2811 = vadd.f32 %v2809, 1e-05
  %v2812 = vrsqrt.pop %v2810
  %v2813 = vrsqrt.pop %v2811
  %v2814 = vmul.f32 %v2798, %v2812
  %v2815 = vmul.f32 %v2799, %v2813
  %v2817 = vlaneseq
  %v2818 = vshrl.u32 %v2817, 7
  %v2819 = vsub.s32 0, %v2818
  %v2820 = vrot.slane %v2788, %v2819
  %v2822 = vmul.f32 %v2814, %v2820
  %v2823 = vmul.f32 %v2815, %v2820
  %v2825 = vlaneseq
  %v2826 = vshrl.u32 %v2825, 7
  %v2827 = vsub.s32 0, %v2826
  %v2828 = vrot.slane %v2789, %v2827
  %v2830 = vadd.f32 %v2822, %v2828
  %v2831 = vadd.f32 %v2823, %v2828
  %2832 = vst.msk [vmem:[%s83] sm:$0xff] %vm235, %v2830
  %2833 = vst.msk [vmem:[%s83 + $0x8] sm:$0xff] %vm235, %v2831
  %v2834 = vmax.f32 %v207, 0.0
  %v2835 = vmax.f32 %v209, 0.0
  %v2836 = vmin.f32 %v2834, 1.0
  %v2837 = vmin.f32 %v2835, 1.0
  %v2838 = vmax.f32 %v2836, 0.001
  %v2839 = vmax.f32 %v2837, 0.001
  %v2840 = vsub.f32 1.0, %v2836
  %v2841 = vsub.f32 1.0, %v2837
  %v2842 = vmax.f32 %v2840, 0.001
  %v2843 = vmax.f32 %v2841, 0.001
  %v2844 = vrcp.pop %v2842
  %v2845 = vmul.f32 %v2838, %v2844
  %v2846 = vrcp.pop %v2843
  %v2847 = vmul.f32 %v2839, %v2846
  %v2848 = vlog2.pop %v2845
  %v2849 = vmul.f32 %v2848, 0.6931472
  %v2850 = vlog2.pop %v2847
  %v2851 = vmul.f32 %v2850, 0.6931472
  %v2852 = vld [vmem:[%s71] sm:$0xf]
  %v2853 = vld [vmem:[%s71 + $0x4] sm:$0xf]
  %v2854 = vld [vmem:[%s71 + $0x8] sm:$0xf]
  %v2855 = vld [vmem:[%s71 + $0xc] sm:$0xf]
  %v2856 = vld [vmem:[%s73] sm:$0x1]
  %v2857 = vpack.c.bf16 %v2787, %v2786
  %v2859 = vlaneseq
  %v2860 = vshrl.u32 %v2859, 7
  %v2861 = vsub.s32 0, %v2860
  %v2862 = vrot.slane %v2856, %v2861
  %v2868 = vunpack.c.l.b16 %v2852
  %v2869 = vunpack.c.l.b16 %v2853
  %v2870 = vunpack.c.l.b16 %v2854
  %v2871 = vunpack.c.l.b16 %v2855
  %v2872 = vpack.c.b16 %v2869, %v2868
  %v2873 = vpack.c.b16 %v2871, %v2870
  %v2877 = vsel %vm235, %v2857, 0
  %2879 = vmatprep.subr.bf16.mxu0 0
  %2880 = vmatpush1.bf16.msra.mxu0 %v2872
  %2881 = vmatprep.subr.bf16.mxu0 0
  %2882 = vmatpush1.bf16.msra.mxu0 %v2873
  %2883 = vmatprep.subr.bf16.mxu0 0
  %2884 = vmatpush1.bf16.msra.mxu0 0
  %2885 = vmatprep.subr.bf16.mxu0 0
  %2886 = vmatpush1.bf16.msra.mxu0 0
  %2887 = vmatprep.subr.bf16.mxu0 0
  %2888 = vmatpush1.bf16.msra.mxu0 0
  %2889 = vmatprep.subr.bf16.mxu0 0
  %2890 = vmatpush1.bf16.msra.mxu0 0
  %2891 = vmatprep.subr.bf16.mxu0 0
  %2892 = vmatpush1.bf16.msra.mxu0 0
  %2893 = vmatprep.subr.bf16.mxu0 0
  %2894 = vmatpush1.bf16.msra.mxu0 0
  %2895 = vmatprep.subr.bf16.mxu0 0
  %2896 = vmatpush1.bf16.msra.mxu0 0
  %2897 = vmatprep.subr.bf16.mxu0 0
  %2898 = vmatpush1.bf16.msra.mxu0 0
  %2899 = vmatprep.subr.bf16.mxu0 0
  %2900 = vmatpush1.bf16.msra.mxu0 0
  %2901 = vmatprep.subr.bf16.mxu0 0
  %2902 = vmatpush1.bf16.msra.mxu0 0
  %2903 = vmatprep.subr.bf16.mxu0 0
  %2904 = vmatpush1.bf16.msra.mxu0 0
  %2905 = vmatprep.subr.bf16.mxu0 0
  %2906 = vmatpush1.bf16.msra.mxu0 0
  %2907 = vmatprep.subr.bf16.mxu0 0
  %2908 = vmatpush1.bf16.msra.mxu0 0
  %2909 = vmatprep.subr.bf16.mxu0 0
  %2910 = vmatpush1.bf16.msra.mxu0 0
  %2911 = vmatprep.mubr.bf16.mxu0 0
  %2912 = vmatmul.mubr.bf16.gmra.mrb[0].mxu0 %v2877
  %v2913 = vpop.f32.mrb[0].mxu0
  %v2914 = vadd.f32 %v2862, %v2913
  %v2915 = vpop.f32.mrb[0].mxu0
  %v2916 = vpop.f32.mrb[0].mxu0
  %v2917 = vadd.f32 %v2862, %v2916
  %v2918 = vpop.f32.mrb[0].mxu0
  %2919 = vdwg.mxu0
  %v2920 = vmax.f32 %v2914, 0.0
  %v2921 = vmax.f32 %v2917, 0.0
  %v2922 = vld [vmem:[%s75] sm:$0xf]
  %v2923 = vld [vmem:[%s75 + $0x4] sm:$0xf]
  %v2924 = vld [vmem:[%s75 + $0x8] sm:$0xf]
  %v2925 = vld [vmem:[%s75 + $0xc] sm:$0xf]
  %v2926 = vld [vmem:[%s77] sm:$0x1]
  %v2927 = vpack.c.bf16 %v2921, %v2920
  %v2929 = vlaneseq
  %v2930 = vshrl.u32 %v2929, 7
  %v2931 = vsub.s32 0, %v2930
  %v2932 = vrot.slane %v2926, %v2931
  %v2938 = vunpack.c.l.b16 %v2922
  %v2939 = vunpack.c.l.b16 %v2923
  %v2940 = vunpack.c.l.b16 %v2924
  %v2941 = vunpack.c.l.b16 %v2925
  %v2942 = vpack.c.b16 %v2939, %v2938
  %v2943 = vpack.c.b16 %v2941, %v2940
  %v2947 = vsel %vm235, %v2927, 0
  %2949 = vmatprep.subr.bf16.mxu0 0
  %2950 = vmatpush1.bf16.msra.mxu0 %v2942
  %2951 = vmatprep.subr.bf16.mxu0 0
  %2952 = vmatpush1.bf16.msra.mxu0 %v2943
  %2953 = vmatprep.subr.bf16.mxu0 0
  %2954 = vmatpush1.bf16.msra.mxu0 0
  %2955 = vmatprep.subr.bf16.mxu0 0
  %2956 = vmatpush1.bf16.msra.mxu0 0
  %2957 = vmatprep.subr.bf16.mxu0 0
  %2958 = vmatpush1.bf16.msra.mxu0 0
  %2959 = vmatprep.subr.bf16.mxu0 0
  %2960 = vmatpush1.bf16.msra.mxu0 0
  %2961 = vmatprep.subr.bf16.mxu0 0
  %2962 = vmatpush1.bf16.msra.mxu0 0
  %2963 = vmatprep.subr.bf16.mxu0 0
  %2964 = vmatpush1.bf16.msra.mxu0 0
  %2965 = vmatprep.subr.bf16.mxu0 0
  %2966 = vmatpush1.bf16.msra.mxu0 0
  %2967 = vmatprep.subr.bf16.mxu0 0
  %2968 = vmatpush1.bf16.msra.mxu0 0
  %2969 = vmatprep.subr.bf16.mxu0 0
  %2970 = vmatpush1.bf16.msra.mxu0 0
  %2971 = vmatprep.subr.bf16.mxu0 0
  %2972 = vmatpush1.bf16.msra.mxu0 0
  %2973 = vmatprep.subr.bf16.mxu0 0
  %2974 = vmatpush1.bf16.msra.mxu0 0
  %2975 = vmatprep.subr.bf16.mxu0 0
  %2976 = vmatpush1.bf16.msra.mxu0 0
  %2977 = vmatprep.subr.bf16.mxu0 0
  %2978 = vmatpush1.bf16.msra.mxu0 0
  %2979 = vmatprep.subr.bf16.mxu0 0
  %2980 = vmatpush1.bf16.msra.mxu0 0
  %2981 = vmatprep.mubr.bf16.mxu0 0
  %2982 = vmatmul.mubr.bf16.gmra.mrb[0].mxu0 %v2947
  %v2983 = vpop.f32.mrb[0].mxu0
  %v2984 = vadd.f32 %v2932, %v2983
  %v2985 = vpop.f32.mrb[0].mxu0
  %v2986 = vpop.f32.mrb[0].mxu0
  %v2987 = vadd.f32 %v2932, %v2986
  %v2988 = vpop.f32.mrb[0].mxu0
  %2989 = vdwg.mxu0
  %v2990 = vmax.f32 %v2984, 0.0
  %v2991 = vmax.f32 %v2987, 0.0
  %v2992 = vld [vmem:[%s79] sm:$0xf]
  %v2993 = vld [vmem:[%s79 + $0x4] sm:$0xf]
  %v2994 = vld [vmem:[%s79 + $0x8] sm:$0xf]
  %v2995 = vld [vmem:[%s79 + $0xc] sm:$0xf]
  %v2996 = vld [vmem:[%s81] sm:$0x1]
  %v2997 = vpack.c.bf16 %v2991, %v2990
  %v2999 = vlaneseq
  %v3000 = vshrl.u32 %v2999, 7
  %v3001 = vsub.s32 0, %v3000
  %v3002 = vrot.slane %v2996, %v3001
  %v3008 = vunpack.c.l.b16 %v2992
  %v3009 = vunpack.c.l.b16 %v2993
  %v3010 = vunpack.c.l.b16 %v2994
  %v3011 = vunpack.c.l.b16 %v2995
  %v3012 = vpack.c.b16 %v3009, %v3008
  %v3013 = vpack.c.b16 %v3011, %v3010
  %v3017 = vsel %vm235, %v2997, 0
  %3019 = vmatprep.subr.bf16.mxu0 0
  %3020 = vmatpush1.bf16.msra.mxu0 %v3012
  %3021 = vmatprep.subr.bf16.mxu0 0
  %3022 = vmatpush1.bf16.msra.mxu0 %v3013
  %3023 = vmatprep.subr.bf16.mxu0 0
  %3024 = vmatpush1.bf16.msra.mxu0 0
  %3025 = vmatprep.subr.bf16.mxu0 0
  %3026 = vmatpush1.bf16.msra.mxu0 0
  %3027 = vmatprep.subr.bf16.mxu0 0
  %3028 = vmatpush1.bf16.msra.mxu0 0
  %3029 = vmatprep.subr.bf16.mxu0 0
  %3030 = vmatpush1.bf16.msra.mxu0 0
  %3031 = vmatprep.subr.bf16.mxu0 0
  %3032 = vmatpush1.bf16.msra.mxu0 0
  %3033 = vmatprep.subr.bf16.mxu0 0
  %3034 = vmatpush1.bf16.msra.mxu0 0
  %3035 = vmatprep.subr.bf16.mxu0 0
  %3036 = vmatpush1.bf16.msra.mxu0 0
  %3037 = vmatprep.subr.bf16.mxu0 0
  %3038 = vmatpush1.bf16.msra.mxu0 0
  %3039 = vmatprep.subr.bf16.mxu0 0
  %3040 = vmatpush1.bf16.msra.mxu0 0
  %3041 = vmatprep.subr.bf16.mxu0 0
  %3042 = vmatpush1.bf16.msra.mxu0 0
  %3043 = vmatprep.subr.bf16.mxu0 0
  %3044 = vmatpush1.bf16.msra.mxu0 0
  %3045 = vmatprep.subr.bf16.mxu0 0
  %3046 = vmatpush1.bf16.msra.mxu0 0
  %3047 = vmatprep.subr.bf16.mxu0 0
  %3048 = vmatpush1.bf16.msra.mxu0 0
  %3049 = vmatprep.subr.bf16.mxu0 0
  %3050 = vmatpush1.bf16.msra.mxu0 0
  %3051 = vmatprep.mubr.bf16.mxu0 0
  %3052 = vmatmul.mubr.bf16.gmra.mrb[0].mxu0 %v3017
  %v3053 = vpop.f32.mrb[0].mxu0
  %v3054 = vadd.f32 %v3002, %v3053
  %v3055 = vpop.f32.mrb[0].mxu0
  %v3056 = vpop.f32.mrb[0].mxu0
  %v3057 = vadd.f32 %v3002, %v3056
  %v3058 = vpop.f32.mrb[0].mxu0
  %3059 = vdwg.mxu0
  %v3060 = vadd.f32 %v3054, %v2849
  %v3061 = vadd.f32 %v3057, %v2851
  %v3062 = vxor.u32 %v3060, 2147483648
  %v3063 = vxor.u32 %v3061, 2147483648
  %v3064 = vmul.f32 %v3062, 1.442695
  %v3065 = vpow.pop %v3064
  %v3066 = vmul.f32 %v3063, 1.442695
  %v3067 = vpow.pop %v3066
  %v3068 = vadd.f32 %v3065, 1.0
  %v3069 = vadd.f32 %v3067, 1.0
  %v3070 = vrcp.pop %v3068
  %v3071 = vmul.f32 1.0, %v3070
  %v3072 = vrcp.pop %v3069
  %v3073 = vmul.f32 1.0, %v3072
  %v3074 = vmul.f32 %v3071, %v188
  %v3075 = vmul.f32 %v3073, %v189
  %v3077 = vsel %vm383, %v3074, 0
  %v3080 = vsel %vm383, %v3075, 0
  %3082 = vmatprep.subr.mxu0 0.0
  %3083 = vmatpush1.msra.mxu0 %v392
  %3084 = vmatprep.subr.mxu0 0.0
  %3085 = vmatpush1.msra.mxu0 0.0
  %3086 = vmatprep.subr.mxu0 0.0
  %3087 = vmatpush1.msra.mxu0 0.0
  %3088 = vmatprep.subr.mxu0 0.0
  %3089 = vmatpush1.msra.mxu0 0.0
  %3090 = vmatprep.subr.mxu0 0.0
  %3091 = vmatpush1.msra.mxu0 0.0
  %3092 = vmatprep.subr.mxu0 0.0
  %3093 = vmatpush1.msra.mxu0 0.0
  %3094 = vmatprep.subr.mxu0 0.0
  %3095 = vmatpush1.msra.mxu0 0.0
  %3096 = vmatprep.subr.mxu0 0.0
  %3097 = vmatpush1.msra.mxu0 0.0
  %3098 = vmatprep.subr.mxu0 0.0
  %3099 = vmatpush1.msra.mxu0 0.0
  %3100 = vmatprep.subr.mxu0 0.0
  %3101 = vmatpush1.msra.mxu0 0.0
  %3102 = vmatprep.subr.mxu0 0.0
  %3103 = vmatpush1.msra.mxu0 0.0
  %3104 = vmatprep.subr.mxu0 0.0
  %3105 = vmatpush1.msra.mxu0 0.0
  %3106 = vmatprep.subr.mxu0 0.0
  %3107 = vmatpush1.msra.mxu0 0.0
  %3108 = vmatprep.subr.mxu0 0.0
  %3109 = vmatpush1.msra.mxu0 0.0
  %3110 = vmatprep.subr.mxu0 0.0
  %3111 = vmatpush1.msra.mxu0 0.0
  %3112 = vmatprep.subr.mxu0 0.0
  %3113 = vmatpush1.msra.mxu0 0.0
  %3114 = vmatprep.subr.mxu0 0.0
  %3115 = vmatpush1.msra.mxu0 0.0
  %3116 = vmatprep.subr.mxu0 0.0
  %3117 = vmatpush1.msra.mxu0 0.0
  %3118 = vmatprep.subr.mxu0 0.0
  %3119 = vmatpush1.msra.mxu0 0.0
  %3120 = vmatprep.subr.mxu0 0.0
  %3121 = vmatpush1.msra.mxu0 0.0
  %3122 = vmatprep.subr.mxu0 0.0
  %3123 = vmatpush1.msra.mxu0 0.0
  %3124 = vmatprep.subr.mxu0 0.0
  %3125 = vmatpush1.msra.mxu0 0.0
  %3126 = vmatprep.subr.mxu0 0.0
  %3127 = vmatpush1.msra.mxu0 0.0
  %3128 = vmatprep.subr.mxu0 0.0
  %3129 = vmatpush1.msra.mxu0 0.0
  %3130 = vmatprep.subr.mxu0 0.0
  %3131 = vmatpush1.msra.mxu0 0.0
  %3132 = vmatprep.subr.mxu0 0.0
  %3133 = vmatpush1.msra.mxu0 0.0
  %3134 = vmatprep.subr.mxu0 0.0
  %3135 = vmatpush1.msra.mxu0 0.0
  %3136 = vmatprep.subr.mxu0 0.0
  %3137 = vmatpush1.msra.mxu0 0.0
  %3138 = vmatprep.subr.mxu0 0.0
  %3139 = vmatpush1.msra.mxu0 0.0
  %3140 = vmatprep.subr.mxu0 0.0
  %3141 = vmatpush1.msra.mxu0 0.0
  %3142 = vmatprep.subr.mxu0 0.0
  %3143 = vmatpush1.msra.mxu0 0.0
  %3144 = vmatprep.subr.mxu0 0.0
  %3145 = vmatpush1.msra.mxu0 0.0
  %3146 = vmatprep.mubr.f32.mxu0 0.0
  %3147 = vmatmul.mubr.f32.gmra.mrb[0].mxu0 %v3077
  %v3148 = vpop.f32.mrb[0].mxu0
  %v3149 = vadd.f32 %v381, %v3148
  %v3150 = vpop.f32.mrb[0].mxu0
  %3151 = vmatprep.mubr.f32.mxu0 0.0
  %3152 = vmatmul.mubr.f32.gmra.mrb[0].mxu0 %v3080
  %v3153 = vpop.f32.mrb[0].mxu0
  %v3154 = vadd.f32 %v381, %v3153
  %v3155 = vpop.f32.mrb[0].mxu0
  %3156 = vdwg.mxu0
  %v3157 = vand.u32 2147483647, %v3149
  %vm3158 = vcmp.le.f32.partialorder %v3157, 0.7853982
  %vm3159 = vcmp.lt.s32.totalorder %v3149, 0
  %v3160 = vand.u32 %v3149, 2139095040
  %v3161 = vshrl.u32 %v3160, 23
  %v3162 = vsub.s32 %v3161, 127
  %v3163 = vand.u32 2147483647, %v3149
  %v3164 = vand.u32 %v3163, 8388607
  %v3165 = vor.u32 %v3164, 8388608
  %v3166 = vsub.s32 0, %v3165
  %v3167 = vadd.s32 %v3162, 1
  %vm3168 = vcmp.gt.s32.totalorder %v3167, 0
  %v3169 = vsel %vm3168, %v3167, 0
  %v3170 = vshrl.u32 %v3169, 5
  %v3171 = vand.u32 %v3169, 31
  %v3172 = vsub.s32 32, %v3171
  %v3173 = vshrl.u32 683565275, %v3172
  %v3174 = vshll.u32 683565275, %v3171
  %v3175 = vshrl.u32 2475754826, %v3172
  %v3176 = vor.u32 %v3174, %v3175
  %v3177 = vshll.u32 2475754826, %v3171
  %v3178 = vshrl.u32 2131351028, %v3172
  %v3179 = vor.u32 %v3177, %v3178
  %v3180 = vshll.u32 2131351028, %v3171
  %v3181 = vshrl.u32 2102212464, %v3172
  %v3182 = vor.u32 %v3180, %v3181
  %v3183 = vshll.u32 2102212464, %v3171
  %v3184 = vshrl.u32 920167782, %v3172
  %v3185 = vor.u32 %v3183, %v3184
  %v3186 = vshll.u32 920167782, %v3171
  %v3187 = vshrl.u32 1326507024, %v3172
  %v3188 = vor.u32 %v3186, %v3187
  %vm3189 = vcmp.lt.s32.totalorder %v3170, 1
  %vm3190 = vcmp.lt.s32.totalorder %v3170, 2
  %vm3191 = vcmp.lt.s32.totalorder %v3170, 3
  %vm3192 = vcmp.lt.s32.totalorder %v3170, 4
  %v3193 = vsel %vm3189, %v3173, %v3176
  %v3194 = vsel %vm3192, %v3182, 2102212464
  %v3195 = vsel %vm3191, %v3179, %v3194
  %v3196 = vsel %vm3190, %v3193, %v3195
  %v3197 = vsel %vm3189, %v3176, %v3179
  %v3198 = vsel %vm3192, %v3185, 920167782
  %v3199 = vsel %vm3191, %v3182, %v3198
  %v3200 = vsel %vm3190, %v3197, %v3199
  %v3201 = vsel %vm3189, %v3179, %v3182
  %v3202 = vsel %vm3192, %v3188, 1326507024
  %v3203 = vsel %vm3191, %v3185, %v3202
  %v3204 = vsel %vm3190, %v3201, %v3203
  %v3205 = vshll.u32 %v3165, 8
  %v3206 = vmul.u32.u64.compose %v3205, %v3204
  %v3207 = vextract.low.u32 %v3206
  %v3208 = vextract.high.u32 %v3206
  %v3209 = vmul.u32.u64.compose %v3205, %v3200
  %v3210 = vextract.low.u32 %v3209
  %v3211 = vextract.high.u32 %v3209
  %v3212 = vmul.u32 %v3205, %v3196
  %v3213 = vadd.s32 %v3208, %v3210
  %vm3214 = vc.u32 %v3208, %v3210
  %v3215 = vadd.s32 %v3211, 1
  %v3216 = vsel %vm3214, %v3215, %v3211
  %v3217 = vadd.s32 %v3212, %v3216
  %v3218 = vadd.s32 %v3217, 536870912
  %v3219 = vshrl.u32 %v3218, 30
  %v3220 = vshll.u32 %v3219, 30
  %v3221 = vsub.s32 %v3217, %v3220
  %vm3222 = vcmp.lt.s32.totalorder %v3221, 0
  %v3223 = vsub.s32 0, %v3221
  %v3224 = vsel %vm3222, %v3223, %v3221
  %v3225 = vclz %v3224
  %v3226 = vsub.s32 %v3225, 2
  %vm3227 = vcmp.gt.s32.totalorder 0, %v3226
  %v3228 = vsel %vm3227, 0, %v3226
  %v3229 = vsub.s32 32, %v3228
  %v3230 = vshll.u32 %v3221, %v3228
  %v3231 = vshrl.u32 %v3213, %v3229
  %v3232 = vor.u32 %v3230, %v3231
  %v3233 = vsub.s32 4294967266, %v3228
  %v3234 = vadd.s32 %v3233, 127
  %v3235 = vshll.u32 %v3234, 23
  %v3236 = vor.u32 4788187, %v3235
  %v3237 = vand.u32 2147483647, %v3236
  %v3239 = vcvt.s32.f32 %v3232
  %v3240 = vmul.f32 %v3239, %v3237
  %v3241 = vxor.u32 %v3240, 2147483648
  %v3242 = vsel %vm3159, %v3241, %v3240
  %v3243 = vsub.s32 4, %v3219
  %v3244 = vsel %vm3159, %v3243, %v3219
  %v3245 = vsel %vm3158, %v3149, %v3242
  %v3246 = vsel %vm3158, 0, %v3244
  %v3247 = vcosq.f32.pop %v3245
  %v3248 = vsinq.f32.pop %v3245
  %vm3249 = vweird.f32 %v3149
  %v3250 = vadd.s32 %v3246, 3
  %v3251 = vand.u32 %v3250, 3
  %vm3252 = vcmp.lt.s32.totalorder %v3251, 2
  %vm3253 = vcmp.eq.s32.totalorder %v3251, 0
  %v3254 = vxor.u32 %v3248, 2147483648
  %v3255 = vsel %vm3253, %v3247, %v3254
  %vm3256 = vcmp.eq.s32.totalorder %v3251, 2
  %v3257 = vxor.u32 %v3247, 2147483648
  %v3258 = vsel %vm3256, %v3257, %v3248
  %v3259 = vsel %vm3252, %v3255, %v3258
  %v3260 = vsel %vm3249, nan, %v3259
  %v3261 = vand.u32 2147483647, %v3154
  %vm3262 = vcmp.le.f32.partialorder %v3261, 0.7853982
  %vm3263 = vcmp.lt.s32.totalorder %v3154, 0
  %v3264 = vand.u32 %v3154, 2139095040
  %v3265 = vshrl.u32 %v3264, 23
  %v3266 = vsub.s32 %v3265, 127
  %v3267 = vand.u32 2147483647, %v3154
  %v3268 = vand.u32 %v3267, 8388607
  %v3269 = vor.u32 %v3268, 8388608
  %v3270 = vsub.s32 0, %v3269
  %v3271 = vadd.s32 %v3266, 1
  %vm3272 = vcmp.gt.s32.totalorder %v3271, 0
  %v3273 = vsel %vm3272, %v3271, 0
  %v3274 = vshrl.u32 %v3273, 5
  %v3275 = vand.u32 %v3273, 31
  %v3276 = vsub.s32 32, %v3275
  %v3277 = vshrl.u32 683565275, %v3276
  %v3278 = vshll.u32 683565275, %v3275
  %v3279 = vshrl.u32 2475754826, %v3276
  %v3280 = vor.u32 %v3278, %v3279
  %v3281 = vshll.u32 2475754826, %v3275
  %v3282 = vshrl.u32 2131351028, %v3276
  %v3283 = vor.u32 %v3281, %v3282
  %v3284 = vshll.u32 2131351028, %v3275
  %v3285 = vshrl.u32 2102212464, %v3276
  %v3286 = vor.u32 %v3284, %v3285
  %v3287 = vshll.u32 2102212464, %v3275
  %v3288 = vshrl.u32 920167782, %v3276
  %v3289 = vor.u32 %v3287, %v3288
  %v3290 = vshll.u32 920167782, %v3275
  %v3291 = vshrl.u32 1326507024, %v3276
  %v3292 = vor.u32 %v3290, %v3291
  %vm3293 = vcmp.lt.s32.totalorder %v3274, 1
  %vm3294 = vcmp.lt.s32.totalorder %v3274, 2
  %vm3295 = vcmp.lt.s32.totalorder %v3274, 3
  %vm3296 = vcmp.lt.s32.totalorder %v3274, 4
  %v3297 = vsel %vm3293, %v3277, %v3280
  %v3298 = vsel %vm3296, %v3286, 2102212464
  %v3299 = vsel %vm3295, %v3283, %v3298
  %v3300 = vsel %vm3294, %v3297, %v3299
  %v3301 = vsel %vm3293, %v3280, %v3283
  %v3302 = vsel %vm3296, %v3289, 920167782
  %v3303 = vsel %vm3295, %v3286, %v3302
  %v3304 = vsel %vm3294, %v3301, %v3303
  %v3305 = vsel %vm3293, %v3283, %v3286
  %v3306 = vsel %vm3296, %v3292, 1326507024
  %v3307 = vsel %vm3295, %v3289, %v3306
  %v3308 = vsel %vm3294, %v3305, %v3307
  %v3309 = vshll.u32 %v3269, 8
  %v3310 = vmul.u32.u64.compose %v3309, %v3308
  %v3311 = vextract.low.u32 %v3310
  %v3312 = vextract.high.u32 %v3310
  %v3313 = vmul.u32.u64.compose %v3309, %v3304
  %v3314 = vextract.low.u32 %v3313
  %v3315 = vextract.high.u32 %v3313
  %v3316 = vmul.u32 %v3309, %v3300
  %v3317 = vadd.s32 %v3312, %v3314
  %vm3318 = vc.u32 %v3312, %v3314
  %v3319 = vadd.s32 %v3315, 1
  %v3320 = vsel %vm3318, %v3319, %v3315
  %v3321 = vadd.s32 %v3316, %v3320
  %v3322 = vadd.s32 %v3321, 536870912
  %v3323 = vshrl.u32 %v3322, 30
  %v3324 = vshll.u32 %v3323, 30
  %v3325 = vsub.s32 %v3321, %v3324
  %vm3326 = vcmp.lt.s32.totalorder %v3325, 0
  %v3327 = vsub.s32 0, %v3325
  %v3328 = vsel %vm3326, %v3327, %v3325
  %v3329 = vclz %v3328
  %v3330 = vsub.s32 %v3329, 2
  %vm3331 = vcmp.gt.s32.totalorder 0, %v3330
  %v3332 = vsel %vm3331, 0, %v3330
  %v3333 = vsub.s32 32, %v3332
  %v3334 = vshll.u32 %v3325, %v3332
  %v3335 = vshrl.u32 %v3317, %v3333
  %v3336 = vor.u32 %v3334, %v3335
  %v3337 = vsub.s32 4294967266, %v3332
  %v3338 = vadd.s32 %v3337, 127
  %v3339 = vshll.u32 %v3338, 23
  %v3340 = vor.u32 4788187, %v3339
  %v3341 = vand.u32 2147483647, %v3340
  %v3343 = vcvt.s32.f32 %v3336
  %v3344 = vmul.f32 %v3343, %v3341
  %v3345 = vxor.u32 %v3344, 2147483648
  %v3346 = vsel %vm3263, %v3345, %v3344
  %v3347 = vsub.s32 4, %v3323
  %v3348 = vsel %vm3263, %v3347, %v3323
  %v3349 = vsel %vm3262, %v3154, %v3346
  %v3350 = vsel %vm3262, 0, %v3348
  %v3351 = vcosq.f32.pop %v3349
  %v3352 = vsinq.f32.pop %v3349
  %vm3353 = vweird.f32 %v3154
  %v3354 = vadd.s32 %v3350, 3
  %v3355 = vand.u32 %v3354, 3
  %vm3356 = vcmp.lt.s32.totalorder %v3355, 2
  %vm3357 = vcmp.eq.s32.totalorder %v3355, 0
  %v3358 = vxor.u32 %v3352, 2147483648
  %v3359 = vsel %vm3357, %v3351, %v3358
  %vm3360 = vcmp.eq.s32.totalorder %v3355, 2
  %v3361 = vxor.u32 %v3351, 2147483648
  %v3362 = vsel %vm3360, %v3361, %v3352
  %v3363 = vsel %vm3356, %v3359, %v3362
  %v3364 = vsel %vm3353, nan, %v3363
  %v3365 = vld [vmem:[%s19] sm:$0xf]
  %v3366 = vld [vmem:[%s19 + $0x4] sm:$0xf]
  %v3367 = vld [vmem:[%s19 + $0x8] sm:$0xf]
  %v3368 = vld [vmem:[%s19 + $0xc] sm:$0xf]
  %v3369 = vld [vmem:[%s19 + $0x10] sm:$0xf]
  %v3370 = vld [vmem:[%s19 + $0x14] sm:$0xf]
  %v3371 = vld [vmem:[%s19 + $0x18] sm:$0xf]
  %v3372 = vld [vmem:[%s19 + $0x1c] sm:$0xf]
  %v3373 = vld [vmem:[%s21] sm:$0x1]
  %v3374 = vpack.c.bf16 %v3364, %v3260
  %v3376 = vlaneseq
  %v3377 = vshrl.u32 %v3376, 7
  %v3378 = vsub.s32 0, %v3377
  %v3379 = vrot.slane %v3373, %v3378
  %v3389 = vunpack.c.l.b16 %v3365
  %v3390 = vunpack.c.l.b16 %v3366
  %v3391 = vunpack.c.l.b16 %v3367
  %v3392 = vunpack.c.l.b16 %v3368
  %v3393 = vunpack.c.l.b16 %v3369
  %v3394 = vunpack.c.l.b16 %v3370
  %v3395 = vunpack.c.l.b16 %v3371
  %v3396 = vunpack.c.l.b16 %v3372
  %v3397 = vpack.c.b16 %v3390, %v3389
  %v3398 = vpack.c.b16 %v3392, %v3391
  %v3399 = vpack.c.b16 %v3394, %v3393
  %v3400 = vpack.c.b16 %v3396, %v3395
  %v3406 = vsel %vm717, %v3374, 0
  %3408 = vmatprep.subr.bf16.mxu0 0
  %3409 = vmatpush1.bf16.msra.mxu0 %v3397
  %3410 = vmatprep.subr.bf16.mxu0 0
  %3411 = vmatpush1.bf16.msra.mxu0 %v3398
  %3412 = vmatprep.subr.bf16.mxu0 0
  %3413 = vmatpush1.bf16.msra.mxu0 %v3399
  %3414 = vmatprep.subr.bf16.mxu0 0
  %3415 = vmatpush1.bf16.msra.mxu0 %v3400
  %3416 = vmatprep.subr.bf16.mxu0 0
  %3417 = vmatpush1.bf16.msra.mxu0 0
  %3418 = vmatprep.subr.bf16.mxu0 0
  %3419 = vmatpush1.bf16.msra.mxu0 0
  %3420 = vmatprep.subr.bf16.mxu0 0
  %3421 = vmatpush1.bf16.msra.mxu0 0
  %3422 = vmatprep.subr.bf16.mxu0 0
  %3423 = vmatpush1.bf16.msra.mxu0 0
  %3424 = vmatprep.subr.bf16.mxu0 0
  %3425 = vmatpush1.bf16.msra.mxu0 0
  %3426 = vmatprep.subr.bf16.mxu0 0
  %3427 = vmatpush1.bf16.msra.mxu0 0
  %3428 = vmatprep.subr.bf16.mxu0 0
  %3429 = vmatpush1.bf16.msra.mxu0 0
  %3430 = vmatprep.subr.bf16.mxu0 0
  %3431 = vmatpush1.bf16.msra.mxu0 0
  %3432 = vmatprep.subr.bf16.mxu0 0
  %3433 = vmatpush1.bf16.msra.mxu0 0
  %3434 = vmatprep.subr.bf16.mxu0 0
  %3435 = vmatpush1.bf16.msra.mxu0 0
  %3436 = vmatprep.subr.bf16.mxu0 0
  %3437 = vmatpush1.bf16.msra.mxu0 0
  %3438 = vmatprep.subr.bf16.mxu0 0
  %3439 = vmatpush1.bf16.msra.mxu0 0
  %3440 = vmatprep.mubr.bf16.mxu0 0
  %3441 = vmatmul.mubr.bf16.gmra.mrb[0].mxu0 %v3406
  %v3442 = vpop.f32.mrb[0].mxu0
  %v3443 = vadd.f32 %v3379, %v3442
  %v3444 = vpop.f32.mrb[0].mxu0
  %v3445 = vpop.f32.mrb[0].mxu0
  %v3446 = vadd.f32 %v3379, %v3445
  %v3447 = vpop.f32.mrb[0].mxu0
  %3448 = vdwg.mxu0
  %v3449 = vmax.f32 %v3443, 0.0
  %v3450 = vmax.f32 %v3446, 0.0
  %v3451 = vld [vmem:[%s23] sm:$0xf]
  %v3452 = vld [vmem:[%s23 + $0x4] sm:$0xf]
  %v3453 = vld [vmem:[%s23 + $0x8] sm:$0xf]
  %v3454 = vld [vmem:[%s23 + $0xc] sm:$0xf]
  %v3455 = vld [vmem:[%s25] sm:$0x1]
  %v3456 = vpack.c.bf16 %v3450, %v3449
  %v3458 = vlaneseq
  %v3459 = vshrl.u32 %v3458, 7
  %v3460 = vsub.s32 0, %v3459
  %v3461 = vrot.slane %v3455, %v3460
  %v3467 = vunpack.c.l.b16 %v3451
  %v3468 = vunpack.c.l.b16 %v3452
  %v3469 = vunpack.c.l.b16 %v3453
  %v3470 = vunpack.c.l.b16 %v3454
  %v3471 = vpack.c.b16 %v3468, %v3467
  %v3472 = vpack.c.b16 %v3470, %v3469
  %v3476 = vsel %vm235, %v3456, 0
  %3478 = vmatprep.subr.bf16.mxu0 0
  %3479 = vmatpush1.bf16.msra.mxu0 %v3471
  %3480 = vmatprep.subr.bf16.mxu0 0
  %3481 = vmatpush1.bf16.msra.mxu0 %v3472
  %3482 = vmatprep.subr.bf16.mxu0 0
  %3483 = vmatpush1.bf16.msra.mxu0 0
  %3484 = vmatprep.subr.bf16.mxu0 0
  %3485 = vmatpush1.bf16.msra.mxu0 0
  %3486 = vmatprep.subr.bf16.mxu0 0
  %3487 = vmatpush1.bf16.msra.mxu0 0
  %3488 = vmatprep.subr.bf16.mxu0 0
  %3489 = vmatpush1.bf16.msra.mxu0 0
  %3490 = vmatprep.subr.bf16.mxu0 0
  %3491 = vmatpush1.bf16.msra.mxu0 0
  %3492 = vmatprep.subr.bf16.mxu0 0
  %3493 = vmatpush1.bf16.msra.mxu0 0
  %3494 = vmatprep.subr.bf16.mxu0 0
  %3495 = vmatpush1.bf16.msra.mxu0 0
  %3496 = vmatprep.subr.bf16.mxu0 0
  %3497 = vmatpush1.bf16.msra.mxu0 0
  %3498 = vmatprep.subr.bf16.mxu0 0
  %3499 = vmatpush1.bf16.msra.mxu0 0
  %3500 = vmatprep.subr.bf16.mxu0 0
  %3501 = vmatpush1.bf16.msra.mxu0 0
  %3502 = vmatprep.subr.bf16.mxu0 0
  %3503 = vmatpush1.bf16.msra.mxu0 0
  %3504 = vmatprep.subr.bf16.mxu0 0
  %3505 = vmatpush1.bf16.msra.mxu0 0
  %3506 = vmatprep.subr.bf16.mxu0 0
  %3507 = vmatpush1.bf16.msra.mxu0 0
  %3508 = vmatprep.subr.bf16.mxu0 0
  %3509 = vmatpush1.bf16.msra.mxu0 0
  %3510 = vmatprep.mubr.bf16.mxu0 0
  %3511 = vmatmul.mubr.bf16.gmra.mrb[0].mxu0 %v3476
  %v3512 = vpop.f32.mrb[0].mxu0
  %v3513 = vadd.f32 %v3461, %v3512
  %v3514 = vpop.f32.mrb[0].mxu0
  %v3515 = vpop.f32.mrb[0].mxu0
  %v3516 = vadd.f32 %v3461, %v3515
  %v3517 = vpop.f32.mrb[0].mxu0
  %3518 = vdwg.mxu0
  %v3519 = vadd.f32 %v2786, %v3513
  %v3520 = vadd.f32 %v2787, %v3516
  %s3521 = scalar_lea.vmem %s27, 16
  %v3522 = vld [vmem:[%s3521] sm:$0xf]
  %v3523 = vld [vmem:[%s3521 + $0x4] sm:$0xf]
  %v3524 = vld [vmem:[%s3521 + $0x8] sm:$0xf]
  %v3525 = vld [vmem:[%s3521 + $0xc] sm:$0xf]
  %s3526 = scalar_lea.vmem %s29, 1
  %v3527 = vld [vmem:[%s3526] sm:$0x1]
  %v3528 = vpack.c.bf16 %v3520, %v3519
  %v3530 = vlaneseq
  %v3531 = vshrl.u32 %v3530, 7
  %v3532 = vsub.s32 0, %v3531
  %v3533 = vrot.slane %v3527, %v3532
  %v3539 = vunpack.c.l.b16 %v3522
  %v3540 = vunpack.c.l.b16 %v3523
  %v3541 = vunpack.c.l.b16 %v3524
  %v3542 = vunpack.c.l.b16 %v3525
  %v3543 = vpack.c.b16 %v3540, %v3539
  %v3544 = vpack.c.b16 %v3542, %v3541
  %v3548 = vsel %vm235, %v3528, 0
  %3550 = vmatprep.subr.bf16.mxu0 0
  %3551 = vmatpush1.bf16.msra.mxu0 %v3543
  %3552 = vmatprep.subr.bf16.mxu0 0
  %3553 = vmatpush1.bf16.msra.mxu0 %v3544
  %3554 = vmatprep.subr.bf16.mxu0 0
  %3555 = vmatpush1.bf16.msra.mxu0 0
  %3556 = vmatprep.subr.bf16.mxu0 0
  %3557 = vmatpush1.bf16.msra.mxu0 0
  %3558 = vmatprep.subr.bf16.mxu0 0
  %3559 = vmatpush1.bf16.msra.mxu0 0
  %3560 = vmatprep.subr.bf16.mxu0 0
  %3561 = vmatpush1.bf16.msra.mxu0 0
  %3562 = vmatprep.subr.bf16.mxu0 0
  %3563 = vmatpush1.bf16.msra.mxu0 0
  %3564 = vmatprep.subr.bf16.mxu0 0
  %3565 = vmatpush1.bf16.msra.mxu0 0
  %3566 = vmatprep.subr.bf16.mxu0 0
  %3567 = vmatpush1.bf16.msra.mxu0 0
  %3568 = vmatprep.subr.bf16.mxu0 0
  %3569 = vmatpush1.bf16.msra.mxu0 0
  %3570 = vmatprep.subr.bf16.mxu0 0
  %3571 = vmatpush1.bf16.msra.mxu0 0
  %3572 = vmatprep.subr.bf16.mxu0 0
  %3573 = vmatpush1.bf16.msra.mxu0 0
  %3574 = vmatprep.subr.bf16.mxu0 0
  %3575 = vmatpush1.bf16.msra.mxu0 0
  %3576 = vmatprep.subr.bf16.mxu0 0
  %3577 = vmatpush1.bf16.msra.mxu0 0
  %3578 = vmatprep.subr.bf16.mxu0 0
  %3579 = vmatpush1.bf16.msra.mxu0 0
  %3580 = vmatprep.subr.bf16.mxu0 0
  %3581 = vmatpush1.bf16.msra.mxu0 0
  %3582 = vmatprep.mubr.bf16.mxu0 0
  %3583 = vmatmul.mubr.bf16.gmra.mrb[0].mxu0 %v3548
  %v3584 = vpop.f32.mrb[0].mxu0
  %v3585 = vadd.f32 %v3533, %v3584
  %v3586 = vpop.f32.mrb[0].mxu0
  %v3587 = vpop.f32.mrb[0].mxu0
  %v3588 = vadd.f32 %v3533, %v3587
  %v3589 = vpop.f32.mrb[0].mxu0
  %3590 = vdwg.mxu0
  %v3591 = vpack.c.bf16 %v3588, %v3585
  %s3592 = scalar_lea.vmem %s31, 16
  %v3593 = vld [vmem:[%s3592] sm:$0xf]
  %v3594 = vld [vmem:[%s3592 + $0x4] sm:$0xf]
  %v3595 = vld [vmem:[%s3592 + $0x8] sm:$0xf]
  %v3596 = vld [vmem:[%s3592 + $0xc] sm:$0xf]
  %s3597 = scalar_lea.vmem %s33, 1
  %v3598 = vld [vmem:[%s3597] sm:$0x1]
  %v3600 = vlaneseq
  %v3601 = vshrl.u32 %v3600, 7
  %v3602 = vsub.s32 0, %v3601
  %v3603 = vrot.slane %v3598, %v3602
  %v3609 = vunpack.c.l.b16 %v3593
  %v3610 = vunpack.c.l.b16 %v3594
  %v3611 = vunpack.c.l.b16 %v3595
  %v3612 = vunpack.c.l.b16 %v3596
  %v3613 = vpack.c.b16 %v3610, %v3609
  %v3614 = vpack.c.b16 %v3612, %v3611
  %3617 = vmatprep.subr.bf16.mxu0 0
  %3618 = vmatpush1.bf16.msra.mxu0 %v3613
  %3619 = vmatprep.subr.bf16.mxu0 0
  %3620 = vmatpush1.bf16.msra.mxu0 %v3614
  %3621 = vmatprep.subr.bf16.mxu0 0
  %3622 = vmatpush1.bf16.msra.mxu0 0
  %3623 = vmatprep.subr.bf16.mxu0 0
  %3624 = vmatpush1.bf16.msra.mxu0 0
  %3625 = vmatprep.subr.bf16.mxu0 0
  %3626 = vmatpush1.bf16.msra.mxu0 0
  %3627 = vmatprep.subr.bf16.mxu0 0
  %3628 = vmatpush1.bf16.msra.mxu0 0
  %3629 = vmatprep.subr.bf16.mxu0 0
  %3630 = vmatpush1.bf16.msra.mxu0 0
  %3631 = vmatprep.subr.bf16.mxu0 0
  %3632 = vmatpush1.bf16.msra.mxu0 0
  %3633 = vmatprep.subr.bf16.mxu0 0
  %3634 = vmatpush1.bf16.msra.mxu0 0
  %3635 = vmatprep.subr.bf16.mxu0 0
  %3636 = vmatpush1.bf16.msra.mxu0 0
  %3637 = vmatprep.subr.bf16.mxu0 0
  %3638 = vmatpush1.bf16.msra.mxu0 0
  %3639 = vmatprep.subr.bf16.mxu0 0
  %3640 = vmatpush1.bf16.msra.mxu0 0
  %3641 = vmatprep.subr.bf16.mxu0 0
  %3642 = vmatpush1.bf16.msra.mxu0 0
  %3643 = vmatprep.subr.bf16.mxu0 0
  %3644 = vmatpush1.bf16.msra.mxu0 0
  %3645 = vmatprep.subr.bf16.mxu0 0
  %3646 = vmatpush1.bf16.msra.mxu0 0
  %3647 = vmatprep.subr.bf16.mxu0 0
  %3648 = vmatpush1.bf16.msra.mxu0 0
  %3649 = vmatprep.mubr.bf16.mxu0 0
  %3650 = vmatmul.mubr.bf16.gmra.mrb[0].mxu0 %v2877
  %v3651 = vpop.f32.mrb[0].mxu0
  %v3652 = vadd.f32 %v3603, %v3651
  %v3653 = vpop.f32.mrb[0].mxu0
  %v3654 = vpop.f32.mrb[0].mxu0
  %v3655 = vadd.f32 %v3603, %v3654
  %v3656 = vpop.f32.mrb[0].mxu0
  %3657 = vdwg.mxu0
  %v3658 = vpack.c.bf16 %v3655, %v3652
  %s3659 = scalar_lea.vmem %s37, 1
  %v3660 = vld [vmem:[%s3659] sm:$0x1]
  %3662 = vrot.lane.b32.xlu0 %v3591, 96
  %v3663 = vpop.permute.xlu0 %3662
  %v3665 = vsel %vm976, %v3591, 0
  %v3668 = vsel %vm976, %v3663, 0
  %3670 = vmatprep.subr.bf16.mxu0 0
  %3671 = vmatpush1.bf16.xpose.msra.mxu0 %v3668
  %3672 = vmatprep.subr.bf16.mxu0 0
  %3673 = vmatpush1.bf16.xpose.msra.mxu0 0
  %3674 = vmatprep.subr.bf16.mxu0 0
  %3675 = vmatpush1.bf16.xpose.msra.mxu0 0
  %3676 = vmatprep.subr.bf16.mxu0 0
  %3677 = vmatpush1.bf16.xpose.msra.mxu0 0
  %3678 = vmatprep.subr.bf16.mxu0 0
  %3679 = vmatpush1.bf16.xpose.msra.mxu0 0
  %3680 = vmatprep.subr.bf16.mxu0 0
  %3681 = vmatpush1.bf16.xpose.msra.mxu0 0
  %3682 = vmatprep.subr.bf16.mxu0 0
  %3683 = vmatpush1.bf16.xpose.msra.mxu0 0
  %3684 = vmatprep.subr.bf16.mxu0 0
  %3685 = vmatpush1.bf16.xpose.msra.mxu0 0
  %3686 = vmatprep.subr.bf16.mxu0 0
  %3687 = vmatpush1.bf16.xpose.msra.mxu0 0
  %3688 = vmatprep.subr.bf16.mxu0 0
  %3689 = vmatpush1.bf16.xpose.msra.mxu0 0
  %3690 = vmatprep.subr.bf16.mxu0 0
  %3691 = vmatpush1.bf16.xpose.msra.mxu0 0
  %3692 = vmatprep.subr.bf16.mxu0 0
  %3693 = vmatpush1.bf16.xpose.msra.mxu0 0
  %3694 = vmatprep.subr.bf16.mxu0 0
  %3695 = vmatpush1.bf16.xpose.msra.mxu0 0
  %3696 = vmatprep.subr.bf16.mxu0 0
  %3697 = vmatpush1.bf16.xpose.msra.mxu0 0
  %3698 = vmatprep.subr.bf16.mxu0 0
  %3699 = vmatpush1.bf16.xpose.msra.mxu0 0
  %3700 = vmatprep.subr.bf16.mxu0 0
  %3701 = vmatpush1.bf16.xpose.msra.mxu0 0
  %3702 = vmatprep.mubr.bf16.mxu0 0
  %3703 = vmatmul.mubr.bf16.gmra.mrb[0].mxu0 %v3665
  %v3704 = vpop.f32.mrb[0].mxu0
  %v3705 = vadd.f32 0.0, %v3704
  %v3706 = vpop.f32.mrb[0].mxu0
  %v3707 = vpop.f32.mrb[0].mxu0
  %v3708 = vadd.f32 0.0, %v3707
  %v3709 = vpop.f32.mrb[0].mxu0
  %3710 = vdwg.mxu0
  %v3711 = vmul.f32 %v3705, 0.35355338
  %v3712 = vmul.f32 %v3708, 0.35355338
  %v3713 = vadd.f32 %v3711, %v190
  %v3714 = vadd.f32 %v3712, %v191
  %v3715 = vsel %vm1028, %v3713, -inf
  %3716 = vmax.xlane.f32.xlu0 %v3715
  %v3717 = vpop.xlane.xlu0 %3716
  %v3718 = vsel %vm1028, %v3714, -inf
  %3719 = vmax.xlane.f32.xlu0 %v3718
  %v3720 = vpop.xlane.xlu0 %3719
  %v3721 = vsub.f32 %v3713, %v3717
  %v3722 = vsub.f32 %v3714, %v3720
  %v3723 = vmul.f32 %v3721, 1.442695
  %v3724 = vpow.pop %v3723
  %v3725 = vmul.f32 %v3722, 1.442695
  %v3726 = vpow.pop %v3725
  %v3727 = vsel %vm1028, %v3724, 0.0
  %3728 = vadd.xlane.f32.xlu0 %v3727
  %v3729 = vpop.xlane.xlu0 %3728
  %v3730 = vsel %vm1028, %v3726, 0.0
  %3731 = vadd.xlane.f32.xlu0 %v3730
  %v3732 = vpop.xlane.xlu0 %3731
  %v3733 = vrcp.pop %v3729
  %v3734 = vrcp.pop %v3732
  %v3735 = vmul.f32 %v3724, %v3733
  %v3736 = vmul.f32 %v3726, %v3734
  %v3737 = vpack.c.bf16 %v3736, %v3735
  %v3739 = vsel %vm1028, %v3737, 0
  %3741 = vmatprep.subr.bf16.mxu0 0
  %3742 = vmatpush1.bf16.msra.mxu0 %v3658
  %3743 = vmatprep.subr.bf16.mxu0 0
  %3744 = vmatpush1.bf16.msra.mxu0 0
  %3745 = vmatprep.subr.bf16.mxu0 0
  %3746 = vmatpush1.bf16.msra.mxu0 0
  %3747 = vmatprep.subr.bf16.mxu0 0
  %3748 = vmatpush1.bf16.msra.mxu0 0
  %3749 = vmatprep.subr.bf16.mxu0 0
  %3750 = vmatpush1.bf16.msra.mxu0 0
  %3751 = vmatprep.subr.bf16.mxu0 0
  %3752 = vmatpush1.bf16.msra.mxu0 0
  %3753 = vmatprep.subr.bf16.mxu0 0
  %3754 = vmatpush1.bf16.msra.mxu0 0
  %3755 = vmatprep.subr.bf16.mxu0 0
  %3756 = vmatpush1.bf16.msra.mxu0 0
  %3757 = vmatprep.subr.bf16.mxu0 0
  %3758 = vmatpush1.bf16.msra.mxu0 0
  %3759 = vmatprep.subr.bf16.mxu0 0
  %3760 = vmatpush1.bf16.msra.mxu0 0
  %3761 = vmatprep.subr.bf16.mxu0 0
  %3762 = vmatpush1.bf16.msra.mxu0 0
  %3763 = vmatprep.subr.bf16.mxu0 0
  %3764 = vmatpush1.bf16.msra.mxu0 0
  %3765 = vmatprep.subr.bf16.mxu0 0
  %3766 = vmatpush1.bf16.msra.mxu0 0
  %3767 = vmatprep.subr.bf16.mxu0 0
  %3768 = vmatpush1.bf16.msra.mxu0 0
  %3769 = vmatprep.subr.bf16.mxu0 0
  %3770 = vmatpush1.bf16.msra.mxu0 0
  %3771 = vmatprep.subr.bf16.mxu0 0
  %3772 = vmatpush1.bf16.msra.mxu0 0
  %3773 = vmatprep.mubr.bf16.mxu0 0
  %3774 = vmatmul.mubr.bf16.gmra.mrb[0].mxu0 %v3739
  %v3775 = vpop.f32.mrb[0].mxu0
  %v3776 = vadd.f32 0.0, %v3775
  %v3777 = vpop.f32.mrb[0].mxu0
  %v3778 = vpop.f32.mrb[0].mxu0
  %v3779 = vadd.f32 0.0, %v3778
  %v3780 = vpop.f32.mrb[0].mxu0
  %3781 = vdwg.mxu0
  %v3782 = vpack.c.bf16 %v3779, %v3776
  %s3783 = scalar_lea.vmem %s35, 16
  %v3784 = vld [vmem:[%s3783] sm:$0xf]
  %3785 = vrot.lane.b32.xlu0 %v3591, 120
  %v3786 = vpop.permute.xlu0 %3785
  %3787 = vrot.lane.b32.xlu0 %v3591, 88
  %v3788 = vpop.permute.xlu0 %3787
  %v3790 = vsel %vm976, %v3786, 0
  %v3793 = vsel %vm976, %v3788, 0
  %3795 = vmatprep.subr.bf16.mxu0 0
  %3796 = vmatpush1.bf16.xpose.msra.mxu0 %v3793
  %3797 = vmatprep.subr.bf16.mxu0 0
  %3798 = vmatpush1.bf16.xpose.msra.mxu0 0
  %3799 = vmatprep.subr.bf16.mxu0 0
  %3800 = vmatpush1.bf16.xpose.msra.mxu0 0
  %3801 = vmatprep.subr.bf16.mxu0 0
  %3802 = vmatpush1.bf16.xpose.msra.mxu0 0
  %3803 = vmatprep.subr.bf16.mxu0 0
  %3804 = vmatpush1.bf16.xpose.msra.mxu0 0
  %3805 = vmatprep.subr.bf16.mxu0 0
  %3806 = vmatpush1.bf16.xpose.msra.mxu0 0
  %3807 = vmatprep.subr.bf16.mxu0 0
  %3808 = vmatpush1.bf16.xpose.msra.mxu0 0
  %3809 = vmatprep.subr.bf16.mxu0 0
  %3810 = vmatpush1.bf16.xpose.msra.mxu0 0
  %3811 = vmatprep.subr.bf16.mxu0 0
  %3812 = vmatpush1.bf16.xpose.msra.mxu0 0
  %3813 = vmatprep.subr.bf16.mxu0 0
  %3814 = vmatpush1.bf16.xpose.msra.mxu0 0
  %3815 = vmatprep.subr.bf16.mxu0 0
  %3816 = vmatpush1.bf16.xpose.msra.mxu0 0
  %3817 = vmatprep.subr.bf16.mxu0 0
  %3818 = vmatpush1.bf16.xpose.msra.mxu0 0
  %3819 = vmatprep.subr.bf16.mxu0 0
  %3820 = vmatpush1.bf16.xpose.msra.mxu0 0
  %3821 = vmatprep.subr.bf16.mxu0 0
  %3822 = vmatpush1.bf16.xpose.msra.mxu0 0
  %3823 = vmatprep.subr.bf16.mxu0 0
  %3824 = vmatpush1.bf16.xpose.msra.mxu0 0
  %3825 = vmatprep.subr.bf16.mxu0 0
  %3826 = vmatpush1.bf16.xpose.msra.mxu0 0
  %3827 = vmatprep.mubr.bf16.mxu0 0
  %3828 = vmatmul.mubr.bf16.gmra.mrb[0].mxu0 %v3790
  %v3829 = vpop.f32.mrb[0].mxu0
  %v3830 = vadd.f32 0.0, %v3829
  %v3831 = vpop.f32.mrb[0].mxu0
  %v3832 = vpop.f32.mrb[0].mxu0
  %v3833 = vadd.f32 0.0, %v3832
  %v3834 = vpop.f32.mrb[0].mxu0
  %3835 = vdwg.mxu0
  %v3836 = vmul.f32 %v3830, 0.35355338
  %v3837 = vmul.f32 %v3833, 0.35355338
  %v3838 = vadd.f32 %v3836, %v190
  %v3839 = vadd.f32 %v3837, %v191
  %v3840 = vsel %vm1028, %v3838, -inf
  %3841 = vmax.xlane.f32.xlu0 %v3840
  %v3842 = vpop.xlane.xlu0 %3841
  %v3843 = vsel %vm1028, %v3839, -inf
  %3844 = vmax.xlane.f32.xlu0 %v3843
  %v3845 = vpop.xlane.xlu0 %3844
  %v3846 = vsub.f32 %v3838, %v3842
  %v3847 = vsub.f32 %v3839, %v3845
  %v3848 = vmul.f32 %v3846, 1.442695
  %v3849 = vpow.pop %v3848
  %v3850 = vmul.f32 %v3847, 1.442695
  %v3851 = vpow.pop %v3850
  %v3852 = vsel %vm1028, %v3849, 0.0
  %3853 = vadd.xlane.f32.xlu0 %v3852
  %v3854 = vpop.xlane.xlu0 %3853
  %v3855 = vsel %vm1028, %v3851, 0.0
  %3856 = vadd.xlane.f32.xlu0 %v3855
  %v3857 = vpop.xlane.xlu0 %3856
  %v3858 = vrcp.pop %v3854
  %v3859 = vrcp.pop %v3857
  %v3860 = vmul.f32 %v3849, %v3858
  %v3861 = vmul.f32 %v3851, %v3859
  %v3862 = vpack.c.bf16 %v3861, %v3860
  %3864 = vrot.lane.b32.xlu0 %v3658, 120
  %v3865 = vpop.permute.xlu0 %3864
  %v3868 = vsel %vm1028, %v3862, 0
  %3870 = vmatprep.subr.bf16.mxu0 0
  %3871 = vmatpush1.bf16.msra.mxu0 %v3865
  %3872 = vmatprep.subr.bf16.mxu0 0
  %3873 = vmatpush1.bf16.msra.mxu0 0
  %3874 = vmatprep.subr.bf16.mxu0 0
  %3875 = vmatpush1.bf16.msra.mxu0 0
  %3876 = vmatprep.subr.bf16.mxu0 0
  %3877 = vmatpush1.bf16.msra.mxu0 0
  %3878 = vmatprep.subr.bf16.mxu0 0
  %3879 = vmatpush1.bf16.msra.mxu0 0
  %3880 = vmatprep.subr.bf16.mxu0 0
  %3881 = vmatpush1.bf16.msra.mxu0 0
  %3882 = vmatprep.subr.bf16.mxu0 0
  %3883 = vmatpush1.bf16.msra.mxu0 0
  %3884 = vmatprep.subr.bf16.mxu0 0
  %3885 = vmatpush1.bf16.msra.mxu0 0
  %3886 = vmatprep.subr.bf16.mxu0 0
  %3887 = vmatpush1.bf16.msra.mxu0 0
  %3888 = vmatprep.subr.bf16.mxu0 0
  %3889 = vmatpush1.bf16.msra.mxu0 0
  %3890 = vmatprep.subr.bf16.mxu0 0
  %3891 = vmatpush1.bf16.msra.mxu0 0
  %3892 = vmatprep.subr.bf16.mxu0 0
  %3893 = vmatpush1.bf16.msra.mxu0 0
  %3894 = vmatprep.subr.bf16.mxu0 0
  %3895 = vmatpush1.bf16.msra.mxu0 0
  %3896 = vmatprep.subr.bf16.mxu0 0
  %3897 = vmatpush1.bf16.msra.mxu0 0
  %3898 = vmatprep.subr.bf16.mxu0 0
  %3899 = vmatpush1.bf16.msra.mxu0 0
  %3900 = vmatprep.subr.bf16.mxu0 0
  %3901 = vmatpush1.bf16.msra.mxu0 0
  %3902 = vmatprep.mubr.bf16.mxu0 0
  %3903 = vmatmul.mubr.bf16.gmra.mrb[0].mxu0 %v3868
  %v3904 = vpop.f32.mrb[0].mxu0
  %v3905 = vadd.f32 0.0, %v3904
  %v3906 = vpop.f32.mrb[0].mxu0
  %v3907 = vpop.f32.mrb[0].mxu0
  %v3908 = vadd.f32 0.0, %v3907
  %v3909 = vpop.f32.mrb[0].mxu0
  %3910 = vdwg.mxu0
  %v3911 = vpack.c.bf16 %v3908, %v3905
  %s3912 = scalar_lea.vmem %s35, 20
  %v3913 = vld [vmem:[%s3912] sm:$0xf]
  %v3915 = vsel %vm976, %v3911, 0
  %v3918 = vsel %vm390, %v3913, 0
  %3920 = vmatprep.subr.bf16.mxu0 0
  %3921 = vmatpush1.bf16.msra.mxu0 %v3918
  %3922 = vmatprep.subr.bf16.mxu0 0
  %3923 = vmatpush1.bf16.msra.mxu0 0
  %3924 = vmatprep.subr.bf16.mxu0 0
  %3925 = vmatpush1.bf16.msra.mxu0 0
  %3926 = vmatprep.subr.bf16.mxu0 0
  %3927 = vmatpush1.bf16.msra.mxu0 0
  %3928 = vmatprep.subr.bf16.mxu0 0
  %3929 = vmatpush1.bf16.msra.mxu0 0
  %3930 = vmatprep.subr.bf16.mxu0 0
  %3931 = vmatpush1.bf16.msra.mxu0 0
  %3932 = vmatprep.subr.bf16.mxu0 0
  %3933 = vmatpush1.bf16.msra.mxu0 0
  %3934 = vmatprep.subr.bf16.mxu0 0
  %3935 = vmatpush1.bf16.msra.mxu0 0
  %3936 = vmatprep.subr.bf16.mxu0 0
  %3937 = vmatpush1.bf16.msra.mxu0 0
  %3938 = vmatprep.subr.bf16.mxu0 0
  %3939 = vmatpush1.bf16.msra.mxu0 0
  %3940 = vmatprep.subr.bf16.mxu0 0
  %3941 = vmatpush1.bf16.msra.mxu0 0
  %3942 = vmatprep.subr.bf16.mxu0 0
  %3943 = vmatpush1.bf16.msra.mxu0 0
  %3944 = vmatprep.subr.bf16.mxu0 0
  %3945 = vmatpush1.bf16.msra.mxu0 0
  %3946 = vmatprep.subr.bf16.mxu0 0
  %3947 = vmatpush1.bf16.msra.mxu0 0
  %3948 = vmatprep.subr.bf16.mxu0 0
  %3949 = vmatpush1.bf16.msra.mxu0 0
  %3950 = vmatprep.subr.bf16.mxu0 0
  %3951 = vmatpush1.bf16.msra.mxu0 0
  %3952 = vmatprep.mubr.bf16.mxu0 0
  %3953 = vmatmul.mubr.bf16.gmra.mrb[0].mxu0 %v3915
  %v3954 = vpop.f32.mrb[0].mxu0
  %v3955 = vadd.f32 0.0, %v3954
  %v3956 = vpop.f32.mrb[0].mxu0
  %v3957 = vpop.f32.mrb[0].mxu0
  %v3958 = vadd.f32 0.0, %v3957
  %v3959 = vpop.f32.mrb[0].mxu0
  %3960 = vdwg.mxu0
  %v3962 = vsel %vm976, %v3782, 0
  %v3965 = vsel %vm390, %v3784, 0
  %3967 = vmatprep.subr.bf16.mxu0 0
  %3968 = vmatpush1.bf16.msra.mxu0 %v3965
  %3969 = vmatprep.subr.bf16.mxu0 0
  %3970 = vmatpush1.bf16.msra.mxu0 0
  %3971 = vmatprep.subr.bf16.mxu0 0
  %3972 = vmatpush1.bf16.msra.mxu0 0
  %3973 = vmatprep.subr.bf16.mxu0 0
  %3974 = vmatpush1.bf16.msra.mxu0 0
  %3975 = vmatprep.subr.bf16.mxu0 0
  %3976 = vmatpush1.bf16.msra.mxu0 0
  %3977 = vmatprep.subr.bf16.mxu0 0
  %3978 = vmatpush1.bf16.msra.mxu0 0
  %3979 = vmatprep.subr.bf16.mxu0 0
  %3980 = vmatpush1.bf16.msra.mxu0 0
  %3981 = vmatprep.subr.bf16.mxu0 0
  %3982 = vmatpush1.bf16.msra.mxu0 0
  %3983 = vmatprep.subr.bf16.mxu0 0
  %3984 = vmatpush1.bf16.msra.mxu0 0
  %3985 = vmatprep.subr.bf16.mxu0 0
  %3986 = vmatpush1.bf16.msra.mxu0 0
  %3987 = vmatprep.subr.bf16.mxu0 0
  %3988 = vmatpush1.bf16.msra.mxu0 0
  %3989 = vmatprep.subr.bf16.mxu0 0
  %3990 = vmatpush1.bf16.msra.mxu0 0
  %3991 = vmatprep.subr.bf16.mxu0 0
  %3992 = vmatpush1.bf16.msra.mxu0 0
  %3993 = vmatprep.subr.bf16.mxu0 0
  %3994 = vmatpush1.bf16.msra.mxu0 0
  %3995 = vmatprep.subr.bf16.mxu0 0
  %3996 = vmatpush1.bf16.msra.mxu0 0
  %3997 = vmatprep.subr.bf16.mxu0 0
  %3998 = vmatpush1.bf16.msra.mxu0 0
  %3999 = vmatprep.mubr.bf16.mxu0 0
  %4000 = vmatmul.mubr.bf16.gmra.mrb[0].mxu0 %v3962
  %v4001 = vpop.f32.mrb[0].mxu0
  %v4002 = vadd.f32 %v3955, %v4001
  %v4003 = vpop.f32.mrb[0].mxu0
  %v4004 = vpop.f32.mrb[0].mxu0
  %v4005 = vadd.f32 %v3958, %v4004
  %v4006 = vpop.f32.mrb[0].mxu0
  %4007 = vdwg.mxu0
  %4008 = vrot.lane.b32.xlu0 %v3591, 112
  %v4009 = vpop.permute.xlu0 %4008
  %4010 = vrot.lane.b32.xlu0 %v3591, 80
  %v4011 = vpop.permute.xlu0 %4010
  %v4013 = vsel %vm976, %v4009, 0
  %v4016 = vsel %vm976, %v4011, 0
  %4018 = vmatprep.subr.bf16.mxu0 0
  %4019 = vmatpush1.bf16.xpose.msra.mxu0 %v4016
  %4020 = vmatprep.subr.bf16.mxu0 0
  %4021 = vmatpush1.bf16.xpose.msra.mxu0 0
  %4022 = vmatprep.subr.bf16.mxu0 0
  %4023 = vmatpush1.bf16.xpose.msra.mxu0 0
  %4024 = vmatprep.subr.bf16.mxu0 0
  %4025 = vmatpush1.bf16.xpose.msra.mxu0 0
  %4026 = vmatprep.subr.bf16.mxu0 0
  %4027 = vmatpush1.bf16.xpose.msra.mxu0 0
  %4028 = vmatprep.subr.bf16.mxu0 0
  %4029 = vmatpush1.bf16.xpose.msra.mxu0 0
  %4030 = vmatprep.subr.bf16.mxu0 0
  %4031 = vmatpush1.bf16.xpose.msra.mxu0 0
  %4032 = vmatprep.subr.bf16.mxu0 0
  %4033 = vmatpush1.bf16.xpose.msra.mxu0 0
  %4034 = vmatprep.subr.bf16.mxu0 0
  %4035 = vmatpush1.bf16.xpose.msra.mxu0 0
  %4036 = vmatprep.subr.bf16.mxu0 0
  %4037 = vmatpush1.bf16.xpose.msra.mxu0 0
  %4038 = vmatprep.subr.bf16.mxu0 0
  %4039 = vmatpush1.bf16.xpose.msra.mxu0 0
  %4040 = vmatprep.subr.bf16.mxu0 0
  %4041 = vmatpush1.bf16.xpose.msra.mxu0 0
  %4042 = vmatprep.subr.bf16.mxu0 0
  %4043 = vmatpush1.bf16.xpose.msra.mxu0 0
  %4044 = vmatprep.subr.bf16.mxu0 0
  %4045 = vmatpush1.bf16.xpose.msra.mxu0 0
  %4046 = vmatprep.subr.bf16.mxu0 0
  %4047 = vmatpush1.bf16.xpose.msra.mxu0 0
  %4048 = vmatprep.subr.bf16.mxu0 0
  %4049 = vmatpush1.bf16.xpose.msra.mxu0 0
  %4050 = vmatprep.mubr.bf16.mxu0 0
  %4051 = vmatmul.mubr.bf16.gmra.mrb[0].mxu0 %v4013
  %v4052 = vpop.f32.mrb[0].mxu0
  %v4053 = vadd.f32 0.0, %v4052
  %v4054 = vpop.f32.mrb[0].mxu0
  %v4055 = vpop.f32.mrb[0].mxu0
  %v4056 = vadd.f32 0.0, %v4055
  %v4057 = vpop.f32.mrb[0].mxu0
  %4058 = vdwg.mxu0
  %v4059 = vmul.f32 %v4053, 0.35355338
  %v4060 = vmul.f32 %v4056, 0.35355338
  %v4061 = vadd.f32 %v4059, %v190
  %v4062 = vadd.f32 %v4060, %v191
  %v4063 = vsel %vm1028, %v4061, -inf
  %4064 = vmax.xlane.f32.xlu0 %v4063
  %v4065 = vpop.xlane.xlu0 %4064
  %v4066 = vsel %vm1028, %v4062, -inf
  %4067 = vmax.xlane.f32.xlu0 %v4066
  %v4068 = vpop.xlane.xlu0 %4067
  %v4069 = vsub.f32 %v4061, %v4065
  %v4070 = vsub.f32 %v4062, %v4068
  %v4071 = vmul.f32 %v4069, 1.442695
  %v4072 = vpow.pop %v4071
  %v4073 = vmul.f32 %v4070, 1.442695
  %v4074 = vpow.pop %v4073
  %v4075 = vsel %vm1028, %v4072, 0.0
  %4076 = vadd.xlane.f32.xlu0 %v4075
  %v4077 = vpop.xlane.xlu0 %4076
  %v4078 = vsel %vm1028, %v4074, 0.0
  %4079 = vadd.xlane.f32.xlu0 %v4078
  %v4080 = vpop.xlane.xlu0 %4079
  %v4081 = vrcp.pop %v4077
  %v4082 = vrcp.pop %v4080
  %v4083 = vmul.f32 %v4072, %v4081
  %v4084 = vmul.f32 %v4074, %v4082
  %v4085 = vpack.c.bf16 %v4084, %v4083
  %4086 = vrot.lane.b32.xlu0 %v3658, 112
  %v4087 = vpop.permute.xlu0 %4086
  %v4090 = vsel %vm1028, %v4085, 0
  %4092 = vmatprep.subr.bf16.mxu0 0
  %4093 = vmatpush1.bf16.msra.mxu0 %v4087
  %4094 = vmatprep.subr.bf16.mxu0 0
  %4095 = vmatpush1.bf16.msra.mxu0 0
  %4096 = vmatprep.subr.bf16.mxu0 0
  %4097 = vmatpush1.bf16.msra.mxu0 0
  %4098 = vmatprep.subr.bf16.mxu0 0
  %4099 = vmatpush1.bf16.msra.mxu0 0
  %4100 = vmatprep.subr.bf16.mxu0 0
  %4101 = vmatpush1.bf16.msra.mxu0 0
  %4102 = vmatprep.subr.bf16.mxu0 0
  %4103 = vmatpush1.bf16.msra.mxu0 0
  %4104 = vmatprep.subr.bf16.mxu0 0
  %4105 = vmatpush1.bf16.msra.mxu0 0
  %4106 = vmatprep.subr.bf16.mxu0 0
  %4107 = vmatpush1.bf16.msra.mxu0 0
  %4108 = vmatprep.subr.bf16.mxu0 0
  %4109 = vmatpush1.bf16.msra.mxu0 0
  %4110 = vmatprep.subr.bf16.mxu0 0
  %4111 = vmatpush1.bf16.msra.mxu0 0
  %4112 = vmatprep.subr.bf16.mxu0 0
  %4113 = vmatpush1.bf16.msra.mxu0 0
  %4114 = vmatprep.subr.bf16.mxu0 0
  %4115 = vmatpush1.bf16.msra.mxu0 0
  %4116 = vmatprep.subr.bf16.mxu0 0
  %4117 = vmatpush1.bf16.msra.mxu0 0
  %4118 = vmatprep.subr.bf16.mxu0 0
  %4119 = vmatpush1.bf16.msra.mxu0 0
  %4120 = vmatprep.subr.bf16.mxu0 0
  %4121 = vmatpush1.bf16.msra.mxu0 0
  %4122 = vmatprep.subr.bf16.mxu0 0
  %4123 = vmatpush1.bf16.msra.mxu0 0
  %4124 = vmatprep.mubr.bf16.mxu0 0
  %4125 = vmatmul.mubr.bf16.gmra.mrb[0].mxu0 %v4090
  %v4126 = vpop.f32.mrb[0].mxu0
  %v4127 = vadd.f32 0.0, %v4126
  %v4128 = vpop.f32.mrb[0].mxu0
  %v4129 = vpop.f32.mrb[0].mxu0
  %v4130 = vadd.f32 0.0, %v4129
  %v4131 = vpop.f32.mrb[0].mxu0
  %4132 = vdwg.mxu0
  %v4133 = vpack.c.bf16 %v4130, %v4127
  %s4134 = scalar_lea.vmem %s35, 24
  %v4135 = vld [vmem:[%s4134] sm:$0xf]
  %v4137 = vsel %vm976, %v4133, 0
  %v4140 = vsel %vm390, %v4135, 0
  %4142 = vmatprep.subr.bf16.mxu0 0
  %4143 = vmatpush1.bf16.msra.mxu0 %v4140
  %4144 = vmatprep.subr.bf16.mxu0 0
  %4145 = vmatpush1.bf16.msra.mxu0 0
  %4146 = vmatprep.subr.bf16.mxu0 0
  %4147 = vmatpush1.bf16.msra.mxu0 0
  %4148 = vmatprep.subr.bf16.mxu0 0
  %4149 = vmatpush1.bf16.msra.mxu0 0
  %4150 = vmatprep.subr.bf16.mxu0 0
  %4151 = vmatpush1.bf16.msra.mxu0 0
  %4152 = vmatprep.subr.bf16.mxu0 0
  %4153 = vmatpush1.bf16.msra.mxu0 0
  %4154 = vmatprep.subr.bf16.mxu0 0
  %4155 = vmatpush1.bf16.msra.mxu0 0
  %4156 = vmatprep.subr.bf16.mxu0 0
  %4157 = vmatpush1.bf16.msra.mxu0 0
  %4158 = vmatprep.subr.bf16.mxu0 0
  %4159 = vmatpush1.bf16.msra.mxu0 0
  %4160 = vmatprep.subr.bf16.mxu0 0
  %4161 = vmatpush1.bf16.msra.mxu0 0
  %4162 = vmatprep.subr.bf16.mxu0 0
  %4163 = vmatpush1.bf16.msra.mxu0 0
  %4164 = vmatprep.subr.bf16.mxu0 0
  %4165 = vmatpush1.bf16.msra.mxu0 0
  %4166 = vmatprep.subr.bf16.mxu0 0
  %4167 = vmatpush1.bf16.msra.mxu0 0
  %4168 = vmatprep.subr.bf16.mxu0 0
  %4169 = vmatpush1.bf16.msra.mxu0 0
  %4170 = vmatprep.subr.bf16.mxu0 0
  %4171 = vmatpush1.bf16.msra.mxu0 0
  %4172 = vmatprep.subr.bf16.mxu0 0
  %4173 = vmatpush1.bf16.msra.mxu0 0
  %4174 = vmatprep.mubr.bf16.mxu0 0
  %4175 = vmatmul.mubr.bf16.gmra.mrb[0].mxu0 %v4137
  %v4176 = vpop.f32.mrb[0].mxu0
  %v4177 = vadd.f32 0.0, %v4176
  %v4178 = vpop.f32.mrb[0].mxu0
  %v4179 = vpop.f32.mrb[0].mxu0
  %v4180 = vadd.f32 0.0, %v4179
  %v4181 = vpop.f32.mrb[0].mxu0
  %4182 = vdwg.mxu0
  %v4183 = vadd.f32 %v4002, %v4177
  %v4184 = vadd.f32 %v4005, %v4180
  %4185 = vrot.lane.b32.xlu0 %v3591, 104
  %v4186 = vpop.permute.xlu0 %4185
  %4187 = vrot.lane.b32.xlu0 %v3591, 72
  %v4188 = vpop.permute.xlu0 %4187
  %v4190 = vsel %vm976, %v4186, 0
  %v4193 = vsel %vm976, %v4188, 0
  %4195 = vmatprep.subr.bf16.mxu0 0
  %4196 = vmatpush1.bf16.xpose.msra.mxu0 %v4193
  %4197 = vmatprep.subr.bf16.mxu0 0
  %4198 = vmatpush1.bf16.xpose.msra.mxu0 0
  %4199 = vmatprep.subr.bf16.mxu0 0
  %4200 = vmatpush1.bf16.xpose.msra.mxu0 0
  %4201 = vmatprep.subr.bf16.mxu0 0
  %4202 = vmatpush1.bf16.xpose.msra.mxu0 0
  %4203 = vmatprep.subr.bf16.mxu0 0
  %4204 = vmatpush1.bf16.xpose.msra.mxu0 0
  %4205 = vmatprep.subr.bf16.mxu0 0
  %4206 = vmatpush1.bf16.xpose.msra.mxu0 0
  %4207 = vmatprep.subr.bf16.mxu0 0
  %4208 = vmatpush1.bf16.xpose.msra.mxu0 0
  %4209 = vmatprep.subr.bf16.mxu0 0
  %4210 = vmatpush1.bf16.xpose.msra.mxu0 0
  %4211 = vmatprep.subr.bf16.mxu0 0
  %4212 = vmatpush1.bf16.xpose.msra.mxu0 0
  %4213 = vmatprep.subr.bf16.mxu0 0
  %4214 = vmatpush1.bf16.xpose.msra.mxu0 0
  %4215 = vmatprep.subr.bf16.mxu0 0
  %4216 = vmatpush1.bf16.xpose.msra.mxu0 0
  %4217 = vmatprep.subr.bf16.mxu0 0
  %4218 = vmatpush1.bf16.xpose.msra.mxu0 0
  %4219 = vmatprep.subr.bf16.mxu0 0
  %4220 = vmatpush1.bf16.xpose.msra.mxu0 0
  %4221 = vmatprep.subr.bf16.mxu0 0
  %4222 = vmatpush1.bf16.xpose.msra.mxu0 0
  %4223 = vmatprep.subr.bf16.mxu0 0
  %4224 = vmatpush1.bf16.xpose.msra.mxu0 0
  %4225 = vmatprep.subr.bf16.mxu0 0
  %4226 = vmatpush1.bf16.xpose.msra.mxu0 0
  %4227 = vmatprep.mubr.bf16.mxu0 0
  %4228 = vmatmul.mubr.bf16.gmra.mrb[0].mxu0 %v4190
  %v4229 = vpop.f32.mrb[0].mxu0
  %v4230 = vadd.f32 0.0, %v4229
  %v4231 = vpop.f32.mrb[0].mxu0
  %v4232 = vpop.f32.mrb[0].mxu0
  %v4233 = vadd.f32 0.0, %v4232
  %v4234 = vpop.f32.mrb[0].mxu0
  %4235 = vdwg.mxu0
  %v4236 = vmul.f32 %v4230, 0.35355338
  %v4237 = vmul.f32 %v4233, 0.35355338
  %v4238 = vadd.f32 %v4236, %v190
  %v4239 = vadd.f32 %v4237, %v191
  %v4240 = vsel %vm1028, %v4238, -inf
  %4241 = vmax.xlane.f32.xlu0 %v4240
  %v4242 = vpop.xlane.xlu0 %4241
  %v4243 = vsel %vm1028, %v4239, -inf
  %4244 = vmax.xlane.f32.xlu0 %v4243
  %v4245 = vpop.xlane.xlu0 %4244
  %v4246 = vsub.f32 %v4238, %v4242
  %v4247 = vsub.f32 %v4239, %v4245
  %v4248 = vmul.f32 %v4246, 1.442695
  %v4249 = vpow.pop %v4248
  %v4250 = vmul.f32 %v4247, 1.442695
  %v4251 = vpow.pop %v4250
  %v4252 = vsel %vm1028, %v4249, 0.0
  %4253 = vadd.xlane.f32.xlu0 %v4252
  %v4254 = vpop.xlane.xlu0 %4253
  %v4255 = vsel %vm1028, %v4251, 0.0
  %4256 = vadd.xlane.f32.xlu0 %v4255
  %v4257 = vpop.xlane.xlu0 %4256
  %v4258 = vrcp.pop %v4254
  %v4259 = vrcp.pop %v4257
  %v4260 = vmul.f32 %v4249, %v4258
  %v4261 = vmul.f32 %v4251, %v4259
  %v4262 = vpack.c.bf16 %v4261, %v4260
  %4263 = vrot.lane.b32.xlu0 %v3658, 104
  %v4264 = vpop.permute.xlu0 %4263
  %v4267 = vsel %vm1028, %v4262, 0
  %4269 = vmatprep.subr.bf16.mxu0 0
  %4270 = vmatpush1.bf16.msra.mxu0 %v4264
  %4271 = vmatprep.subr.bf16.mxu0 0
  %4272 = vmatpush1.bf16.msra.mxu0 0
  %4273 = vmatprep.subr.bf16.mxu0 0
  %4274 = vmatpush1.bf16.msra.mxu0 0
  %4275 = vmatprep.subr.bf16.mxu0 0
  %4276 = vmatpush1.bf16.msra.mxu0 0
  %4277 = vmatprep.subr.bf16.mxu0 0
  %4278 = vmatpush1.bf16.msra.mxu0 0
  %4279 = vmatprep.subr.bf16.mxu0 0
  %4280 = vmatpush1.bf16.msra.mxu0 0
  %4281 = vmatprep.subr.bf16.mxu0 0
  %4282 = vmatpush1.bf16.msra.mxu0 0
  %4283 = vmatprep.subr.bf16.mxu0 0
  %4284 = vmatpush1.bf16.msra.mxu0 0
  %4285 = vmatprep.subr.bf16.mxu0 0
  %4286 = vmatpush1.bf16.msra.mxu0 0
  %4287 = vmatprep.subr.bf16.mxu0 0
  %4288 = vmatpush1.bf16.msra.mxu0 0
  %4289 = vmatprep.subr.bf16.mxu0 0
  %4290 = vmatpush1.bf16.msra.mxu0 0
  %4291 = vmatprep.subr.bf16.mxu0 0
  %4292 = vmatpush1.bf16.msra.mxu0 0
  %4293 = vmatprep.subr.bf16.mxu0 0
  %4294 = vmatpush1.bf16.msra.mxu0 0
  %4295 = vmatprep.subr.bf16.mxu0 0
  %4296 = vmatpush1.bf16.msra.mxu0 0
  %4297 = vmatprep.subr.bf16.mxu0 0
  %4298 = vmatpush1.bf16.msra.mxu0 0
  %4299 = vmatprep.subr.bf16.mxu0 0
  %4300 = vmatpush1.bf16.msra.mxu0 0
  %4301 = vmatprep.mubr.bf16.mxu0 0
  %4302 = vmatmul.mubr.bf16.gmra.mrb[0].mxu0 %v4267
  %v4303 = vpop.f32.mrb[0].mxu0
  %v4304 = vadd.f32 0.0, %v4303
  %v4305 = vpop.f32.mrb[0].mxu0
  %v4306 = vpop.f32.mrb[0].mxu0
  %v4307 = vadd.f32 0.0, %v4306
  %v4308 = vpop.f32.mrb[0].mxu0
  %4309 = vdwg.mxu0
  %v4310 = vpack.c.bf16 %v4307, %v4304
  %s4311 = scalar_lea.vmem %s35, 28
  %v4312 = vld [vmem:[%s4311] sm:$0xf]
  %v4314 = vsel %vm976, %v4310, 0
  %v4317 = vsel %vm390, %v4312, 0
  %4319 = vmatprep.subr.bf16.mxu0 0
  %4320 = vmatpush1.bf16.msra.mxu0 %v4317
  %4321 = vmatprep.subr.bf16.mxu0 0
  %4322 = vmatpush1.bf16.msra.mxu0 0
  %4323 = vmatprep.subr.bf16.mxu0 0
  %4324 = vmatpush1.bf16.msra.mxu0 0
  %4325 = vmatprep.subr.bf16.mxu0 0
  %4326 = vmatpush1.bf16.msra.mxu0 0
  %4327 = vmatprep.subr.bf16.mxu0 0
  %4328 = vmatpush1.bf16.msra.mxu0 0
  %4329 = vmatprep.subr.bf16.mxu0 0
  %4330 = vmatpush1.bf16.msra.mxu0 0
  %4331 = vmatprep.subr.bf16.mxu0 0
  %4332 = vmatpush1.bf16.msra.mxu0 0
  %4333 = vmatprep.subr.bf16.mxu0 0
  %4334 = vmatpush1.bf16.msra.mxu0 0
  %4335 = vmatprep.subr.bf16.mxu0 0
  %4336 = vmatpush1.bf16.msra.mxu0 0
  %4337 = vmatprep.subr.bf16.mxu0 0
  %4338 = vmatpush1.bf16.msra.mxu0 0
  %4339 = vmatprep.subr.bf16.mxu0 0
  %4340 = vmatpush1.bf16.msra.mxu0 0
  %4341 = vmatprep.subr.bf16.mxu0 0
  %4342 = vmatpush1.bf16.msra.mxu0 0
  %4343 = vmatprep.subr.bf16.mxu0 0
  %4344 = vmatpush1.bf16.msra.mxu0 0
  %4345 = vmatprep.subr.bf16.mxu0 0
  %4346 = vmatpush1.bf16.msra.mxu0 0
  %4347 = vmatprep.subr.bf16.mxu0 0
  %4348 = vmatpush1.bf16.msra.mxu0 0
  %4349 = vmatprep.subr.bf16.mxu0 0
  %4350 = vmatpush1.bf16.msra.mxu0 0
  %4351 = vmatprep.mubr.bf16.mxu0 0
  %4352 = vmatmul.mubr.bf16.gmra.mrb[0].mxu0 %v4314
  %v4353 = vpop.f32.mrb[0].mxu0
  %v4354 = vadd.f32 0.0, %v4353
  %v4355 = vpop.f32.mrb[0].mxu0
  %v4356 = vpop.f32.mrb[0].mxu0
  %v4357 = vadd.f32 0.0, %v4356
  %v4358 = vpop.f32.mrb[0].mxu0
  %4359 = vdwg.mxu0
  %v4360 = vadd.f32 %v4183, %v4354
  %v4361 = vadd.f32 %v4184, %v4357
  %v4363 = vlaneseq
  %v4364 = vshrl.u32 %v4363, 7
  %v4365 = vsub.s32 0, %v4364
  %v4366 = vrot.slane %v3660, %v4365
  %v4368 = vadd.f32 %v4360, %v4366
  %v4369 = vadd.f32 %v4361, %v4366
  %v4370 = vadd.f32 %v2786, %v4368
  %v4371 = vadd.f32 %v2787, %v4369
  %s4372 = scalar_lea.vmem %s63, 3
  %v4373 = vld [vmem:[%s4372] sm:$0x1]
  %s4374 = scalar_lea.vmem %s65, 3
  %v4375 = vld [vmem:[%s4374] sm:$0x1]
  %v4376 = vsel %vm235, %v4370, 0.0
  %4377 = vadd.xlane.f32.xlu0 %v4376
  %v4378 = vpop.xlane.xlu0 %4377
  %v4379 = vsel %vm235, %v4371, 0.0
  %4380 = vadd.xlane.f32.xlu0 %v4379
  %v4381 = vpop.xlane.xlu0 %4380
  %v4382 = vmul.f32 %v4378, %v1693
  %v4383 = vmul.f32 %v4381, %v1693
  %v4384 = vsub.f32 %v4370, %v4382
  %v4385 = vsub.f32 %v4371, %v4383
  %v4386 = vmul.f32 %v4384, %v4384
  %v4387 = vmul.f32 %v4385, %v4385
  %v4388 = vsel %vm235, %v4386, 0.0
  %4389 = vadd.xlane.f32.xlu0 %v4388
  %v4390 = vpop.xlane.xlu0 %4389
  %v4391 = vsel %vm235, %v4387, 0.0
  %4392 = vadd.xlane.f32.xlu0 %v4391
  %v4393 = vpop.xlane.xlu0 %4392
  %v4394 = vmul.f32 %v4390, %v1693
  %v4395 = vmul.f32 %v4393, %v1693
  %v4396 = vadd.f32 %v4394, 1e-05
  %v4397 = vadd.f32 %v4395, 1e-05
  %v4398 = vrsqrt.pop %v4396
  %v4399 = vrsqrt.pop %v4397
  %v4400 = vmul.f32 %v4384, %v4398
  %v4401 = vmul.f32 %v4385, %v4399
  %v4403 = vlaneseq
  %v4404 = vshrl.u32 %v4403, 7
  %v4405 = vsub.s32 0, %v4404
  %v4406 = vrot.slane %v4373, %v4405
  %v4408 = vmul.f32 %v4400, %v4406
  %v4409 = vmul.f32 %v4401, %v4406
  %v4411 = vlaneseq
  %v4412 = vshrl.u32 %v4411, 7
  %v4413 = vsub.s32 0, %v4412
  %v4414 = vrot.slane %v4375, %v4413
  %v4416 = vadd.f32 %v4408, %v4414
  %v4417 = vadd.f32 %v4409, %v4414
  %v4418 = vadd.f32 %v4416, %v3513
  %v4419 = vadd.f32 %v4417, %v3516
  %s4420 = scalar_lea.vmem %s39, 16
  %v4421 = vld [vmem:[%s4420] sm:$0xf]
  %v4422 = vld [vmem:[%s4420 + $0x4] sm:$0xf]
  %v4423 = vld [vmem:[%s4420 + $0x8] sm:$0xf]
  %v4424 = vld [vmem:[%s4420 + $0xc] sm:$0xf]
  %s4425 = scalar_lea.vmem %s41, 1
  %v4426 = vld [vmem:[%s4425] sm:$0x1]
  %v4427 = vpack.c.bf16 %v4419, %v4418
  %v4429 = vlaneseq
  %v4430 = vshrl.u32 %v4429, 7
  %v4431 = vsub.s32 0, %v4430
  %v4432 = vrot.slane %v4426, %v4431
  %v4438 = vunpack.c.l.b16 %v4421
  %v4439 = vunpack.c.l.b16 %v4422
  %v4440 = vunpack.c.l.b16 %v4423
  %v4441 = vunpack.c.l.b16 %v4424
  %v4442 = vpack.c.b16 %v4439, %v4438
  %v4443 = vpack.c.b16 %v4441, %v4440
  %v4447 = vsel %vm235, %v4427, 0
  %4449 = vmatprep.subr.bf16.mxu0 0
  %4450 = vmatpush1.bf16.msra.mxu0 %v4442
  %4451 = vmatprep.subr.bf16.mxu0 0
  %4452 = vmatpush1.bf16.msra.mxu0 %v4443
  %4453 = vmatprep.subr.bf16.mxu0 0
  %4454 = vmatpush1.bf16.msra.mxu0 0
  %4455 = vmatprep.subr.bf16.mxu0 0
  %4456 = vmatpush1.bf16.msra.mxu0 0
  %4457 = vmatprep.subr.bf16.mxu0 0
  %4458 = vmatpush1.bf16.msra.mxu0 0
  %4459 = vmatprep.subr.bf16.mxu0 0
  %4460 = vmatpush1.bf16.msra.mxu0 0
  %4461 = vmatprep.subr.bf16.mxu0 0
  %4462 = vmatpush1.bf16.msra.mxu0 0
  %4463 = vmatprep.subr.bf16.mxu0 0
  %4464 = vmatpush1.bf16.msra.mxu0 0
  %4465 = vmatprep.subr.bf16.mxu0 0
  %4466 = vmatpush1.bf16.msra.mxu0 0
  %4467 = vmatprep.subr.bf16.mxu0 0
  %4468 = vmatpush1.bf16.msra.mxu0 0
  %4469 = vmatprep.subr.bf16.mxu0 0
  %4470 = vmatpush1.bf16.msra.mxu0 0
  %4471 = vmatprep.subr.bf16.mxu0 0
  %4472 = vmatpush1.bf16.msra.mxu0 0
  %4473 = vmatprep.subr.bf16.mxu0 0
  %4474 = vmatpush1.bf16.msra.mxu0 0
  %4475 = vmatprep.subr.bf16.mxu0 0
  %4476 = vmatpush1.bf16.msra.mxu0 0
  %4477 = vmatprep.subr.bf16.mxu0 0
  %4478 = vmatpush1.bf16.msra.mxu0 0
  %4479 = vmatprep.subr.bf16.mxu0 0
  %4480 = vmatpush1.bf16.msra.mxu0 0
  %4481 = vmatprep.mubr.bf16.mxu0 0
  %4482 = vmatmul.mubr.bf16.gmra.mrb[0].mxu0 %v4447
  %v4483 = vpop.f32.mrb[0].mxu0
  %v4484 = vadd.f32 %v4432, %v4483
  %v4485 = vpop.f32.mrb[0].mxu0
  %v4486 = vpop.f32.mrb[0].mxu0
  %v4487 = vadd.f32 %v4432, %v4486
  %v4488 = vpop.f32.mrb[0].mxu0
  %4489 = vdwg.mxu0
  %v4490 = vpack.c.bf16 %v4487, %v4484
  %s4491 = scalar_lea.vmem %s53, 1
  %v4492 = vld [vmem:[%s4491] sm:$0x1]
  %4493 = vrot.lane.b32.xlu0 %v291, 96
  %v4494 = vpop.permute.xlu0 %4493
  %4495 = vrot.lane.b32.xlu0 %v292, 96
  %v4496 = vpop.permute.xlu0 %4495
  %v4498 = vsel %vm976, %v4490, 0
  %v4501 = vsel %vm976, %v4494, 0
  %v4504 = vsel %vm976, %v4496, 0
  %4506 = vmatprep.subr.bf16.mxu0 0
  %4507 = vmatpush1.bf16.xpose.msra.mxu0 %v4501
  %4508 = vmatprep.subr.bf16.mxu0 0
  %4509 = vmatpush1.bf16.xpose.msra.mxu0 %v4504
  %4510 = vmatprep.subr.bf16.mxu0 0
  %4511 = vmatpush1.bf16.xpose.msra.mxu0 0
  %4512 = vmatprep.subr.bf16.mxu0 0
  %4513 = vmatpush1.bf16.xpose.msra.mxu0 0
  %4514 = vmatprep.subr.bf16.mxu0 0
  %4515 = vmatpush1.bf16.xpose.msra.mxu0 0
  %4516 = vmatprep.subr.bf16.mxu0 0
  %4517 = vmatpush1.bf16.xpose.msra.mxu0 0
  %4518 = vmatprep.subr.bf16.mxu0 0
  %4519 = vmatpush1.bf16.xpose.msra.mxu0 0
  %4520 = vmatprep.subr.bf16.mxu0 0
  %4521 = vmatpush1.bf16.xpose.msra.mxu0 0
  %4522 = vmatprep.subr.bf16.mxu0 0
  %4523 = vmatpush1.bf16.xpose.msra.mxu0 0
  %4524 = vmatprep.subr.bf16.mxu0 0
  %4525 = vmatpush1.bf16.xpose.msra.mxu0 0
  %4526 = vmatprep.subr.bf16.mxu0 0
  %4527 = vmatpush1.bf16.xpose.msra.mxu0 0
  %4528 = vmatprep.subr.bf16.mxu0 0
  %4529 = vmatpush1.bf16.xpose.msra.mxu0 0
  %4530 = vmatprep.subr.bf16.mxu0 0
  %4531 = vmatpush1.bf16.xpose.msra.mxu0 0
  %4532 = vmatprep.subr.bf16.mxu0 0
  %4533 = vmatpush1.bf16.xpose.msra.mxu0 0
  %4534 = vmatprep.subr.bf16.mxu0 0
  %4535 = vmatpush1.bf16.xpose.msra.mxu0 0
  %4536 = vmatprep.subr.bf16.mxu0 0
  %4537 = vmatpush1.bf16.xpose.msra.mxu0 0
  %4538 = vmatprep.mubr.bf16.mxu0 0
  %4539 = vmatmul.mubr.bf16.gmra.mrb[0].mxu0 %v4498
  %v4540 = vpop.f32.mrb[0].mxu0
  %v4541 = vadd.f32 0.0, %v4540
  %v4542 = vpop.f32.mrb[0].mxu0
  %v4543 = vpop.f32.mrb[0].mxu0
  %v4544 = vadd.f32 0.0, %v4543
  %v4545 = vpop.f32.mrb[0].mxu0
  %4546 = vdwg.mxu0
  %v4547 = vmul.f32 %v4541, 0.35355338
  %v4548 = vmul.f32 %v4544, 0.35355338
  %v4549 = vadd.f32 %v4547, %v192
  %v4550 = vadd.f32 %v4548, %v193
  %v4551 = vsel %vm235, %v4549, -inf
  %4552 = vmax.xlane.f32.xlu0 %v4551
  %v4553 = vpop.xlane.xlu0 %4552
  %v4554 = vsel %vm235, %v4550, -inf
  %4555 = vmax.xlane.f32.xlu0 %v4554
  %v4556 = vpop.xlane.xlu0 %4555
  %v4557 = vsub.f32 %v4549, %v4553
  %v4558 = vsub.f32 %v4550, %v4556
  %v4559 = vmul.f32 %v4557, 1.442695
  %v4560 = vpow.pop %v4559
  %v4561 = vmul.f32 %v4558, 1.442695
  %v4562 = vpow.pop %v4561
  %v4563 = vsel %vm235, %v4560, 0.0
  %4564 = vadd.xlane.f32.xlu0 %v4563
  %v4565 = vpop.xlane.xlu0 %4564
  %v4566 = vsel %vm235, %v4562, 0.0
  %4567 = vadd.xlane.f32.xlu0 %v4566
  %v4568 = vpop.xlane.xlu0 %4567
  %v4569 = vrcp.pop %v4565
  %v4570 = vrcp.pop %v4568
  %v4571 = vmul.f32 %v4560, %v4569
  %v4572 = vmul.f32 %v4562, %v4570
  %v4573 = vpack.c.bf16 %v4572, %v4571
  %4574 = vrot.lane.b32.xlu0 %v373, 96
  %v4575 = vpop.permute.xlu0 %4574
  %4576 = vrot.lane.b32.xlu0 %v374, 96
  %v4577 = vpop.permute.xlu0 %4576
  %v4581 = vsel %vm235, %v4573, 0
  %4583 = vmatprep.subr.bf16.mxu0 0
  %4584 = vmatpush1.bf16.msra.mxu0 %v4575
  %4585 = vmatprep.subr.bf16.mxu0 0
  %4586 = vmatpush1.bf16.msra.mxu0 %v4577
  %4587 = vmatprep.subr.bf16.mxu0 0
  %4588 = vmatpush1.bf16.msra.mxu0 0
  %4589 = vmatprep.subr.bf16.mxu0 0
  %4590 = vmatpush1.bf16.msra.mxu0 0
  %4591 = vmatprep.subr.bf16.mxu0 0
  %4592 = vmatpush1.bf16.msra.mxu0 0
  %4593 = vmatprep.subr.bf16.mxu0 0
  %4594 = vmatpush1.bf16.msra.mxu0 0
  %4595 = vmatprep.subr.bf16.mxu0 0
  %4596 = vmatpush1.bf16.msra.mxu0 0
  %4597 = vmatprep.subr.bf16.mxu0 0
  %4598 = vmatpush1.bf16.msra.mxu0 0
  %4599 = vmatprep.subr.bf16.mxu0 0
  %4600 = vmatpush1.bf16.msra.mxu0 0
  %4601 = vmatprep.subr.bf16.mxu0 0
  %4602 = vmatpush1.bf16.msra.mxu0 0
  %4603 = vmatprep.subr.bf16.mxu0 0
  %4604 = vmatpush1.bf16.msra.mxu0 0
  %4605 = vmatprep.subr.bf16.mxu0 0
  %4606 = vmatpush1.bf16.msra.mxu0 0
  %4607 = vmatprep.subr.bf16.mxu0 0
  %4608 = vmatpush1.bf16.msra.mxu0 0
  %4609 = vmatprep.subr.bf16.mxu0 0
  %4610 = vmatpush1.bf16.msra.mxu0 0
  %4611 = vmatprep.subr.bf16.mxu0 0
  %4612 = vmatpush1.bf16.msra.mxu0 0
  %4613 = vmatprep.subr.bf16.mxu0 0
  %4614 = vmatpush1.bf16.msra.mxu0 0
  %4615 = vmatprep.mubr.bf16.mxu0 0
  %4616 = vmatmul.mubr.bf16.gmra.mrb[0].mxu0 %v4581
  %v4617 = vpop.f32.mrb[0].mxu0
  %v4618 = vadd.f32 0.0, %v4617
  %v4619 = vpop.f32.mrb[0].mxu0
  %v4620 = vpop.f32.mrb[0].mxu0
  %v4621 = vadd.f32 0.0, %v4620
  %v4622 = vpop.f32.mrb[0].mxu0
  %4623 = vdwg.mxu0
  %v4624 = vpack.c.bf16 %v4621, %v4618
  %s4625 = scalar_lea.vmem %s51, 16
  %v4626 = vld [vmem:[%s4625] sm:$0xf]
  %4628 = vrot.lane.b32.xlu0 %v4490, 120
  %v4629 = vpop.permute.xlu0 %4628
  %4630 = vrot.lane.b32.xlu0 %v291, 88
  %v4631 = vpop.permute.xlu0 %4630
  %4632 = vrot.lane.b32.xlu0 %v292, 88
  %v4633 = vpop.permute.xlu0 %4632
  %v4635 = vsel %vm976, %v4629, 0
  %v4638 = vsel %vm976, %v4631, 0
  %v4641 = vsel %vm976, %v4633, 0
  %4643 = vmatprep.subr.bf16.mxu0 0
  %4644 = vmatpush1.bf16.xpose.msra.mxu0 %v4638
  %4645 = vmatprep.subr.bf16.mxu0 0
  %4646 = vmatpush1.bf16.xpose.msra.mxu0 %v4641
  %4647 = vmatprep.subr.bf16.mxu0 0
  %4648 = vmatpush1.bf16.xpose.msra.mxu0 0
  %4649 = vmatprep.subr.bf16.mxu0 0
  %4650 = vmatpush1.bf16.xpose.msra.mxu0 0
  %4651 = vmatprep.subr.bf16.mxu0 0
  %4652 = vmatpush1.bf16.xpose.msra.mxu0 0
  %4653 = vmatprep.subr.bf16.mxu0 0
  %4654 = vmatpush1.bf16.xpose.msra.mxu0 0
  %4655 = vmatprep.subr.bf16.mxu0 0
  %4656 = vmatpush1.bf16.xpose.msra.mxu0 0
  %4657 = vmatprep.subr.bf16.mxu0 0
  %4658 = vmatpush1.bf16.xpose.msra.mxu0 0
  %4659 = vmatprep.subr.bf16.mxu0 0
  %4660 = vmatpush1.bf16.xpose.msra.mxu0 0
  %4661 = vmatprep.subr.bf16.mxu0 0
  %4662 = vmatpush1.bf16.xpose.msra.mxu0 0
  %4663 = vmatprep.subr.bf16.mxu0 0
  %4664 = vmatpush1.bf16.xpose.msra.mxu0 0
  %4665 = vmatprep.subr.bf16.mxu0 0
  %4666 = vmatpush1.bf16.xpose.msra.mxu0 0
  %4667 = vmatprep.subr.bf16.mxu0 0
  %4668 = vmatpush1.bf16.xpose.msra.mxu0 0
  %4669 = vmatprep.subr.bf16.mxu0 0
  %4670 = vmatpush1.bf16.xpose.msra.mxu0 0
  %4671 = vmatprep.subr.bf16.mxu0 0
  %4672 = vmatpush1.bf16.xpose.msra.mxu0 0
  %4673 = vmatprep.subr.bf16.mxu0 0
  %4674 = vmatpush1.bf16.xpose.msra.mxu0 0
  %4675 = vmatprep.mubr.bf16.mxu0 0
  %4676 = vmatmul.mubr.bf16.gmra.mrb[0].mxu0 %v4635
  %v4677 = vpop.f32.mrb[0].mxu0
  %v4678 = vadd.f32 0.0, %v4677
  %v4679 = vpop.f32.mrb[0].mxu0
  %v4680 = vpop.f32.mrb[0].mxu0
  %v4681 = vadd.f32 0.0, %v4680
  %v4682 = vpop.f32.mrb[0].mxu0
  %4683 = vdwg.mxu0
  %v4684 = vmul.f32 %v4678, 0.35355338
  %v4685 = vmul.f32 %v4681, 0.35355338
  %v4686 = vadd.f32 %v4684, %v192
  %v4687 = vadd.f32 %v4685, %v193
  %v4688 = vsel %vm235, %v4686, -inf
  %4689 = vmax.xlane.f32.xlu0 %v4688
  %v4690 = vpop.xlane.xlu0 %4689
  %v4691 = vsel %vm235, %v4687, -inf
  %4692 = vmax.xlane.f32.xlu0 %v4691
  %v4693 = vpop.xlane.xlu0 %4692
  %v4694 = vsub.f32 %v4686, %v4690
  %v4695 = vsub.f32 %v4687, %v4693
  %v4696 = vmul.f32 %v4694, 1.442695
  %v4697 = vpow.pop %v4696
  %v4698 = vmul.f32 %v4695, 1.442695
  %v4699 = vpow.pop %v4698
  %v4700 = vsel %vm235, %v4697, 0.0
  %4701 = vadd.xlane.f32.xlu0 %v4700
  %v4702 = vpop.xlane.xlu0 %4701
  %v4703 = vsel %vm235, %v4699, 0.0
  %4704 = vadd.xlane.f32.xlu0 %v4703
  %v4705 = vpop.xlane.xlu0 %4704
  %v4706 = vrcp.pop %v4702
  %v4707 = vrcp.pop %v4705
  %v4708 = vmul.f32 %v4697, %v4706
  %v4709 = vmul.f32 %v4699, %v4707
  %v4710 = vpack.c.bf16 %v4709, %v4708
  %4711 = vrot.lane.b32.xlu0 %v373, 88
  %v4712 = vpop.permute.xlu0 %4711
  %4713 = vrot.lane.b32.xlu0 %v374, 88
  %v4714 = vpop.permute.xlu0 %4713
  %v4718 = vsel %vm235, %v4710, 0
  %4720 = vmatprep.subr.bf16.mxu0 0
  %4721 = vmatpush1.bf16.msra.mxu0 %v4712
  %4722 = vmatprep.subr.bf16.mxu0 0
  %4723 = vmatpush1.bf16.msra.mxu0 %v4714
  %4724 = vmatprep.subr.bf16.mxu0 0
  %4725 = vmatpush1.bf16.msra.mxu0 0
  %4726 = vmatprep.subr.bf16.mxu0 0
  %4727 = vmatpush1.bf16.msra.mxu0 0
  %4728 = vmatprep.subr.bf16.mxu0 0
  %4729 = vmatpush1.bf16.msra.mxu0 0
  %4730 = vmatprep.subr.bf16.mxu0 0
  %4731 = vmatpush1.bf16.msra.mxu0 0
  %4732 = vmatprep.subr.bf16.mxu0 0
  %4733 = vmatpush1.bf16.msra.mxu0 0
  %4734 = vmatprep.subr.bf16.mxu0 0
  %4735 = vmatpush1.bf16.msra.mxu0 0
  %4736 = vmatprep.subr.bf16.mxu0 0
  %4737 = vmatpush1.bf16.msra.mxu0 0
  %4738 = vmatprep.subr.bf16.mxu0 0
  %4739 = vmatpush1.bf16.msra.mxu0 0
  %4740 = vmatprep.subr.bf16.mxu0 0
  %4741 = vmatpush1.bf16.msra.mxu0 0
  %4742 = vmatprep.subr.bf16.mxu0 0
  %4743 = vmatpush1.bf16.msra.mxu0 0
  %4744 = vmatprep.subr.bf16.mxu0 0
  %4745 = vmatpush1.bf16.msra.mxu0 0
  %4746 = vmatprep.subr.bf16.mxu0 0
  %4747 = vmatpush1.bf16.msra.mxu0 0
  %4748 = vmatprep.subr.bf16.mxu0 0
  %4749 = vmatpush1.bf16.msra.mxu0 0
  %4750 = vmatprep.subr.bf16.mxu0 0
  %4751 = vmatpush1.bf16.msra.mxu0 0
  %4752 = vmatprep.mubr.bf16.mxu0 0
  %4753 = vmatmul.mubr.bf16.gmra.mrb[0].mxu0 %v4718
  %v4754 = vpop.f32.mrb[0].mxu0
  %v4755 = vadd.f32 0.0, %v4754
  %v4756 = vpop.f32.mrb[0].mxu0
  %v4757 = vpop.f32.mrb[0].mxu0
  %v4758 = vadd.f32 0.0, %v4757
  %v4759 = vpop.f32.mrb[0].mxu0
  %4760 = vdwg.mxu0
  %v4761 = vpack.c.bf16 %v4758, %v4755
  %s4762 = scalar_lea.vmem %s51, 20
  %v4763 = vld [vmem:[%s4762] sm:$0xf]
  %v4765 = vsel %vm976, %v4761, 0
  %v4768 = vsel %vm390, %v4763, 0
  %4770 = vmatprep.subr.bf16.mxu0 0
  %4771 = vmatpush1.bf16.msra.mxu0 %v4768
  %4772 = vmatprep.subr.bf16.mxu0 0
  %4773 = vmatpush1.bf16.msra.mxu0 0
  %4774 = vmatprep.subr.bf16.mxu0 0
  %4775 = vmatpush1.bf16.msra.mxu0 0
  %4776 = vmatprep.subr.bf16.mxu0 0
  %4777 = vmatpush1.bf16.msra.mxu0 0
  %4778 = vmatprep.subr.bf16.mxu0 0
  %4779 = vmatpush1.bf16.msra.mxu0 0
  %4780 = vmatprep.subr.bf16.mxu0 0
  %4781 = vmatpush1.bf16.msra.mxu0 0
  %4782 = vmatprep.subr.bf16.mxu0 0
  %4783 = vmatpush1.bf16.msra.mxu0 0
  %4784 = vmatprep.subr.bf16.mxu0 0
  %4785 = vmatpush1.bf16.msra.mxu0 0
  %4786 = vmatprep.subr.bf16.mxu0 0
  %4787 = vmatpush1.bf16.msra.mxu0 0
  %4788 = vmatprep.subr.bf16.mxu0 0
  %4789 = vmatpush1.bf16.msra.mxu0 0
  %4790 = vmatprep.subr.bf16.mxu0 0
  %4791 = vmatpush1.bf16.msra.mxu0 0
  %4792 = vmatprep.subr.bf16.mxu0 0
  %4793 = vmatpush1.bf16.msra.mxu0 0
  %4794 = vmatprep.subr.bf16.mxu0 0
  %4795 = vmatpush1.bf16.msra.mxu0 0
  %4796 = vmatprep.subr.bf16.mxu0 0
  %4797 = vmatpush1.bf16.msra.mxu0 0
  %4798 = vmatprep.subr.bf16.mxu0 0
  %4799 = vmatpush1.bf16.msra.mxu0 0
  %4800 = vmatprep.subr.bf16.mxu0 0
  %4801 = vmatpush1.bf16.msra.mxu0 0
  %4802 = vmatprep.mubr.bf16.mxu0 0
  %4803 = vmatmul.mubr.bf16.gmra.mrb[0].mxu0 %v4765
  %v4804 = vpop.f32.mrb[0].mxu0
  %v4805 = vadd.f32 0.0, %v4804
  %v4806 = vpop.f32.mrb[0].mxu0
  %v4807 = vpop.f32.mrb[0].mxu0
  %v4808 = vadd.f32 0.0, %v4807
  %v4809 = vpop.f32.mrb[0].mxu0
  %4810 = vdwg.mxu0
  %v4812 = vsel %vm976, %v4624, 0
  %v4815 = vsel %vm390, %v4626, 0
  %4817 = vmatprep.subr.bf16.mxu0 0
  %4818 = vmatpush1.bf16.msra.mxu0 %v4815
  %4819 = vmatprep.subr.bf16.mxu0 0
  %4820 = vmatpush1.bf16.msra.mxu0 0
  %4821 = vmatprep.subr.bf16.mxu0 0
  %4822 = vmatpush1.bf16.msra.mxu0 0
  %4823 = vmatprep.subr.bf16.mxu0 0
  %4824 = vmatpush1.bf16.msra.mxu0 0
  %4825 = vmatprep.subr.bf16.mxu0 0
  %4826 = vmatpush1.bf16.msra.mxu0 0
  %4827 = vmatprep.subr.bf16.mxu0 0
  %4828 = vmatpush1.bf16.msra.mxu0 0
  %4829 = vmatprep.subr.bf16.mxu0 0
  %4830 = vmatpush1.bf16.msra.mxu0 0
  %4831 = vmatprep.subr.bf16.mxu0 0
  %4832 = vmatpush1.bf16.msra.mxu0 0
  %4833 = vmatprep.subr.bf16.mxu0 0
  %4834 = vmatpush1.bf16.msra.mxu0 0
  %4835 = vmatprep.subr.bf16.mxu0 0
  %4836 = vmatpush1.bf16.msra.mxu0 0
  %4837 = vmatprep.subr.bf16.mxu0 0
  %4838 = vmatpush1.bf16.msra.mxu0 0
  %4839 = vmatprep.subr.bf16.mxu0 0
  %4840 = vmatpush1.bf16.msra.mxu0 0
  %4841 = vmatprep.subr.bf16.mxu0 0
  %4842 = vmatpush1.bf16.msra.mxu0 0
  %4843 = vmatprep.subr.bf16.mxu0 0
  %4844 = vmatpush1.bf16.msra.mxu0 0
  %4845 = vmatprep.subr.bf16.mxu0 0
  %4846 = vmatpush1.bf16.msra.mxu0 0
  %4847 = vmatprep.subr.bf16.mxu0 0
  %4848 = vmatpush1.bf16.msra.mxu0 0
  %4849 = vmatprep.mubr.bf16.mxu0 0
  %4850 = vmatmul.mubr.bf16.gmra.mrb[0].mxu0 %v4812
  %v4851 = vpop.f32.mrb[0].mxu0
  %v4852 = vadd.f32 %v4805, %v4851
  %v4853 = vpop.f32.mrb[0].mxu0
  %v4854 = vpop.f32.mrb[0].mxu0
  %v4855 = vadd.f32 %v4808, %v4854
  %v4856 = vpop.f32.mrb[0].mxu0
  %4857 = vdwg.mxu0
  %4858 = vrot.lane.b32.xlu0 %v4490, 112
  %v4859 = vpop.permute.xlu0 %4858
  %4860 = vrot.lane.b32.xlu0 %v291, 80
  %v4861 = vpop.permute.xlu0 %4860
  %4862 = vrot.lane.b32.xlu0 %v292, 80
  %v4863 = vpop.permute.xlu0 %4862
  %v4865 = vsel %vm976, %v4859, 0
  %v4868 = vsel %vm976, %v4861, 0
  %v4871 = vsel %vm976, %v4863, 0
  %4873 = vmatprep.subr.bf16.mxu0 0
  %4874 = vmatpush1.bf16.xpose.msra.mxu0 %v4868
  %4875 = vmatprep.subr.bf16.mxu0 0
  %4876 = vmatpush1.bf16.xpose.msra.mxu0 %v4871
  %4877 = vmatprep.subr.bf16.mxu0 0
  %4878 = vmatpush1.bf16.xpose.msra.mxu0 0
  %4879 = vmatprep.subr.bf16.mxu0 0
  %4880 = vmatpush1.bf16.xpose.msra.mxu0 0
  %4881 = vmatprep.subr.bf16.mxu0 0
  %4882 = vmatpush1.bf16.xpose.msra.mxu0 0
  %4883 = vmatprep.subr.bf16.mxu0 0
  %4884 = vmatpush1.bf16.xpose.msra.mxu0 0
  %4885 = vmatprep.subr.bf16.mxu0 0
  %4886 = vmatpush1.bf16.xpose.msra.mxu0 0
  %4887 = vmatprep.subr.bf16.mxu0 0
  %4888 = vmatpush1.bf16.xpose.msra.mxu0 0
  %4889 = vmatprep.subr.bf16.mxu0 0
  %4890 = vmatpush1.bf16.xpose.msra.mxu0 0
  %4891 = vmatprep.subr.bf16.mxu0 0
  %4892 = vmatpush1.bf16.xpose.msra.mxu0 0
  %4893 = vmatprep.subr.bf16.mxu0 0
  %4894 = vmatpush1.bf16.xpose.msra.mxu0 0
  %4895 = vmatprep.subr.bf16.mxu0 0
  %4896 = vmatpush1.bf16.xpose.msra.mxu0 0
  %4897 = vmatprep.subr.bf16.mxu0 0
  %4898 = vmatpush1.bf16.xpose.msra.mxu0 0
  %4899 = vmatprep.subr.bf16.mxu0 0
  %4900 = vmatpush1.bf16.xpose.msra.mxu0 0
  %4901 = vmatprep.subr.bf16.mxu0 0
  %4902 = vmatpush1.bf16.xpose.msra.mxu0 0
  %4903 = vmatprep.subr.bf16.mxu0 0
  %4904 = vmatpush1.bf16.xpose.msra.mxu0 0
  %4905 = vmatprep.mubr.bf16.mxu0 0
  %4906 = vmatmul.mubr.bf16.gmra.mrb[0].mxu0 %v4865
  %v4907 = vpop.f32.mrb[0].mxu0
  %v4908 = vadd.f32 0.0, %v4907
  %v4909 = vpop.f32.mrb[0].mxu0
  %v4910 = vpop.f32.mrb[0].mxu0
  %v4911 = vadd.f32 0.0, %v4910
  %v4912 = vpop.f32.mrb[0].mxu0
  %4913 = vdwg.mxu0
  %v4914 = vmul.f32 %v4908, 0.35355338
  %v4915 = vmul.f32 %v4911, 0.35355338
  %v4916 = vadd.f32 %v4914, %v192
  %v4917 = vadd.f32 %v4915, %v193
  %v4918 = vsel %vm235, %v4916, -inf
  %4919 = vmax.xlane.f32.xlu0 %v4918
  %v4920 = vpop.xlane.xlu0 %4919
  %v4921 = vsel %vm235, %v4917, -inf
  %4922 = vmax.xlane.f32.xlu0 %v4921
  %v4923 = vpop.xlane.xlu0 %4922
  %v4924 = vsub.f32 %v4916, %v4920
  %v4925 = vsub.f32 %v4917, %v4923
  %v4926 = vmul.f32 %v4924, 1.442695
  %v4927 = vpow.pop %v4926
  %v4928 = vmul.f32 %v4925, 1.442695
  %v4929 = vpow.pop %v4928
  %v4930 = vsel %vm235, %v4927, 0.0
  %4931 = vadd.xlane.f32.xlu0 %v4930
  %v4932 = vpop.xlane.xlu0 %4931
  %v4933 = vsel %vm235, %v4929, 0.0
  %4934 = vadd.xlane.f32.xlu0 %v4933
  %v4935 = vpop.xlane.xlu0 %4934
  %v4936 = vrcp.pop %v4932
  %v4937 = vrcp.pop %v4935
  %v4938 = vmul.f32 %v4927, %v4936
  %v4939 = vmul.f32 %v4929, %v4937
  %v4940 = vpack.c.bf16 %v4939, %v4938
  %4941 = vrot.lane.b32.xlu0 %v373, 80
  %v4942 = vpop.permute.xlu0 %4941
  %4943 = vrot.lane.b32.xlu0 %v374, 80
  %v4944 = vpop.permute.xlu0 %4943
  %v4948 = vsel %vm235, %v4940, 0
  %4950 = vmatprep.subr.bf16.mxu0 0
  %4951 = vmatpush1.bf16.msra.mxu0 %v4942
  %4952 = vmatprep.subr.bf16.mxu0 0
  %4953 = vmatpush1.bf16.msra.mxu0 %v4944
  %4954 = vmatprep.subr.bf16.mxu0 0
  %4955 = vmatpush1.bf16.msra.mxu0 0
  %4956 = vmatprep.subr.bf16.mxu0 0
  %4957 = vmatpush1.bf16.msra.mxu0 0
  %4958 = vmatprep.subr.bf16.mxu0 0
  %4959 = vmatpush1.bf16.msra.mxu0 0
  %4960 = vmatprep.subr.bf16.mxu0 0
  %4961 = vmatpush1.bf16.msra.mxu0 0
  %4962 = vmatprep.subr.bf16.mxu0 0
  %4963 = vmatpush1.bf16.msra.mxu0 0
  %4964 = vmatprep.subr.bf16.mxu0 0
  %4965 = vmatpush1.bf16.msra.mxu0 0
  %4966 = vmatprep.subr.bf16.mxu0 0
  %4967 = vmatpush1.bf16.msra.mxu0 0
  %4968 = vmatprep.subr.bf16.mxu0 0
  %4969 = vmatpush1.bf16.msra.mxu0 0
  %4970 = vmatprep.subr.bf16.mxu0 0
  %4971 = vmatpush1.bf16.msra.mxu0 0
  %4972 = vmatprep.subr.bf16.mxu0 0
  %4973 = vmatpush1.bf16.msra.mxu0 0
  %4974 = vmatprep.subr.bf16.mxu0 0
  %4975 = vmatpush1.bf16.msra.mxu0 0
  %4976 = vmatprep.subr.bf16.mxu0 0
  %4977 = vmatpush1.bf16.msra.mxu0 0
  %4978 = vmatprep.subr.bf16.mxu0 0
  %4979 = vmatpush1.bf16.msra.mxu0 0
  %4980 = vmatprep.subr.bf16.mxu0 0
  %4981 = vmatpush1.bf16.msra.mxu0 0
  %4982 = vmatprep.mubr.bf16.mxu0 0
  %4983 = vmatmul.mubr.bf16.gmra.mrb[0].mxu0 %v4948
  %v4984 = vpop.f32.mrb[0].mxu0
  %v4985 = vadd.f32 0.0, %v4984
  %v4986 = vpop.f32.mrb[0].mxu0
  %v4987 = vpop.f32.mrb[0].mxu0
  %v4988 = vadd.f32 0.0, %v4987
  %v4989 = vpop.f32.mrb[0].mxu0
  %4990 = vdwg.mxu0
  %v4991 = vpack.c.bf16 %v4988, %v4985
  %s4992 = scalar_lea.vmem %s51, 24
  %v4993 = vld [vmem:[%s4992] sm:$0xf]
  %v4995 = vsel %vm976, %v4991, 0
  %v4998 = vsel %vm390, %v4993, 0
  %5000 = vmatprep.subr.bf16.mxu0 0
  %5001 = vmatpush1.bf16.msra.mxu0 %v4998
  %5002 = vmatprep.subr.bf16.mxu0 0
  %5003 = vmatpush1.bf16.msra.mxu0 0
  %5004 = vmatprep.subr.bf16.mxu0 0
  %5005 = vmatpush1.bf16.msra.mxu0 0
  %5006 = vmatprep.subr.bf16.mxu0 0
  %5007 = vmatpush1.bf16.msra.mxu0 0
  %5008 = vmatprep.subr.bf16.mxu0 0
  %5009 = vmatpush1.bf16.msra.mxu0 0
  %5010 = vmatprep.subr.bf16.mxu0 0
  %5011 = vmatpush1.bf16.msra.mxu0 0
  %5012 = vmatprep.subr.bf16.mxu0 0
  %5013 = vmatpush1.bf16.msra.mxu0 0
  %5014 = vmatprep.subr.bf16.mxu0 0
  %5015 = vmatpush1.bf16.msra.mxu0 0
  %5016 = vmatprep.subr.bf16.mxu0 0
  %5017 = vmatpush1.bf16.msra.mxu0 0
  %5018 = vmatprep.subr.bf16.mxu0 0
  %5019 = vmatpush1.bf16.msra.mxu0 0
  %5020 = vmatprep.subr.bf16.mxu0 0
  %5021 = vmatpush1.bf16.msra.mxu0 0
  %5022 = vmatprep.subr.bf16.mxu0 0
  %5023 = vmatpush1.bf16.msra.mxu0 0
  %5024 = vmatprep.subr.bf16.mxu0 0
  %5025 = vmatpush1.bf16.msra.mxu0 0
  %5026 = vmatprep.subr.bf16.mxu0 0
  %5027 = vmatpush1.bf16.msra.mxu0 0
  %5028 = vmatprep.subr.bf16.mxu0 0
  %5029 = vmatpush1.bf16.msra.mxu0 0
  %5030 = vmatprep.subr.bf16.mxu0 0
  %5031 = vmatpush1.bf16.msra.mxu0 0
  %5032 = vmatprep.mubr.bf16.mxu0 0
  %5033 = vmatmul.mubr.bf16.gmra.mrb[0].mxu0 %v4995
  %v5034 = vpop.f32.mrb[0].mxu0
  %v5035 = vadd.f32 0.0, %v5034
  %v5036 = vpop.f32.mrb[0].mxu0
  %v5037 = vpop.f32.mrb[0].mxu0
  %v5038 = vadd.f32 0.0, %v5037
  %v5039 = vpop.f32.mrb[0].mxu0
  %5040 = vdwg.mxu0
  %v5041 = vadd.f32 %v4852, %v5035
  %v5042 = vadd.f32 %v4855, %v5038
  %5043 = vrot.lane.b32.xlu0 %v4490, 104
  %v5044 = vpop.permute.xlu0 %5043
  %5045 = vrot.lane.b32.xlu0 %v291, 72
  %v5046 = vpop.permute.xlu0 %5045
  %5047 = vrot.lane.b32.xlu0 %v292, 72
  %v5048 = vpop.permute.xlu0 %5047
  %v5050 = vsel %vm976, %v5044, 0
  %v5053 = vsel %vm976, %v5046, 0
  %v5056 = vsel %vm976, %v5048, 0
  %5058 = vmatprep.subr.bf16.mxu0 0
  %5059 = vmatpush1.bf16.xpose.msra.mxu0 %v5053
  %5060 = vmatprep.subr.bf16.mxu0 0
  %5061 = vmatpush1.bf16.xpose.msra.mxu0 %v5056
  %5062 = vmatprep.subr.bf16.mxu0 0
  %5063 = vmatpush1.bf16.xpose.msra.mxu0 0
  %5064 = vmatprep.subr.bf16.mxu0 0
  %5065 = vmatpush1.bf16.xpose.msra.mxu0 0
  %5066 = vmatprep.subr.bf16.mxu0 0
  %5067 = vmatpush1.bf16.xpose.msra.mxu0 0
  %5068 = vmatprep.subr.bf16.mxu0 0
  %5069 = vmatpush1.bf16.xpose.msra.mxu0 0
  %5070 = vmatprep.subr.bf16.mxu0 0
  %5071 = vmatpush1.bf16.xpose.msra.mxu0 0
  %5072 = vmatprep.subr.bf16.mxu0 0
  %5073 = vmatpush1.bf16.xpose.msra.mxu0 0
  %5074 = vmatprep.subr.bf16.mxu0 0
  %5075 = vmatpush1.bf16.xpose.msra.mxu0 0
  %5076 = vmatprep.subr.bf16.mxu0 0
  %5077 = vmatpush1.bf16.xpose.msra.mxu0 0
  %5078 = vmatprep.subr.bf16.mxu0 0
  %5079 = vmatpush1.bf16.xpose.msra.mxu0 0
  %5080 = vmatprep.subr.bf16.mxu0 0
  %5081 = vmatpush1.bf16.xpose.msra.mxu0 0
  %5082 = vmatprep.subr.bf16.mxu0 0
  %5083 = vmatpush1.bf16.xpose.msra.mxu0 0
  %5084 = vmatprep.subr.bf16.mxu0 0
  %5085 = vmatpush1.bf16.xpose.msra.mxu0 0
  %5086 = vmatprep.subr.bf16.mxu0 0
  %5087 = vmatpush1.bf16.xpose.msra.mxu0 0
  %5088 = vmatprep.subr.bf16.mxu0 0
  %5089 = vmatpush1.bf16.xpose.msra.mxu0 0
  %5090 = vmatprep.mubr.bf16.mxu0 0
  %5091 = vmatmul.mubr.bf16.gmra.mrb[0].mxu0 %v5050
  %v5092 = vpop.f32.mrb[0].mxu0
  %v5093 = vadd.f32 0.0, %v5092
  %v5094 = vpop.f32.mrb[0].mxu0
  %v5095 = vpop.f32.mrb[0].mxu0
  %v5096 = vadd.f32 0.0, %v5095
  %v5097 = vpop.f32.mrb[0].mxu0
  %5098 = vdwg.mxu0
  %v5099 = vmul.f32 %v5093, 0.35355338
  %v5100 = vmul.f32 %v5096, 0.35355338
  %v5101 = vadd.f32 %v5099, %v192
  %v5102 = vadd.f32 %v5100, %v193
  %v5103 = vsel %vm235, %v5101, -inf
  %5104 = vmax.xlane.f32.xlu0 %v5103
  %v5105 = vpop.xlane.xlu0 %5104
  %v5106 = vsel %vm235, %v5102, -inf
  %5107 = vmax.xlane.f32.xlu0 %v5106
  %v5108 = vpop.xlane.xlu0 %5107
  %v5109 = vsub.f32 %v5101, %v5105
  %v5110 = vsub.f32 %v5102, %v5108
  %v5111 = vmul.f32 %v5109, 1.442695
  %v5112 = vpow.pop %v5111
  %v5113 = vmul.f32 %v5110, 1.442695
  %v5114 = vpow.pop %v5113
  %v5115 = vsel %vm235, %v5112, 0.0
  %5116 = vadd.xlane.f32.xlu0 %v5115
  %v5117 = vpop.xlane.xlu0 %5116
  %v5118 = vsel %vm235, %v5114, 0.0
  %5119 = vadd.xlane.f32.xlu0 %v5118
  %v5120 = vpop.xlane.xlu0 %5119
  %v5121 = vrcp.pop %v5117
  %v5122 = vrcp.pop %v5120
  %v5123 = vmul.f32 %v5112, %v5121
  %v5124 = vmul.f32 %v5114, %v5122
  %v5125 = vpack.c.bf16 %v5124, %v5123
  %5126 = vrot.lane.b32.xlu0 %v373, 72
  %v5127 = vpop.permute.xlu0 %5126
  %5128 = vrot.lane.b32.xlu0 %v374, 72
  %v5129 = vpop.permute.xlu0 %5128
  %v5133 = vsel %vm235, %v5125, 0
  %5135 = vmatprep.subr.bf16.mxu0 0
  %5136 = vmatpush1.bf16.msra.mxu0 %v5127
  %5137 = vmatprep.subr.bf16.mxu0 0
  %5138 = vmatpush1.bf16.msra.mxu0 %v5129
  %5139 = vmatprep.subr.bf16.mxu0 0
  %5140 = vmatpush1.bf16.msra.mxu0 0
  %5141 = vmatprep.subr.bf16.mxu0 0
  %5142 = vmatpush1.bf16.msra.mxu0 0
  %5143 = vmatprep.subr.bf16.mxu0 0
  %5144 = vmatpush1.bf16.msra.mxu0 0
  %5145 = vmatprep.subr.bf16.mxu0 0
  %5146 = vmatpush1.bf16.msra.mxu0 0
  %5147 = vmatprep.subr.bf16.mxu0 0
  %5148 = vmatpush1.bf16.msra.mxu0 0
  %5149 = vmatprep.subr.bf16.mxu0 0
  %5150 = vmatpush1.bf16.msra.mxu0 0
  %5151 = vmatprep.subr.bf16.mxu0 0
  %5152 = vmatpush1.bf16.msra.mxu0 0
  %5153 = vmatprep.subr.bf16.mxu0 0
  %5154 = vmatpush1.bf16.msra.mxu0 0
  %5155 = vmatprep.subr.bf16.mxu0 0
  %5156 = vmatpush1.bf16.msra.mxu0 0
  %5157 = vmatprep.subr.bf16.mxu0 0
  %5158 = vmatpush1.bf16.msra.mxu0 0
  %5159 = vmatprep.subr.bf16.mxu0 0
  %5160 = vmatpush1.bf16.msra.mxu0 0
  %5161 = vmatprep.subr.bf16.mxu0 0
  %5162 = vmatpush1.bf16.msra.mxu0 0
  %5163 = vmatprep.subr.bf16.mxu0 0
  %5164 = vmatpush1.bf16.msra.mxu0 0
  %5165 = vmatprep.subr.bf16.mxu0 0
  %5166 = vmatpush1.bf16.msra.mxu0 0
  %5167 = vmatprep.mubr.bf16.mxu0 0
  %5168 = vmatmul.mubr.bf16.gmra.mrb[0].mxu0 %v5133
  %v5169 = vpop.f32.mrb[0].mxu0
  %v5170 = vadd.f32 0.0, %v5169
  %v5171 = vpop.f32.mrb[0].mxu0
  %v5172 = vpop.f32.mrb[0].mxu0
  %v5173 = vadd.f32 0.0, %v5172
  %v5174 = vpop.f32.mrb[0].mxu0
  %5175 = vdwg.mxu0
  %v5176 = vpack.c.bf16 %v5173, %v5170
  %s5177 = scalar_lea.vmem %s51, 28
  %v5178 = vld [vmem:[%s5177] sm:$0xf]
  %v5180 = vsel %vm976, %v5176, 0
  %v5183 = vsel %vm390, %v5178, 0
  %5185 = vmatprep.subr.bf16.mxu0 0
  %5186 = vmatpush1.bf16.msra.mxu0 %v5183
  %5187 = vmatprep.subr.bf16.mxu0 0
  %5188 = vmatpush1.bf16.msra.mxu0 0
  %5189 = vmatprep.subr.bf16.mxu0 0
  %5190 = vmatpush1.bf16.msra.mxu0 0
  %5191 = vmatprep.subr.bf16.mxu0 0
  %5192 = vmatpush1.bf16.msra.mxu0 0
  %5193 = vmatprep.subr.bf16.mxu0 0
  %5194 = vmatpush1.bf16.msra.mxu0 0
  %5195 = vmatprep.subr.bf16.mxu0 0
  %5196 = vmatpush1.bf16.msra.mxu0 0
  %5197 = vmatprep.subr.bf16.mxu0 0
  %5198 = vmatpush1.bf16.msra.mxu0 0
  %5199 = vmatprep.subr.bf16.mxu0 0
  %5200 = vmatpush1.bf16.msra.mxu0 0
  %5201 = vmatprep.subr.bf16.mxu0 0
  %5202 = vmatpush1.bf16.msra.mxu0 0
  %5203 = vmatprep.subr.bf16.mxu0 0
  %5204 = vmatpush1.bf16.msra.mxu0 0
  %5205 = vmatprep.subr.bf16.mxu0 0
  %5206 = vmatpush1.bf16.msra.mxu0 0
  %5207 = vmatprep.subr.bf16.mxu0 0
  %5208 = vmatpush1.bf16.msra.mxu0 0
  %5209 = vmatprep.subr.bf16.mxu0 0
  %5210 = vmatpush1.bf16.msra.mxu0 0
  %5211 = vmatprep.subr.bf16.mxu0 0
  %5212 = vmatpush1.bf16.msra.mxu0 0
  %5213 = vmatprep.subr.bf16.mxu0 0
  %5214 = vmatpush1.bf16.msra.mxu0 0
  %5215 = vmatprep.subr.bf16.mxu0 0
  %5216 = vmatpush1.bf16.msra.mxu0 0
  %5217 = vmatprep.mubr.bf16.mxu0 0
  %5218 = vmatmul.mubr.bf16.gmra.mrb[0].mxu0 %v5180
  %v5219 = vpop.f32.mrb[0].mxu0
  %v5220 = vadd.f32 0.0, %v5219
  %v5221 = vpop.f32.mrb[0].mxu0
  %v5222 = vpop.f32.mrb[0].mxu0
  %v5223 = vadd.f32 0.0, %v5222
  %v5224 = vpop.f32.mrb[0].mxu0
  %5225 = vdwg.mxu0
  %v5226 = vadd.f32 %v5041, %v5220
  %v5227 = vadd.f32 %v5042, %v5223
  %v5229 = vlaneseq
  %v5230 = vshrl.u32 %v5229, 7
  %v5231 = vsub.s32 0, %v5230
  %v5232 = vrot.slane %v4492, %v5231
  %v5234 = vadd.f32 %v5226, %v5232
  %v5235 = vadd.f32 %v5227, %v5232
  %v5236 = vadd.f32 %v4416, %v5234
  %v5237 = vadd.f32 %v4417, %v5235
  %s5238 = scalar_lea.vmem %s63, 4
  %v5239 = vld [vmem:[%s5238] sm:$0x1]
  %s5240 = scalar_lea.vmem %s65, 4
  %v5241 = vld [vmem:[%s5240] sm:$0x1]
  %v5242 = vsel %vm235, %v5236, 0.0
  %5243 = vadd.xlane.f32.xlu0 %v5242
  %v5244 = vpop.xlane.xlu0 %5243
  %v5245 = vsel %vm235, %v5237, 0.0
  %5246 = vadd.xlane.f32.xlu0 %v5245
  %v5247 = vpop.xlane.xlu0 %5246
  %v5248 = vmul.f32 %v5244, %v1693
  %v5249 = vmul.f32 %v5247, %v1693
  %v5250 = vsub.f32 %v5236, %v5248
  %v5251 = vsub.f32 %v5237, %v5249
  %v5252 = vmul.f32 %v5250, %v5250
  %v5253 = vmul.f32 %v5251, %v5251
  %v5254 = vsel %vm235, %v5252, 0.0
  %5255 = vadd.xlane.f32.xlu0 %v5254
  %v5256 = vpop.xlane.xlu0 %5255
  %v5257 = vsel %vm235, %v5253, 0.0
  %5258 = vadd.xlane.f32.xlu0 %v5257
  %v5259 = vpop.xlane.xlu0 %5258
  %v5260 = vmul.f32 %v5256, %v1693
  %v5261 = vmul.f32 %v5259, %v1693
  %v5262 = vadd.f32 %v5260, 1e-05
  %v5263 = vadd.f32 %v5261, 1e-05
  %v5264 = vrsqrt.pop %v5262
  %v5265 = vrsqrt.pop %v5263
  %v5266 = vmul.f32 %v5250, %v5264
  %v5267 = vmul.f32 %v5251, %v5265
  %v5269 = vlaneseq
  %v5270 = vshrl.u32 %v5269, 7
  %v5271 = vsub.s32 0, %v5270
  %v5272 = vrot.slane %v5239, %v5271
  %v5274 = vmul.f32 %v5266, %v5272
  %v5275 = vmul.f32 %v5267, %v5272
  %v5277 = vlaneseq
  %v5278 = vshrl.u32 %v5277, 7
  %v5279 = vsub.s32 0, %v5278
  %v5280 = vrot.slane %v5241, %v5279
  %v5282 = vadd.f32 %v5274, %v5280
  %v5283 = vadd.f32 %v5275, %v5280
  %s5284 = scalar_lea.vmem %s55, 16
  %v5285 = vld [vmem:[%s5284] sm:$0xf]
  %v5286 = vld [vmem:[%s5284 + $0x4] sm:$0xf]
  %v5287 = vld [vmem:[%s5284 + $0x8] sm:$0xf]
  %v5288 = vld [vmem:[%s5284 + $0xc] sm:$0xf]
  %s5289 = scalar_lea.vmem %s57, 1
  %v5290 = vld [vmem:[%s5289] sm:$0x1]
  %v5291 = vpack.c.bf16 %v5283, %v5282
  %v5293 = vlaneseq
  %v5294 = vshrl.u32 %v5293, 7
  %v5295 = vsub.s32 0, %v5294
  %v5296 = vrot.slane %v5290, %v5295
  %v5302 = vunpack.c.l.b16 %v5285
  %v5303 = vunpack.c.l.b16 %v5286
  %v5304 = vunpack.c.l.b16 %v5287
  %v5305 = vunpack.c.l.b16 %v5288
  %v5306 = vpack.c.b16 %v5303, %v5302
  %v5307 = vpack.c.b16 %v5305, %v5304
  %v5311 = vsel %vm235, %v5291, 0
  %5313 = vmatprep.subr.bf16.mxu0 0
  %5314 = vmatpush1.bf16.msra.mxu0 %v5306
  %5315 = vmatprep.subr.bf16.mxu0 0
  %5316 = vmatpush1.bf16.msra.mxu0 %v5307
  %5317 = vmatprep.subr.bf16.mxu0 0
  %5318 = vmatpush1.bf16.msra.mxu0 0
  %5319 = vmatprep.subr.bf16.mxu0 0
  %5320 = vmatpush1.bf16.msra.mxu0 0
  %5321 = vmatprep.subr.bf16.mxu0 0
  %5322 = vmatpush1.bf16.msra.mxu0 0
  %5323 = vmatprep.subr.bf16.mxu0 0
  %5324 = vmatpush1.bf16.msra.mxu0 0
  %5325 = vmatprep.subr.bf16.mxu0 0
  %5326 = vmatpush1.bf16.msra.mxu0 0
  %5327 = vmatprep.subr.bf16.mxu0 0
  %5328 = vmatpush1.bf16.msra.mxu0 0
  %5329 = vmatprep.subr.bf16.mxu0 0
  %5330 = vmatpush1.bf16.msra.mxu0 0
  %5331 = vmatprep.subr.bf16.mxu0 0
  %5332 = vmatpush1.bf16.msra.mxu0 0
  %5333 = vmatprep.subr.bf16.mxu0 0
  %5334 = vmatpush1.bf16.msra.mxu0 0
  %5335 = vmatprep.subr.bf16.mxu0 0
  %5336 = vmatpush1.bf16.msra.mxu0 0
  %5337 = vmatprep.subr.bf16.mxu0 0
  %5338 = vmatpush1.bf16.msra.mxu0 0
  %5339 = vmatprep.subr.bf16.mxu0 0
  %5340 = vmatpush1.bf16.msra.mxu0 0
  %5341 = vmatprep.subr.bf16.mxu0 0
  %5342 = vmatpush1.bf16.msra.mxu0 0
  %5343 = vmatprep.subr.bf16.mxu0 0
  %5344 = vmatpush1.bf16.msra.mxu0 0
  %5345 = vmatprep.mubr.bf16.mxu0 0
  %5346 = vmatmul.mubr.bf16.gmra.mrb[0].mxu0 %v5311
  %v5347 = vpop.f32.mrb[0].mxu0
  %v5348 = vadd.f32 %v5296, %v5347
  %v5349 = vpop.f32.mrb[0].mxu0
  %v5350 = vpop.f32.mrb[0].mxu0
  %v5351 = vadd.f32 %v5296, %v5350
  %v5352 = vpop.f32.mrb[0].mxu0
  %5353 = vdwg.mxu0
  %v5354 = vmax.f32 %v5348, 0.0
  %v5355 = vmax.f32 %v5351, 0.0
  %s5356 = scalar_lea.vmem %s59, 32
  %v5357 = vld [vmem:[%s5356] sm:$0xf]
  %v5358 = vld [vmem:[%s5356 + $0x4] sm:$0xf]
  %v5359 = vld [vmem:[%s5356 + $0x8] sm:$0xf]
  %v5360 = vld [vmem:[%s5356 + $0xc] sm:$0xf]
  %v5361 = vld [vmem:[%s5356 + $0x10] sm:$0xf]
  %v5362 = vld [vmem:[%s5356 + $0x14] sm:$0xf]
  %v5363 = vld [vmem:[%s5356 + $0x18] sm:$0xf]
  %v5364 = vld [vmem:[%s5356 + $0x1c] sm:$0xf]
  %s5365 = scalar_lea.vmem %s61, 1
  %v5366 = vld [vmem:[%s5365] sm:$0x1]
  %v5367 = vpack.c.bf16 %v5355, %v5354
  %v5369 = vlaneseq
  %v5370 = vshrl.u32 %v5369, 7
  %v5371 = vsub.s32 0, %v5370
  %v5372 = vrot.slane %v5366, %v5371
  %v5382 = vunpack.c.l.b16 %v5357
  %v5383 = vunpack.c.l.b16 %v5358
  %v5384 = vunpack.c.l.b16 %v5359
  %v5385 = vunpack.c.l.b16 %v5360
  %v5386 = vunpack.c.l.b16 %v5361
  %v5387 = vunpack.c.l.b16 %v5362
  %v5388 = vunpack.c.l.b16 %v5363
  %v5389 = vunpack.c.l.b16 %v5364
  %v5390 = vpack.c.b16 %v5383, %v5382
  %v5391 = vpack.c.b16 %v5385, %v5384
  %v5392 = vpack.c.b16 %v5387, %v5386
  %v5393 = vpack.c.b16 %v5389, %v5388
  %v5399 = vsel %vm717, %v5367, 0
  %5401 = vmatprep.subr.bf16.mxu0 0
  %5402 = vmatpush1.bf16.msra.mxu0 %v5390
  %5403 = vmatprep.subr.bf16.mxu0 0
  %5404 = vmatpush1.bf16.msra.mxu0 %v5391
  %5405 = vmatprep.subr.bf16.mxu0 0
  %5406 = vmatpush1.bf16.msra.mxu0 %v5392
  %5407 = vmatprep.subr.bf16.mxu0 0
  %5408 = vmatpush1.bf16.msra.mxu0 %v5393
  %5409 = vmatprep.subr.bf16.mxu0 0
  %5410 = vmatpush1.bf16.msra.mxu0 0
  %5411 = vmatprep.subr.bf16.mxu0 0
  %5412 = vmatpush1.bf16.msra.mxu0 0
  %5413 = vmatprep.subr.bf16.mxu0 0
  %5414 = vmatpush1.bf16.msra.mxu0 0
  %5415 = vmatprep.subr.bf16.mxu0 0
  %5416 = vmatpush1.bf16.msra.mxu0 0
  %5417 = vmatprep.subr.bf16.mxu0 0
  %5418 = vmatpush1.bf16.msra.mxu0 0
  %5419 = vmatprep.subr.bf16.mxu0 0
  %5420 = vmatpush1.bf16.msra.mxu0 0
  %5421 = vmatprep.subr.bf16.mxu0 0
  %5422 = vmatpush1.bf16.msra.mxu0 0
  %5423 = vmatprep.subr.bf16.mxu0 0
  %5424 = vmatpush1.bf16.msra.mxu0 0
  %5425 = vmatprep.subr.bf16.mxu0 0
  %5426 = vmatpush1.bf16.msra.mxu0 0
  %5427 = vmatprep.subr.bf16.mxu0 0
  %5428 = vmatpush1.bf16.msra.mxu0 0
  %5429 = vmatprep.subr.bf16.mxu0 0
  %5430 = vmatpush1.bf16.msra.mxu0 0
  %5431 = vmatprep.subr.bf16.mxu0 0
  %5432 = vmatpush1.bf16.msra.mxu0 0
  %5433 = vmatprep.mubr.bf16.mxu0 0
  %5434 = vmatmul.mubr.bf16.gmra.mrb[0].mxu0 %v5399
  %v5435 = vpop.f32.mrb[0].mxu0
  %v5436 = vadd.f32 %v5372, %v5435
  %v5437 = vpop.f32.mrb[0].mxu0
  %v5438 = vpop.f32.mrb[0].mxu0
  %v5439 = vadd.f32 %v5372, %v5438
  %v5440 = vpop.f32.mrb[0].mxu0
  %5441 = vdwg.mxu0
  %v5442 = vadd.f32 %v5282, %v5436
  %v5443 = vadd.f32 %v5283, %v5439
  %s5444 = scalar_lea.vmem %s63, 5
  %v5445 = vld [vmem:[%s5444] sm:$0x1]
  %s5446 = scalar_lea.vmem %s65, 5
  %v5447 = vld [vmem:[%s5446] sm:$0x1]
  %v5448 = vsel %vm235, %v5442, 0.0
  %5449 = vadd.xlane.f32.xlu0 %v5448
  %v5450 = vpop.xlane.xlu0 %5449
  %v5451 = vsel %vm235, %v5443, 0.0
  %5452 = vadd.xlane.f32.xlu0 %v5451
  %v5453 = vpop.xlane.xlu0 %5452
  %v5454 = vmul.f32 %v5450, %v1693
  %v5455 = vmul.f32 %v5453, %v1693
  %v5456 = vsub.f32 %v5442, %v5454
  %v5457 = vsub.f32 %v5443, %v5455
  %v5458 = vmul.f32 %v5456, %v5456
  %v5459 = vmul.f32 %v5457, %v5457
  %v5460 = vsel %vm235, %v5458, 0.0
  %5461 = vadd.xlane.f32.xlu0 %v5460
  %v5462 = vpop.xlane.xlu0 %5461
  %v5463 = vsel %vm235, %v5459, 0.0
  %5464 = vadd.xlane.f32.xlu0 %v5463
  %v5465 = vpop.xlane.xlu0 %5464
  %v5466 = vmul.f32 %v5462, %v1693
  %v5467 = vmul.f32 %v5465, %v1693
  %v5468 = vadd.f32 %v5466, 1e-05
  %v5469 = vadd.f32 %v5467, 1e-05
  %v5470 = vrsqrt.pop %v5468
  %v5471 = vrsqrt.pop %v5469
  %v5472 = vmul.f32 %v5456, %v5470
  %v5473 = vmul.f32 %v5457, %v5471
  %v5475 = vlaneseq
  %v5476 = vshrl.u32 %v5475, 7
  %v5477 = vsub.s32 0, %v5476
  %v5478 = vrot.slane %v5445, %v5477
  %v5480 = vmul.f32 %v5472, %v5478
  %v5481 = vmul.f32 %v5473, %v5478
  %v5483 = vlaneseq
  %v5484 = vshrl.u32 %v5483, 7
  %v5485 = vsub.s32 0, %v5484
  %v5486 = vrot.slane %v5447, %v5485
  %v5488 = vadd.f32 %v5480, %v5486
  %v5489 = vadd.f32 %v5481, %v5486
  %v5490 = vld [vmem:[%s67] sm:$0x1]
  %v5491 = vld [vmem:[%s69] sm:$0x1]
  %v5492 = vsel %vm235, %v5488, 0.0
  %5493 = vadd.xlane.f32.xlu0 %v5492
  %v5494 = vpop.xlane.xlu0 %5493
  %v5495 = vsel %vm235, %v5489, 0.0
  %5496 = vadd.xlane.f32.xlu0 %v5495
  %v5497 = vpop.xlane.xlu0 %5496
  %v5498 = vmul.f32 %v5494, %v1693
  %v5499 = vmul.f32 %v5497, %v1693
  %v5500 = vsub.f32 %v5488, %v5498
  %v5501 = vsub.f32 %v5489, %v5499
  %v5502 = vmul.f32 %v5500, %v5500
  %v5503 = vmul.f32 %v5501, %v5501
  %v5504 = vsel %vm235, %v5502, 0.0
  %5505 = vadd.xlane.f32.xlu0 %v5504
  %v5506 = vpop.xlane.xlu0 %5505
  %v5507 = vsel %vm235, %v5503, 0.0
  %5508 = vadd.xlane.f32.xlu0 %v5507
  %v5509 = vpop.xlane.xlu0 %5508
  %v5510 = vmul.f32 %v5506, %v1693
  %v5511 = vmul.f32 %v5509, %v1693
  %v5512 = vadd.f32 %v5510, 1e-05
  %v5513 = vadd.f32 %v5511, 1e-05
  %v5514 = vrsqrt.pop %v5512
  %v5515 = vrsqrt.pop %v5513
  %v5516 = vmul.f32 %v5500, %v5514
  %v5517 = vmul.f32 %v5501, %v5515
  %v5519 = vlaneseq
  %v5520 = vshrl.u32 %v5519, 7
  %v5521 = vsub.s32 0, %v5520
  %v5522 = vrot.slane %v5490, %v5521
  %v5524 = vmul.f32 %v5516, %v5522
  %v5525 = vmul.f32 %v5517, %v5522
  %v5527 = vlaneseq
  %v5528 = vshrl.u32 %v5527, 7
  %v5529 = vsub.s32 0, %v5528
  %v5530 = vrot.slane %v5491, %v5529
  %v5532 = vadd.f32 %v5524, %v5530
  %v5533 = vadd.f32 %v5525, %v5530
  %s5534 = scalar_lea.vmem %s83, 16
  %5535 = vst.msk [vmem:[%s5534] sm:$0xff] %vm235, %v5532
  %5536 = vst.msk [vmem:[%s5534 + $0x8] sm:$0xff] %vm235, %v5533
  %v5537 = vmax.f32 %v3071, 0.0
  %v5538 = vmax.f32 %v3073, 0.0
  %v5539 = vmin.f32 %v5537, 1.0
  %v5540 = vmin.f32 %v5538, 1.0
  %v5541 = vmax.f32 %v5539, 0.001
  %v5542 = vmax.f32 %v5540, 0.001
  %v5543 = vsub.f32 1.0, %v5539
  %v5544 = vsub.f32 1.0, %v5540
  %v5545 = vmax.f32 %v5543, 0.001
  %v5546 = vmax.f32 %v5544, 0.001
  %v5547 = vrcp.pop %v5545
  %v5548 = vmul.f32 %v5541, %v5547
  %v5549 = vrcp.pop %v5546
  %v5550 = vmul.f32 %v5542, %v5549
  %v5551 = vlog2.pop %v5548
  %v5552 = vmul.f32 %v5551, 0.6931472
  %v5553 = vlog2.pop %v5550
  %v5554 = vmul.f32 %v5553, 0.6931472
  %s5555 = scalar_lea.vmem %s71, 16
  %v5556 = vld [vmem:[%s5555] sm:$0xf]
  %v5557 = vld [vmem:[%s5555 + $0x4] sm:$0xf]
  %v5558 = vld [vmem:[%s5555 + $0x8] sm:$0xf]
  %v5559 = vld [vmem:[%s5555 + $0xc] sm:$0xf]
  %s5560 = scalar_lea.vmem %s73, 1
  %v5561 = vld [vmem:[%s5560] sm:$0x1]
  %v5562 = vpack.c.bf16 %v5489, %v5488
  %v5564 = vlaneseq
  %v5565 = vshrl.u32 %v5564, 7
  %v5566 = vsub.s32 0, %v5565
  %v5567 = vrot.slane %v5561, %v5566
  %v5573 = vunpack.c.l.b16 %v5556
  %v5574 = vunpack.c.l.b16 %v5557
  %v5575 = vunpack.c.l.b16 %v5558
  %v5576 = vunpack.c.l.b16 %v5559
  %v5577 = vpack.c.b16 %v5574, %v5573
  %v5578 = vpack.c.b16 %v5576, %v5575
  %v5582 = vsel %vm235, %v5562, 0
  %5584 = vmatprep.subr.bf16.mxu0 0
  %5585 = vmatpush1.bf16.msra.mxu0 %v5577
  %5586 = vmatprep.subr.bf16.mxu0 0
  %5587 = vmatpush1.bf16.msra.mxu0 %v5578
  %5588 = vmatprep.subr.bf16.mxu0 0
  %5589 = vmatpush1.bf16.msra.mxu0 0
  %5590 = vmatprep.subr.bf16.mxu0 0
  %5591 = vmatpush1.bf16.msra.mxu0 0
  %5592 = vmatprep.subr.bf16.mxu0 0
  %5593 = vmatpush1.bf16.msra.mxu0 0
  %5594 = vmatprep.subr.bf16.mxu0 0
  %5595 = vmatpush1.bf16.msra.mxu0 0
  %5596 = vmatprep.subr.bf16.mxu0 0
  %5597 = vmatpush1.bf16.msra.mxu0 0
  %5598 = vmatprep.subr.bf16.mxu0 0
  %5599 = vmatpush1.bf16.msra.mxu0 0
  %5600 = vmatprep.subr.bf16.mxu0 0
  %5601 = vmatpush1.bf16.msra.mxu0 0
  %5602 = vmatprep.subr.bf16.mxu0 0
  %5603 = vmatpush1.bf16.msra.mxu0 0
  %5604 = vmatprep.subr.bf16.mxu0 0
  %5605 = vmatpush1.bf16.msra.mxu0 0
  %5606 = vmatprep.subr.bf16.mxu0 0
  %5607 = vmatpush1.bf16.msra.mxu0 0
  %5608 = vmatprep.subr.bf16.mxu0 0
  %5609 = vmatpush1.bf16.msra.mxu0 0
  %5610 = vmatprep.subr.bf16.mxu0 0
  %5611 = vmatpush1.bf16.msra.mxu0 0
  %5612 = vmatprep.subr.bf16.mxu0 0
  %5613 = vmatpush1.bf16.msra.mxu0 0
  %5614 = vmatprep.subr.bf16.mxu0 0
  %5615 = vmatpush1.bf16.msra.mxu0 0
  %5616 = vmatprep.mubr.bf16.mxu0 0
  %5617 = vmatmul.mubr.bf16.gmra.mrb[0].mxu0 %v5582
  %v5618 = vpop.f32.mrb[0].mxu0
  %v5619 = vadd.f32 %v5567, %v5618
  %v5620 = vpop.f32.mrb[0].mxu0
  %v5621 = vpop.f32.mrb[0].mxu0
  %v5622 = vadd.f32 %v5567, %v5621
  %v5623 = vpop.f32.mrb[0].mxu0
  %5624 = vdwg.mxu0
  %v5625 = vmax.f32 %v5619, 0.0
  %v5626 = vmax.f32 %v5622, 0.0
  %s5627 = scalar_lea.vmem %s75, 16
  %v5628 = vld [vmem:[%s5627] sm:$0xf]
  %v5629 = vld [vmem:[%s5627 + $0x4] sm:$0xf]
  %v5630 = vld [vmem:[%s5627 + $0x8] sm:$0xf]
  %v5631 = vld [vmem:[%s5627 + $0xc] sm:$0xf]
  %s5632 = scalar_lea.vmem %s77, 1
  %v5633 = vld [vmem:[%s5632] sm:$0x1]
  %v5634 = vpack.c.bf16 %v5626, %v5625
  %v5636 = vlaneseq
  %v5637 = vshrl.u32 %v5636, 7
  %v5638 = vsub.s32 0, %v5637
  %v5639 = vrot.slane %v5633, %v5638
  %v5645 = vunpack.c.l.b16 %v5628
  %v5646 = vunpack.c.l.b16 %v5629
  %v5647 = vunpack.c.l.b16 %v5630
  %v5648 = vunpack.c.l.b16 %v5631
  %v5649 = vpack.c.b16 %v5646, %v5645
  %v5650 = vpack.c.b16 %v5648, %v5647
  %v5654 = vsel %vm235, %v5634, 0
  %5656 = vmatprep.subr.bf16.mxu0 0
  %5657 = vmatpush1.bf16.msra.mxu0 %v5649
  %5658 = vmatprep.subr.bf16.mxu0 0
  %5659 = vmatpush1.bf16.msra.mxu0 %v5650
  %5660 = vmatprep.subr.bf16.mxu0 0
  %5661 = vmatpush1.bf16.msra.mxu0 0
  %5662 = vmatprep.subr.bf16.mxu0 0
  %5663 = vmatpush1.bf16.msra.mxu0 0
  %5664 = vmatprep.subr.bf16.mxu0 0
  %5665 = vmatpush1.bf16.msra.mxu0 0
  %5666 = vmatprep.subr.bf16.mxu0 0
  %5667 = vmatpush1.bf16.msra.mxu0 0
  %5668 = vmatprep.subr.bf16.mxu0 0
  %5669 = vmatpush1.bf16.msra.mxu0 0
  %5670 = vmatprep.subr.bf16.mxu0 0
  %5671 = vmatpush1.bf16.msra.mxu0 0
  %5672 = vmatprep.subr.bf16.mxu0 0
  %5673 = vmatpush1.bf16.msra.mxu0 0
  %5674 = vmatprep.subr.bf16.mxu0 0
  %5675 = vmatpush1.bf16.msra.mxu0 0
  %5676 = vmatprep.subr.bf16.mxu0 0
  %5677 = vmatpush1.bf16.msra.mxu0 0
  %5678 = vmatprep.subr.bf16.mxu0 0
  %5679 = vmatpush1.bf16.msra.mxu0 0
  %5680 = vmatprep.subr.bf16.mxu0 0
  %5681 = vmatpush1.bf16.msra.mxu0 0
  %5682 = vmatprep.subr.bf16.mxu0 0
  %5683 = vmatpush1.bf16.msra.mxu0 0
  %5684 = vmatprep.subr.bf16.mxu0 0
  %5685 = vmatpush1.bf16.msra.mxu0 0
  %5686 = vmatprep.subr.bf16.mxu0 0
  %5687 = vmatpush1.bf16.msra.mxu0 0
  %5688 = vmatprep.mubr.bf16.mxu0 0
  %5689 = vmatmul.mubr.bf16.gmra.mrb[0].mxu0 %v5654
  %v5690 = vpop.f32.mrb[0].mxu0
  %v5691 = vadd.f32 %v5639, %v5690
  %v5692 = vpop.f32.mrb[0].mxu0
  %v5693 = vpop.f32.mrb[0].mxu0
  %v5694 = vadd.f32 %v5639, %v5693
  %v5695 = vpop.f32.mrb[0].mxu0
  %5696 = vdwg.mxu0
  %v5697 = vmax.f32 %v5691, 0.0
  %v5698 = vmax.f32 %v5694, 0.0
  %s5699 = scalar_lea.vmem %s79, 16
  %v5700 = vld [vmem:[%s5699] sm:$0xf]
  %v5701 = vld [vmem:[%s5699 + $0x4] sm:$0xf]
  %v5702 = vld [vmem:[%s5699 + $0x8] sm:$0xf]
  %v5703 = vld [vmem:[%s5699 + $0xc] sm:$0xf]
  %s5704 = scalar_lea.vmem %s81, 1
  %v5705 = vld [vmem:[%s5704] sm:$0x1]
  %v5706 = vpack.c.bf16 %v5698, %v5697
  %v5708 = vlaneseq
  %v5709 = vshrl.u32 %v5708, 7
  %v5710 = vsub.s32 0, %v5709
  %v5711 = vrot.slane %v5705, %v5710
  %v5717 = vunpack.c.l.b16 %v5700
  %v5718 = vunpack.c.l.b16 %v5701
  %v5719 = vunpack.c.l.b16 %v5702
  %v5720 = vunpack.c.l.b16 %v5703
  %v5721 = vpack.c.b16 %v5718, %v5717
  %v5722 = vpack.c.b16 %v5720, %v5719
  %v5726 = vsel %vm235, %v5706, 0
  %5728 = vmatprep.subr.bf16.mxu0 0
  %5729 = vmatpush1.bf16.msra.mxu0 %v5721
  %5730 = vmatprep.subr.bf16.mxu0 0
  %5731 = vmatpush1.bf16.msra.mxu0 %v5722
  %5732 = vmatprep.subr.bf16.mxu0 0
  %5733 = vmatpush1.bf16.msra.mxu0 0
  %5734 = vmatprep.subr.bf16.mxu0 0
  %5735 = vmatpush1.bf16.msra.mxu0 0
  %5736 = vmatprep.subr.bf16.mxu0 0
  %5737 = vmatpush1.bf16.msra.mxu0 0
  %5738 = vmatprep.subr.bf16.mxu0 0
  %5739 = vmatpush1.bf16.msra.mxu0 0
  %5740 = vmatprep.subr.bf16.mxu0 0
  %5741 = vmatpush1.bf16.msra.mxu0 0
  %5742 = vmatprep.subr.bf16.mxu0 0
  %5743 = vmatpush1.bf16.msra.mxu0 0
  %5744 = vmatprep.subr.bf16.mxu0 0
  %5745 = vmatpush1.bf16.msra.mxu0 0
  %5746 = vmatprep.subr.bf16.mxu0 0
  %5747 = vmatpush1.bf16.msra.mxu0 0
  %5748 = vmatprep.subr.bf16.mxu0 0
  %5749 = vmatpush1.bf16.msra.mxu0 0
  %5750 = vmatprep.subr.bf16.mxu0 0
  %5751 = vmatpush1.bf16.msra.mxu0 0
  %5752 = vmatprep.subr.bf16.mxu0 0
  %5753 = vmatpush1.bf16.msra.mxu0 0
  %5754 = vmatprep.subr.bf16.mxu0 0
  %5755 = vmatpush1.bf16.msra.mxu0 0
  %5756 = vmatprep.subr.bf16.mxu0 0
  %5757 = vmatpush1.bf16.msra.mxu0 0
  %5758 = vmatprep.subr.bf16.mxu0 0
  %5759 = vmatpush1.bf16.msra.mxu0 0
  %5760 = vmatprep.mubr.bf16.mxu0 0
  %5761 = vmatmul.mubr.bf16.gmra.mrb[0].mxu0 %v5726
  %v5762 = vpop.f32.mrb[0].mxu0
  %v5763 = vadd.f32 %v5711, %v5762
  %v5764 = vpop.f32.mrb[0].mxu0
  %v5765 = vpop.f32.mrb[0].mxu0
  %v5766 = vadd.f32 %v5711, %v5765
  %v5767 = vpop.f32.mrb[0].mxu0
  %5768 = vdwg.mxu0
  %v5769 = vadd.f32 %v5763, %v5552
  %v5770 = vadd.f32 %v5766, %v5554
  %v5771 = vxor.u32 %v5769, 2147483648
  %v5772 = vxor.u32 %v5770, 2147483648
  %v5773 = vmul.f32 %v5771, 1.442695
  %v5774 = vpow.pop %v5773
  %v5775 = vmul.f32 %v5772, 1.442695
  %v5776 = vpow.pop %v5775
  %v5777 = vadd.f32 %v5774, 1.0
  %v5778 = vadd.f32 %v5776, 1.0
  %v5779 = vrcp.pop %v5777
  %v5780 = vmul.f32 1.0, %v5779
  %v5781 = vrcp.pop %v5778
  %v5782 = vmul.f32 1.0, %v5781
  %5785 = vrot.lane.b32.xlu0 %v3071, 4
  %v5786 = vpop.permute.xlu0 %5785
  %5787 = vrot.lane.b32.xlu0 %v3073, 4
  %v5788 = vpop.permute.xlu0 %5787
  %5793 = vrot.lane.b32.xlu0 %v5780, 8
  %v5794 = vpop.permute.xlu0 %5793
  %5795 = vrot.lane.b32.xlu0 %v5782, 8
  %v5796 = vpop.permute.xlu0 %5795
  %v5799 = vsel %vm383, %v207, %v5786
  %v5800 = vsel %vm383, %v209, %v5788
  %v5801 = vsel %vm976, %v5799, %v5794
  %v5802 = vsel %vm976, %v5800, %v5796
  %vm5803 = vcmask 97280
  %5804 = vst.msk [vmem:[%s85] sm:$0xff] %vm5803, %v5801
  %5805 = vst.msk [vmem:[%s85 + $0x8] sm:$0xff] %vm5803, %v5802
  // Predicated region
  $region166: #{transformer_decoder_forward.1} parent=0 // pred_check
    _
  $region167: #{transformer_decoder_forward.1} parent=0 // pred_check_branch
    %5807 = sbr.rel (0) target = $region169
  $region168: #{transformer_decoder_forward.1} parent=0 // pred_region
    _
  $region169: #{transformer_decoder_forward.1} parent=0 // pred_fallthru
    _
  // Predicated region
  $region170: #{transformer_decoder_forward.1} parent=0 // pred_check
    _
  $region171: #{transformer_decoder_forward.1} parent=0 // pred_check_branch
    %5809 = sbr.rel (0) target = $region173
  $region172: #{transformer_decoder_forward.1} parent=0 // pred_region
    _
  $region173: #{transformer_decoder_forward.1} parent=0 // pred_fallthru
    _
  // Predicated region
  $region174: #{transformer_decoder_forward.1} parent=0 // pred_check
    _
  $region175: #{transformer_decoder_forward.1} parent=0 // pred_check_branch
    %5811 = sbr.rel (0) target = $region177
  $region176: #{transformer_decoder_forward.1} parent=0 // pred_region
    _
  $region177: #{transformer_decoder_forward.1} parent=0 // pred_fallthru
    _
  // Predicated region
  $region178: #{transformer_decoder_forward.1} parent=0 // pred_check
    _
  $region179: #{transformer_decoder_forward.1} parent=0 // pred_check_branch
    %5813 = sbr.rel (0) target = $region181
  $region180: #{transformer_decoder_forward.1} parent=0 // pred_region
    _
  $region181: #{transformer_decoder_forward.1} parent=0 // pred_fallthru
    _

</llo_original>
